<compile_context>
chip_gen: v6e
topology: v6e:2x2x1
jax: 0.10.0
libtpu: 0.0.40
codegen_flags: <defaults>
</compile_context>

<pallas_src>
import jax
import jax.numpy as jnp
from jax import lax
from jax.experimental import pallas as pl
from jax.experimental.pallas import tpu as pltpu

EPS = 1e-5  # PyTorch LayerNorm default eps


def _round_up(v, m):
    return ((v + m - 1) // m) * m


def _layernorm(x, gamma, beta):
    # Fused moments: var = E[x^2] - E[x]^2 (clamped for rounding), matches biased PyTorch LN.
    mu = jnp.mean(x, axis=-1, keepdims=True)
    ms = jnp.mean(x * x, axis=-1, keepdims=True)
    var = jnp.maximum(ms - mu * mu, 0.0)
    return (x - mu) * lax.rsqrt(var + EPS) * gamma + beta


def encoder_kernel(x_ref,
                   wqkv_ref, bqkv_ref, wo_ref, bo_ref,
                   g1_ref, be1_ref, g2_ref, be2_ref,
                   wf1_ref, bf1_ref, wf2_ref, bf2_ref,
                   wfin_ref, bfin_ref,
                   o_ref):
    L, B, E = x_ref.shape          # seq-first block: (L, B, E)
    M = L * B                      # tokens in this block
    Eseg = wo_ref.shape[0]         # 128-aligned per-head segment width (>= E)
    Opad = o_ref.shape[-1]
    scale = 1.0 / (E ** 0.5)       # num_heads = 1 -> head_dim = E

    # (L, B, E) -> (M, E): pure reshape; layout-free because B is a sublane multiple (8).
    x = x_ref[...].astype(jnp.float32).reshape(M, E)
    x_bf = x.astype(jnp.bfloat16)

    # --- fused QKV projection: one (M, E) x (E, 3*Eseg) MXU matmul; every segment
    # starts on a 128-lane boundary so the slices below are relayout-free. ---
    qkv = jnp.dot(x_bf, wqkv_ref[...], preferred_element_type=jnp.float32) + bqkv_ref[...]
    q = qkv[:, 0 * Eseg:1 * Eseg].astype(jnp.bfloat16)   # (M, Eseg); pad cols are exact 0
    k = qkv[:, 1 * Eseg:2 * Eseg].astype(jnp.bfloat16)
    v = qkv[:, 2 * Eseg:3 * Eseg].astype(jnp.bfloat16)

    # --- single-head attention over the whole block as ONE dense masked matmul.
    # Token i = l*B + b  ->  sequence id = i % B; only same-sequence pairs attend. ---
    seq_i = lax.broadcasted_iota(jnp.int32, (M, 1), 0) % B
    seq_j = lax.broadcasted_iota(jnp.int32, (1, M), 1) % B
    mask_bias = jnp.where(seq_i == seq_j, 0.0, -1e30).astype(jnp.float32)   # (M, M)

    s = jnp.einsum('me,ne->mn', q, k,
                   preferred_element_type=jnp.float32) * scale + mask_bias  # (M, M) f32
    s = s - jnp.max(s, axis=-1, keepdims=True)
    p = jnp.exp(s)                                       # masked entries underflow to 0
    denom = jnp.sum(p, axis=-1, keepdims=True)
    attn = jnp.dot(p.astype(jnp.bfloat16), v,
                   preferred_element_type=jnp.float32)   # (M, Eseg)
    attn = attn * pl.reciprocal(denom, approx=True)      # softmax normalize (EUP)

    attn = jnp.dot(attn.astype(jnp.bfloat16), wo_ref[...],
                   preferred_element_type=jnp.float32) + bo_ref[...]        # (M, E)

    # residual + LayerNorm 1 (dropout p = 0.0 -> identity)
    h = _layernorm(x + attn, g1_ref[...], be1_ref[...])

    # --- FFN: Linear(E, Hpad) -> ReLU -> Linear(Hpad, E); H zero-padded to 128 lanes ---
    ffh = jnp.dot(h.astype(jnp.bfloat16), wf1_ref[...],
                  preferred_element_type=jnp.float32) + bf1_ref[...]
    ffh = jnp.maximum(ffh, 0.0)
    ff = jnp.dot(ffh.astype(jnp.bfloat16), wf2_ref[...],
                 preferred_element_type=jnp.float32) + bf2_ref[...]

    # residual + LayerNorm 2
    h2 = _layernorm(h + ff, g2_ref[...], be2_ref[...])

    # --- final linear (output columns padded to a lane-dense 128 multiple) ---
    y = jnp.dot(h2.astype(jnp.bfloat16), wfin_ref[...],
                preferred_element_type=jnp.float32) + bfin_ref[...]
    o_ref[...] = y.reshape(L, B, Opad).astype(o_ref.dtype)


def init_params(key, in_features, out_features):
    """PyTorch-shaped f32 parameters (weights stored (in, out) so math is x @ W)."""
    E, O = in_features, out_features
    H = int(in_features * 0.3)
    ks = jax.random.split(key, 9)

    def w(k, shape, scale=0.05):
        return (scale * jax.random.normal(k, shape)).astype(jnp.float32)

    return dict(
        wq=w(ks[0], (E, E)), wk=w(ks[1], (E, E)), wv=w(ks[2], (E, E)),
        bq=w(ks[3], (1, E)), bk=w(ks[4], (1, E)), bv=w(ks[5], (1, E)),
        wo=w(ks[6], (E, E)), bo=jnp.zeros((1, E), jnp.float32),
        g1=jnp.ones((1, E), jnp.float32), be1=jnp.zeros((1, E), jnp.float32),
        g2=jnp.ones((1, E), jnp.float32), be2=jnp.zeros((1, E), jnp.float32),
        wf1=w(ks[7], (E, H)), bf1=jnp.zeros((1, H), jnp.float32),
        wf2=w(ks[8], (H, E)), bf2=jnp.zeros((1, E), jnp.float32),
        wfin=w(jax.random.fold_in(key, 99), (E, O)),
        bfin=jnp.zeros((1, O), jnp.float32),
    )


def pack_params(p, lane=128):
    """Kernel-format params: fused QKV with 128-aligned segments, zero-padded H/O, bf16 weights."""
    E = p["wq"].shape[0]
    H = p["wf1"].shape[1]
    O = p["wfin"].shape[1]
    Eseg = _round_up(E, lane)     # per-segment (head-dim) width: lane-aligned
    Hpad = _round_up(H, lane)
    Opad = _round_up(O, lane)

    def pad_to(a, rows=None, cols=None):
        r = 0 if rows is None else rows - a.shape[0]
        c = 0 if cols is None else cols - a.shape[1]
        return jnp.pad(a, ((0, r), (0, c)))

    bf16 = jnp.bfloat16
    # Zero padding is inert: padded q/k/v columns are exactly 0 (zero weight cols + zero
    # bias), so scores, PV output and the zero-row-padded out-projection are unchanged.
    wqkv = jnp.concatenate([pad_to(p["wq"], cols=Eseg),
                            pad_to(p["wk"], cols=Eseg),
                            pad_to(p["wv"], cols=Eseg)], axis=1)   # (E, 3*Eseg)
    bqkv = jnp.concatenate([pad_to(p["bq"], cols=Eseg),
                            pad_to(p["bk"], cols=Eseg),
                            pad_to(p["bv"], cols=Eseg)], axis=1)   # (1, 3*Eseg)

    return dict(
        wqkv=wqkv.astype(bf16), bqkv=bqkv.astype(jnp.float32),
        wo=pad_to(p["wo"], rows=Eseg).astype(bf16), bo=p["bo"].astype(jnp.float32),
        g1=p["g1"], be1=p["be1"], g2=p["g2"], be2=p["be2"],
        wf1=pad_to(p["wf1"], cols=Hpad).astype(bf16),
        bf1=pad_to(p["bf1"], cols=Hpad).astype(jnp.float32),
        wf2=pad_to(p["wf2"], rows=Hpad).astype(bf16),
        bf2=p["bf2"].astype(jnp.float32),
        wfin=pad_to(p["wfin"], cols=Opad).astype(bf16),
        bfin=pad_to(p["bfin"], cols=Opad).astype(jnp.float32),
    )


def _pick_block_n(N, L, target_rows=256, max_rows=512):
    """Batch-block size: >= target_rows tokens/step, grid >= 2, multiple of 8."""
    B = max(1, min(N, -(-target_rows // L)))      # aim for >= target_rows tokens per step
    if B >= N and N >= 2:
        B = -(-N // 2)                            # keep grid >= 2 so both v7x TCs get work
    B = min(B, max(1, max_rows // L))             # cap the quadratic (M x M) score tile
    return _round_up(B, 8)                        # sublane-aligned -> layout-free reshapes


def _vmem_limit_bytes(L, B, E, kparams):
    """Generation-aware VMEM limit: working set + headroom, capped at 3/4 physical VMEM."""
    M = L * B
    Eseg = kparams["wo"].shape[0]
    Hpad = kparams["wf1"].shape[1]
    Opad = kparams["wfin"].shape[1]
    act = 4 * M * (E + 3 * Eseg + Eseg + 4 * E + Hpad + Opad)   # f32 activations / temps
    act += (4 + 2 + 4) * M * M                                  # scores f32 + probs bf16 + mask
    io = 2 * 4 * L * B * E + 2 * 4 * L * B * Opad               # double-buffered in/out blocks
    w = sum(int(a.size) * a.dtype.itemsize for a in kparams.values())
    need = int(1.5 * (act + io + w)) + (8 << 20)                # compiler-scratch headroom
    try:
        cap = pltpu.get_tpu_info().vmem_capacity_bytes
    except Exception:
        cap = 64 << 20                                          # conservative (v7x per-TC VMEM)
    return int(min(max(32 << 20, need), (cap * 3) // 4))


def linear_encoder_forward(x, kparams, out_features, target_rows=256):
    # x: (L, N, E) -- PyTorch MultiheadAttention seq-first convention; no HBM transposes.
    L, N, E = x.shape
    Opad = kparams["wfin"].shape[1]

    B = _pick_block_n(N, L, target_rows)
    N_pad = _round_up(N, B)
    if N_pad != N:
        x = jnp.pad(x, ((0, 0), (0, N_pad - N), (0, 0)))   # zero sequences, cropped below
    grid = (N_pad // B,)

    order = ["wqkv", "bqkv", "wo", "bo", "g1", "be1", "g2", "be2",
             "wf1", "bf1", "wf2", "bf2", "wfin", "bfin"]
    weights = [kparams[name] for name in order]

    vmem_limit = _vmem_limit_bytes(L, B, E, kparams)

    def run(single_buffer_weights):
        if single_buffer_weights:
            def const_spec(a):
                return pl.BlockSpec(a.shape, lambda n, _nd=a.ndim: (0,) * _nd,
                                    pipeline_mode=pl.Buffered(1))
        else:
            def const_spec(a):
                return pl.BlockSpec(a.shape, lambda n, _nd=a.ndim: (0,) * _nd)
        return pl.pallas_call(
            encoder_kernel,
            out_shape=jax.ShapeDtypeStruct((L, N_pad, Opad), x.dtype),
            grid=grid,
            in_specs=[pl.BlockSpec((L, B, E), lambda n: (0, n, 0))]
                     + [const_spec(a) for a in weights],
            out_specs=pl.BlockSpec((L, B, Opad), lambda n: (0, n, 0)),
            compiler_params=pltpu.CompilerParams(
                dimension_semantics=("parallel",),
                vmem_limit_bytes=vmem_limit),
        )(x, *weights)

    try:
        out_pad = run(True)        # weights single-buffered (constant index_map)
    except Exception:
        # TODO(synk): pipeline_mode=pl.Buffered(1) rejected by this jax/Mosaic version;
        # fall back to default (double-buffered) weight specs.
        out_pad = run(False)

    return out_pad[:, :N, :out_features]   # crop batch + lane padding


def reference_forward(x, p):
    """Pure-JAX f32 reference matching PyTorch semantics (correctness check)."""
    L, N, E = x.shape
    scale = 1.0 / (E ** 0.5)

    def ln(h, g, b):
        mu = h.mean(-1, keepdims=True)
        var = ((h - mu) ** 2).mean(-1, keepdims=True)
        return (h - mu) * lax.rsqrt(var + EPS) * g + b

    q = x @ p["wq"] + p["bq"]
    k = x @ p["wk"] + p["bk"]
    v = x @ p["wv"] + p["bv"]
    s = jnp.einsum("qne,kne->nqk", q, k) * scale
    a = jax.nn.softmax(s, axis=-1)
    attn = jnp.einsum("nqk,kne->qne", a, v) @ p["wo"] + p["bo"]
    h = ln(x + attn, p["g1"], p["be1"])
    ff = jnp.maximum(h @ p["wf1"] + p["bf1"], 0.0) @ p["wf2"] + p["bf2"]
    h2 = ln(h + ff, p["g2"], p["be2"])
    return h2 @ p["wfin"] + p["bfin"]


if __name__ == "__main__":
    in_features, out_features = 32, 16
    L, N = 8, 64   # seq len, batch -> B=32 (256 tokens/step), grid=2 (both v7x TCs busy)

    key = jax.random.PRNGKey(0)
    kx, kp = jax.random.split(key)
    x = jax.random.normal(kx, (L, N, in_features), jnp.float32)

    params = init_params(kp, in_features, out_features)   # f32 / PyTorch layout
    kparams = pack_params(params)                          # fused / lane-padded / bf16

    out = linear_encoder_forward(x, kparams, out_features)
    out = jax.block_until_ready(out)

    ref = reference_forward(x, params)
    assert out.shape == (L, N, out_features)
    # MXU matmuls use bf16 operands (f32 accumulation); compare to the full-f32 reference
    # with a bf16-appropriate tolerance. pl.reciprocal(approx=True) adds ~1e-3 rel error.
    assert jnp.allclose(out, ref, atol=2e-2, rtol=2e-2), (
        f"max abs err {float(jnp.max(jnp.abs(out - ref)))}")

    print("KERNEL_OK")
</pallas_src>

<mosaic_0001>
module attributes {stable_mosaic.version = 11 : i64} {
  func.func @encoder_kernel(%arg0: i32, %arg1: memref<8x32x32xf32, #tpu.memory_space<vmem>>, %arg2: memref<32x384xbf16, #tpu.memory_space<vmem>>, %arg3: memref<1x384xf32, #tpu.memory_space<vmem>>, %arg4: memref<128x32xbf16, #tpu.memory_space<vmem>>, %arg5: memref<1x32xf32, #tpu.memory_space<vmem>>, %arg6: memref<1x32xf32, #tpu.memory_space<vmem>>, %arg7: memref<1x32xf32, #tpu.memory_space<vmem>>, %arg8: memref<1x32xf32, #tpu.memory_space<vmem>>, %arg9: memref<1x32xf32, #tpu.memory_space<vmem>>, %arg10: memref<32x128xbf16, #tpu.memory_space<vmem>>, %arg11: memref<1x128xf32, #tpu.memory_space<vmem>>, %arg12: memref<128x32xbf16, #tpu.memory_space<vmem>>, %arg13: memref<1x32xf32, #tpu.memory_space<vmem>>, %arg14: memref<32x128xbf16, #tpu.memory_space<vmem>>, %arg15: memref<1x128xf32, #tpu.memory_space<vmem>>, %arg16: memref<8x32x128xf32, #tpu.memory_space<vmem>>) attributes {dimension_semantics = [#tpu.dimension_semantics<parallel>], iteration_bounds = array<i64: 2>, scalar_prefetch = 0 : i64, scratch_operands = 0 : i64, tpu.core_type = #tpu.core_type<tc>, window_params = [{transform_indices = @transform_0, window_bounds = array<i64: 8, 32, 32>}, {pipeline_mode = #tpu.pipeline_mode<synchronous>, transform_indices = @transform_1, window_bounds = array<i64: 32, 384>}, {pipeline_mode = #tpu.pipeline_mode<synchronous>, transform_indices = @transform_2, window_bounds = array<i64: 1, 384>}, {pipeline_mode = #tpu.pipeline_mode<synchronous>, transform_indices = @transform_3, window_bounds = array<i64: 128, 32>}, {pipeline_mode = #tpu.pipeline_mode<synchronous>, transform_indices = @transform_4, window_bounds = array<i64: 1, 32>}, {pipeline_mode = #tpu.pipeline_mode<synchronous>, transform_indices = @transform_5, window_bounds = array<i64: 1, 32>}, {pipeline_mode = #tpu.pipeline_mode<synchronous>, transform_indices = @transform_6, window_bounds = array<i64: 1, 32>}, {pipeline_mode = #tpu.pipeline_mode<synchronous>, transform_indices = @transform_7, window_bounds = array<i64: 1, 32>}, {pipeline_mode = #tpu.pipeline_mode<synchronous>, transform_indices = @transform_8, window_bounds = array<i64: 1, 32>}, {pipeline_mode = #tpu.pipeline_mode<synchronous>, transform_indices = @transform_9, window_bounds = array<i64: 32, 128>}, {pipeline_mode = #tpu.pipeline_mode<synchronous>, transform_indices = @transform_10, window_bounds = array<i64: 1, 128>}, {pipeline_mode = #tpu.pipeline_mode<synchronous>, transform_indices = @transform_11, window_bounds = array<i64: 128, 32>}, {pipeline_mode = #tpu.pipeline_mode<synchronous>, transform_indices = @transform_12, window_bounds = array<i64: 1, 32>}, {pipeline_mode = #tpu.pipeline_mode<synchronous>, transform_indices = @transform_13, window_bounds = array<i64: 32, 128>}, {pipeline_mode = #tpu.pipeline_mode<synchronous>, transform_indices = @transform_14, window_bounds = array<i64: 1, 128>}, {transform_indices = @transform_15, window_bounds = array<i64: 8, 32, 128>}]} {
    %c0 = arith.constant 0 : index
    %c0_0 = arith.constant 0 : index
    %c0_1 = arith.constant 0 : index
    %0 = vector.load %arg1[%c0, %c0_0, %c0_1] : memref<8x32x32xf32, #tpu.memory_space<vmem>>, vector<8x32x32xf32>
    %1 = vector.shape_cast %0 : vector<8x32x32xf32> to vector<256x32xf32>
    %2 = arith.truncf %1 : vector<256x32xf32> to vector<256x32xbf16>
    %c0_2 = arith.constant 0 : index
    %c0_3 = arith.constant 0 : index
    %3 = vector.load %arg2[%c0_2, %c0_3] : memref<32x384xbf16, #tpu.memory_space<vmem>>, vector<32x384xbf16>
    %cst = arith.constant dense<0.000000e+00> : vector<256x384xf32>
    %4 = tpu.matmul %2, %3, %cst {dimension_numbers = #tpu.dot_dimension_numbers<[1], [0], [0], [1], [0, 0, 1, 1], [], []>} : vector<256x32xbf16>, vector<32x384xbf16>, vector<256x384xf32> -> vector<256x384xf32>
    %c0_4 = arith.constant 0 : index
    %c0_5 = arith.constant 0 : index
    %5 = vector.load %arg3[%c0_4, %c0_5] : memref<1x384xf32, #tpu.memory_space<vmem>>, vector<1x384xf32>
    %6 = vector.broadcast %5 : vector<1x384xf32> to vector<256x384xf32>
    %7 = arith.addf %4, %6 : vector<256x384xf32>
    %8 = vector.extract_strided_slice %7 {offsets = [0, 0], sizes = [256, 128], strides = [1, 1]} : vector<256x384xf32> to vector<256x128xf32>
    %9 = arith.truncf %8 : vector<256x128xf32> to vector<256x128xbf16>
    %10 = vector.extract_strided_slice %7 {offsets = [0, 128], sizes = [256, 128], strides = [1, 1]} : vector<256x384xf32> to vector<256x128xf32>
    %11 = arith.truncf %10 : vector<256x128xf32> to vector<256x128xbf16>
    %12 = vector.extract_strided_slice %7 {offsets = [0, 256], sizes = [256, 128], strides = [1, 1]} : vector<256x384xf32> to vector<256x128xf32>
    %13 = arith.truncf %12 : vector<256x128xf32> to vector<256x128xbf16>
    %14 = tpu.iota {dimensions = array<i32: 0>} : vector<256x1xi32>
    %c32_i32 = arith.constant 32 : i32
    %c0_i32 = arith.constant 0 : i32
    %15 = arith.cmpi eq, %c32_i32, %c0_i32 : i32
    %c1_i32 = arith.constant 1 : i32
    %16 = arith.select %15, %c1_i32, %c32_i32 : i32
    %17 = vector.broadcast %16 : i32 to vector<256x1xi32>
    %18 = arith.remsi %14, %17 : vector<256x1xi32>
    %c0_i32_6 = arith.constant 0 : i32
    %19 = vector.broadcast %c0_i32_6 : i32 to vector<256x1xi32>
    %20 = arith.cmpi ne, %18, %19 : vector<256x1xi32>
    %c0_i32_7 = arith.constant 0 : i32
    %21 = vector.broadcast %c0_i32_7 : i32 to vector<256x1xi32>
    %22 = arith.cmpi slt, %18, %21 : vector<256x1xi32>
    %c0_i32_8 = arith.constant 0 : i32
    %23 = arith.cmpi slt, %16, %c0_i32_8 : i32
    %24 = vector.broadcast %23 : i1 to vector<256x1xi1>
    %25 = vector.broadcast %24 : vector<256x1xi1> to vector<256x1xi1>
    %26 = arith.xori %22, %25 : vector<256x1xi1>
    %27 = arith.andi %26, %20 : vector<256x1xi1>
    %28 = vector.broadcast %16 : i32 to vector<256x1xi32>
    %29 = arith.addi %18, %28 : vector<256x1xi32>
    %30 = arith.select %27, %29, %18 : vector<256x1xi1>, vector<256x1xi32>
    %31 = tpu.iota {dimensions = array<i32: 1>} : vector<1x256xi32>
    %c32_i32_9 = arith.constant 32 : i32
    %c0_i32_10 = arith.constant 0 : i32
    %32 = arith.cmpi eq, %c32_i32_9, %c0_i32_10 : i32
    %c1_i32_11 = arith.constant 1 : i32
    %33 = arith.select %32, %c1_i32_11, %c32_i32_9 : i32
    %34 = vector.broadcast %33 : i32 to vector<1x256xi32>
    %35 = arith.remsi %31, %34 : vector<1x256xi32>
    %c0_i32_12 = arith.constant 0 : i32
    %36 = vector.broadcast %c0_i32_12 : i32 to vector<1x256xi32>
    %37 = arith.cmpi ne, %35, %36 : vector<1x256xi32>
    %c0_i32_13 = arith.constant 0 : i32
    %38 = vector.broadcast %c0_i32_13 : i32 to vector<1x256xi32>
    %39 = arith.cmpi slt, %35, %38 : vector<1x256xi32>
    %c0_i32_14 = arith.constant 0 : i32
    %40 = arith.cmpi slt, %33, %c0_i32_14 : i32
    %41 = vector.broadcast %40 : i1 to vector<1x256xi1>
    %42 = vector.broadcast %41 : vector<1x256xi1> to vector<1x256xi1>
    %43 = arith.xori %39, %42 : vector<1x256xi1>
    %44 = arith.andi %43, %37 : vector<1x256xi1>
    %45 = vector.broadcast %33 : i32 to vector<1x256xi32>
    %46 = arith.addi %35, %45 : vector<1x256xi32>
    %47 = arith.select %44, %46, %35 : vector<1x256xi1>, vector<1x256xi32>
    %48 = vector.broadcast %30 : vector<256x1xi32> to vector<256x256xi32>
    %49 = vector.broadcast %47 : vector<1x256xi32> to vector<256x256xi32>
    %50 = arith.cmpi eq, %48, %49 : vector<256x256xi32>
    %cst_15 = arith.constant 0.000000e+00 : f32
    %cst_16 = arith.constant -1.000000e+30 : f32
    %51 = vector.broadcast %cst_15 : f32 to vector<256x256xf32>
    %52 = vector.broadcast %cst_16 : f32 to vector<256x256xf32>
    %53 = arith.select %50, %51, %52 : vector<256x256xi1>, vector<256x256xf32>
    "tpu.trace_start"() <{level = 10 : i32, message = "me,ne->mn"}> : () -> ()
    %cst_17 = arith.constant dense<0.000000e+00> : vector<256x256xf32>
    %54 = tpu.matmul %9, %11, %cst_17 {dimension_numbers = #tpu.dot_dimension_numbers<[1], [1], [0], [0], [0, 0, 1, 0], [], []>} : vector<256x128xbf16>, vector<256x128xbf16>, vector<256x256xf32> -> vector<256x256xf32>
    "tpu.trace_stop"() : () -> ()
    %cst_18 = arith.constant 0.176776692 : f32
    %55 = vector.broadcast %cst_18 : f32 to vector<256x256xf32>
    %56 = arith.mulf %54, %55 : vector<256x256xf32>
    %57 = arith.addf %56, %53 : vector<256x256xf32>
    %cst_19 = arith.constant dense<0xFF800000> : vector<256xf32>
    %58 = vector.multi_reduction <maximumf>, %57, %cst_19 [1] : vector<256x256xf32> to vector<256xf32>
    %59 = vector.shape_cast %58 : vector<256xf32> to vector<256x1xf32>
    %60 = vector.broadcast %59 : vector<256x1xf32> to vector<256x256xf32>
    %61 = arith.subf %57, %60 : vector<256x256xf32>
    %62 = math.exp %61 : vector<256x256xf32>
    %cst_20 = arith.constant dense<0.000000e+00> : vector<256xf32>
    %63 = vector.multi_reduction <add>, %62, %cst_20 [1] : vector<256x256xf32> to vector<256xf32>
    %64 = vector.shape_cast %63 : vector<256xf32> to vector<256x1xf32>
    %65 = arith.truncf %62 : vector<256x256xf32> to vector<256x256xbf16>
    %cst_21 = arith.constant dense<0.000000e+00> : vector<256x128xf32>
    %66 = tpu.matmul %65, %13, %cst_21 {dimension_numbers = #tpu.dot_dimension_numbers<[1], [0], [0], [1], [0, 0, 1, 1], [], []>} : vector<256x256xbf16>, vector<256x128xbf16>, vector<256x128xf32> -> vector<256x128xf32>
    %67 = tpu.reciprocal %64 {approx = true} : vector<256x1xf32> -> vector<256x1xf32>
    %68 = vector.broadcast %67 : vector<256x1xf32> to vector<256x128xf32>
    %69 = arith.mulf %66, %68 : vector<256x128xf32>
    %70 = arith.truncf %69 : vector<256x128xf32> to vector<256x128xbf16>
    %c0_22 = arith.constant 0 : index
    %c0_23 = arith.constant 0 : index
    %71 = vector.load %arg4[%c0_22, %c0_23] : memref<128x32xbf16, #tpu.memory_space<vmem>>, vector<128x32xbf16>
    %cst_24 = arith.constant dense<0.000000e+00> : vector<256x32xf32>
    %72 = tpu.matmul %70, %71, %cst_24 {dimension_numbers = #tpu.dot_dimension_numbers<[1], [0], [0], [1], [0, 0, 1, 1], [], []>} : vector<256x128xbf16>, vector<128x32xbf16>, vector<256x32xf32> -> vector<256x32xf32>
    %c0_25 = arith.constant 0 : index
    %c0_26 = arith.constant 0 : index
    %73 = vector.load %arg5[%c0_25, %c0_26] : memref<1x32xf32, #tpu.memory_space<vmem>>, vector<1x32xf32>
    %74 = vector.broadcast %73 : vector<1x32xf32> to vector<256x32xf32>
    %75 = arith.addf %72, %74 : vector<256x32xf32>
    %76 = arith.addf %1, %75 : vector<256x32xf32>
    %c0_27 = arith.constant 0 : index
    %c0_28 = arith.constant 0 : index
    %77 = vector.load %arg6[%c0_27, %c0_28] : memref<1x32xf32, #tpu.memory_space<vmem>>, vector<1x32xf32>
    %c0_29 = arith.constant 0 : index
    %c0_30 = arith.constant 0 : index
    %78 = vector.load %arg7[%c0_29, %c0_30] : memref<1x32xf32, #tpu.memory_space<vmem>>, vector<1x32xf32>
    %cst_31 = arith.constant dense<0.000000e+00> : vector<256xf32>
    %79 = vector.multi_reduction <add>, %76, %cst_31 [1] : vector<256x32xf32> to vector<256xf32>
    %80 = vector.shape_cast %79 : vector<256xf32> to vector<256x1xf32>
    %cst_32 = arith.constant 3.200000e+01 : f32
    %81 = vector.broadcast %cst_32 : f32 to vector<256x1xf32>
    %82 = arith.divf %80, %81 : vector<256x1xf32>
    %83 = arith.mulf %76, %76 : vector<256x32xf32>
    %cst_33 = arith.constant dense<0.000000e+00> : vector<256xf32>
    %84 = vector.multi_reduction <add>, %83, %cst_33 [1] : vector<256x32xf32> to vector<256xf32>
    %85 = vector.shape_cast %84 : vector<256xf32> to vector<256x1xf32>
    %cst_34 = arith.constant 3.200000e+01 : f32
    %86 = vector.broadcast %cst_34 : f32 to vector<256x1xf32>
    %87 = arith.divf %85, %86 : vector<256x1xf32>
    %88 = arith.mulf %82, %82 : vector<256x1xf32>
    %89 = arith.subf %87, %88 : vector<256x1xf32>
    %cst_35 = arith.constant 0.000000e+00 : f32
    %90 = vector.broadcast %cst_35 : f32 to vector<256x1xf32>
    %91 = arith.maximumf %89, %90 : vector<256x1xf32>
    %92 = vector.broadcast %82 : vector<256x1xf32> to vector<256x32xf32>
    %93 = arith.subf %76, %92 : vector<256x32xf32>
    %cst_36 = arith.constant 9.99999974E-6 : f32
    %94 = vector.broadcast %cst_36 : f32 to vector<256x1xf32>
    %95 = arith.addf %91, %94 : vector<256x1xf32>
    %96 = math.rsqrt %95 : vector<256x1xf32>
    %97 = vector.broadcast %96 : vector<256x1xf32> to vector<256x32xf32>
    %98 = arith.mulf %93, %97 : vector<256x32xf32>
    %99 = vector.broadcast %77 : vector<1x32xf32> to vector<256x32xf32>
    %100 = arith.mulf %98, %99 : vector<256x32xf32>
    %101 = vector.broadcast %78 : vector<1x32xf32> to vector<256x32xf32>
    %102 = arith.addf %100, %101 : vector<256x32xf32>
    %103 = arith.truncf %102 : vector<256x32xf32> to vector<256x32xbf16>
    %c0_37 = arith.constant 0 : index
    %c0_38 = arith.constant 0 : index
    %104 = vector.load %arg10[%c0_37, %c0_38] : memref<32x128xbf16, #tpu.memory_space<vmem>>, vector<32x128xbf16>
    %cst_39 = arith.constant dense<0.000000e+00> : vector<256x128xf32>
    %105 = tpu.matmul %103, %104, %cst_39 {dimension_numbers = #tpu.dot_dimension_numbers<[1], [0], [0], [1], [0, 0, 1, 1], [], []>} : vector<256x32xbf16>, vector<32x128xbf16>, vector<256x128xf32> -> vector<256x128xf32>
    %c0_40 = arith.constant 0 : index
    %c0_41 = arith.constant 0 : index
    %106 = vector.load %arg11[%c0_40, %c0_41] : memref<1x128xf32, #tpu.memory_space<vmem>>, vector<1x128xf32>
    %107 = vector.broadcast %106 : vector<1x128xf32> to vector<256x128xf32>
    %108 = arith.addf %105, %107 : vector<256x128xf32>
    %cst_42 = arith.constant 0.000000e+00 : f32
    %109 = vector.broadcast %cst_42 : f32 to vector<256x128xf32>
    %110 = arith.maximumf %108, %109 : vector<256x128xf32>
    %111 = arith.truncf %110 : vector<256x128xf32> to vector<256x128xbf16>
    %c0_43 = arith.constant 0 : index
    %c0_44 = arith.constant 0 : index
    %112 = vector.load %arg12[%c0_43, %c0_44] : memref<128x32xbf16, #tpu.memory_space<vmem>>, vector<128x32xbf16>
    %cst_45 = arith.constant dense<0.000000e+00> : vector<256x32xf32>
    %113 = tpu.matmul %111, %112, %cst_45 {dimension_numbers = #tpu.dot_dimension_numbers<[1], [0], [0], [1], [0, 0, 1, 1], [], []>} : vector<256x128xbf16>, vector<128x32xbf16>, vector<256x32xf32> -> vector<256x32xf32>
    %c0_46 = arith.constant 0 : index
    %c0_47 = arith.constant 0 : index
    %114 = vector.load %arg13[%c0_46, %c0_47] : memref<1x32xf32, #tpu.memory_space<vmem>>, vector<1x32xf32>
    %115 = vector.broadcast %114 : vector<1x32xf32> to vector<256x32xf32>
    %116 = arith.addf %113, %115 : vector<256x32xf32>
    %117 = arith.addf %102, %116 : vector<256x32xf32>
    %c0_48 = arith.constant 0 : index
    %c0_49 = arith.constant 0 : index
    %118 = vector.load %arg8[%c0_48, %c0_49] : memref<1x32xf32, #tpu.memory_space<vmem>>, vector<1x32xf32>
    %c0_50 = arith.constant 0 : index
    %c0_51 = arith.constant 0 : index
    %119 = vector.load %arg9[%c0_50, %c0_51] : memref<1x32xf32, #tpu.memory_space<vmem>>, vector<1x32xf32>
    %cst_52 = arith.constant dense<0.000000e+00> : vector<256xf32>
    %120 = vector.multi_reduction <add>, %117, %cst_52 [1] : vector<256x32xf32> to vector<256xf32>
    %121 = vector.shape_cast %120 : vector<256xf32> to vector<256x1xf32>
    %cst_53 = arith.constant 3.200000e+01 : f32
    %122 = vector.broadcast %cst_53 : f32 to vector<256x1xf32>
    %123 = arith.divf %121, %122 : vector<256x1xf32>
    %124 = arith.mulf %117, %117 : vector<256x32xf32>
    %cst_54 = arith.constant dense<0.000000e+00> : vector<256xf32>
    %125 = vector.multi_reduction <add>, %124, %cst_54 [1] : vector<256x32xf32> to vector<256xf32>
    %126 = vector.shape_cast %125 : vector<256xf32> to vector<256x1xf32>
    %cst_55 = arith.constant 3.200000e+01 : f32
    %127 = vector.broadcast %cst_55 : f32 to vector<256x1xf32>
    %128 = arith.divf %126, %127 : vector<256x1xf32>
    %129 = arith.mulf %123, %123 : vector<256x1xf32>
    %130 = arith.subf %128, %129 : vector<256x1xf32>
    %cst_56 = arith.constant 0.000000e+00 : f32
    %131 = vector.broadcast %cst_56 : f32 to vector<256x1xf32>
    %132 = arith.maximumf %130, %131 : vector<256x1xf32>
    %133 = vector.broadcast %123 : vector<256x1xf32> to vector<256x32xf32>
    %134 = arith.subf %117, %133 : vector<256x32xf32>
    %cst_57 = arith.constant 9.99999974E-6 : f32
    %135 = vector.broadcast %cst_57 : f32 to vector<256x1xf32>
    %136 = arith.addf %132, %135 : vector<256x1xf32>
    %137 = math.rsqrt %136 : vector<256x1xf32>
    %138 = vector.broadcast %137 : vector<256x1xf32> to vector<256x32xf32>
    %139 = arith.mulf %134, %138 : vector<256x32xf32>
    %140 = vector.broadcast %118 : vector<1x32xf32> to vector<256x32xf32>
    %141 = arith.mulf %139, %140 : vector<256x32xf32>
    %142 = vector.broadcast %119 : vector<1x32xf32> to vector<256x32xf32>
    %143 = arith.addf %141, %142 : vector<256x32xf32>
    %144 = arith.truncf %143 : vector<256x32xf32> to vector<256x32xbf16>
    %c0_58 = arith.constant 0 : index
    %c0_59 = arith.constant 0 : index
    %145 = vector.load %arg14[%c0_58, %c0_59] : memref<32x128xbf16, #tpu.memory_space<vmem>>, vector<32x128xbf16>
    %cst_60 = arith.constant dense<0.000000e+00> : vector<256x128xf32>
    %146 = tpu.matmul %144, %145, %cst_60 {dimension_numbers = #tpu.dot_dimension_numbers<[1], [0], [0], [1], [0, 0, 1, 1], [], []>} : vector<256x32xbf16>, vector<32x128xbf16>, vector<256x128xf32> -> vector<256x128xf32>
    %c0_61 = arith.constant 0 : index
    %c0_62 = arith.constant 0 : index
    %147 = vector.load %arg15[%c0_61, %c0_62] : memref<1x128xf32, #tpu.memory_space<vmem>>, vector<1x128xf32>
    %148 = vector.broadcast %147 : vector<1x128xf32> to vector<256x128xf32>
    %149 = arith.addf %146, %148 : vector<256x128xf32>
    %150 = vector.shape_cast %149 : vector<256x128xf32> to vector<8x32x128xf32>
    %c0_63 = arith.constant 0 : index
    %c0_64 = arith.constant 0 : index
    %c0_65 = arith.constant 0 : index
    %151 = vector.load %arg16[%c0_63, %c0_64, %c0_65] : memref<8x32x128xf32, #tpu.memory_space<vmem>>, vector<8x32x128xf32>
    tpu.vector_store %arg16[%c0_63, %c0_64, %c0_65], %150 {strides = array<i32>} : memref<8x32x128xf32, #tpu.memory_space<vmem>>, vector<8x32x128xf32>,
    return
  }
  func.func @transform_0(%arg0: i32) -> (i32, i32, i32) {
    %c0_i32 = arith.constant 0 : i32
    %c0_i32_0 = arith.constant 0 : i32
    %c0_i32_1 = arith.constant 0 : i32
    return %c0_i32, %arg0, %c0_i32_0 : i32, i32, i32
  }
  func.func @transform_1(%arg0: i32) -> (i32, i32) {
    %c0_i32 = arith.constant 0 : i32
    %c0_i32_0 = arith.constant 0 : i32
    %c0_i32_1 = arith.constant 0 : i32
    return %c0_i32, %c0_i32_0 : i32, i32
  }
  func.func @transform_2(%arg0: i32) -> (i32, i32) {
    %c0_i32 = arith.constant 0 : i32
    %c0_i32_0 = arith.constant 0 : i32
    %c0_i32_1 = arith.constant 0 : i32
    return %c0_i32, %c0_i32_0 : i32, i32
  }
  func.func @transform_3(%arg0: i32) -> (i32, i32) {
    %c0_i32 = arith.constant 0 : i32
    %c0_i32_0 = arith.constant 0 : i32
    %c0_i32_1 = arith.constant 0 : i32
    return %c0_i32, %c0_i32_0 : i32, i32
  }
  func.func @transform_4(%arg0: i32) -> (i32, i32) {
    %c0_i32 = arith.constant 0 : i32
    %c0_i32_0 = arith.constant 0 : i32
    %c0_i32_1 = arith.constant 0 : i32
    return %c0_i32, %c0_i32_0 : i32, i32
  }
  func.func @transform_5(%arg0: i32) -> (i32, i32) {
    %c0_i32 = arith.constant 0 : i32
    %c0_i32_0 = arith.constant 0 : i32
    %c0_i32_1 = arith.constant 0 : i32
    return %c0_i32, %c0_i32_0 : i32, i32
  }
  func.func @transform_6(%arg0: i32) -> (i32, i32) {
    %c0_i32 = arith.constant 0 : i32
    %c0_i32_0 = arith.constant 0 : i32
    %c0_i32_1 = arith.constant 0 : i32
    return %c0_i32, %c0_i32_0 : i32, i32
  }
  func.func @transform_7(%arg0: i32) -> (i32, i32) {
    %c0_i32 = arith.constant 0 : i32
    %c0_i32_0 = arith.constant 0 : i32
    %c0_i32_1 = arith.constant 0 : i32
    return %c0_i32, %c0_i32_0 : i32, i32
  }
  func.func @transform_8(%arg0: i32) -> (i32, i32) {
    %c0_i32 = arith.constant 0 : i32
    %c0_i32_0 = arith.constant 0 : i32
    %c0_i32_1 = arith.constant 0 : i32
    return %c0_i32, %c0_i32_0 : i32, i32
  }
  func.func @transform_9(%arg0: i32) -> (i32, i32) {
    %c0_i32 = arith.constant 0 : i32
    %c0_i32_0 = arith.constant 0 : i32
    %c0_i32_1 = arith.constant 0 : i32
    return %c0_i32, %c0_i32_0 : i32, i32
  }
  func.func @transform_10(%arg0: i32) -> (i32, i32) {
    %c0_i32 = arith.constant 0 : i32
    %c0_i32_0 = arith.constant 0 : i32
    %c0_i32_1 = arith.constant 0 : i32
    return %c0_i32, %c0_i32_0 : i32, i32
  }
  func.func @transform_11(%arg0: i32) -> (i32, i32) {
    %c0_i32 = arith.constant 0 : i32
    %c0_i32_0 = arith.constant 0 : i32
    %c0_i32_1 = arith.constant 0 : i32
    return %c0_i32, %c0_i32_0 : i32, i32
  }
  func.func @transform_12(%arg0: i32) -> (i32, i32) {
    %c0_i32 = arith.constant 0 : i32
    %c0_i32_0 = arith.constant 0 : i32
    %c0_i32_1 = arith.constant 0 : i32
    return %c0_i32, %c0_i32_0 : i32, i32
  }
  func.func @transform_13(%arg0: i32) -> (i32, i32) {
    %c0_i32 = arith.constant 0 : i32
    %c0_i32_0 = arith.constant 0 : i32
    %c0_i32_1 = arith.constant 0 : i32
    return %c0_i32, %c0_i32_0 : i32, i32
  }
  func.func @transform_14(%arg0: i32) -> (i32, i32) {
    %c0_i32 = arith.constant 0 : i32
    %c0_i32_0 = arith.constant 0 : i32
    %c0_i32_1 = arith.constant 0 : i32
    return %c0_i32, %c0_i32_0 : i32, i32
  }
  func.func @transform_15(%arg0: i32) -> (i32, i32, i32) {
    %c0_i32 = arith.constant 0 : i32
    %c0_i32_0 = arith.constant 0 : i32
    %c0_i32_1 = arith.constant 0 : i32
    return %c0_i32, %arg0, %c0_i32_0 : i32, i32, i32
  }
}

module attributes {stable_mosaic.version = 11 : i64} {
  func.func @encoder_kernel(%arg0: i32, %arg1: memref<8x32x32xf32, #tpu.memory_space<vmem>>, %arg2: memref<32x384xbf16, #tpu.memory_space<vmem>>, %arg3: memref<1x384xf32, #tpu.memory_space<vmem>>, %arg4: memref<128x32xbf16, #tpu.memory_space<vmem>>, %arg5: memref<1x32xf32, #tpu.memory_space<vmem>>, %arg6: memref<1x32xf32, #tpu.memory_space<vmem>>, %arg7: memref<1x32xf32, #tpu.memory_space<vmem>>, %arg8: memref<1x32xf32, #tpu.memory_space<vmem>>, %arg9: memref<1x32xf32, #tpu.memory_space<vmem>>, %arg10: memref<32x128xbf16, #tpu.memory_space<vmem>>, %arg11: memref<1x128xf32, #tpu.memory_space<vmem>>, %arg12: memref<128x32xbf16, #tpu.memory_space<vmem>>, %arg13: memref<1x32xf32, #tpu.memory_space<vmem>>, %arg14: memref<32x128xbf16, #tpu.memory_space<vmem>>, %arg15: memref<1x128xf32, #tpu.memory_space<vmem>>, %arg16: memref<8x32x128xf32, #tpu.memory_space<vmem>>) attributes {dimension_semantics = [#tpu.dimension_semantics<parallel>], iteration_bounds = array<i64: 2>, scalar_prefetch = 0 : i64, scratch_operands = 0 : i64, tpu.core_type = #tpu.core_type<tc>, window_params = [{transform_indices = @transform_0, window_bounds = array<i64: 8, 32, 32>}, {pipeline_mode = #tpu.pipeline_mode<synchronous>, transform_indices = @transform_1, window_bounds = array<i64: 32, 384>}, {pipeline_mode = #tpu.pipeline_mode<synchronous>, transform_indices = @transform_2, window_bounds = array<i64: 1, 384>}, {pipeline_mode = #tpu.pipeline_mode<synchronous>, transform_indices = @transform_3, window_bounds = array<i64: 128, 32>}, {pipeline_mode = #tpu.pipeline_mode<synchronous>, transform_indices = @transform_4, window_bounds = array<i64: 1, 32>}, {pipeline_mode = #tpu.pipeline_mode<synchronous>, transform_indices = @transform_5, window_bounds = array<i64: 1, 32>}, {pipeline_mode = #tpu.pipeline_mode<synchronous>, transform_indices = @transform_6, window_bounds = array<i64: 1, 32>}, {pipeline_mode = #tpu.pipeline_mode<synchronous>, transform_indices = @transform_7, window_bounds = array<i64: 1, 32>}, {pipeline_mode = #tpu.pipeline_mode<synchronous>, transform_indices = @transform_8, window_bounds = array<i64: 1, 32>}, {pipeline_mode = #tpu.pipeline_mode<synchronous>, transform_indices = @transform_9, window_bounds = array<i64: 32, 128>}, {pipeline_mode = #tpu.pipeline_mode<synchronous>, transform_indices = @transform_10, window_bounds = array<i64: 1, 128>}, {pipeline_mode = #tpu.pipeline_mode<synchronous>, transform_indices = @transform_11, window_bounds = array<i64: 128, 32>}, {pipeline_mode = #tpu.pipeline_mode<synchronous>, transform_indices = @transform_12, window_bounds = array<i64: 1, 32>}, {pipeline_mode = #tpu.pipeline_mode<synchronous>, transform_indices = @transform_13, window_bounds = array<i64: 32, 128>}, {pipeline_mode = #tpu.pipeline_mode<synchronous>, transform_indices = @transform_14, window_bounds = array<i64: 1, 128>}, {transform_indices = @transform_15, window_bounds = array<i64: 8, 32, 128>}]} {
    %c0 = arith.constant 0 : index
    %c0_0 = arith.constant 0 : index
    %c0_1 = arith.constant 0 : index
    %0 = vector.load %arg1[%c0, %c0_0, %c0_1] : memref<8x32x32xf32, #tpu.memory_space<vmem>>, vector<8x32x32xf32>
    %1 = vector.shape_cast %0 : vector<8x32x32xf32> to vector<256x32xf32>
    %2 = arith.truncf %1 : vector<256x32xf32> to vector<256x32xbf16>
    %c0_2 = arith.constant 0 : index
    %c0_3 = arith.constant 0 : index
    %3 = vector.load %arg2[%c0_2, %c0_3] : memref<32x384xbf16, #tpu.memory_space<vmem>>, vector<32x384xbf16>
    %cst = arith.constant dense<0.000000e+00> : vector<256x384xf32>
    %4 = tpu.matmul %2, %3, %cst {dimension_numbers = #tpu.dot_dimension_numbers<[1], [0], [0], [1], [0, 0, 1, 1], [], []>} : vector<256x32xbf16>, vector<32x384xbf16>, vector<256x384xf32> -> vector<256x384xf32>
    %c0_4 = arith.constant 0 : index
    %c0_5 = arith.constant 0 : index
    %5 = vector.load %arg3[%c0_4, %c0_5] : memref<1x384xf32, #tpu.memory_space<vmem>>, vector<1x384xf32>
    %6 = vector.broadcast %5 : vector<1x384xf32> to vector<256x384xf32>
    %7 = arith.addf %4, %6 : vector<256x384xf32>
    %8 = vector.extract_strided_slice %7 {offsets = [0, 0], sizes = [256, 128], strides = [1, 1]} : vector<256x384xf32> to vector<256x128xf32>
    %9 = arith.truncf %8 : vector<256x128xf32> to vector<256x128xbf16>
    %10 = vector.extract_strided_slice %7 {offsets = [0, 128], sizes = [256, 128], strides = [1, 1]} : vector<256x384xf32> to vector<256x128xf32>
    %11 = arith.truncf %10 : vector<256x128xf32> to vector<256x128xbf16>
    %12 = vector.extract_strided_slice %7 {offsets = [0, 256], sizes = [256, 128], strides = [1, 1]} : vector<256x384xf32> to vector<256x128xf32>
    %13 = arith.truncf %12 : vector<256x128xf32> to vector<256x128xbf16>
    %14 = tpu.iota {dimensions = array<i32: 0>} : vector<256x1xi32>
    %c32_i32 = arith.constant 32 : i32
    %c0_i32 = arith.constant 0 : i32
    %15 = arith.cmpi eq, %c32_i32, %c0_i32 : i32
    %c1_i32 = arith.constant 1 : i32
    %16 = arith.select %15, %c1_i32, %c32_i32 : i32
    %17 = vector.broadcast %16 : i32 to vector<256x1xi32>
    %18 = arith.remsi %14, %17 : vector<256x1xi32>
    %c0_i32_6 = arith.constant 0 : i32
    %19 = vector.broadcast %c0_i32_6 : i32 to vector<256x1xi32>
    %20 = arith.cmpi ne, %18, %19 : vector<256x1xi32>
    %c0_i32_7 = arith.constant 0 : i32
    %21 = vector.broadcast %c0_i32_7 : i32 to vector<256x1xi32>
    %22 = arith.cmpi slt, %18, %21 : vector<256x1xi32>
    %c0_i32_8 = arith.constant 0 : i32
    %23 = arith.cmpi slt, %16, %c0_i32_8 : i32
    %24 = vector.broadcast %23 : i1 to vector<256x1xi1>
    %25 = vector.broadcast %24 : vector<256x1xi1> to vector<256x1xi1>
    %26 = arith.xori %22, %25 : vector<256x1xi1>
    %27 = arith.andi %26, %20 : vector<256x1xi1>
    %28 = vector.broadcast %16 : i32 to vector<256x1xi32>
    %29 = arith.addi %18, %28 : vector<256x1xi32>
    %30 = arith.select %27, %29, %18 : vector<256x1xi1>, vector<256x1xi32>
    %31 = tpu.iota {dimensions = array<i32: 1>} : vector<1x256xi32>
    %c32_i32_9 = arith.constant 32 : i32
    %c0_i32_10 = arith.constant 0 : i32
    %32 = arith.cmpi eq, %c32_i32_9, %c0_i32_10 : i32
    %c1_i32_11 = arith.constant 1 : i32
    %33 = arith.select %32, %c1_i32_11, %c32_i32_9 : i32
    %34 = vector.broadcast %33 : i32 to vector<1x256xi32>
    %35 = arith.remsi %31, %34 : vector<1x256xi32>
    %c0_i32_12 = arith.constant 0 : i32
    %36 = vector.broadcast %c0_i32_12 : i32 to vector<1x256xi32>
    %37 = arith.cmpi ne, %35, %36 : vector<1x256xi32>
    %c0_i32_13 = arith.constant 0 : i32
    %38 = vector.broadcast %c0_i32_13 : i32 to vector<1x256xi32>
    %39 = arith.cmpi slt, %35, %38 : vector<1x256xi32>
    %c0_i32_14 = arith.constant 0 : i32
    %40 = arith.cmpi slt, %33, %c0_i32_14 : i32
    %41 = vector.broadcast %40 : i1 to vector<1x256xi1>
    %42 = vector.broadcast %41 : vector<1x256xi1> to vector<1x256xi1>
    %43 = arith.xori %39, %42 : vector<1x256xi1>
    %44 = arith.andi %43, %37 : vector<1x256xi1>
    %45 = vector.broadcast %33 : i32 to vector<1x256xi32>
    %46 = arith.addi %35, %45 : vector<1x256xi32>
    %47 = arith.select %44, %46, %35 : vector<1x256xi1>, vector<1x256xi32>
    %48 = vector.broadcast %30 : vector<256x1xi32> to vector<256x256xi32>
    %49 = vector.broadcast %47 : vector<1x256xi32> to vector<256x256xi32>
    %50 = arith.cmpi eq, %48, %49 : vector<256x256xi32>
    %cst_15 = arith.constant 0.000000e+00 : f32
    %cst_16 = arith.constant -1.000000e+30 : f32
    %51 = vector.broadcast %cst_15 : f32 to vector<256x256xf32>
    %52 = vector.broadcast %cst_16 : f32 to vector<256x256xf32>
    %53 = arith.select %50, %51, %52 : vector<256x256xi1>, vector<256x256xf32>
    "tpu.trace_start"() <{level = 10 : i32, message = "me,ne->mn"}> : () -> ()
    %cst_17 = arith.constant dense<0.000000e+00> : vector<256x256xf32>
    %54 = tpu.matmul %9, %11, %cst_17 {dimension_numbers = #tpu.dot_dimension_numbers<[1], [1], [0], [0], [0, 0, 1, 0], [], []>} : vector<256x128xbf16>, vector<256x128xbf16>, vector<256x256xf32> -> vector<256x256xf32>
    "tpu.trace_stop"() : () -> ()
    %cst_18 = arith.constant 0.176776692 : f32
    %55 = vector.broadcast %cst_18 : f32 to vector<256x256xf32>
    %56 = arith.mulf %54, %55 : vector<256x256xf32>
    %57 = arith.addf %56, %53 : vector<256x256xf32>
    %cst_19 = arith.constant dense<0xFF800000> : vector<256xf32>
    %58 = vector.multi_reduction <maximumf>, %57, %cst_19 [1] : vector<256x256xf32> to vector<256xf32>
    %59 = vector.shape_cast %58 : vector<256xf32> to vector<256x1xf32>
    %60 = vector.broadcast %59 : vector<256x1xf32> to vector<256x256xf32>
    %61 = arith.subf %57, %60 : vector<256x256xf32>
    %62 = math.exp %61 : vector<256x256xf32>
    %cst_20 = arith.constant dense<0.000000e+00> : vector<256xf32>
    %63 = vector.multi_reduction <add>, %62, %cst_20 [1] : vector<256x256xf32> to vector<256xf32>
    %64 = vector.shape_cast %63 : vector<256xf32> to vector<256x1xf32>
    %65 = arith.truncf %62 : vector<256x256xf32> to vector<256x256xbf16>
    %cst_21 = arith.constant dense<0.000000e+00> : vector<256x128xf32>
    %66 = tpu.matmul %65, %13, %cst_21 {dimension_numbers = #tpu.dot_dimension_numbers<[1], [0], [0], [1], [0, 0, 1, 1], [], []>} : vector<256x256xbf16>, vector<256x128xbf16>, vector<256x128xf32> -> vector<256x128xf32>
    %67 = tpu.reciprocal %64 {approx = true} : vector<256x1xf32> -> vector<256x1xf32>
    %68 = vector.broadcast %67 : vector<256x1xf32> to vector<256x128xf32>
    %69 = arith.mulf %66, %68 : vector<256x128xf32>
    %70 = arith.truncf %69 : vector<256x128xf32> to vector<256x128xbf16>
    %c0_22 = arith.constant 0 : index
    %c0_23 = arith.constant 0 : index
    %71 = vector.load %arg4[%c0_22, %c0_23] : memref<128x32xbf16, #tpu.memory_space<vmem>>, vector<128x32xbf16>
    %cst_24 = arith.constant dense<0.000000e+00> : vector<256x32xf32>
    %72 = tpu.matmul %70, %71, %cst_24 {dimension_numbers = #tpu.dot_dimension_numbers<[1], [0], [0], [1], [0, 0, 1, 1], [], []>} : vector<256x128xbf16>, vector<128x32xbf16>, vector<256x32xf32> -> vector<256x32xf32>
    %c0_25 = arith.constant 0 : index
    %c0_26 = arith.constant 0 : index
    %73 = vector.load %arg5[%c0_25, %c0_26] : memref<1x32xf32, #tpu.memory_space<vmem>>, vector<1x32xf32>
    %74 = vector.broadcast %73 : vector<1x32xf32> to vector<256x32xf32>
    %75 = arith.addf %72, %74 : vector<256x32xf32>
    %76 = arith.addf %1, %75 : vector<256x32xf32>
    %c0_27 = arith.constant 0 : index
    %c0_28 = arith.constant 0 : index
    %77 = vector.load %arg6[%c0_27, %c0_28] : memref<1x32xf32, #tpu.memory_space<vmem>>, vector<1x32xf32>
    %c0_29 = arith.constant 0 : index
    %c0_30 = arith.constant 0 : index
    %78 = vector.load %arg7[%c0_29, %c0_30] : memref<1x32xf32, #tpu.memory_space<vmem>>, vector<1x32xf32>
    %cst_31 = arith.constant dense<0.000000e+00> : vector<256xf32>
    %79 = vector.multi_reduction <add>, %76, %cst_31 [1] : vector<256x32xf32> to vector<256xf32>
    %80 = vector.shape_cast %79 : vector<256xf32> to vector<256x1xf32>
    %cst_32 = arith.constant 3.200000e+01 : f32
    %81 = vector.broadcast %cst_32 : f32 to vector<256x1xf32>
    %82 = arith.divf %80, %81 : vector<256x1xf32>
    %83 = arith.mulf %76, %76 : vector<256x32xf32>
    %cst_33 = arith.constant dense<0.000000e+00> : vector<256xf32>
    %84 = vector.multi_reduction <add>, %83, %cst_33 [1] : vector<256x32xf32> to vector<256xf32>
    %85 = vector.shape_cast %84 : vector<256xf32> to vector<256x1xf32>
    %cst_34 = arith.constant 3.200000e+01 : f32
    %86 = vector.broadcast %cst_34 : f32 to vector<256x1xf32>
    %87 = arith.divf %85, %86 : vector<256x1xf32>
    %88 = arith.mulf %82, %82 : vector<256x1xf32>
    %89 = arith.subf %87, %88 : vector<256x1xf32>
    %cst_35 = arith.constant 0.000000e+00 : f32
    %90 = vector.broadcast %cst_35 : f32 to vector<256x1xf32>
    %91 = arith.maximumf %89, %90 : vector<256x1xf32>
    %92 = vector.broadcast %82 : vector<256x1xf32> to vector<256x32xf32>
    %93 = arith.subf %76, %92 : vector<256x32xf32>
    %cst_36 = arith.constant 9.99999974E-6 : f32
    %94 = vector.broadcast %cst_36 : f32 to vector<256x1xf32>
    %95 = arith.addf %91, %94 : vector<256x1xf32>
    %96 = math.rsqrt %95 : vector<256x1xf32>
    %97 = vector.broadcast %96 : vector<256x1xf32> to vector<256x32xf32>
    %98 = arith.mulf %93, %97 : vector<256x32xf32>
    %99 = vector.broadcast %77 : vector<1x32xf32> to vector<256x32xf32>
    %100 = arith.mulf %98, %99 : vector<256x32xf32>
    %101 = vector.broadcast %78 : vector<1x32xf32> to vector<256x32xf32>
    %102 = arith.addf %100, %101 : vector<256x32xf32>
    %103 = arith.truncf %102 : vector<256x32xf32> to vector<256x32xbf16>
    %c0_37 = arith.constant 0 : index
    %c0_38 = arith.constant 0 : index
    %104 = vector.load %arg10[%c0_37, %c0_38] : memref<32x128xbf16, #tpu.memory_space<vmem>>, vector<32x128xbf16>
    %cst_39 = arith.constant dense<0.000000e+00> : vector<256x128xf32>
    %105 = tpu.matmul %103, %104, %cst_39 {dimension_numbers = #tpu.dot_dimension_numbers<[1], [0], [0], [1], [0, 0, 1, 1], [], []>} : vector<256x32xbf16>, vector<32x128xbf16>, vector<256x128xf32> -> vector<256x128xf32>
    %c0_40 = arith.constant 0 : index
    %c0_41 = arith.constant 0 : index
    %106 = vector.load %arg11[%c0_40, %c0_41] : memref<1x128xf32, #tpu.memory_space<vmem>>, vector<1x128xf32>
    %107 = vector.broadcast %106 : vector<1x128xf32> to vector<256x128xf32>
    %108 = arith.addf %105, %107 : vector<256x128xf32>
    %cst_42 = arith.constant 0.000000e+00 : f32
    %109 = vector.broadcast %cst_42 : f32 to vector<256x128xf32>
    %110 = arith.maximumf %108, %109 : vector<256x128xf32>
    %111 = arith.truncf %110 : vector<256x128xf32> to vector<256x128xbf16>
    %c0_43 = arith.constant 0 : index
    %c0_44 = arith.constant 0 : index
    %112 = vector.load %arg12[%c0_43, %c0_44] : memref<128x32xbf16, #tpu.memory_space<vmem>>, vector<128x32xbf16>
    %cst_45 = arith.constant dense<0.000000e+00> : vector<256x32xf32>
    %113 = tpu.matmul %111, %112, %cst_45 {dimension_numbers = #tpu.dot_dimension_numbers<[1], [0], [0], [1], [0, 0, 1, 1], [], []>} : vector<256x128xbf16>, vector<128x32xbf16>, vector<256x32xf32> -> vector<256x32xf32>
    %c0_46 = arith.constant 0 : index
    %c0_47 = arith.constant 0 : index
    %114 = vector.load %arg13[%c0_46, %c0_47] : memref<1x32xf32, #tpu.memory_space<vmem>>, vector<1x32xf32>
    %115 = vector.broadcast %114 : vector<1x32xf32> to vector<256x32xf32>
    %116 = arith.addf %113, %115 : vector<256x32xf32>
    %117 = arith.addf %102, %116 : vector<256x32xf32>
    %c0_48 = arith.constant 0 : index
    %c0_49 = arith.constant 0 : index
    %118 = vector.load %arg8[%c0_48, %c0_49] : memref<1x32xf32, #tpu.memory_space<vmem>>, vector<1x32xf32>
    %c0_50 = arith.constant 0 : index
    %c0_51 = arith.constant 0 : index
    %119 = vector.load %arg9[%c0_50, %c0_51] : memref<1x32xf32, #tpu.memory_space<vmem>>, vector<1x32xf32>
    %cst_52 = arith.constant dense<0.000000e+00> : vector<256xf32>
    %120 = vector.multi_reduction <add>, %117, %cst_52 [1] : vector<256x32xf32> to vector<256xf32>
    %121 = vector.shape_cast %120 : vector<256xf32> to vector<256x1xf32>
    %cst_53 = arith.constant 3.200000e+01 : f32
    %122 = vector.broadcast %cst_53 : f32 to vector<256x1xf32>
    %123 = arith.divf %121, %122 : vector<256x1xf32>
    %124 = arith.mulf %117, %117 : vector<256x32xf32>
    %cst_54 = arith.constant dense<0.000000e+00> : vector<256xf32>
    %125 = vector.multi_reduction <add>, %124, %cst_54 [1] : vector<256x32xf32> to vector<256xf32>
    %126 = vector.shape_cast %125 : vector<256xf32> to vector<256x1xf32>
    %cst_55 = arith.constant 3.200000e+01 : f32
    %127 = vector.broadcast %cst_55 : f32 to vector<256x1xf32>
    %128 = arith.divf %126, %127 : vector<256x1xf32>
    %129 = arith.mulf %123, %123 : vector<256x1xf32>
    %130 = arith.subf %128, %129 : vector<256x1xf32>
    %cst_56 = arith.constant 0.000000e+00 : f32
    %131 = vector.broadcast %cst_56 : f32 to vector<256x1xf32>
    %132 = arith.maximumf %130, %131 : vector<256x1xf32>
    %133 = vector.broadcast %123 : vector<256x1xf32> to vector<256x32xf32>
    %134 = arith.subf %117, %133 : vector<256x32xf32>
    %cst_57 = arith.constant 9.99999974E-6 : f32
    %135 = vector.broadcast %cst_57 : f32 to vector<256x1xf32>
    %136 = arith.addf %132, %135 : vector<256x1xf32>
    %137 = math.rsqrt %136 : vector<256x1xf32>
    %138 = vector.broadcast %137 : vector<256x1xf32> to vector<256x32xf32>
    %139 = arith.mulf %134, %138 : vector<256x32xf32>
    %140 = vector.broadcast %118 : vector<1x32xf32> to vector<256x32xf32>
    %141 = arith.mulf %139, %140 : vector<256x32xf32>
    %142 = vector.broadcast %119 : vector<1x32xf32> to vector<256x32xf32>
    %143 = arith.addf %141, %142 : vector<256x32xf32>
    %144 = arith.truncf %143 : vector<256x32xf32> to vector<256x32xbf16>
    %c0_58 = arith.constant 0 : index
    %c0_59 = arith.constant 0 : index
    %145 = vector.load %arg14[%c0_58, %c0_59] : memref<32x128xbf16, #tpu.memory_space<vmem>>, vector<32x128xbf16>
    %cst_60 = arith.constant dense<0.000000e+00> : vector<256x128xf32>
    %146 = tpu.matmul %144, %145, %cst_60 {dimension_numbers = #tpu.dot_dimension_numbers<[1], [0], [0], [1], [0, 0, 1, 1], [], []>} : vector<256x32xbf16>, vector<32x128xbf16>, vector<256x128xf32> -> vector<256x128xf32>
    %c0_61 = arith.constant 0 : index
    %c0_62 = arith.constant 0 : index
    %147 = vector.load %arg15[%c0_61, %c0_62] : memref<1x128xf32, #tpu.memory_space<vmem>>, vector<1x128xf32>
    %148 = vector.broadcast %147 : vector<1x128xf32> to vector<256x128xf32>
    %149 = arith.addf %146, %148 : vector<256x128xf32>
    %150 = vector.shape_cast %149 : vector<256x128xf32> to vector<8x32x128xf32>
    %c0_63 = arith.constant 0 : index
    %c0_64 = arith.constant 0 : index
    %c0_65 = arith.constant 0 : index
    %151 = vector.load %arg16[%c0_63, %c0_64, %c0_65] : memref<8x32x128xf32, #tpu.memory_space<vmem>>, vector<8x32x128xf32>
    tpu.vector_store %arg16[%c0_63, %c0_64, %c0_65], %150 {strides = array<i32>} : memref<8x32x128xf32, #tpu.memory_space<vmem>>, vector<8x32x128xf32>,
    return
  }
  func.func @transform_0(%arg0: i32) -> (i32, i32, i32) {
    %c0_i32 = arith.constant 0 : i32
    %c0_i32_0 = arith.constant 0 : i32
    %c0_i32_1 = arith.constant 0 : i32
    return %c0_i32, %arg0, %c0_i32_0 : i32, i32, i32
  }
  func.func @transform_1(%arg0: i32) -> (i32, i32) {
    %c0_i32 = arith.constant 0 : i32
    %c0_i32_0 = arith.constant 0 : i32
    %c0_i32_1 = arith.constant 0 : i32
    return %c0_i32, %c0_i32_0 : i32, i32
  }
  func.func @transform_2(%arg0: i32) -> (i32, i32) {
    %c0_i32 = arith.constant 0 : i32
    %c0_i32_0 = arith.constant 0 : i32
    %c0_i32_1 = arith.constant 0 : i32
    return %c0_i32, %c0_i32_0 : i32, i32
  }
  func.func @transform_3(%arg0: i32) -> (i32, i32) {
    %c0_i32 = arith.constant 0 : i32
    %c0_i32_0 = arith.constant 0 : i32
    %c0_i32_1 = arith.constant 0 : i32
    return %c0_i32, %c0_i32_0 : i32, i32
  }
  func.func @transform_4(%arg0: i32) -> (i32, i32) {
    %c0_i32 = arith.constant 0 : i32
    %c0_i32_0 = arith.constant 0 : i32
    %c0_i32_1 = arith.constant 0 : i32
    return %c0_i32, %c0_i32_0 : i32, i32
  }
  func.func @transform_5(%arg0: i32) -> (i32, i32) {
    %c0_i32 = arith.constant 0 : i32
    %c0_i32_0 = arith.constant 0 : i32
    %c0_i32_1 = arith.constant 0 : i32
    return %c0_i32, %c0_i32_0 : i32, i32
  }
  func.func @transform_6(%arg0: i32) -> (i32, i32) {
    %c0_i32 = arith.constant 0 : i32
    %c0_i32_0 = arith.constant 0 : i32
    %c0_i32_1 = arith.constant 0 : i32
    return %c0_i32, %c0_i32_0 : i32, i32
  }
  func.func @transform_7(%arg0: i32) -> (i32, i32) {
    %c0_i32 = arith.constant 0 : i32
    %c0_i32_0 = arith.constant 0 : i32
    %c0_i32_1 = arith.constant 0 : i32
    return %c0_i32, %c0_i32_0 : i32, i32
  }
  func.func @transform_8(%arg0: i32) -> (i32, i32) {
    %c0_i32 = arith.constant 0 : i32
    %c0_i32_0 = arith.constant 0 : i32
    %c0_i32_1 = arith.constant 0 : i32
    return %c0_i32, %c0_i32_0 : i32, i32
  }
  func.func @transform_9(%arg0: i32) -> (i32, i32) {
    %c0_i32 = arith.constant 0 : i32
    %c0_i32_0 = arith.constant 0 : i32
    %c0_i32_1 = arith.constant 0 : i32
    return %c0_i32, %c0_i32_0 : i32, i32
  }
  func.func @transform_10(%arg0: i32) -> (i32, i32) {
    %c0_i32 = arith.constant 0 : i32
    %c0_i32_0 = arith.constant 0 : i32
    %c0_i32_1 = arith.constant 0 : i32
    return %c0_i32, %c0_i32_0 : i32, i32
  }
  func.func @transform_11(%arg0: i32) -> (i32, i32) {
    %c0_i32 = arith.constant 0 : i32
    %c0_i32_0 = arith.constant 0 : i32
    %c0_i32_1 = arith.constant 0 : i32
    return %c0_i32, %c0_i32_0 : i32, i32
  }
  func.func @transform_12(%arg0: i32) -> (i32, i32) {
    %c0_i32 = arith.constant 0 : i32
    %c0_i32_0 = arith.constant 0 : i32
    %c0_i32_1 = arith.constant 0 : i32
    return %c0_i32, %c0_i32_0 : i32, i32
  }
  func.func @transform_13(%arg0: i32) -> (i32, i32) {
    %c0_i32 = arith.constant 0 : i32
    %c0_i32_0 = arith.constant 0 : i32
    %c0_i32_1 = arith.constant 0 : i32
    return %c0_i32, %c0_i32_0 : i32, i32
  }
  func.func @transform_14(%arg0: i32) -> (i32, i32) {
    %c0_i32 = arith.constant 0 : i32
    %c0_i32_0 = arith.constant 0 : i32
    %c0_i32_1 = arith.constant 0 : i32
    return %c0_i32, %c0_i32_0 : i32, i32
  }
  func.func @transform_15(%arg0: i32) -> (i32, i32, i32) {
    %c0_i32 = arith.constant 0 : i32
    %c0_i32_0 = arith.constant 0 : i32
    %c0_i32_1 = arith.constant 0 : i32
    return %c0_i32, %arg0, %c0_i32_0 : i32, i32, i32
  }
}

</mosaic_0001>

<llo_original>
// kernel: tpu_custom_call.1
$region0: #{tpu_custom_call.1}
  #allocation0 [shape = 'u32[]', space=smem, size = 0x4, offset = 0x4, fixed_abs, tag = 'smem constant byte address 0x4 - core index']
  #allocation1 [shape = 'u32[144,128]{1,0:T(1,128)}', space=vmem, size = 0x12000, scoped, tag = 'internal scratch']
  #allocation5 [shape = 's32[]', space=sflag, size = 0x4, offset = 0, fixed_abs, tag = 'sflag constant byte address 0x0 - dummy sync flag']
  %s0 = inlined_call_operand.vmem [shape: f32[8,64,32], index: 0, kind: input, shape index: {}]
  %s1 = inlined_call_operand.vmem [shape: bf16[32,384], index: 1, kind: input, shape index: {}]
  %s2 = inlined_call_operand.vmem [shape: f32[1,384], index: 2, kind: input, shape index: {}]
  %s3 = inlined_call_operand.vmem [shape: bf16[128,32], index: 3, kind: input, shape index: {}]
  %s4 = inlined_call_operand.vmem [shape: f32[1,32], index: 4, kind: input, shape index: {}]
  %s5 = inlined_call_operand.vmem [shape: f32[1,32], index: 5, kind: input, shape index: {}]
  %s6 = inlined_call_operand.vmem [shape: f32[1,32], index: 6, kind: input, shape index: {}]
  %s7 = inlined_call_operand.vmem [shape: f32[1,32], index: 7, kind: input, shape index: {}]
  %s8 = inlined_call_operand.vmem [shape: f32[1,32], index: 8, kind: input, shape index: {}]
  %s9 = inlined_call_operand.vmem [shape: bf16[32,128], index: 9, kind: input, shape index: {}]
  %s10 = inlined_call_operand.vmem [shape: f32[1,128], index: 10, kind: input, shape index: {}]
  %s11 = inlined_call_operand.vmem [shape: bf16[128,32], index: 11, kind: input, shape index: {}]
  %s12 = inlined_call_operand.vmem [shape: f32[1,32], index: 12, kind: input, shape index: {}]
  %s13 = inlined_call_operand.vmem [shape: bf16[32,128], index: 13, kind: input, shape index: {}]
  %s14 = inlined_call_operand.vmem [shape: f32[1,128], index: 14, kind: input, shape index: {}]
  %s15 = inlined_call_operand.hbm [shape: f32[8,64,128], index: 15, kind: output, shape index: {}]
  %s16 = sld [smem:[#allocation0]]
  $region131: #{tpu_custom_call.1} parent=0
    _
  %s18 = ssub.s32 1, %s16
  %s19 = scalar_select 0, %s18, %s16
  $region1: #{tpu_custom_call.1} parent=0
    #allocation2 [shape = 'u8[262144]{0}', space=vmem, size = 0x40000, scoped, tag = 'input window, operand 0']
    #allocation3 [shape = 'u8[262144]{0}', space=vmem, size = 0x40000, scoped, tag = 'output window, operand 0']
    #allocation4 [shape = 's32[2]{0}', space=sflag, size = 0x8, scoped, tag = 'scoped memory for tpu_custom_call.1']
    %20 = vsyncpa [#allocation4], 0
    %s21 = scalar_lea.sflag [#allocation4], 1
    %22 = vsyncpa %s21, 0
    loop: start=0, step=1, limit=4
    $region2: #{tpu_custom_call.1} parent=1 // loop_pre_header
      _
    $region3: #{tpu_custom_call.1} parent=1 // loop_header
      %s24 = sphi 0, %s28
      %p25 = scmp.ge.s32.totalorder %s24, 4
      %s34 = sphi 0, %s36
      %s37 = sphi 0, %s34
      %s38 = sphi 0, %s37
      %s54 = sphi 0, %s38
      %s58 = sphi 0, %s58
      %s60 = sphi 0, %s58
      %s61 = sphi 0, %s60
      %s75 = sphi 0, %s61
      %s79 = sphi 0, %s79
      %s81 = sphi 0, %s79
      %s82 = sphi 0, %s81
      %s96 = sphi 0, %s82
      %s100 = sphi 0, %s100
      %s102 = sphi 0, %s100
      %s103 = sphi 0, %s102
      %s117 = sphi 0, %s103
      %s121 = sphi 0, %s121
      %s123 = sphi 0, %s121
      %s124 = sphi 0, %s123
      %s138 = sphi 0, %s124
      %s142 = sphi 0, %s142
      %s144 = sphi 0, %s142
      %s145 = sphi 0, %s144
      %s159 = sphi 0, %s145
      %s163 = sphi 0, %s163
      %s165 = sphi 0, %s163
      %s166 = sphi 0, %s165
      %s180 = sphi 0, %s166
      %s184 = sphi 0, %s184
      %s186 = sphi 0, %s184
      %s187 = sphi 0, %s186
      %s201 = sphi 0, %s187
      %s205 = sphi 0, %s205
      %s207 = sphi 0, %s205
      %s208 = sphi 0, %s207
      %s222 = sphi 0, %s208
      %s226 = sphi 0, %s226
      %s228 = sphi 0, %s226
      %s229 = sphi 0, %s228
      %s243 = sphi 0, %s229
      %s247 = sphi 0, %s247
      %s249 = sphi 0, %s247
      %s250 = sphi 0, %s249
      %s264 = sphi 0, %s250
      %s268 = sphi 0, %s268
      %s270 = sphi 0, %s268
      %s271 = sphi 0, %s270
      %s285 = sphi 0, %s271
      %s289 = sphi 0, %s289
      %s291 = sphi 0, %s289
      %s292 = sphi 0, %s291
      %s306 = sphi 0, %s292
      %s310 = sphi 0, %s310
      %s312 = sphi 0, %s310
      %s313 = sphi 0, %s312
      %s327 = sphi 0, %s313
      %s331 = sphi 0, %s331
      %s333 = sphi 0, %s331
      %s334 = sphi 0, %s333
      %s348 = sphi 0, %s334
      %s354 = sphi 0, %s356
      %s357 = sphi 0, %s354
      %s358 = sphi 0, %s357
      %s374 = sphi 0, %s358
    $region4: #{tpu_custom_call.1} parent=1 // loop_header_branch
      %27 = sbr.rel (%p25) target = $region8
    $region5: #{tpu_custom_call.1} parent=1 // loop_body
      %s29 = ssub.s32 %s24, 1
      %s30 = ssub.s32 %s24, 2
      %s31 = sadd.s32 %s24, 1
      %s32 = ssub.s32 %s24, %s31
      %p33 = scmp.eq.s32.totalorder %s32, 0
      %s35 = sadd.s32 %s34, 1
      %s36 = scalar_select %p33, %s34, %s35
      %p39 = pneg %p33
      %p40 = scmp.eq.s32.totalorder %s24, 1
      %p41 = por %p39, %p40
      %p42 = scmp.ne.s32.totalorder %s34, %s37
      %p43 = scmp.eq.s32.totalorder %s24, 0
      %p44 = por %p42, %p43
      %p45 = scmp.ne.s32.totalorder %s34, %s37
      %p46 = scmp.eq.s32.totalorder %s29, 1
      %p47 = por %p45, %p46
      %p48 = scmp.ne.s32.totalorder %s37, %s38
      %p49 = scmp.eq.s32.totalorder %s29, 0
      %p50 = por %p48, %p49
      %p51 = scmp.ne.s32.totalorder %s37, %s38
      %p52 = scmp.eq.s32.totalorder %s30, 1
      %p53 = por %p51, %p52
      %p55 = scmp.ne.s32.totalorder %s38, %s54
      %p56 = scmp.eq.s32.totalorder %s30, 0
      %p57 = por %p55, %p56
      %s59 = sadd.s32 %s58, 1
      %p62 = scmp.eq.s32.totalorder %s24, 1
      %p63 = scmp.ne.s32.totalorder %s58, %s60
      %p64 = scmp.eq.s32.totalorder %s24, 0
      %p65 = por %p63, %p64
      %p66 = scmp.ne.s32.totalorder %s58, %s60
      %p67 = scmp.eq.s32.totalorder %s29, 1
      %p68 = por %p66, %p67
      %p69 = scmp.ne.s32.totalorder %s60, %s61
      %p70 = scmp.eq.s32.totalorder %s29, 0
      %p71 = por %p69, %p70
      %p72 = scmp.ne.s32.totalorder %s60, %s61
      %p73 = scmp.eq.s32.totalorder %s30, 1
      %p74 = por %p72, %p73
      %p76 = scmp.ne.s32.totalorder %s61, %s75
      %p77 = scmp.eq.s32.totalorder %s30, 0
      %p78 = por %p76, %p77
      %s80 = sadd.s32 %s79, 1
      %p83 = scmp.eq.s32.totalorder %s24, 1
      %p84 = scmp.ne.s32.totalorder %s79, %s81
      %p85 = scmp.eq.s32.totalorder %s24, 0
      %p86 = por %p84, %p85
      %p87 = scmp.ne.s32.totalorder %s79, %s81
      %p88 = scmp.eq.s32.totalorder %s29, 1
      %p89 = por %p87, %p88
      %p90 = scmp.ne.s32.totalorder %s81, %s82
      %p91 = scmp.eq.s32.totalorder %s29, 0
      %p92 = por %p90, %p91
      %p93 = scmp.ne.s32.totalorder %s81, %s82
      %p94 = scmp.eq.s32.totalorder %s30, 1
      %p95 = por %p93, %p94
      %p97 = scmp.ne.s32.totalorder %s82, %s96
      %p98 = scmp.eq.s32.totalorder %s30, 0
      %p99 = por %p97, %p98
      %s101 = sadd.s32 %s100, 1
      %p104 = scmp.eq.s32.totalorder %s24, 1
      %p105 = scmp.ne.s32.totalorder %s100, %s102
      %p106 = scmp.eq.s32.totalorder %s24, 0
      %p107 = por %p105, %p106
      %p108 = scmp.ne.s32.totalorder %s100, %s102
      %p109 = scmp.eq.s32.totalorder %s29, 1
      %p110 = por %p108, %p109
      %p111 = scmp.ne.s32.totalorder %s102, %s103
      %p112 = scmp.eq.s32.totalorder %s29, 0
      %p113 = por %p111, %p112
      %p114 = scmp.ne.s32.totalorder %s102, %s103
      %p115 = scmp.eq.s32.totalorder %s30, 1
      %p116 = por %p114, %p115
      %p118 = scmp.ne.s32.totalorder %s103, %s117
      %p119 = scmp.eq.s32.totalorder %s30, 0
      %p120 = por %p118, %p119
      %s122 = sadd.s32 %s121, 1
      %p125 = scmp.eq.s32.totalorder %s24, 1
      %p126 = scmp.ne.s32.totalorder %s121, %s123
      %p127 = scmp.eq.s32.totalorder %s24, 0
      %p128 = por %p126, %p127
      %p129 = scmp.ne.s32.totalorder %s121, %s123
      %p130 = scmp.eq.s32.totalorder %s29, 1
      %p131 = por %p129, %p130
      %p132 = scmp.ne.s32.totalorder %s123, %s124
      %p133 = scmp.eq.s32.totalorder %s29, 0
      %p134 = por %p132, %p133
      %p135 = scmp.ne.s32.totalorder %s123, %s124
      %p136 = scmp.eq.s32.totalorder %s30, 1
      %p137 = por %p135, %p136
      %p139 = scmp.ne.s32.totalorder %s124, %s138
      %p140 = scmp.eq.s32.totalorder %s30, 0
      %p141 = por %p139, %p140
      %s143 = sadd.s32 %s142, 1
      %p146 = scmp.eq.s32.totalorder %s24, 1
      %p147 = scmp.ne.s32.totalorder %s142, %s144
      %p148 = scmp.eq.s32.totalorder %s24, 0
      %p149 = por %p147, %p148
      %p150 = scmp.ne.s32.totalorder %s142, %s144
      %p151 = scmp.eq.s32.totalorder %s29, 1
      %p152 = por %p150, %p151
      %p153 = scmp.ne.s32.totalorder %s144, %s145
      %p154 = scmp.eq.s32.totalorder %s29, 0
      %p155 = por %p153, %p154
      %p156 = scmp.ne.s32.totalorder %s144, %s145
      %p157 = scmp.eq.s32.totalorder %s30, 1
      %p158 = por %p156, %p157
      %p160 = scmp.ne.s32.totalorder %s145, %s159
      %p161 = scmp.eq.s32.totalorder %s30, 0
      %p162 = por %p160, %p161
      %s164 = sadd.s32 %s163, 1
      %p167 = scmp.eq.s32.totalorder %s24, 1
      %p168 = scmp.ne.s32.totalorder %s163, %s165
      %p169 = scmp.eq.s32.totalorder %s24, 0
      %p170 = por %p168, %p169
      %p171 = scmp.ne.s32.totalorder %s163, %s165
      %p172 = scmp.eq.s32.totalorder %s29, 1
      %p173 = por %p171, %p172
      %p174 = scmp.ne.s32.totalorder %s165, %s166
      %p175 = scmp.eq.s32.totalorder %s29, 0
      %p176 = por %p174, %p175
      %p177 = scmp.ne.s32.totalorder %s165, %s166
      %p178 = scmp.eq.s32.totalorder %s30, 1
      %p179 = por %p177, %p178
      %p181 = scmp.ne.s32.totalorder %s166, %s180
      %p182 = scmp.eq.s32.totalorder %s30, 0
      %p183 = por %p181, %p182
      %s185 = sadd.s32 %s184, 1
      %p188 = scmp.eq.s32.totalorder %s24, 1
      %p189 = scmp.ne.s32.totalorder %s184, %s186
      %p190 = scmp.eq.s32.totalorder %s24, 0
      %p191 = por %p189, %p190
      %p192 = scmp.ne.s32.totalorder %s184, %s186
      %p193 = scmp.eq.s32.totalorder %s29, 1
      %p194 = por %p192, %p193
      %p195 = scmp.ne.s32.totalorder %s186, %s187
      %p196 = scmp.eq.s32.totalorder %s29, 0
      %p197 = por %p195, %p196
      %p198 = scmp.ne.s32.totalorder %s186, %s187
      %p199 = scmp.eq.s32.totalorder %s30, 1
      %p200 = por %p198, %p199
      %p202 = scmp.ne.s32.totalorder %s187, %s201
      %p203 = scmp.eq.s32.totalorder %s30, 0
      %p204 = por %p202, %p203
      %s206 = sadd.s32 %s205, 1
      %p209 = scmp.eq.s32.totalorder %s24, 1
      %p210 = scmp.ne.s32.totalorder %s205, %s207
      %p211 = scmp.eq.s32.totalorder %s24, 0
      %p212 = por %p210, %p211
      %p213 = scmp.ne.s32.totalorder %s205, %s207
      %p214 = scmp.eq.s32.totalorder %s29, 1
      %p215 = por %p213, %p214
      %p216 = scmp.ne.s32.totalorder %s207, %s208
      %p217 = scmp.eq.s32.totalorder %s29, 0
      %p218 = por %p216, %p217
      %p219 = scmp.ne.s32.totalorder %s207, %s208
      %p220 = scmp.eq.s32.totalorder %s30, 1
      %p221 = por %p219, %p220
      %p223 = scmp.ne.s32.totalorder %s208, %s222
      %p224 = scmp.eq.s32.totalorder %s30, 0
      %p225 = por %p223, %p224
      %s227 = sadd.s32 %s226, 1
      %p230 = scmp.eq.s32.totalorder %s24, 1
      %p231 = scmp.ne.s32.totalorder %s226, %s228
      %p232 = scmp.eq.s32.totalorder %s24, 0
      %p233 = por %p231, %p232
      %p234 = scmp.ne.s32.totalorder %s226, %s228
      %p235 = scmp.eq.s32.totalorder %s29, 1
      %p236 = por %p234, %p235
      %p237 = scmp.ne.s32.totalorder %s228, %s229
      %p238 = scmp.eq.s32.totalorder %s29, 0
      %p239 = por %p237, %p238
      %p240 = scmp.ne.s32.totalorder %s228, %s229
      %p241 = scmp.eq.s32.totalorder %s30, 1
      %p242 = por %p240, %p241
      %p244 = scmp.ne.s32.totalorder %s229, %s243
      %p245 = scmp.eq.s32.totalorder %s30, 0
      %p246 = por %p244, %p245
      %s248 = sadd.s32 %s247, 1
      %p251 = scmp.eq.s32.totalorder %s24, 1
      %p252 = scmp.ne.s32.totalorder %s247, %s249
      %p253 = scmp.eq.s32.totalorder %s24, 0
      %p254 = por %p252, %p253
      %p255 = scmp.ne.s32.totalorder %s247, %s249
      %p256 = scmp.eq.s32.totalorder %s29, 1
      %p257 = por %p255, %p256
      %p258 = scmp.ne.s32.totalorder %s249, %s250
      %p259 = scmp.eq.s32.totalorder %s29, 0
      %p260 = por %p258, %p259
      %p261 = scmp.ne.s32.totalorder %s249, %s250
      %p262 = scmp.eq.s32.totalorder %s30, 1
      %p263 = por %p261, %p262
      %p265 = scmp.ne.s32.totalorder %s250, %s264
      %p266 = scmp.eq.s32.totalorder %s30, 0
      %p267 = por %p265, %p266
      %s269 = sadd.s32 %s268, 1
      %p272 = scmp.eq.s32.totalorder %s24, 1
      %p273 = scmp.ne.s32.totalorder %s268, %s270
      %p274 = scmp.eq.s32.totalorder %s24, 0
      %p275 = por %p273, %p274
      %p276 = scmp.ne.s32.totalorder %s268, %s270
      %p277 = scmp.eq.s32.totalorder %s29, 1
      %p278 = por %p276, %p277
      %p279 = scmp.ne.s32.totalorder %s270, %s271
      %p280 = scmp.eq.s32.totalorder %s29, 0
      %p281 = por %p279, %p280
      %p282 = scmp.ne.s32.totalorder %s270, %s271
      %p283 = scmp.eq.s32.totalorder %s30, 1
      %p284 = por %p282, %p283
      %p286 = scmp.ne.s32.totalorder %s271, %s285
      %p287 = scmp.eq.s32.totalorder %s30, 0
      %p288 = por %p286, %p287
      %s290 = sadd.s32 %s289, 1
      %p293 = scmp.eq.s32.totalorder %s24, 1
      %p294 = scmp.ne.s32.totalorder %s289, %s291
      %p295 = scmp.eq.s32.totalorder %s24, 0
      %p296 = por %p294, %p295
      %p297 = scmp.ne.s32.totalorder %s289, %s291
      %p298 = scmp.eq.s32.totalorder %s29, 1
      %p299 = por %p297, %p298
      %p300 = scmp.ne.s32.totalorder %s291, %s292
      %p301 = scmp.eq.s32.totalorder %s29, 0
      %p302 = por %p300, %p301
      %p303 = scmp.ne.s32.totalorder %s291, %s292
      %p304 = scmp.eq.s32.totalorder %s30, 1
      %p305 = por %p303, %p304
      %p307 = scmp.ne.s32.totalorder %s292, %s306
      %p308 = scmp.eq.s32.totalorder %s30, 0
      %p309 = por %p307, %p308
      %s311 = sadd.s32 %s310, 1
      %p314 = scmp.eq.s32.totalorder %s24, 1
      %p315 = scmp.ne.s32.totalorder %s310, %s312
      %p316 = scmp.eq.s32.totalorder %s24, 0
      %p317 = por %p315, %p316
      %p318 = scmp.ne.s32.totalorder %s310, %s312
      %p319 = scmp.eq.s32.totalorder %s29, 1
      %p320 = por %p318, %p319
      %p321 = scmp.ne.s32.totalorder %s312, %s313
      %p322 = scmp.eq.s32.totalorder %s29, 0
      %p323 = por %p321, %p322
      %p324 = scmp.ne.s32.totalorder %s312, %s313
      %p325 = scmp.eq.s32.totalorder %s30, 1
      %p326 = por %p324, %p325
      %p328 = scmp.ne.s32.totalorder %s313, %s327
      %p329 = scmp.eq.s32.totalorder %s30, 0
      %p330 = por %p328, %p329
      %s332 = sadd.s32 %s331, 1
      %p335 = scmp.eq.s32.totalorder %s24, 1
      %p336 = scmp.ne.s32.totalorder %s331, %s333
      %p337 = scmp.eq.s32.totalorder %s24, 0
      %p338 = por %p336, %p337
      %p339 = scmp.ne.s32.totalorder %s331, %s333
      %p340 = scmp.eq.s32.totalorder %s29, 1
      %p341 = por %p339, %p340
      %p342 = scmp.ne.s32.totalorder %s333, %s334
      %p343 = scmp.eq.s32.totalorder %s29, 0
      %p344 = por %p342, %p343
      %p345 = scmp.ne.s32.totalorder %s333, %s334
      %p346 = scmp.eq.s32.totalorder %s30, 1
      %p347 = por %p345, %p346
      %p349 = scmp.ne.s32.totalorder %s334, %s348
      %p350 = scmp.eq.s32.totalorder %s30, 0
      %p351 = por %p349, %p350
      %s352 = ssub.s32 %s24, %s31
      %p353 = scmp.eq.s32.totalorder %s352, 0
      %s355 = sadd.s32 %s354, 1
      %s356 = scalar_select %p353, %s354, %s355
      %p359 = pneg %p353
      %p360 = scmp.eq.s32.totalorder %s24, 1
      %p361 = por %p359, %p360
      %p362 = scmp.ne.s32.totalorder %s354, %s357
      %p363 = scmp.eq.s32.totalorder %s24, 0
      %p364 = por %p362, %p363
      %p365 = scmp.ne.s32.totalorder %s354, %s357
      %p366 = scmp.eq.s32.totalorder %s29, 1
      %p367 = por %p365, %p366
      %p368 = scmp.ne.s32.totalorder %s357, %s358
      %p369 = scmp.eq.s32.totalorder %s29, 0
      %p370 = por %p368, %p369
      %p371 = scmp.ne.s32.totalorder %s357, %s358
      %p372 = scmp.eq.s32.totalorder %s30, 1
      %p373 = por %p371, %p372
      %p375 = scmp.ne.s32.totalorder %s358, %s374
      %p376 = scmp.eq.s32.totalorder %s30, 0
      %p377 = por %p375, %p376
      %p378 = scmp.le.s32.totalorder 1, %s24
      %p379 = scmp.lt.s32.totalorder %s24, 3
      %p380 = pnand %p378, %p379
      %p381 = pneg %p380
      // Predicated region
      $region9: #{tpu_custom_call.1} parent=5 // pred_check
        _
      $region10: #{tpu_custom_call.1} parent=5 // pred_check_branch
        %383 = sbr.rel (%p380) target = $region12
      $region11: #{tpu_custom_call.1} parent=5 // pred_region
        %s384 = ssub.s32 %s24, 1
        // Predicated region
        $region13: #{tpu_custom_call.1} parent=11 // pred_check
          %p385 = pneg %p71
        $region14: #{tpu_custom_call.1} parent=11 // pred_check_branch
          %387 = sbr.rel (%p385) target = $region16
        $region15: #{tpu_custom_call.1} parent=11 // pred_region
          _
        $region16: #{tpu_custom_call.1} parent=11 // pred_fallthru
          _
        // Predicated region
        $region17: #{tpu_custom_call.1} parent=11 // pred_check
          %p388 = pneg %p92
        $region18: #{tpu_custom_call.1} parent=11 // pred_check_branch
          %390 = sbr.rel (%p388) target = $region20
        $region19: #{tpu_custom_call.1} parent=11 // pred_region
          _
        $region20: #{tpu_custom_call.1} parent=11 // pred_fallthru
          _
        // Predicated region
        $region21: #{tpu_custom_call.1} parent=11 // pred_check
          %p391 = pneg %p113
        $region22: #{tpu_custom_call.1} parent=11 // pred_check_branch
          %393 = sbr.rel (%p391) target = $region24
        $region23: #{tpu_custom_call.1} parent=11 // pred_region
          _
        $region24: #{tpu_custom_call.1} parent=11 // pred_fallthru
          _
        // Predicated region
        $region25: #{tpu_custom_call.1} parent=11 // pred_check
          %p394 = pneg %p134
        $region26: #{tpu_custom_call.1} parent=11 // pred_check_branch
          %396 = sbr.rel (%p394) target = $region28
        $region27: #{tpu_custom_call.1} parent=11 // pred_region
          _
        $region28: #{tpu_custom_call.1} parent=11 // pred_fallthru
          _
        // Predicated region
        $region29: #{tpu_custom_call.1} parent=11 // pred_check
          %p397 = pneg %p155
        $region30: #{tpu_custom_call.1} parent=11 // pred_check_branch
          %399 = sbr.rel (%p397) target = $region32
        $region31: #{tpu_custom_call.1} parent=11 // pred_region
          _
        $region32: #{tpu_custom_call.1} parent=11 // pred_fallthru
          _
        // Predicated region
        $region33: #{tpu_custom_call.1} parent=11 // pred_check
          %p400 = pneg %p176
        $region34: #{tpu_custom_call.1} parent=11 // pred_check_branch
          %402 = sbr.rel (%p400) target = $region36
        $region35: #{tpu_custom_call.1} parent=11 // pred_region
          _
        $region36: #{tpu_custom_call.1} parent=11 // pred_fallthru
          _
        // Predicated region
        $region37: #{tpu_custom_call.1} parent=11 // pred_check
          %p403 = pneg %p197
        $region38: #{tpu_custom_call.1} parent=11 // pred_check_branch
          %405 = sbr.rel (%p403) target = $region40
        $region39: #{tpu_custom_call.1} parent=11 // pred_region
          _
        $region40: #{tpu_custom_call.1} parent=11 // pred_fallthru
          _
        // Predicated region
        $region41: #{tpu_custom_call.1} parent=11 // pred_check
          %p406 = pneg %p218
        $region42: #{tpu_custom_call.1} parent=11 // pred_check_branch
          %408 = sbr.rel (%p406) target = $region44
        $region43: #{tpu_custom_call.1} parent=11 // pred_region
          _
        $region44: #{tpu_custom_call.1} parent=11 // pred_fallthru
          _
        // Predicated region
        $region45: #{tpu_custom_call.1} parent=11 // pred_check
          %p409 = pneg %p239
        $region46: #{tpu_custom_call.1} parent=11 // pred_check_branch
          %411 = sbr.rel (%p409) target = $region48
        $region47: #{tpu_custom_call.1} parent=11 // pred_region
          _
        $region48: #{tpu_custom_call.1} parent=11 // pred_fallthru
          _
        // Predicated region
        $region49: #{tpu_custom_call.1} parent=11 // pred_check
          %p412 = pneg %p260
        $region50: #{tpu_custom_call.1} parent=11 // pred_check_branch
          %414 = sbr.rel (%p412) target = $region52
        $region51: #{tpu_custom_call.1} parent=11 // pred_region
          _
        $region52: #{tpu_custom_call.1} parent=11 // pred_fallthru
          _
        // Predicated region
        $region53: #{tpu_custom_call.1} parent=11 // pred_check
          %p415 = pneg %p281
        $region54: #{tpu_custom_call.1} parent=11 // pred_check_branch
          %417 = sbr.rel (%p415) target = $region56
        $region55: #{tpu_custom_call.1} parent=11 // pred_region
          _
        $region56: #{tpu_custom_call.1} parent=11 // pred_fallthru
          _
        // Predicated region
        $region57: #{tpu_custom_call.1} parent=11 // pred_check
          %p418 = pneg %p302
        $region58: #{tpu_custom_call.1} parent=11 // pred_check_branch
          %420 = sbr.rel (%p418) target = $region60
        $region59: #{tpu_custom_call.1} parent=11 // pred_region
          _
        $region60: #{tpu_custom_call.1} parent=11 // pred_fallthru
          _
        // Predicated region
        $region61: #{tpu_custom_call.1} parent=11 // pred_check
          %p421 = pneg %p323
        $region62: #{tpu_custom_call.1} parent=11 // pred_check_branch
          %423 = sbr.rel (%p421) target = $region64
        $region63: #{tpu_custom_call.1} parent=11 // pred_region
          _
        $region64: #{tpu_custom_call.1} parent=11 // pred_fallthru
          _
        // Predicated region
        $region65: #{tpu_custom_call.1} parent=11 // pred_check
          %p424 = pneg %p344
        $region66: #{tpu_custom_call.1} parent=11 // pred_check_branch
          %426 = sbr.rel (%p424) target = $region68
        $region67: #{tpu_custom_call.1} parent=11 // pred_region
          _
        $region68: #{tpu_custom_call.1} parent=11 // pred_fallthru
          _
      $region12: #{tpu_custom_call.1} parent=5 // pred_fallthru
        _
      %p427 = scmp.lt.s32.totalorder %s24, 2
      // Predicated region
      $region69: #{tpu_custom_call.1} parent=5 // pred_check
        %p428 = pneg %p427
      $region70: #{tpu_custom_call.1} parent=5 // pred_check_branch
        %430 = sbr.rel (%p428) target = $region72
      $region71: #{tpu_custom_call.1} parent=5 // pred_region
        // Predicated region
        $region73: #{tpu_custom_call.1} parent=71 // pred_check
          %p431 = pneg %p44
        $region74: #{tpu_custom_call.1} parent=71 // pred_check_branch
          %433 = sbr.rel (%p431) target = $region76
        $region75: #{tpu_custom_call.1} parent=71 // pred_region
          %s434 = sand.u32 %s34, 1
          %s435 = sand.u32 %s34, 1
          %s436 = smul.addr %s435, 256
          %s437 = scalar_lea.vmem [#allocation2], %s436
          %s438 = smul.u32 4, %s24
          %s439 = smul.addr %s438, 8
          %s440 = scalar_lea.vmem %s0, %s439
          // Predicated region
          $region77: #{tpu_custom_call.1} parent=75 // pred_check
            _
          $region78: #{tpu_custom_call.1} parent=75 // pred_check_branch
            %442 = sbr.rel (0) target = $region80
          $region79: #{tpu_custom_call.1} parent=75 // pred_region
            // Predicated region
            $region81: #{tpu_custom_call.1} parent=79 // pred_check
              _
            $region82: #{tpu_custom_call.1} parent=79 // pred_check_branch
              %444 = sbr.rel (0) target = $region84
            $region83: #{tpu_custom_call.1} parent=79 // pred_region
              // Predicated region
              $region96: #{tpu_custom_call.1} parent=83 // pred_check
                _
              $region97: #{tpu_custom_call.1} parent=83 // pred_check_branch
                %522 = sbr.rel (0) target = $region99
              $region98: #{tpu_custom_call.1} parent=83 // pred_region
                loop: start=0, step=1, limit=1
                $region100: #{tpu_custom_call.1} parent=98 // loop_pre_header
                  _
                $region101: #{tpu_custom_call.1} parent=98 // loop_header
                  %s524 = sphi 0, %s528
                  %p525 = scmp.ge.s32.totalorder %s524, 1
                  %s529 = sphi %s440, %s440
                  %s530 = sphi %s437, %s437
                $region102: #{tpu_custom_call.1} parent=98 // loop_header_branch
                  %527 = sbr.rel (%p525) target = $region106
                $region103: #{tpu_custom_call.1} parent=98 // loop_body
                  %v531 = vld [vmem:[%s529] sm:$0xff]
                  %532 = vst [vmem:[%s530] sm:$0xff] %v531
                  %v533 = vld [vmem:[%s529 + $0x8] sm:$0xff]
                  %534 = vst [vmem:[%s530 + $0x8] sm:$0xff] %v533
                  %v535 = vld [vmem:[%s529 + $0x10] sm:$0xff]
                  %536 = vst [vmem:[%s530 + $0x10] sm:$0xff] %v535
                  %v537 = vld [vmem:[%s529 + $0x18] sm:$0xff]
                  %538 = vst [vmem:[%s530 + $0x18] sm:$0xff] %v537
                  %v539 = vld [vmem:[%s529 + $0x40] sm:$0xff]
                  %540 = vst [vmem:[%s530 + $0x20] sm:$0xff] %v539
                  %v541 = vld [vmem:[%s529 + $0x48] sm:$0xff]
                  %542 = vst [vmem:[%s530 + $0x28] sm:$0xff] %v541
                  %v543 = vld [vmem:[%s529 + $0x50] sm:$0xff]
                  %544 = vst [vmem:[%s530 + $0x30] sm:$0xff] %v543
                  %v545 = vld [vmem:[%s529 + $0x58] sm:$0xff]
                  %546 = vst [vmem:[%s530 + $0x38] sm:$0xff] %v545
                  %v547 = vld [vmem:[%s529 + $0x80] sm:$0xff]
                  %548 = vst [vmem:[%s530 + $0x40] sm:$0xff] %v547
                  %v549 = vld [vmem:[%s529 + $0x88] sm:$0xff]
                  %550 = vst [vmem:[%s530 + $0x48] sm:$0xff] %v549
                  %v551 = vld [vmem:[%s529 + $0x90] sm:$0xff]
                  %552 = vst [vmem:[%s530 + $0x50] sm:$0xff] %v551
                  %v553 = vld [vmem:[%s529 + $0x98] sm:$0xff]
                  %554 = vst [vmem:[%s530 + $0x58] sm:$0xff] %v553
                  %v555 = vld [vmem:[%s529 + $0xc0] sm:$0xff]
                  %556 = vst [vmem:[%s530 + $0x60] sm:$0xff] %v555
                  %v557 = vld [vmem:[%s529 + $0xc8] sm:$0xff]
                  %558 = vst [vmem:[%s530 + $0x68] sm:$0xff] %v557
                  %v559 = vld [vmem:[%s529 + $0xd0] sm:$0xff]
                  %560 = vst [vmem:[%s530 + $0x70] sm:$0xff] %v559
                  %v561 = vld [vmem:[%s529 + $0xd8] sm:$0xff]
                  %562 = vst [vmem:[%s530 + $0x78] sm:$0xff] %v561
                  %v563 = vld [vmem:[%s529 + $0x100] sm:$0xff]
                  %564 = vst [vmem:[%s530 + $0x80] sm:$0xff] %v563
                  %v565 = vld [vmem:[%s529 + $0x108] sm:$0xff]
                  %566 = vst [vmem:[%s530 + $0x88] sm:$0xff] %v565
                  %v567 = vld [vmem:[%s529 + $0x110] sm:$0xff]
                  %568 = vst [vmem:[%s530 + $0x90] sm:$0xff] %v567
                  %v569 = vld [vmem:[%s529 + $0x118] sm:$0xff]
                  %570 = vst [vmem:[%s530 + $0x98] sm:$0xff] %v569
                  %v571 = vld [vmem:[%s529 + $0x140] sm:$0xff]
                  %572 = vst [vmem:[%s530 + $0xa0] sm:$0xff] %v571
                  %v573 = vld [vmem:[%s529 + $0x148] sm:$0xff]
                  %574 = vst [vmem:[%s530 + $0xa8] sm:$0xff] %v573
                  %v575 = vld [vmem:[%s529 + $0x150] sm:$0xff]
                  %576 = vst [vmem:[%s530 + $0xb0] sm:$0xff] %v575
                  %v577 = vld [vmem:[%s529 + $0x158] sm:$0xff]
                  %578 = vst [vmem:[%s530 + $0xb8] sm:$0xff] %v577
                  %v579 = vld [vmem:[%s529 + $0x180] sm:$0xff]
                  %580 = vst [vmem:[%s530 + $0xc0] sm:$0xff] %v579
                  %v581 = vld [vmem:[%s529 + $0x188] sm:$0xff]
                  %582 = vst [vmem:[%s530 + $0xc8] sm:$0xff] %v581
                  %v583 = vld [vmem:[%s529 + $0x190] sm:$0xff]
                  %584 = vst [vmem:[%s530 + $0xd0] sm:$0xff] %v583
                  %v585 = vld [vmem:[%s529 + $0x198] sm:$0xff]
                  %586 = vst [vmem:[%s530 + $0xd8] sm:$0xff] %v585
                  %v587 = vld [vmem:[%s529 + $0x1c0] sm:$0xff]
                  %588 = vst [vmem:[%s530 + $0xe0] sm:$0xff] %v587
                  %v589 = vld [vmem:[%s529 + $0x1c8] sm:$0xff]
                  %590 = vst [vmem:[%s530 + $0xe8] sm:$0xff] %v589
                  %v591 = vld [vmem:[%s529 + $0x1d0] sm:$0xff]
                  %592 = vst [vmem:[%s530 + $0xf0] sm:$0xff] %v591
                  %v593 = vld [vmem:[%s529 + $0x1d8] sm:$0xff]
                  %594 = vst [vmem:[%s530 + $0xf8] sm:$0xff] %v593
                $region104: #{tpu_custom_call.1} parent=98 // loop_footer
                  %s528 = sadd.s32 1, %s524
                $region105: #{tpu_custom_call.1} parent=98 // loop_footer_branch
                  %523 = sbr.rel target = $region101
                $region106: #{tpu_custom_call.1} parent=98 // loop_exit
                  _
              $region99: #{tpu_custom_call.1} parent=83 // pred_fallthru
                _
              // Predicated region
              $region107: #{tpu_custom_call.1} parent=83 // pred_check
                _
              $region108: #{tpu_custom_call.1} parent=83 // pred_check_branch
                %596 = sbr.rel target = $region110
              $region109: #{tpu_custom_call.1} parent=83 // pred_region
                _
              $region110: #{tpu_custom_call.1} parent=83 // pred_fallthru
                _
            $region84: #{tpu_custom_call.1} parent=79 // pred_fallthru
              _
            // Predicated region
            $region85: #{tpu_custom_call.1} parent=79 // pred_check
              _
            $region86: #{tpu_custom_call.1} parent=79 // pred_check_branch
              %446 = sbr.rel target = $region88
            $region87: #{tpu_custom_call.1} parent=79 // pred_region
              %s448 = ssub.s32 256, 1
              loop: start=0, step=1, limit=1
              $region89: #{tpu_custom_call.1} parent=87 // loop_pre_header
                _
              $region90: #{tpu_custom_call.1} parent=87 // loop_header
                %s450 = sphi 0, %s454
                %p451 = scmp.ge.s32.totalorder %s450, 1
                %s455 = sphi %s440, %s440
                %s456 = sphi %s437, %s437
              $region91: #{tpu_custom_call.1} parent=87 // loop_header_branch
                %453 = sbr.rel (%p451) target = $region95
              $region92: #{tpu_custom_call.1} parent=87 // loop_body
                %v457 = vld [vmem:[%s455] sm:%s448]
                %458 = vst [vmem:[%s456] sm:%s448] %v457
                %v459 = vld [vmem:[%s455 + $0x8] sm:%s448]
                %460 = vst [vmem:[%s456 + $0x8] sm:%s448] %v459
                %v461 = vld [vmem:[%s455 + $0x10] sm:%s448]
                %462 = vst [vmem:[%s456 + $0x10] sm:%s448] %v461
                %v463 = vld [vmem:[%s455 + $0x18] sm:%s448]
                %464 = vst [vmem:[%s456 + $0x18] sm:%s448] %v463
                %v465 = vld [vmem:[%s455 + $0x40] sm:%s448]
                %466 = vst [vmem:[%s456 + $0x20] sm:%s448] %v465
                %v467 = vld [vmem:[%s455 + $0x48] sm:%s448]
                %468 = vst [vmem:[%s456 + $0x28] sm:%s448] %v467
                %v469 = vld [vmem:[%s455 + $0x50] sm:%s448]
                %470 = vst [vmem:[%s456 + $0x30] sm:%s448] %v469
                %v471 = vld [vmem:[%s455 + $0x58] sm:%s448]
                %472 = vst [vmem:[%s456 + $0x38] sm:%s448] %v471
                %v473 = vld [vmem:[%s455 + $0x80] sm:%s448]
                %474 = vst [vmem:[%s456 + $0x40] sm:%s448] %v473
                %v475 = vld [vmem:[%s455 + $0x88] sm:%s448]
                %476 = vst [vmem:[%s456 + $0x48] sm:%s448] %v475
                %v477 = vld [vmem:[%s455 + $0x90] sm:%s448]
                %478 = vst [vmem:[%s456 + $0x50] sm:%s448] %v477
                %v479 = vld [vmem:[%s455 + $0x98] sm:%s448]
                %480 = vst [vmem:[%s456 + $0x58] sm:%s448] %v479
                %v481 = vld [vmem:[%s455 + $0xc0] sm:%s448]
                %482 = vst [vmem:[%s456 + $0x60] sm:%s448] %v481
                %v483 = vld [vmem:[%s455 + $0xc8] sm:%s448]
                %484 = vst [vmem:[%s456 + $0x68] sm:%s448] %v483
                %v485 = vld [vmem:[%s455 + $0xd0] sm:%s448]
                %486 = vst [vmem:[%s456 + $0x70] sm:%s448] %v485
                %v487 = vld [vmem:[%s455 + $0xd8] sm:%s448]
                %488 = vst [vmem:[%s456 + $0x78] sm:%s448] %v487
                %v489 = vld [vmem:[%s455 + $0x100] sm:%s448]
                %490 = vst [vmem:[%s456 + $0x80] sm:%s448] %v489
                %v491 = vld [vmem:[%s455 + $0x108] sm:%s448]
                %492 = vst [vmem:[%s456 + $0x88] sm:%s448] %v491
                %v493 = vld [vmem:[%s455 + $0x110] sm:%s448]
                %494 = vst [vmem:[%s456 + $0x90] sm:%s448] %v493
                %v495 = vld [vmem:[%s455 + $0x118] sm:%s448]
                %496 = vst [vmem:[%s456 + $0x98] sm:%s448] %v495
                %v497 = vld [vmem:[%s455 + $0x140] sm:%s448]
                %498 = vst [vmem:[%s456 + $0xa0] sm:%s448] %v497
                %v499 = vld [vmem:[%s455 + $0x148] sm:%s448]
                %500 = vst [vmem:[%s456 + $0xa8] sm:%s448] %v499
                %v501 = vld [vmem:[%s455 + $0x150] sm:%s448]
                %502 = vst [vmem:[%s456 + $0xb0] sm:%s448] %v501
                %v503 = vld [vmem:[%s455 + $0x158] sm:%s448]
                %504 = vst [vmem:[%s456 + $0xb8] sm:%s448] %v503
                %v505 = vld [vmem:[%s455 + $0x180] sm:%s448]
                %506 = vst [vmem:[%s456 + $0xc0] sm:%s448] %v505
                %v507 = vld [vmem:[%s455 + $0x188] sm:%s448]
                %508 = vst [vmem:[%s456 + $0xc8] sm:%s448] %v507
                %v509 = vld [vmem:[%s455 + $0x190] sm:%s448]
                %510 = vst [vmem:[%s456 + $0xd0] sm:%s448] %v509
                %v511 = vld [vmem:[%s455 + $0x198] sm:%s448]
                %512 = vst [vmem:[%s456 + $0xd8] sm:%s448] %v511
                %v513 = vld [vmem:[%s455 + $0x1c0] sm:%s448]
                %514 = vst [vmem:[%s456 + $0xe0] sm:%s448] %v513
                %v515 = vld [vmem:[%s455 + $0x1c8] sm:%s448]
                %516 = vst [vmem:[%s456 + $0xe8] sm:%s448] %v515
                %v517 = vld [vmem:[%s455 + $0x1d0] sm:%s448]
                %518 = vst [vmem:[%s456 + $0xf0] sm:%s448] %v517
                %v519 = vld [vmem:[%s455 + $0x1d8] sm:%s448]
                %520 = vst [vmem:[%s456 + $0xf8] sm:%s448] %v519
              $region93: #{tpu_custom_call.1} parent=87 // loop_footer
                %s454 = sadd.s32 1, %s450
              $region94: #{tpu_custom_call.1} parent=87 // loop_footer_branch
                %449 = sbr.rel target = $region90
              $region95: #{tpu_custom_call.1} parent=87 // loop_exit
                _
            $region88: #{tpu_custom_call.1} parent=79 // pred_fallthru
              _
          $region80: #{tpu_custom_call.1} parent=75 // pred_fallthru
            _
          %597 = vnop
        $region76: #{tpu_custom_call.1} parent=71 // pred_fallthru
          _
      $region72: #{tpu_custom_call.1} parent=5 // pred_fallthru
        _
      %p598 = scmp.le.s32.totalorder 1, %s24
      %p599 = scmp.lt.s32.totalorder %s24, 3
      %p600 = pnand %p598, %p599
      %p601 = pneg %p600
      // Predicated region
      $region111: #{tpu_custom_call.1} parent=5 // pred_check
        _
      $region112: #{tpu_custom_call.1} parent=5 // pred_check_branch
        %603 = sbr.rel (%p600) target = $region114
      $region113: #{tpu_custom_call.1} parent=5 // pred_region
        %s604 = ssub.s32 %s24, 1
        %s605 = sand.u32 %s37, 1
        %s606 = sand.u32 %s37, 1
        %s607 = smul.addr %s606, 256
        %s608 = scalar_lea.vmem [#allocation2], %s607
        // Predicated region
        $region115: #{tpu_custom_call.1} parent=113 // pred_check
          %p609 = pneg %p50
        $region116: #{tpu_custom_call.1} parent=113 // pred_check_branch
          %611 = sbr.rel (%p609) target = $region118
        $region117: #{tpu_custom_call.1} parent=113 // pred_region
          _
        $region118: #{tpu_custom_call.1} parent=113 // pred_fallthru
          _
        %s612 = sand.u32 %s37, 1
        %s613 = sand.u32 %s37, 1
        %s614 = smul.addr %s613, 256
        %s615 = scalar_lea.vmem [#allocation2], %s614
        %p616 = pneg %p50
        %p617 = pneg %p47
        %p618 = pneg %p71
        %p619 = pneg %p68
        %p620 = pneg %p92
        %p621 = pneg %p89
        %p622 = pneg %p113
        %p623 = pneg %p110
        %p624 = pneg %p134
        %p625 = pneg %p131
        %p626 = pneg %p155
        %p627 = pneg %p152
        %p628 = pneg %p176
        %p629 = pneg %p173
        %p630 = pneg %p197
        %p631 = pneg %p194
        %p632 = pneg %p218
        %p633 = pneg %p215
        %p634 = pneg %p239
        %p635 = pneg %p236
        %p636 = pneg %p260
        %p637 = pneg %p257
        %p638 = pneg %p281
        %p639 = pneg %p278
        %p640 = pneg %p302
        %p641 = pneg %p299
        %p642 = pneg %p323
        %p643 = pneg %p320
        %p644 = pneg %p344
        %p645 = pneg %p341
        %p646 = pneg %p370
        %p647 = pneg %p367
        %s648 = sand.u32 %s357, 1
        %s649 = scalar_lea.sflag [#allocation4], %s648
        %s650 = sand.u32 %s357, 1
        %s651 = smul.addr %s650, 256
        %s652 = scalar_lea.vmem [#allocation3], %s651
        %s653 = smul.u32 4, %s29
        %s654 = smul.u32 4, %s29
        %v656 = vld [vmem:[%s608] sm:$0xff]
        %v657 = vld [vmem:[%s608 + $0x8] sm:$0xff]
        %v658 = vld [vmem:[%s608 + $0x10] sm:$0xff]
        %v659 = vld [vmem:[%s608 + $0x18] sm:$0xff]
        %v660 = vld [vmem:[%s608 + $0x20] sm:$0xff]
        %v661 = vld [vmem:[%s608 + $0x28] sm:$0xff]
        %v662 = vld [vmem:[%s608 + $0x30] sm:$0xff]
        %v663 = vld [vmem:[%s608 + $0x38] sm:$0xff]
        %v664 = vld [vmem:[%s608 + $0x40] sm:$0xff]
        %v665 = vld [vmem:[%s608 + $0x48] sm:$0xff]
        %v666 = vld [vmem:[%s608 + $0x50] sm:$0xff]
        %v667 = vld [vmem:[%s608 + $0x58] sm:$0xff]
        %v668 = vld [vmem:[%s608 + $0x60] sm:$0xff]
        %v669 = vld [vmem:[%s608 + $0x68] sm:$0xff]
        %v670 = vld [vmem:[%s608 + $0x70] sm:$0xff]
        %v671 = vld [vmem:[%s608 + $0x78] sm:$0xff]
        %v672 = vld [vmem:[%s608 + $0x80] sm:$0xff]
        %v673 = vld [vmem:[%s608 + $0x88] sm:$0xff]
        %v674 = vld [vmem:[%s608 + $0x90] sm:$0xff]
        %v675 = vld [vmem:[%s608 + $0x98] sm:$0xff]
        %v676 = vld [vmem:[%s608 + $0xa0] sm:$0xff]
        %v677 = vld [vmem:[%s608 + $0xa8] sm:$0xff]
        %v678 = vld [vmem:[%s608 + $0xb0] sm:$0xff]
        %v679 = vld [vmem:[%s608 + $0xb8] sm:$0xff]
        %v680 = vld [vmem:[%s608 + $0xc0] sm:$0xff]
        %v681 = vld [vmem:[%s608 + $0xc8] sm:$0xff]
        %v682 = vld [vmem:[%s608 + $0xd0] sm:$0xff]
        %v683 = vld [vmem:[%s608 + $0xd8] sm:$0xff]
        %v684 = vld [vmem:[%s608 + $0xe0] sm:$0xff]
        %v685 = vld [vmem:[%s608 + $0xe8] sm:$0xff]
        %v686 = vld [vmem:[%s608 + $0xf0] sm:$0xff]
        %v687 = vld [vmem:[%s608 + $0xf8] sm:$0xff]
        %v688 = vpack.c.bf16 %v657, %v656
        %v689 = vpack.c.bf16 %v659, %v658
        %v690 = vpack.c.bf16 %v661, %v660
        %v691 = vpack.c.bf16 %v663, %v662
        %v692 = vpack.c.bf16 %v665, %v664
        %v693 = vpack.c.bf16 %v667, %v666
        %v694 = vpack.c.bf16 %v669, %v668
        %v695 = vpack.c.bf16 %v671, %v670
        %v696 = vpack.c.bf16 %v673, %v672
        %v697 = vpack.c.bf16 %v675, %v674
        %v698 = vpack.c.bf16 %v677, %v676
        %v699 = vpack.c.bf16 %v679, %v678
        %v700 = vpack.c.bf16 %v681, %v680
        %v701 = vpack.c.bf16 %v683, %v682
        %v702 = vpack.c.bf16 %v685, %v684
        %v703 = vpack.c.bf16 %v687, %v686
        %v704 = vld [vmem:[%s1] sm:$0xff]
        %v705 = vld [vmem:[%s1 + $0x8] sm:$0xf]
        %v706 = vld [vmem:[%s1 + $0xc] sm:$0xff]
        %v707 = vld [vmem:[%s1 + $0x14] sm:$0xf]
        %v708 = vld [vmem:[%s1 + $0x18] sm:$0xff]
        %v709 = vld [vmem:[%s1 + $0x20] sm:$0xf]
        %v710 = vld [vmem:[%s1 + $0x24] sm:$0xff]
        %v711 = vld [vmem:[%s1 + $0x2c] sm:$0xf]
        %v712 = vld [vmem:[%s2] sm:$0x7]
        %v714 = vlaneseq
        %v715 = vshrl.u32 %v714, 7
        %v716 = vsub.s32 0, %v715
        %v717 = vrot.slane %v712, %v716
        %v718 = vlaneseq
        %v719 = vshrl.u32 %v718, 7
        %v720 = vsub.s32 1, %v719
        %v721 = vrot.slane %v712, %v720
        %v722 = vlaneseq
        %v723 = vshrl.u32 %v722, 7
        %v724 = vsub.s32 2, %v723
        %v725 = vrot.slane %v712, %v724
        %v737 = vunpack.c.l.b16 %v704
        %v738 = vunpack.c.h.b16 %v704
        %v739 = vunpack.c.l.b16 %v705
        %v740 = vunpack.c.l.b16 %v706
        %v741 = vunpack.c.h.b16 %v706
        %v742 = vunpack.c.l.b16 %v707
        %v743 = vunpack.c.l.b16 %v708
        %v744 = vunpack.c.h.b16 %v708
        %v745 = vunpack.c.l.b16 %v709
        %v746 = vunpack.c.l.b16 %v710
        %v747 = vunpack.c.h.b16 %v710
        %v748 = vunpack.c.l.b16 %v711
        %v749 = vpack.c.b16 %v740, %v737
        %v750 = vpack.c.b16 %v741, %v738
        %v751 = vpack.c.b16 %v742, %v739
        %v752 = vpack.c.b16 %v746, %v743
        %v753 = vpack.c.b16 %v747, %v744
        %v754 = vpack.c.b16 %v748, %v745
        %vm761 = vcmask 261120
        %v763 = vsel %vm761, %v688, 0
        %v766 = vsel %vm761, %v689, 0
        %v769 = vsel %vm761, %v690, 0
        %v772 = vsel %vm761, %v691, 0
        %v775 = vsel %vm761, %v692, 0
        %v778 = vsel %vm761, %v693, 0
        %v781 = vsel %vm761, %v694, 0
        %v784 = vsel %vm761, %v695, 0
        %v787 = vsel %vm761, %v696, 0
        %v790 = vsel %vm761, %v697, 0
        %v793 = vsel %vm761, %v698, 0
        %v796 = vsel %vm761, %v699, 0
        %v799 = vsel %vm761, %v700, 0
        %v802 = vsel %vm761, %v701, 0
        %v805 = vsel %vm761, %v702, 0
        %v808 = vsel %vm761, %v703, 0
        %810 = vmatprep.subr.bf16.mxu0 0
        %811 = vmatpush1.bf16.msra.mxu0 0
        %812 = vmatprep.subr.bf16.mxu0 0
        %813 = vmatpush1.bf16.msra.mxu0 0
        %814 = vmatprep.subr.bf16.mxu0 0
        %815 = vmatpush1.bf16.msra.mxu0 0
        %816 = vmatprep.subr.bf16.mxu0 0
        %817 = vmatpush1.bf16.msra.mxu0 0
        %818 = vmatprep.subr.bf16.mxu0 0
        %819 = vmatpush1.bf16.msra.mxu0 0
        %820 = vmatprep.subr.bf16.mxu0 0
        %821 = vmatpush1.bf16.msra.mxu0 0
        %822 = vmatprep.subr.bf16.mxu0 %v753
        %823 = vmatpush1.bf16.msra.mxu0 %v752
        %824 = vmatprep.subr.bf16.mxu0 %v750
        %825 = vmatpush1.bf16.msra.mxu0 %v749
        %826 = vmatprep.subr.bf16.mxu0 0
        %827 = vmatpush2.bf16.msra.mxu0 0
        %828 = vmatprep.subr.bf16.mxu0 0
        %829 = vmatpush2.bf16.msra.mxu0 0
        %830 = vmatprep.subr.bf16.mxu0 0
        %831 = vmatpush2.bf16.msra.mxu0 0
        %832 = vmatprep.subr.bf16.mxu0 0
        %833 = vmatpush2.bf16.msra.mxu0 0
        %834 = vmatprep.subr.bf16.mxu0 0
        %835 = vmatpush2.bf16.msra.mxu0 0
        %836 = vmatprep.subr.bf16.mxu0 0
        %837 = vmatpush2.bf16.msra.mxu0 0
        %838 = vmatprep.subr.bf16.mxu0 0
        %839 = vmatpush2.bf16.msra.mxu0 0
        %840 = vmatprep.subr.bf16.mxu0 0
        %841 = vmatpush2.bf16.msra.mxu0 0
        %842 = vmatprep.mubr.bf16.mxu0 0
        %843 = vmatmul.mubr.bf16.gmra.mxu0 %v763
        %v844 = vpop.f32.mrf.mxu0
        %v845 = vadd.f32 %v717, %v844
        %v846 = vpop.f32.mrf.mxu0
        %v847 = vadd.f32 %v721, %v846
        %v848 = vpop.f32.mrf.mxu0
        %v849 = vadd.f32 %v717, %v848
        %v850 = vpop.f32.mrf.mxu0
        %v851 = vadd.f32 %v721, %v850
        %852 = vmatprep.mubr.bf16.mxu0 0
        %853 = vmatmul.mubr.bf16.gmra.mxu0 %v766
        %v854 = vpop.f32.mrf.mxu0
        %v855 = vadd.f32 %v717, %v854
        %v856 = vpop.f32.mrf.mxu0
        %v857 = vadd.f32 %v721, %v856
        %v858 = vpop.f32.mrf.mxu0
        %v859 = vadd.f32 %v717, %v858
        %v860 = vpop.f32.mrf.mxu0
        %v861 = vadd.f32 %v721, %v860
        %862 = vmatprep.mubr.bf16.mxu0 0
        %863 = vmatmul.mubr.bf16.gmra.mxu0 %v769
        %v864 = vpop.f32.mrf.mxu0
        %v865 = vadd.f32 %v717, %v864
        %v866 = vpop.f32.mrf.mxu0
        %v867 = vadd.f32 %v721, %v866
        %v868 = vpop.f32.mrf.mxu0
        %v869 = vadd.f32 %v717, %v868
        %v870 = vpop.f32.mrf.mxu0
        %v871 = vadd.f32 %v721, %v870
        %872 = vmatprep.mubr.bf16.mxu0 0
        %873 = vmatmul.mubr.bf16.gmra.mxu0 %v772
        %v874 = vpop.f32.mrf.mxu0
        %v875 = vadd.f32 %v717, %v874
        %v876 = vpop.f32.mrf.mxu0
        %v877 = vadd.f32 %v721, %v876
        %v878 = vpop.f32.mrf.mxu0
        %v879 = vadd.f32 %v717, %v878
        %v880 = vpop.f32.mrf.mxu0
        %v881 = vadd.f32 %v721, %v880
        %882 = vmatprep.mubr.bf16.mxu0 0
        %883 = vmatmul.mubr.bf16.gmra.mxu0 %v775
        %v884 = vpop.f32.mrf.mxu0
        %v885 = vadd.f32 %v717, %v884
        %v886 = vpop.f32.mrf.mxu0
        %v887 = vadd.f32 %v721, %v886
        %v888 = vpop.f32.mrf.mxu0
        %v889 = vadd.f32 %v717, %v888
        %v890 = vpop.f32.mrf.mxu0
        %v891 = vadd.f32 %v721, %v890
        %892 = vmatprep.mubr.bf16.mxu0 0
        %893 = vmatmul.mubr.bf16.gmra.mxu0 %v778
        %v894 = vpop.f32.mrf.mxu0
        %v895 = vadd.f32 %v717, %v894
        %v896 = vpop.f32.mrf.mxu0
        %v897 = vadd.f32 %v721, %v896
        %v898 = vpop.f32.mrf.mxu0
        %v899 = vadd.f32 %v717, %v898
        %v900 = vpop.f32.mrf.mxu0
        %v901 = vadd.f32 %v721, %v900
        %902 = vmatprep.mubr.bf16.mxu0 0
        %903 = vmatmul.mubr.bf16.gmra.mxu0 %v781
        %v904 = vpop.f32.mrf.mxu0
        %v905 = vadd.f32 %v717, %v904
        %v906 = vpop.f32.mrf.mxu0
        %v907 = vadd.f32 %v721, %v906
        %v908 = vpop.f32.mrf.mxu0
        %v909 = vadd.f32 %v717, %v908
        %v910 = vpop.f32.mrf.mxu0
        %v911 = vadd.f32 %v721, %v910
        %912 = vmatprep.mubr.bf16.mxu0 0
        %913 = vmatmul.mubr.bf16.gmra.mxu0 %v784
        %v914 = vpop.f32.mrf.mxu0
        %v915 = vadd.f32 %v717, %v914
        %v916 = vpop.f32.mrf.mxu0
        %v917 = vadd.f32 %v721, %v916
        %v918 = vpop.f32.mrf.mxu0
        %v919 = vadd.f32 %v717, %v918
        %v920 = vpop.f32.mrf.mxu0
        %v921 = vadd.f32 %v721, %v920
        %922 = vmatprep.mubr.bf16.mxu0 0
        %923 = vmatmul.mubr.bf16.gmra.mxu0 %v787
        %v924 = vpop.f32.mrf.mxu0
        %v925 = vadd.f32 %v717, %v924
        %v926 = vpop.f32.mrf.mxu0
        %v927 = vadd.f32 %v721, %v926
        %v928 = vpop.f32.mrf.mxu0
        %v929 = vadd.f32 %v717, %v928
        %v930 = vpop.f32.mrf.mxu0
        %v931 = vadd.f32 %v721, %v930
        %932 = vmatprep.mubr.bf16.mxu0 0
        %933 = vmatmul.mubr.bf16.gmra.mxu0 %v790
        %v934 = vpop.f32.mrf.mxu0
        %v935 = vadd.f32 %v717, %v934
        %v936 = vpop.f32.mrf.mxu0
        %v937 = vadd.f32 %v721, %v936
        %v938 = vpop.f32.mrf.mxu0
        %v939 = vadd.f32 %v717, %v938
        %v940 = vpop.f32.mrf.mxu0
        %v941 = vadd.f32 %v721, %v940
        %942 = vmatprep.mubr.bf16.mxu0 0
        %943 = vmatmul.mubr.bf16.gmra.mxu0 %v793
        %v944 = vpop.f32.mrf.mxu0
        %v945 = vadd.f32 %v717, %v944
        %v946 = vpop.f32.mrf.mxu0
        %v947 = vadd.f32 %v721, %v946
        %v948 = vpop.f32.mrf.mxu0
        %v949 = vadd.f32 %v717, %v948
        %v950 = vpop.f32.mrf.mxu0
        %v951 = vadd.f32 %v721, %v950
        %952 = vmatprep.mubr.bf16.mxu0 0
        %953 = vmatmul.mubr.bf16.gmra.mxu0 %v796
        %v954 = vpop.f32.mrf.mxu0
        %v955 = vadd.f32 %v717, %v954
        %v956 = vpop.f32.mrf.mxu0
        %v957 = vadd.f32 %v721, %v956
        %v958 = vpop.f32.mrf.mxu0
        %v959 = vadd.f32 %v717, %v958
        %v960 = vpop.f32.mrf.mxu0
        %v961 = vadd.f32 %v721, %v960
        %962 = vmatprep.mubr.bf16.mxu0 0
        %963 = vmatmul.mubr.bf16.gmra.mxu0 %v799
        %v964 = vpop.f32.mrf.mxu0
        %v965 = vadd.f32 %v717, %v964
        %v966 = vpop.f32.mrf.mxu0
        %v967 = vadd.f32 %v721, %v966
        %v968 = vpop.f32.mrf.mxu0
        %v969 = vadd.f32 %v717, %v968
        %v970 = vpop.f32.mrf.mxu0
        %v971 = vadd.f32 %v721, %v970
        %972 = vmatprep.mubr.bf16.mxu0 0
        %973 = vmatmul.mubr.bf16.gmra.mxu0 %v802
        %v974 = vpop.f32.mrf.mxu0
        %v975 = vadd.f32 %v717, %v974
        %v976 = vpop.f32.mrf.mxu0
        %v977 = vadd.f32 %v721, %v976
        %v978 = vpop.f32.mrf.mxu0
        %v979 = vadd.f32 %v717, %v978
        %v980 = vpop.f32.mrf.mxu0
        %v981 = vadd.f32 %v721, %v980
        %982 = vmatprep.mubr.bf16.mxu0 0
        %983 = vmatmul.mubr.bf16.gmra.mxu0 %v805
        %v984 = vpop.f32.mrf.mxu0
        %v985 = vadd.f32 %v717, %v984
        %v986 = vpop.f32.mrf.mxu0
        %v987 = vadd.f32 %v721, %v986
        %v988 = vpop.f32.mrf.mxu0
        %v989 = vadd.f32 %v717, %v988
        %v990 = vpop.f32.mrf.mxu0
        %v991 = vadd.f32 %v721, %v990
        %992 = vmatprep.mubr.bf16.mxu0 0
        %993 = vmatmul.mubr.bf16.gmra.mxu0 %v808
        %v994 = vpop.f32.mrf.mxu0
        %v995 = vadd.f32 %v717, %v994
        %v996 = vpop.f32.mrf.mxu0
        %v997 = vadd.f32 %v721, %v996
        %v998 = vpop.f32.mrf.mxu0
        %v999 = vadd.f32 %v717, %v998
        %v1000 = vpop.f32.mrf.mxu0
        %v1001 = vadd.f32 %v721, %v1000
        %1002 = vdwg.mxu0
        %1003 = vmatprep.subr.bf16.mxu0 0
        %1004 = vmatpush1.bf16.msra.mxu0 0
        %1005 = vmatprep.subr.bf16.mxu0 0
        %1006 = vmatpush1.bf16.msra.mxu0 0
        %1007 = vmatprep.subr.bf16.mxu0 0
        %1008 = vmatpush1.bf16.msra.mxu0 0
        %1009 = vmatprep.subr.bf16.mxu0 0
        %1010 = vmatpush1.bf16.msra.mxu0 0
        %1011 = vmatprep.subr.bf16.mxu0 0
        %1012 = vmatpush1.bf16.msra.mxu0 0
        %1013 = vmatprep.subr.bf16.mxu0 0
        %1014 = vmatpush1.bf16.msra.mxu0 0
        %1015 = vmatprep.subr.bf16.mxu0 0
        %1016 = vmatpush1.bf16.msra.mxu0 %v754
        %1017 = vmatprep.subr.bf16.mxu0 0
        %1018 = vmatpush1.bf16.msra.mxu0 %v751
        %1019 = vmatprep.subr.bf16.mxu0 0
        %1020 = vmatpush2.bf16.msra.mxu0 0
        %1021 = vmatprep.subr.bf16.mxu0 0
        %1022 = vmatpush2.bf16.msra.mxu0 0
        %1023 = vmatprep.subr.bf16.mxu0 0
        %1024 = vmatpush2.bf16.msra.mxu0 0
        %1025 = vmatprep.subr.bf16.mxu0 0
        %1026 = vmatpush2.bf16.msra.mxu0 0
        %1027 = vmatprep.subr.bf16.mxu0 0
        %1028 = vmatpush2.bf16.msra.mxu0 0
        %1029 = vmatprep.subr.bf16.mxu0 0
        %1030 = vmatpush2.bf16.msra.mxu0 0
        %1031 = vmatprep.subr.bf16.mxu0 0
        %1032 = vmatpush2.bf16.msra.mxu0 0
        %1033 = vmatprep.subr.bf16.mxu0 0
        %1034 = vmatpush2.bf16.msra.mxu0 0
        %1035 = vmatprep.mubr.bf16.mxu0 0
        %1036 = vmatmul.mubr.bf16.gmra.mxu0 %v763
        %v1037 = vpop.f32.mrf.mxu0
        %v1038 = vadd.f32 %v725, %v1037
        %v1039 = vpop.f32.mrf.mxu0
        %v1040 = vpop.f32.mrf.mxu0
        %v1041 = vadd.f32 %v725, %v1040
        %v1042 = vpop.f32.mrf.mxu0
        %1043 = vmatprep.mubr.bf16.mxu0 0
        %1044 = vmatmul.mubr.bf16.gmra.mxu0 %v766
        %v1045 = vpop.f32.mrf.mxu0
        %v1046 = vadd.f32 %v725, %v1045
        %v1047 = vpop.f32.mrf.mxu0
        %v1048 = vpop.f32.mrf.mxu0
        %v1049 = vadd.f32 %v725, %v1048
        %v1050 = vpop.f32.mrf.mxu0
        %1051 = vmatprep.mubr.bf16.mxu0 0
        %1052 = vmatmul.mubr.bf16.gmra.mxu0 %v769
        %v1053 = vpop.f32.mrf.mxu0
        %v1054 = vadd.f32 %v725, %v1053
        %v1055 = vpop.f32.mrf.mxu0
        %v1056 = vpop.f32.mrf.mxu0
        %v1057 = vadd.f32 %v725, %v1056
        %v1058 = vpop.f32.mrf.mxu0
        %1059 = vmatprep.mubr.bf16.mxu0 0
        %1060 = vmatmul.mubr.bf16.gmra.mxu0 %v772
        %v1061 = vpop.f32.mrf.mxu0
        %v1062 = vadd.f32 %v725, %v1061
        %v1063 = vpop.f32.mrf.mxu0
        %v1064 = vpop.f32.mrf.mxu0
        %v1065 = vadd.f32 %v725, %v1064
        %v1066 = vpop.f32.mrf.mxu0
        %1067 = vmatprep.mubr.bf16.mxu0 0
        %1068 = vmatmul.mubr.bf16.gmra.mxu0 %v775
        %v1069 = vpop.f32.mrf.mxu0
        %v1070 = vadd.f32 %v725, %v1069
        %v1071 = vpop.f32.mrf.mxu0
        %v1072 = vpop.f32.mrf.mxu0
        %v1073 = vadd.f32 %v725, %v1072
        %v1074 = vpop.f32.mrf.mxu0
        %1075 = vmatprep.mubr.bf16.mxu0 0
        %1076 = vmatmul.mubr.bf16.gmra.mxu0 %v778
        %v1077 = vpop.f32.mrf.mxu0
        %v1078 = vadd.f32 %v725, %v1077
        %v1079 = vpop.f32.mrf.mxu0
        %v1080 = vpop.f32.mrf.mxu0
        %v1081 = vadd.f32 %v725, %v1080
        %v1082 = vpop.f32.mrf.mxu0
        %1083 = vmatprep.mubr.bf16.mxu0 0
        %1084 = vmatmul.mubr.bf16.gmra.mxu0 %v781
        %v1085 = vpop.f32.mrf.mxu0
        %v1086 = vadd.f32 %v725, %v1085
        %v1087 = vpop.f32.mrf.mxu0
        %v1088 = vpop.f32.mrf.mxu0
        %v1089 = vadd.f32 %v725, %v1088
        %v1090 = vpop.f32.mrf.mxu0
        %1091 = vmatprep.mubr.bf16.mxu0 0
        %1092 = vmatmul.mubr.bf16.gmra.mxu0 %v784
        %v1093 = vpop.f32.mrf.mxu0
        %v1094 = vadd.f32 %v725, %v1093
        %v1095 = vpop.f32.mrf.mxu0
        %v1096 = vpop.f32.mrf.mxu0
        %v1097 = vadd.f32 %v725, %v1096
        %v1098 = vpop.f32.mrf.mxu0
        %1099 = vmatprep.mubr.bf16.mxu0 0
        %1100 = vmatmul.mubr.bf16.gmra.mxu0 %v787
        %v1101 = vpop.f32.mrf.mxu0
        %v1102 = vadd.f32 %v725, %v1101
        %v1103 = vpop.f32.mrf.mxu0
        %v1104 = vpop.f32.mrf.mxu0
        %v1105 = vadd.f32 %v725, %v1104
        %v1106 = vpop.f32.mrf.mxu0
        %1107 = vmatprep.mubr.bf16.mxu0 0
        %1108 = vmatmul.mubr.bf16.gmra.mxu0 %v790
        %v1109 = vpop.f32.mrf.mxu0
        %v1110 = vadd.f32 %v725, %v1109
        %v1111 = vpop.f32.mrf.mxu0
        %v1112 = vpop.f32.mrf.mxu0
        %v1113 = vadd.f32 %v725, %v1112
        %v1114 = vpop.f32.mrf.mxu0
        %1115 = vmatprep.mubr.bf16.mxu0 0
        %1116 = vmatmul.mubr.bf16.gmra.mxu0 %v793
        %v1117 = vpop.f32.mrf.mxu0
        %v1118 = vadd.f32 %v725, %v1117
        %v1119 = vpop.f32.mrf.mxu0
        %v1120 = vpop.f32.mrf.mxu0
        %v1121 = vadd.f32 %v725, %v1120
        %v1122 = vpop.f32.mrf.mxu0
        %1123 = vmatprep.mubr.bf16.mxu0 0
        %1124 = vmatmul.mubr.bf16.gmra.mxu0 %v796
        %v1125 = vpop.f32.mrf.mxu0
        %v1126 = vadd.f32 %v725, %v1125
        %v1127 = vpop.f32.mrf.mxu0
        %v1128 = vpop.f32.mrf.mxu0
        %v1129 = vadd.f32 %v725, %v1128
        %v1130 = vpop.f32.mrf.mxu0
        %1131 = vmatprep.mubr.bf16.mxu0 0
        %1132 = vmatmul.mubr.bf16.gmra.mxu0 %v799
        %v1133 = vpop.f32.mrf.mxu0
        %v1134 = vadd.f32 %v725, %v1133
        %v1135 = vpop.f32.mrf.mxu0
        %v1136 = vpop.f32.mrf.mxu0
        %v1137 = vadd.f32 %v725, %v1136
        %v1138 = vpop.f32.mrf.mxu0
        %1139 = vmatprep.mubr.bf16.mxu0 0
        %1140 = vmatmul.mubr.bf16.gmra.mxu0 %v802
        %v1141 = vpop.f32.mrf.mxu0
        %v1142 = vadd.f32 %v725, %v1141
        %v1143 = vpop.f32.mrf.mxu0
        %v1144 = vpop.f32.mrf.mxu0
        %v1145 = vadd.f32 %v725, %v1144
        %v1146 = vpop.f32.mrf.mxu0
        %1147 = vmatprep.mubr.bf16.mxu0 0
        %1148 = vmatmul.mubr.bf16.gmra.mxu0 %v805
        %v1149 = vpop.f32.mrf.mxu0
        %v1150 = vadd.f32 %v725, %v1149
        %v1151 = vpop.f32.mrf.mxu0
        %v1152 = vpop.f32.mrf.mxu0
        %v1153 = vadd.f32 %v725, %v1152
        %v1154 = vpop.f32.mrf.mxu0
        %1155 = vmatprep.mubr.bf16.mxu0 0
        %1156 = vmatmul.mubr.bf16.gmra.mxu0 %v808
        %v1157 = vpop.f32.mrf.mxu0
        %v1158 = vadd.f32 %v725, %v1157
        %v1159 = vpop.f32.mrf.mxu0
        %v1160 = vpop.f32.mrf.mxu0
        %v1161 = vadd.f32 %v725, %v1160
        %v1162 = vpop.f32.mrf.mxu0
        %1163 = vdwg.mxu0
        %v1164 = vpack.c.bf16 %v849, %v845
        %v1165 = vpack.c.bf16 %v859, %v855
        %v1166 = vpack.c.bf16 %v869, %v865
        %v1167 = vpack.c.bf16 %v879, %v875
        %v1168 = vpack.c.bf16 %v889, %v885
        %v1169 = vpack.c.bf16 %v899, %v895
        %v1170 = vpack.c.bf16 %v909, %v905
        %v1171 = vpack.c.bf16 %v919, %v915
        %v1172 = vpack.c.bf16 %v929, %v925
        %v1173 = vpack.c.bf16 %v939, %v935
        %v1174 = vpack.c.bf16 %v949, %v945
        %v1175 = vpack.c.bf16 %v959, %v955
        %v1176 = vpack.c.bf16 %v969, %v965
        %v1177 = vpack.c.bf16 %v979, %v975
        %v1178 = vpack.c.bf16 %v989, %v985
        %v1179 = vpack.c.bf16 %v999, %v995
        %v1180 = vpack.c.bf16 %v851, %v847
        %v1181 = vpack.c.bf16 %v861, %v857
        %v1182 = vpack.c.bf16 %v871, %v867
        %v1183 = vpack.c.bf16 %v881, %v877
        %v1184 = vpack.c.bf16 %v891, %v887
        %v1185 = vpack.c.bf16 %v901, %v897
        %v1186 = vpack.c.bf16 %v911, %v907
        %v1187 = vpack.c.bf16 %v921, %v917
        %v1188 = vpack.c.bf16 %v931, %v927
        %v1189 = vpack.c.bf16 %v941, %v937
        %v1190 = vpack.c.bf16 %v951, %v947
        %v1191 = vpack.c.bf16 %v961, %v957
        %v1192 = vpack.c.bf16 %v971, %v967
        %v1193 = vpack.c.bf16 %v981, %v977
        %v1194 = vpack.c.bf16 %v991, %v987
        %v1195 = vpack.c.bf16 %v1001, %v997
        %v1196 = vpack.c.bf16 %v1041, %v1038
        %v1197 = vpack.c.bf16 %v1049, %v1046
        %v1198 = vpack.c.bf16 %v1057, %v1054
        %v1199 = vpack.c.bf16 %v1065, %v1062
        %v1200 = vpack.c.bf16 %v1073, %v1070
        %v1201 = vpack.c.bf16 %v1081, %v1078
        %v1202 = vpack.c.bf16 %v1089, %v1086
        %v1203 = vpack.c.bf16 %v1097, %v1094
        %v1204 = vpack.c.bf16 %v1105, %v1102
        %v1205 = vpack.c.bf16 %v1113, %v1110
        %v1206 = vpack.c.bf16 %v1121, %v1118
        %v1207 = vpack.c.bf16 %v1129, %v1126
        %v1208 = vpack.c.bf16 %v1137, %v1134
        %v1209 = vpack.c.bf16 %v1145, %v1142
        %v1210 = vpack.c.bf16 %v1153, %v1150
        %v1211 = vpack.c.bf16 %v1161, %v1158
        %v1212 = vlaneseq
        %v1213 = vshrl.u32 %v1212, 7
        %v1214 = vadd.s32 %v1213, 8
        %v1215 = vadd.s32 %v1213, 16
        %v1216 = vadd.s32 %v1213, 24
        %v1217 = vadd.s32 %v1213, 32
        %v1218 = vadd.s32 %v1213, 40
        %v1219 = vadd.s32 %v1213, 48
        %v1220 = vadd.s32 %v1213, 56
        %v1221 = vadd.s32 %v1213, 64
        %v1222 = vadd.s32 %v1213, 72
        %v1223 = vadd.s32 %v1213, 80
        %v1224 = vadd.s32 %v1213, 88
        %v1225 = vadd.s32 %v1213, 96
        %v1226 = vadd.s32 %v1213, 104
        %v1227 = vadd.s32 %v1213, 112
        %v1228 = vadd.s32 %v1213, 120
        %v1229 = vadd.s32 %v1213, 128
        %v1230 = vadd.s32 %v1213, 136
        %v1231 = vadd.s32 %v1213, 144
        %v1232 = vadd.s32 %v1213, 152
        %v1233 = vadd.s32 %v1213, 160
        %v1234 = vadd.s32 %v1213, 168
        %v1235 = vadd.s32 %v1213, 176
        %v1236 = vadd.s32 %v1213, 184
        %v1237 = vadd.s32 %v1213, 192
        %v1238 = vadd.s32 %v1213, 200
        %v1239 = vadd.s32 %v1213, 208
        %v1240 = vadd.s32 %v1213, 216
        %v1241 = vadd.s32 %v1213, 224
        %v1242 = vadd.s32 %v1213, 232
        %v1243 = vadd.s32 %v1213, 240
        %v1244 = vadd.s32 %v1213, 248
        %vm1245 = vcmp.lt.s32.totalorder %v1213, 0
        %v1246 = vsub.s32 0, %v1213
        %v1247 = vsel %vm1245, %v1246, %v1213
        %v1248 = vshrl.u32 %v1247, 5
        %v1249 = vand.u32 %v1247, 31
        %v1250 = vsub.s32 0, %v1249
        %v1251 = vsel %vm1245, %v1250, %v1249
        %vm1252 = vcmp.lt.s32.totalorder %v1214, 0
        %v1253 = vsub.s32 0, %v1214
        %v1254 = vsel %vm1252, %v1253, %v1214
        %v1255 = vshrl.u32 %v1254, 5
        %v1256 = vand.u32 %v1254, 31
        %v1257 = vsub.s32 0, %v1256
        %v1258 = vsel %vm1252, %v1257, %v1256
        %vm1259 = vcmp.lt.s32.totalorder %v1215, 0
        %v1260 = vsub.s32 0, %v1215
        %v1261 = vsel %vm1259, %v1260, %v1215
        %v1262 = vshrl.u32 %v1261, 5
        %v1263 = vand.u32 %v1261, 31
        %v1264 = vsub.s32 0, %v1263
        %v1265 = vsel %vm1259, %v1264, %v1263
        %vm1266 = vcmp.lt.s32.totalorder %v1216, 0
        %v1267 = vsub.s32 0, %v1216
        %v1268 = vsel %vm1266, %v1267, %v1216
        %v1269 = vshrl.u32 %v1268, 5
        %v1270 = vand.u32 %v1268, 31
        %v1271 = vsub.s32 0, %v1270
        %v1272 = vsel %vm1266, %v1271, %v1270
        %vm1273 = vcmp.lt.s32.totalorder %v1217, 0
        %v1274 = vsub.s32 0, %v1217
        %v1275 = vsel %vm1273, %v1274, %v1217
        %v1276 = vshrl.u32 %v1275, 5
        %v1277 = vand.u32 %v1275, 31
        %v1278 = vsub.s32 0, %v1277
        %v1279 = vsel %vm1273, %v1278, %v1277
        %vm1280 = vcmp.lt.s32.totalorder %v1218, 0
        %v1281 = vsub.s32 0, %v1218
        %v1282 = vsel %vm1280, %v1281, %v1218
        %v1283 = vshrl.u32 %v1282, 5
        %v1284 = vand.u32 %v1282, 31
        %v1285 = vsub.s32 0, %v1284
        %v1286 = vsel %vm1280, %v1285, %v1284
        %vm1287 = vcmp.lt.s32.totalorder %v1219, 0
        %v1288 = vsub.s32 0, %v1219
        %v1289 = vsel %vm1287, %v1288, %v1219
        %v1290 = vshrl.u32 %v1289, 5
        %v1291 = vand.u32 %v1289, 31
        %v1292 = vsub.s32 0, %v1291
        %v1293 = vsel %vm1287, %v1292, %v1291
        %vm1294 = vcmp.lt.s32.totalorder %v1220, 0
        %v1295 = vsub.s32 0, %v1220
        %v1296 = vsel %vm1294, %v1295, %v1220
        %v1297 = vshrl.u32 %v1296, 5
        %v1298 = vand.u32 %v1296, 31
        %v1299 = vsub.s32 0, %v1298
        %v1300 = vsel %vm1294, %v1299, %v1298
        %vm1301 = vcmp.lt.s32.totalorder %v1221, 0
        %v1302 = vsub.s32 0, %v1221
        %v1303 = vsel %vm1301, %v1302, %v1221
        %v1304 = vshrl.u32 %v1303, 5
        %v1305 = vand.u32 %v1303, 31
        %v1306 = vsub.s32 0, %v1305
        %v1307 = vsel %vm1301, %v1306, %v1305
        %vm1308 = vcmp.lt.s32.totalorder %v1222, 0
        %v1309 = vsub.s32 0, %v1222
        %v1310 = vsel %vm1308, %v1309, %v1222
        %v1311 = vshrl.u32 %v1310, 5
        %v1312 = vand.u32 %v1310, 31
        %v1313 = vsub.s32 0, %v1312
        %v1314 = vsel %vm1308, %v1313, %v1312
        %vm1315 = vcmp.lt.s32.totalorder %v1223, 0
        %v1316 = vsub.s32 0, %v1223
        %v1317 = vsel %vm1315, %v1316, %v1223
        %v1318 = vshrl.u32 %v1317, 5
        %v1319 = vand.u32 %v1317, 31
        %v1320 = vsub.s32 0, %v1319
        %v1321 = vsel %vm1315, %v1320, %v1319
        %vm1322 = vcmp.lt.s32.totalorder %v1224, 0
        %v1323 = vsub.s32 0, %v1224
        %v1324 = vsel %vm1322, %v1323, %v1224
        %v1325 = vshrl.u32 %v1324, 5
        %v1326 = vand.u32 %v1324, 31
        %v1327 = vsub.s32 0, %v1326
        %v1328 = vsel %vm1322, %v1327, %v1326
        %vm1329 = vcmp.lt.s32.totalorder %v1225, 0
        %v1330 = vsub.s32 0, %v1225
        %v1331 = vsel %vm1329, %v1330, %v1225
        %v1332 = vshrl.u32 %v1331, 5
        %v1333 = vand.u32 %v1331, 31
        %v1334 = vsub.s32 0, %v1333
        %v1335 = vsel %vm1329, %v1334, %v1333
        %vm1336 = vcmp.lt.s32.totalorder %v1226, 0
        %v1337 = vsub.s32 0, %v1226
        %v1338 = vsel %vm1336, %v1337, %v1226
        %v1339 = vshrl.u32 %v1338, 5
        %v1340 = vand.u32 %v1338, 31
        %v1341 = vsub.s32 0, %v1340
        %v1342 = vsel %vm1336, %v1341, %v1340
        %vm1343 = vcmp.lt.s32.totalorder %v1227, 0
        %v1344 = vsub.s32 0, %v1227
        %v1345 = vsel %vm1343, %v1344, %v1227
        %v1346 = vshrl.u32 %v1345, 5
        %v1347 = vand.u32 %v1345, 31
        %v1348 = vsub.s32 0, %v1347
        %v1349 = vsel %vm1343, %v1348, %v1347
        %vm1350 = vcmp.lt.s32.totalorder %v1228, 0
        %v1351 = vsub.s32 0, %v1228
        %v1352 = vsel %vm1350, %v1351, %v1228
        %v1353 = vshrl.u32 %v1352, 5
        %v1354 = vand.u32 %v1352, 31
        %v1355 = vsub.s32 0, %v1354
        %v1356 = vsel %vm1350, %v1355, %v1354
        %vm1357 = vcmp.lt.s32.totalorder %v1229, 0
        %v1358 = vsub.s32 0, %v1229
        %v1359 = vsel %vm1357, %v1358, %v1229
        %v1360 = vshrl.u32 %v1359, 5
        %v1361 = vand.u32 %v1359, 31
        %v1362 = vsub.s32 0, %v1361
        %v1363 = vsel %vm1357, %v1362, %v1361
        %vm1364 = vcmp.lt.s32.totalorder %v1230, 0
        %v1365 = vsub.s32 0, %v1230
        %v1366 = vsel %vm1364, %v1365, %v1230
        %v1367 = vshrl.u32 %v1366, 5
        %v1368 = vand.u32 %v1366, 31
        %v1369 = vsub.s32 0, %v1368
        %v1370 = vsel %vm1364, %v1369, %v1368
        %vm1371 = vcmp.lt.s32.totalorder %v1231, 0
        %v1372 = vsub.s32 0, %v1231
        %v1373 = vsel %vm1371, %v1372, %v1231
        %v1374 = vshrl.u32 %v1373, 5
        %v1375 = vand.u32 %v1373, 31
        %v1376 = vsub.s32 0, %v1375
        %v1377 = vsel %vm1371, %v1376, %v1375
        %vm1378 = vcmp.lt.s32.totalorder %v1232, 0
        %v1379 = vsub.s32 0, %v1232
        %v1380 = vsel %vm1378, %v1379, %v1232
        %v1381 = vshrl.u32 %v1380, 5
        %v1382 = vand.u32 %v1380, 31
        %v1383 = vsub.s32 0, %v1382
        %v1384 = vsel %vm1378, %v1383, %v1382
        %vm1385 = vcmp.lt.s32.totalorder %v1233, 0
        %v1386 = vsub.s32 0, %v1233
        %v1387 = vsel %vm1385, %v1386, %v1233
        %v1388 = vshrl.u32 %v1387, 5
        %v1389 = vand.u32 %v1387, 31
        %v1390 = vsub.s32 0, %v1389
        %v1391 = vsel %vm1385, %v1390, %v1389
        %vm1392 = vcmp.lt.s32.totalorder %v1234, 0
        %v1393 = vsub.s32 0, %v1234
        %v1394 = vsel %vm1392, %v1393, %v1234
        %v1395 = vshrl.u32 %v1394, 5
        %v1396 = vand.u32 %v1394, 31
        %v1397 = vsub.s32 0, %v1396
        %v1398 = vsel %vm1392, %v1397, %v1396
        %vm1399 = vcmp.lt.s32.totalorder %v1235, 0
        %v1400 = vsub.s32 0, %v1235
        %v1401 = vsel %vm1399, %v1400, %v1235
        %v1402 = vshrl.u32 %v1401, 5
        %v1403 = vand.u32 %v1401, 31
        %v1404 = vsub.s32 0, %v1403
        %v1405 = vsel %vm1399, %v1404, %v1403
        %vm1406 = vcmp.lt.s32.totalorder %v1236, 0
        %v1407 = vsub.s32 0, %v1236
        %v1408 = vsel %vm1406, %v1407, %v1236
        %v1409 = vshrl.u32 %v1408, 5
        %v1410 = vand.u32 %v1408, 31
        %v1411 = vsub.s32 0, %v1410
        %v1412 = vsel %vm1406, %v1411, %v1410
        %vm1413 = vcmp.lt.s32.totalorder %v1237, 0
        %v1414 = vsub.s32 0, %v1237
        %v1415 = vsel %vm1413, %v1414, %v1237
        %v1416 = vshrl.u32 %v1415, 5
        %v1417 = vand.u32 %v1415, 31
        %v1418 = vsub.s32 0, %v1417
        %v1419 = vsel %vm1413, %v1418, %v1417
        %vm1420 = vcmp.lt.s32.totalorder %v1238, 0
        %v1421 = vsub.s32 0, %v1238
        %v1422 = vsel %vm1420, %v1421, %v1238
        %v1423 = vshrl.u32 %v1422, 5
        %v1424 = vand.u32 %v1422, 31
        %v1425 = vsub.s32 0, %v1424
        %v1426 = vsel %vm1420, %v1425, %v1424
        %vm1427 = vcmp.lt.s32.totalorder %v1239, 0
        %v1428 = vsub.s32 0, %v1239
        %v1429 = vsel %vm1427, %v1428, %v1239
        %v1430 = vshrl.u32 %v1429, 5
        %v1431 = vand.u32 %v1429, 31
        %v1432 = vsub.s32 0, %v1431
        %v1433 = vsel %vm1427, %v1432, %v1431
        %vm1434 = vcmp.lt.s32.totalorder %v1240, 0
        %v1435 = vsub.s32 0, %v1240
        %v1436 = vsel %vm1434, %v1435, %v1240
        %v1437 = vshrl.u32 %v1436, 5
        %v1438 = vand.u32 %v1436, 31
        %v1439 = vsub.s32 0, %v1438
        %v1440 = vsel %vm1434, %v1439, %v1438
        %vm1441 = vcmp.lt.s32.totalorder %v1241, 0
        %v1442 = vsub.s32 0, %v1241
        %v1443 = vsel %vm1441, %v1442, %v1241
        %v1444 = vshrl.u32 %v1443, 5
        %v1445 = vand.u32 %v1443, 31
        %v1446 = vsub.s32 0, %v1445
        %v1447 = vsel %vm1441, %v1446, %v1445
        %vm1448 = vcmp.lt.s32.totalorder %v1242, 0
        %v1449 = vsub.s32 0, %v1242
        %v1450 = vsel %vm1448, %v1449, %v1242
        %v1451 = vshrl.u32 %v1450, 5
        %v1452 = vand.u32 %v1450, 31
        %v1453 = vsub.s32 0, %v1452
        %v1454 = vsel %vm1448, %v1453, %v1452
        %vm1455 = vcmp.lt.s32.totalorder %v1243, 0
        %v1456 = vsub.s32 0, %v1243
        %v1457 = vsel %vm1455, %v1456, %v1243
        %v1458 = vshrl.u32 %v1457, 5
        %v1459 = vand.u32 %v1457, 31
        %v1460 = vsub.s32 0, %v1459
        %v1461 = vsel %vm1455, %v1460, %v1459
        %vm1462 = vcmp.lt.s32.totalorder %v1244, 0
        %v1463 = vsub.s32 0, %v1244
        %v1464 = vsel %vm1462, %v1463, %v1244
        %v1465 = vshrl.u32 %v1464, 5
        %v1466 = vand.u32 %v1464, 31
        %v1467 = vsub.s32 0, %v1466
        %v1468 = vsel %vm1462, %v1467, %v1466
        %vm1469 = vcmp.ne.s32.totalorder %v1251, 0
        %vm1470 = vcmp.ne.s32.totalorder %v1258, 0
        %vm1471 = vcmp.ne.s32.totalorder %v1265, 0
        %vm1472 = vcmp.ne.s32.totalorder %v1272, 0
        %vm1473 = vcmp.ne.s32.totalorder %v1279, 0
        %vm1474 = vcmp.ne.s32.totalorder %v1286, 0
        %vm1475 = vcmp.ne.s32.totalorder %v1293, 0
        %vm1476 = vcmp.ne.s32.totalorder %v1300, 0
        %vm1477 = vcmp.ne.s32.totalorder %v1307, 0
        %vm1478 = vcmp.ne.s32.totalorder %v1314, 0
        %vm1479 = vcmp.ne.s32.totalorder %v1321, 0
        %vm1480 = vcmp.ne.s32.totalorder %v1328, 0
        %vm1481 = vcmp.ne.s32.totalorder %v1335, 0
        %vm1482 = vcmp.ne.s32.totalorder %v1342, 0
        %vm1483 = vcmp.ne.s32.totalorder %v1349, 0
        %vm1484 = vcmp.ne.s32.totalorder %v1356, 0
        %vm1485 = vcmp.ne.s32.totalorder %v1363, 0
        %vm1486 = vcmp.ne.s32.totalorder %v1370, 0
        %vm1487 = vcmp.ne.s32.totalorder %v1377, 0
        %vm1488 = vcmp.ne.s32.totalorder %v1384, 0
        %vm1489 = vcmp.ne.s32.totalorder %v1391, 0
        %vm1490 = vcmp.ne.s32.totalorder %v1398, 0
        %vm1491 = vcmp.ne.s32.totalorder %v1405, 0
        %vm1492 = vcmp.ne.s32.totalorder %v1412, 0
        %vm1493 = vcmp.ne.s32.totalorder %v1419, 0
        %vm1494 = vcmp.ne.s32.totalorder %v1426, 0
        %vm1495 = vcmp.ne.s32.totalorder %v1433, 0
        %vm1496 = vcmp.ne.s32.totalorder %v1440, 0
        %vm1497 = vcmp.ne.s32.totalorder %v1447, 0
        %vm1498 = vcmp.ne.s32.totalorder %v1454, 0
        %vm1499 = vcmp.ne.s32.totalorder %v1461, 0
        %vm1500 = vcmp.ne.s32.totalorder %v1468, 0
        %vm1501 = vcmp.lt.s32.totalorder %v1251, 0
        %vm1502 = vcmp.lt.s32.totalorder %v1258, 0
        %vm1503 = vcmp.lt.s32.totalorder %v1265, 0
        %vm1504 = vcmp.lt.s32.totalorder %v1272, 0
        %vm1505 = vcmp.lt.s32.totalorder %v1279, 0
        %vm1506 = vcmp.lt.s32.totalorder %v1286, 0
        %vm1507 = vcmp.lt.s32.totalorder %v1293, 0
        %vm1508 = vcmp.lt.s32.totalorder %v1300, 0
        %vm1509 = vcmp.lt.s32.totalorder %v1307, 0
        %vm1510 = vcmp.lt.s32.totalorder %v1314, 0
        %vm1511 = vcmp.lt.s32.totalorder %v1321, 0
        %vm1512 = vcmp.lt.s32.totalorder %v1328, 0
        %vm1513 = vcmp.lt.s32.totalorder %v1335, 0
        %vm1514 = vcmp.lt.s32.totalorder %v1342, 0
        %vm1515 = vcmp.lt.s32.totalorder %v1349, 0
        %vm1516 = vcmp.lt.s32.totalorder %v1356, 0
        %vm1517 = vcmp.lt.s32.totalorder %v1363, 0
        %vm1518 = vcmp.lt.s32.totalorder %v1370, 0
        %vm1519 = vcmp.lt.s32.totalorder %v1377, 0
        %vm1520 = vcmp.lt.s32.totalorder %v1384, 0
        %vm1521 = vcmp.lt.s32.totalorder %v1391, 0
        %vm1522 = vcmp.lt.s32.totalorder %v1398, 0
        %vm1523 = vcmp.lt.s32.totalorder %v1405, 0
        %vm1524 = vcmp.lt.s32.totalorder %v1412, 0
        %vm1525 = vcmp.lt.s32.totalorder %v1419, 0
        %vm1526 = vcmp.lt.s32.totalorder %v1426, 0
        %vm1527 = vcmp.lt.s32.totalorder %v1433, 0
        %vm1528 = vcmp.lt.s32.totalorder %v1440, 0
        %vm1529 = vcmp.lt.s32.totalorder %v1447, 0
        %vm1530 = vcmp.lt.s32.totalorder %v1454, 0
        %vm1531 = vcmp.lt.s32.totalorder %v1461, 0
        %vm1532 = vcmp.lt.s32.totalorder %v1468, 0
        %vm1533 = vmand %vm1501, %vm1469
        %vm1534 = vmand %vm1502, %vm1470
        %vm1535 = vmand %vm1503, %vm1471
        %vm1536 = vmand %vm1504, %vm1472
        %vm1537 = vmand %vm1505, %vm1473
        %vm1538 = vmand %vm1506, %vm1474
        %vm1539 = vmand %vm1507, %vm1475
        %vm1540 = vmand %vm1508, %vm1476
        %vm1541 = vmand %vm1509, %vm1477
        %vm1542 = vmand %vm1510, %vm1478
        %vm1543 = vmand %vm1511, %vm1479
        %vm1544 = vmand %vm1512, %vm1480
        %vm1545 = vmand %vm1513, %vm1481
        %vm1546 = vmand %vm1514, %vm1482
        %vm1547 = vmand %vm1515, %vm1483
        %vm1548 = vmand %vm1516, %vm1484
        %vm1549 = vmand %vm1517, %vm1485
        %vm1550 = vmand %vm1518, %vm1486
        %vm1551 = vmand %vm1519, %vm1487
        %vm1552 = vmand %vm1520, %vm1488
        %vm1553 = vmand %vm1521, %vm1489
        %vm1554 = vmand %vm1522, %vm1490
        %vm1555 = vmand %vm1523, %vm1491
        %vm1556 = vmand %vm1524, %vm1492
        %vm1557 = vmand %vm1525, %vm1493
        %vm1558 = vmand %vm1526, %vm1494
        %vm1559 = vmand %vm1527, %vm1495
        %vm1560 = vmand %vm1528, %vm1496
        %vm1561 = vmand %vm1529, %vm1497
        %vm1562 = vmand %vm1530, %vm1498
        %vm1563 = vmand %vm1531, %vm1499
        %vm1564 = vmand %vm1532, %vm1500
        %v1565 = vadd.s32 %v1251, 32
        %v1566 = vadd.s32 %v1258, 32
        %v1567 = vadd.s32 %v1265, 32
        %v1568 = vadd.s32 %v1272, 32
        %v1569 = vadd.s32 %v1279, 32
        %v1570 = vadd.s32 %v1286, 32
        %v1571 = vadd.s32 %v1293, 32
        %v1572 = vadd.s32 %v1300, 32
        %v1573 = vadd.s32 %v1307, 32
        %v1574 = vadd.s32 %v1314, 32
        %v1575 = vadd.s32 %v1321, 32
        %v1576 = vadd.s32 %v1328, 32
        %v1577 = vadd.s32 %v1335, 32
        %v1578 = vadd.s32 %v1342, 32
        %v1579 = vadd.s32 %v1349, 32
        %v1580 = vadd.s32 %v1356, 32
        %v1581 = vadd.s32 %v1363, 32
        %v1582 = vadd.s32 %v1370, 32
        %v1583 = vadd.s32 %v1377, 32
        %v1584 = vadd.s32 %v1384, 32
        %v1585 = vadd.s32 %v1391, 32
        %v1586 = vadd.s32 %v1398, 32
        %v1587 = vadd.s32 %v1405, 32
        %v1588 = vadd.s32 %v1412, 32
        %v1589 = vadd.s32 %v1419, 32
        %v1590 = vadd.s32 %v1426, 32
        %v1591 = vadd.s32 %v1433, 32
        %v1592 = vadd.s32 %v1440, 32
        %v1593 = vadd.s32 %v1447, 32
        %v1594 = vadd.s32 %v1454, 32
        %v1595 = vadd.s32 %v1461, 32
        %v1596 = vadd.s32 %v1468, 32
        %v1597 = vsel %vm1533, %v1565, %v1251
        %v1598 = vsel %vm1534, %v1566, %v1258
        %v1599 = vsel %vm1535, %v1567, %v1265
        %v1600 = vsel %vm1536, %v1568, %v1272
        %v1601 = vsel %vm1537, %v1569, %v1279
        %v1602 = vsel %vm1538, %v1570, %v1286
        %v1603 = vsel %vm1539, %v1571, %v1293
        %v1604 = vsel %vm1540, %v1572, %v1300
        %v1605 = vsel %vm1541, %v1573, %v1307
        %v1606 = vsel %vm1542, %v1574, %v1314
        %v1607 = vsel %vm1543, %v1575, %v1321
        %v1608 = vsel %vm1544, %v1576, %v1328
        %v1609 = vsel %vm1545, %v1577, %v1335
        %v1610 = vsel %vm1546, %v1578, %v1342
        %v1611 = vsel %vm1547, %v1579, %v1349
        %v1612 = vsel %vm1548, %v1580, %v1356
        %v1613 = vsel %vm1549, %v1581, %v1363
        %v1614 = vsel %vm1550, %v1582, %v1370
        %v1615 = vsel %vm1551, %v1583, %v1377
        %v1616 = vsel %vm1552, %v1584, %v1384
        %v1617 = vsel %vm1553, %v1585, %v1391
        %v1618 = vsel %vm1554, %v1586, %v1398
        %v1619 = vsel %vm1555, %v1587, %v1405
        %v1620 = vsel %vm1556, %v1588, %v1412
        %v1621 = vsel %vm1557, %v1589, %v1419
        %v1622 = vsel %vm1558, %v1590, %v1426
        %v1623 = vsel %vm1559, %v1591, %v1433
        %v1624 = vsel %vm1560, %v1592, %v1440
        %v1625 = vsel %vm1561, %v1593, %v1447
        %v1626 = vsel %vm1562, %v1594, %v1454
        %v1627 = vsel %vm1563, %v1595, %v1461
        %v1628 = vsel %vm1564, %v1596, %v1468
        %v1629 = vlaneseq
        %v1630 = vand.u32 %v1629, 127
        %v1631 = vadd.s32 %v1630, 128
        %vm1632 = vcmp.lt.s32.totalorder %v1630, 0
        %v1633 = vsub.s32 0, %v1630
        %v1634 = vsel %vm1632, %v1633, %v1630
        %v1635 = vshrl.u32 %v1634, 5
        %v1636 = vand.u32 %v1634, 31
        %v1637 = vsub.s32 0, %v1636
        %v1638 = vsel %vm1632, %v1637, %v1636
        %vm1639 = vcmp.lt.s32.totalorder %v1631, 0
        %v1640 = vsub.s32 0, %v1631
        %v1641 = vsel %vm1639, %v1640, %v1631
        %v1642 = vshrl.u32 %v1641, 5
        %v1643 = vand.u32 %v1641, 31
        %v1644 = vsub.s32 0, %v1643
        %v1645 = vsel %vm1639, %v1644, %v1643
        %vm1646 = vcmp.ne.s32.totalorder %v1638, 0
        %vm1647 = vcmp.ne.s32.totalorder %v1645, 0
        %vm1648 = vcmp.lt.s32.totalorder %v1638, 0
        %vm1649 = vcmp.lt.s32.totalorder %v1645, 0
        %vm1650 = vmand %vm1648, %vm1646
        %vm1651 = vmand %vm1649, %vm1647
        %v1652 = vadd.s32 %v1638, 32
        %v1653 = vadd.s32 %v1645, 32
        %v1654 = vsel %vm1650, %v1652, %v1638
        %v1655 = vsel %vm1651, %v1653, %v1645
        %vm1656 = vcmp.eq.s32.totalorder %v1597, %v1654
        %vm1657 = vcmp.eq.s32.totalorder %v1597, %v1655
        %vm1658 = vcmp.eq.s32.totalorder %v1598, %v1654
        %vm1659 = vcmp.eq.s32.totalorder %v1598, %v1655
        %vm1660 = vcmp.eq.s32.totalorder %v1599, %v1654
        %vm1661 = vcmp.eq.s32.totalorder %v1599, %v1655
        %vm1662 = vcmp.eq.s32.totalorder %v1600, %v1654
        %vm1663 = vcmp.eq.s32.totalorder %v1600, %v1655
        %vm1664 = vcmp.eq.s32.totalorder %v1601, %v1654
        %vm1665 = vcmp.eq.s32.totalorder %v1601, %v1655
        %vm1666 = vcmp.eq.s32.totalorder %v1602, %v1654
        %vm1667 = vcmp.eq.s32.totalorder %v1602, %v1655
        %vm1668 = vcmp.eq.s32.totalorder %v1603, %v1654
        %vm1669 = vcmp.eq.s32.totalorder %v1603, %v1655
        %vm1670 = vcmp.eq.s32.totalorder %v1604, %v1654
        %vm1671 = vcmp.eq.s32.totalorder %v1604, %v1655
        %vm1672 = vcmp.eq.s32.totalorder %v1605, %v1654
        %vm1673 = vcmp.eq.s32.totalorder %v1605, %v1655
        %vm1674 = vcmp.eq.s32.totalorder %v1606, %v1654
        %vm1675 = vcmp.eq.s32.totalorder %v1606, %v1655
        %vm1676 = vcmp.eq.s32.totalorder %v1607, %v1654
        %vm1677 = vcmp.eq.s32.totalorder %v1607, %v1655
        %vm1678 = vcmp.eq.s32.totalorder %v1608, %v1654
        %vm1679 = vcmp.eq.s32.totalorder %v1608, %v1655
        %vm1680 = vcmp.eq.s32.totalorder %v1609, %v1654
        %vm1681 = vcmp.eq.s32.totalorder %v1609, %v1655
        %vm1682 = vcmp.eq.s32.totalorder %v1610, %v1654
        %vm1683 = vcmp.eq.s32.totalorder %v1610, %v1655
        %vm1684 = vcmp.eq.s32.totalorder %v1611, %v1654
        %vm1685 = vcmp.eq.s32.totalorder %v1611, %v1655
        %vm1686 = vcmp.eq.s32.totalorder %v1612, %v1654
        %vm1687 = vcmp.eq.s32.totalorder %v1612, %v1655
        %vm1688 = vcmp.eq.s32.totalorder %v1613, %v1654
        %vm1689 = vcmp.eq.s32.totalorder %v1613, %v1655
        %vm1690 = vcmp.eq.s32.totalorder %v1614, %v1654
        %vm1691 = vcmp.eq.s32.totalorder %v1614, %v1655
        %vm1692 = vcmp.eq.s32.totalorder %v1615, %v1654
        %vm1693 = vcmp.eq.s32.totalorder %v1615, %v1655
        %vm1694 = vcmp.eq.s32.totalorder %v1616, %v1654
        %vm1695 = vcmp.eq.s32.totalorder %v1616, %v1655
        %vm1696 = vcmp.eq.s32.totalorder %v1617, %v1654
        %vm1697 = vcmp.eq.s32.totalorder %v1617, %v1655
        %vm1698 = vcmp.eq.s32.totalorder %v1618, %v1654
        %vm1699 = vcmp.eq.s32.totalorder %v1618, %v1655
        %vm1700 = vcmp.eq.s32.totalorder %v1619, %v1654
        %vm1701 = vcmp.eq.s32.totalorder %v1619, %v1655
        %vm1702 = vcmp.eq.s32.totalorder %v1620, %v1654
        %vm1703 = vcmp.eq.s32.totalorder %v1620, %v1655
        %vm1704 = vcmp.eq.s32.totalorder %v1621, %v1654
        %vm1705 = vcmp.eq.s32.totalorder %v1621, %v1655
        %vm1706 = vcmp.eq.s32.totalorder %v1622, %v1654
        %vm1707 = vcmp.eq.s32.totalorder %v1622, %v1655
        %vm1708 = vcmp.eq.s32.totalorder %v1623, %v1654
        %vm1709 = vcmp.eq.s32.totalorder %v1623, %v1655
        %vm1710 = vcmp.eq.s32.totalorder %v1624, %v1654
        %vm1711 = vcmp.eq.s32.totalorder %v1624, %v1655
        %vm1712 = vcmp.eq.s32.totalorder %v1625, %v1654
        %vm1713 = vcmp.eq.s32.totalorder %v1625, %v1655
        %vm1714 = vcmp.eq.s32.totalorder %v1626, %v1654
        %vm1715 = vcmp.eq.s32.totalorder %v1626, %v1655
        %vm1716 = vcmp.eq.s32.totalorder %v1627, %v1654
        %vm1717 = vcmp.eq.s32.totalorder %v1627, %v1655
        %vm1718 = vcmp.eq.s32.totalorder %v1628, %v1654
        %vm1719 = vcmp.eq.s32.totalorder %v1628, %v1655
        %v1720 = vsel %vm1656, 0.0, -1e+30
        %v1721 = vsel %vm1657, 0.0, -1e+30
        %v1722 = vsel %vm1658, 0.0, -1e+30
        %v1723 = vsel %vm1659, 0.0, -1e+30
        %v1724 = vsel %vm1660, 0.0, -1e+30
        %v1725 = vsel %vm1661, 0.0, -1e+30
        %v1726 = vsel %vm1662, 0.0, -1e+30
        %v1727 = vsel %vm1663, 0.0, -1e+30
        %v1728 = vsel %vm1664, 0.0, -1e+30
        %v1729 = vsel %vm1665, 0.0, -1e+30
        %v1730 = vsel %vm1666, 0.0, -1e+30
        %v1731 = vsel %vm1667, 0.0, -1e+30
        %v1732 = vsel %vm1668, 0.0, -1e+30
        %v1733 = vsel %vm1669, 0.0, -1e+30
        %v1734 = vsel %vm1670, 0.0, -1e+30
        %v1735 = vsel %vm1671, 0.0, -1e+30
        %v1736 = vsel %vm1672, 0.0, -1e+30
        %v1737 = vsel %vm1673, 0.0, -1e+30
        %v1738 = vsel %vm1674, 0.0, -1e+30
        %v1739 = vsel %vm1675, 0.0, -1e+30
        %v1740 = vsel %vm1676, 0.0, -1e+30
        %v1741 = vsel %vm1677, 0.0, -1e+30
        %v1742 = vsel %vm1678, 0.0, -1e+30
        %v1743 = vsel %vm1679, 0.0, -1e+30
        %v1744 = vsel %vm1680, 0.0, -1e+30
        %v1745 = vsel %vm1681, 0.0, -1e+30
        %v1746 = vsel %vm1682, 0.0, -1e+30
        %v1747 = vsel %vm1683, 0.0, -1e+30
        %v1748 = vsel %vm1684, 0.0, -1e+30
        %v1749 = vsel %vm1685, 0.0, -1e+30
        %v1750 = vsel %vm1686, 0.0, -1e+30
        %v1751 = vsel %vm1687, 0.0, -1e+30
        %v1752 = vsel %vm1688, 0.0, -1e+30
        %v1753 = vsel %vm1689, 0.0, -1e+30
        %v1754 = vsel %vm1690, 0.0, -1e+30
        %v1755 = vsel %vm1691, 0.0, -1e+30
        %v1756 = vsel %vm1692, 0.0, -1e+30
        %v1757 = vsel %vm1693, 0.0, -1e+30
        %v1758 = vsel %vm1694, 0.0, -1e+30
        %v1759 = vsel %vm1695, 0.0, -1e+30
        %v1760 = vsel %vm1696, 0.0, -1e+30
        %v1761 = vsel %vm1697, 0.0, -1e+30
        %v1762 = vsel %vm1698, 0.0, -1e+30
        %v1763 = vsel %vm1699, 0.0, -1e+30
        %v1764 = vsel %vm1700, 0.0, -1e+30
        %v1765 = vsel %vm1701, 0.0, -1e+30
        %v1766 = vsel %vm1702, 0.0, -1e+30
        %v1767 = vsel %vm1703, 0.0, -1e+30
        %v1768 = vsel %vm1704, 0.0, -1e+30
        %v1769 = vsel %vm1705, 0.0, -1e+30
        %v1770 = vsel %vm1706, 0.0, -1e+30
        %v1771 = vsel %vm1707, 0.0, -1e+30
        %v1772 = vsel %vm1708, 0.0, -1e+30
        %v1773 = vsel %vm1709, 0.0, -1e+30
        %v1774 = vsel %vm1710, 0.0, -1e+30
        %v1775 = vsel %vm1711, 0.0, -1e+30
        %v1776 = vsel %vm1712, 0.0, -1e+30
        %v1777 = vsel %vm1713, 0.0, -1e+30
        %v1778 = vsel %vm1714, 0.0, -1e+30
        %v1779 = vsel %vm1715, 0.0, -1e+30
        %v1780 = vsel %vm1716, 0.0, -1e+30
        %v1781 = vsel %vm1717, 0.0, -1e+30
        %v1782 = vsel %vm1718, 0.0, -1e+30
        %v1783 = vsel %vm1719, 0.0, -1e+30
        %1784 = vmatprep.subr.bf16.mxu0 0
        %1785 = vmatpush1.bf16.xpose.msra.mxu0 %v1187
        %1786 = vmatprep.subr.bf16.mxu0 0
        %1787 = vmatpush1.bf16.xpose.msra.mxu0 %v1186
        %1788 = vmatprep.subr.bf16.mxu0 0
        %1789 = vmatpush1.bf16.xpose.msra.mxu0 %v1185
        %1790 = vmatprep.subr.bf16.mxu0 0
        %1791 = vmatpush1.bf16.xpose.msra.mxu0 %v1184
        %1792 = vmatprep.subr.bf16.mxu0 0
        %1793 = vmatpush1.bf16.xpose.msra.mxu0 %v1183
        %1794 = vmatprep.subr.bf16.mxu0 0
        %1795 = vmatpush1.bf16.xpose.msra.mxu0 %v1182
        %1796 = vmatprep.subr.bf16.mxu0 0
        %1797 = vmatpush1.bf16.xpose.msra.mxu0 %v1181
        %1798 = vmatprep.subr.bf16.mxu0 0
        %1799 = vmatpush1.bf16.xpose.msra.mxu0 %v1180
        %1800 = vmatprep.subr.bf16.mxu0 0
        %1801 = vmatpush2.bf16.xpose.msra.mxu0 %v1195
        %1802 = vmatprep.subr.bf16.mxu0 0
        %1803 = vmatpush2.bf16.xpose.msra.mxu0 %v1194
        %1804 = vmatprep.subr.bf16.mxu0 0
        %1805 = vmatpush2.bf16.xpose.msra.mxu0 %v1193
        %1806 = vmatprep.subr.bf16.mxu0 0
        %1807 = vmatpush2.bf16.xpose.msra.mxu0 %v1192
        %1808 = vmatprep.subr.bf16.mxu0 0
        %1809 = vmatpush2.bf16.xpose.msra.mxu0 %v1191
        %1810 = vmatprep.subr.bf16.mxu0 0
        %1811 = vmatpush2.bf16.xpose.msra.mxu0 %v1190
        %1812 = vmatprep.subr.bf16.mxu0 0
        %1813 = vmatpush2.bf16.xpose.msra.mxu0 %v1189
        %1814 = vmatprep.subr.bf16.mxu0 0
        %1815 = vmatpush2.bf16.xpose.msra.mxu0 %v1188
        %1816 = vmatprep.mubr.bf16.mxu0 0
        %1817 = vmatmul.mubr.bf16.gmra.mxu0 %v1164
        %v1818 = vpop.f32.mrf.mxu0
        %v1819 = vadd.f32 0.0, %v1818
        %v1820 = vpop.f32.mrf.mxu0
        %v1821 = vadd.f32 0.0, %v1820
        %v1822 = vpop.f32.mrf.mxu0
        %v1823 = vadd.f32 0.0, %v1822
        %v1824 = vpop.f32.mrf.mxu0
        %v1825 = vadd.f32 0.0, %v1824
        %1826 = vmatprep.mubr.bf16.mxu0 0
        %1827 = vmatmul.mubr.bf16.gmra.mxu0 %v1165
        %v1828 = vpop.f32.mrf.mxu0
        %v1829 = vadd.f32 0.0, %v1828
        %v1830 = vpop.f32.mrf.mxu0
        %v1831 = vadd.f32 0.0, %v1830
        %v1832 = vpop.f32.mrf.mxu0
        %v1833 = vadd.f32 0.0, %v1832
        %v1834 = vpop.f32.mrf.mxu0
        %v1835 = vadd.f32 0.0, %v1834
        %1836 = vmatprep.mubr.bf16.mxu0 0
        %1837 = vmatmul.mubr.bf16.gmra.mxu0 %v1166
        %v1838 = vpop.f32.mrf.mxu0
        %v1839 = vadd.f32 0.0, %v1838
        %v1840 = vpop.f32.mrf.mxu0
        %v1841 = vadd.f32 0.0, %v1840
        %v1842 = vpop.f32.mrf.mxu0
        %v1843 = vadd.f32 0.0, %v1842
        %v1844 = vpop.f32.mrf.mxu0
        %v1845 = vadd.f32 0.0, %v1844
        %1846 = vmatprep.mubr.bf16.mxu0 0
        %1847 = vmatmul.mubr.bf16.gmra.mxu0 %v1167
        %v1848 = vpop.f32.mrf.mxu0
        %v1849 = vadd.f32 0.0, %v1848
        %v1850 = vpop.f32.mrf.mxu0
        %v1851 = vadd.f32 0.0, %v1850
        %v1852 = vpop.f32.mrf.mxu0
        %v1853 = vadd.f32 0.0, %v1852
        %v1854 = vpop.f32.mrf.mxu0
        %v1855 = vadd.f32 0.0, %v1854
        %1856 = vmatprep.mubr.bf16.mxu0 0
        %1857 = vmatmul.mubr.bf16.gmra.mxu0 %v1168
        %v1858 = vpop.f32.mrf.mxu0
        %v1859 = vadd.f32 0.0, %v1858
        %v1860 = vpop.f32.mrf.mxu0
        %v1861 = vadd.f32 0.0, %v1860
        %v1862 = vpop.f32.mrf.mxu0
        %v1863 = vadd.f32 0.0, %v1862
        %v1864 = vpop.f32.mrf.mxu0
        %v1865 = vadd.f32 0.0, %v1864
        %1866 = vmatprep.mubr.bf16.mxu0 0
        %1867 = vmatmul.mubr.bf16.gmra.mxu0 %v1169
        %v1868 = vpop.f32.mrf.mxu0
        %v1869 = vadd.f32 0.0, %v1868
        %v1870 = vpop.f32.mrf.mxu0
        %v1871 = vadd.f32 0.0, %v1870
        %v1872 = vpop.f32.mrf.mxu0
        %v1873 = vadd.f32 0.0, %v1872
        %v1874 = vpop.f32.mrf.mxu0
        %v1875 = vadd.f32 0.0, %v1874
        %1876 = vmatprep.mubr.bf16.mxu0 0
        %1877 = vmatmul.mubr.bf16.gmra.mxu0 %v1170
        %v1878 = vpop.f32.mrf.mxu0
        %v1879 = vadd.f32 0.0, %v1878
        %v1880 = vpop.f32.mrf.mxu0
        %v1881 = vadd.f32 0.0, %v1880
        %v1882 = vpop.f32.mrf.mxu0
        %v1883 = vadd.f32 0.0, %v1882
        %v1884 = vpop.f32.mrf.mxu0
        %v1885 = vadd.f32 0.0, %v1884
        %1886 = vmatprep.mubr.bf16.mxu0 0
        %1887 = vmatmul.mubr.bf16.gmra.mxu0 %v1171
        %v1888 = vpop.f32.mrf.mxu0
        %v1889 = vadd.f32 0.0, %v1888
        %v1890 = vpop.f32.mrf.mxu0
        %v1891 = vadd.f32 0.0, %v1890
        %v1892 = vpop.f32.mrf.mxu0
        %v1893 = vadd.f32 0.0, %v1892
        %v1894 = vpop.f32.mrf.mxu0
        %v1895 = vadd.f32 0.0, %v1894
        %1896 = vmatprep.mubr.bf16.mxu0 0
        %1897 = vmatmul.mubr.bf16.gmra.mxu0 %v1172
        %v1898 = vpop.f32.mrf.mxu0
        %v1899 = vadd.f32 0.0, %v1898
        %v1900 = vpop.f32.mrf.mxu0
        %v1901 = vadd.f32 0.0, %v1900
        %v1902 = vpop.f32.mrf.mxu0
        %v1903 = vadd.f32 0.0, %v1902
        %v1904 = vpop.f32.mrf.mxu0
        %v1905 = vadd.f32 0.0, %v1904
        %1906 = vmatprep.mubr.bf16.mxu0 0
        %1907 = vmatmul.mubr.bf16.gmra.mxu0 %v1173
        %v1908 = vpop.f32.mrf.mxu0
        %v1909 = vadd.f32 0.0, %v1908
        %v1910 = vpop.f32.mrf.mxu0
        %v1911 = vadd.f32 0.0, %v1910
        %v1912 = vpop.f32.mrf.mxu0
        %v1913 = vadd.f32 0.0, %v1912
        %v1914 = vpop.f32.mrf.mxu0
        %v1915 = vadd.f32 0.0, %v1914
        %1916 = vmatprep.mubr.bf16.mxu0 0
        %1917 = vmatmul.mubr.bf16.gmra.mxu0 %v1174
        %v1918 = vpop.f32.mrf.mxu0
        %v1919 = vadd.f32 0.0, %v1918
        %v1920 = vpop.f32.mrf.mxu0
        %v1921 = vadd.f32 0.0, %v1920
        %v1922 = vpop.f32.mrf.mxu0
        %v1923 = vadd.f32 0.0, %v1922
        %v1924 = vpop.f32.mrf.mxu0
        %v1925 = vadd.f32 0.0, %v1924
        %1926 = vmatprep.mubr.bf16.mxu0 0
        %1927 = vmatmul.mubr.bf16.gmra.mxu0 %v1175
        %v1928 = vpop.f32.mrf.mxu0
        %v1929 = vadd.f32 0.0, %v1928
        %v1930 = vpop.f32.mrf.mxu0
        %v1931 = vadd.f32 0.0, %v1930
        %v1932 = vpop.f32.mrf.mxu0
        %v1933 = vadd.f32 0.0, %v1932
        %v1934 = vpop.f32.mrf.mxu0
        %v1935 = vadd.f32 0.0, %v1934
        %1936 = vmatprep.mubr.bf16.mxu0 0
        %1937 = vmatmul.mubr.bf16.gmra.mxu0 %v1176
        %v1938 = vpop.f32.mrf.mxu0
        %v1939 = vadd.f32 0.0, %v1938
        %v1940 = vpop.f32.mrf.mxu0
        %v1941 = vadd.f32 0.0, %v1940
        %v1942 = vpop.f32.mrf.mxu0
        %v1943 = vadd.f32 0.0, %v1942
        %v1944 = vpop.f32.mrf.mxu0
        %v1945 = vadd.f32 0.0, %v1944
        %1946 = vmatprep.mubr.bf16.mxu0 0
        %1947 = vmatmul.mubr.bf16.gmra.mxu0 %v1177
        %v1948 = vpop.f32.mrf.mxu0
        %v1949 = vadd.f32 0.0, %v1948
        %v1950 = vpop.f32.mrf.mxu0
        %v1951 = vadd.f32 0.0, %v1950
        %v1952 = vpop.f32.mrf.mxu0
        %v1953 = vadd.f32 0.0, %v1952
        %v1954 = vpop.f32.mrf.mxu0
        %v1955 = vadd.f32 0.0, %v1954
        %1956 = vmatprep.mubr.bf16.mxu0 0
        %1957 = vmatmul.mubr.bf16.gmra.mxu0 %v1178
        %v1958 = vpop.f32.mrf.mxu0
        %v1959 = vadd.f32 0.0, %v1958
        %v1960 = vpop.f32.mrf.mxu0
        %v1961 = vadd.f32 0.0, %v1960
        %v1962 = vpop.f32.mrf.mxu0
        %v1963 = vadd.f32 0.0, %v1962
        %v1964 = vpop.f32.mrf.mxu0
        %v1965 = vadd.f32 0.0, %v1964
        %1966 = vmatprep.mubr.bf16.mxu0 0
        %1967 = vmatmul.mubr.bf16.gmra.mxu0 %v1179
        %v1968 = vpop.f32.mrf.mxu0
        %v1969 = vadd.f32 0.0, %v1968
        %v1970 = vpop.f32.mrf.mxu0
        %v1971 = vadd.f32 0.0, %v1970
        %v1972 = vpop.f32.mrf.mxu0
        %v1973 = vadd.f32 0.0, %v1972
        %v1974 = vpop.f32.mrf.mxu0
        %v1975 = vadd.f32 0.0, %v1974
        %1976 = vdwg.mxu0
        %v1977 = vmul.f32 %v1819, 0.17677669
        %v1978 = vmul.f32 %v1821, 0.17677669
        %v1979 = vmul.f32 %v1823, 0.17677669
        %v1980 = vmul.f32 %v1825, 0.17677669
        %v1981 = vmul.f32 %v1829, 0.17677669
        %v1982 = vmul.f32 %v1831, 0.17677669
        %v1983 = vmul.f32 %v1833, 0.17677669
        %v1984 = vmul.f32 %v1835, 0.17677669
        %v1985 = vmul.f32 %v1839, 0.17677669
        %v1986 = vmul.f32 %v1841, 0.17677669
        %v1987 = vmul.f32 %v1843, 0.17677669
        %v1988 = vmul.f32 %v1845, 0.17677669
        %v1989 = vmul.f32 %v1849, 0.17677669
        %v1990 = vmul.f32 %v1851, 0.17677669
        %v1991 = vmul.f32 %v1853, 0.17677669
        %v1992 = vmul.f32 %v1855, 0.17677669
        %v1993 = vmul.f32 %v1859, 0.17677669
        %v1994 = vmul.f32 %v1861, 0.17677669
        %v1995 = vmul.f32 %v1863, 0.17677669
        %v1996 = vmul.f32 %v1865, 0.17677669
        %v1997 = vmul.f32 %v1869, 0.17677669
        %v1998 = vmul.f32 %v1871, 0.17677669
        %v1999 = vmul.f32 %v1873, 0.17677669
        %v2000 = vmul.f32 %v1875, 0.17677669
        %v2001 = vmul.f32 %v1879, 0.17677669
        %v2002 = vmul.f32 %v1881, 0.17677669
        %v2003 = vmul.f32 %v1883, 0.17677669
        %v2004 = vmul.f32 %v1885, 0.17677669
        %v2005 = vmul.f32 %v1889, 0.17677669
        %v2006 = vmul.f32 %v1891, 0.17677669
        %v2007 = vmul.f32 %v1893, 0.17677669
        %v2008 = vmul.f32 %v1895, 0.17677669
        %v2009 = vmul.f32 %v1899, 0.17677669
        %v2010 = vmul.f32 %v1901, 0.17677669
        %v2011 = vmul.f32 %v1903, 0.17677669
        %v2012 = vmul.f32 %v1905, 0.17677669
        %v2013 = vmul.f32 %v1909, 0.17677669
        %v2014 = vmul.f32 %v1911, 0.17677669
        %v2015 = vmul.f32 %v1913, 0.17677669
        %v2016 = vmul.f32 %v1915, 0.17677669
        %v2017 = vmul.f32 %v1919, 0.17677669
        %v2018 = vmul.f32 %v1921, 0.17677669
        %v2019 = vmul.f32 %v1923, 0.17677669
        %v2020 = vmul.f32 %v1925, 0.17677669
        %v2021 = vmul.f32 %v1929, 0.17677669
        %v2022 = vmul.f32 %v1931, 0.17677669
        %v2023 = vmul.f32 %v1933, 0.17677669
        %v2024 = vmul.f32 %v1935, 0.17677669
        %v2025 = vmul.f32 %v1939, 0.17677669
        %v2026 = vmul.f32 %v1941, 0.17677669
        %v2027 = vmul.f32 %v1943, 0.17677669
        %v2028 = vmul.f32 %v1945, 0.17677669
        %v2029 = vmul.f32 %v1949, 0.17677669
        %v2030 = vmul.f32 %v1951, 0.17677669
        %v2031 = vmul.f32 %v1953, 0.17677669
        %v2032 = vmul.f32 %v1955, 0.17677669
        %v2033 = vmul.f32 %v1959, 0.17677669
        %v2034 = vmul.f32 %v1961, 0.17677669
        %v2035 = vmul.f32 %v1963, 0.17677669
        %v2036 = vmul.f32 %v1965, 0.17677669
        %v2037 = vmul.f32 %v1969, 0.17677669
        %v2038 = vmul.f32 %v1971, 0.17677669
        %v2039 = vmul.f32 %v1973, 0.17677669
        %v2040 = vmul.f32 %v1975, 0.17677669
        %v2041 = vadd.f32 %v1977, %v1720
        %v2042 = vadd.f32 %v1978, %v1721
        %v2043 = vadd.f32 %v1979, %v1722
        %v2044 = vadd.f32 %v1980, %v1723
        %v2045 = vadd.f32 %v1981, %v1724
        %v2046 = vadd.f32 %v1982, %v1725
        %v2047 = vadd.f32 %v1983, %v1726
        %v2048 = vadd.f32 %v1984, %v1727
        %v2049 = vadd.f32 %v1985, %v1728
        %v2050 = vadd.f32 %v1986, %v1729
        %v2051 = vadd.f32 %v1987, %v1730
        %v2052 = vadd.f32 %v1988, %v1731
        %v2053 = vadd.f32 %v1989, %v1732
        %v2054 = vadd.f32 %v1990, %v1733
        %v2055 = vadd.f32 %v1991, %v1734
        %v2056 = vadd.f32 %v1992, %v1735
        %v2057 = vadd.f32 %v1993, %v1736
        %v2058 = vadd.f32 %v1994, %v1737
        %v2059 = vadd.f32 %v1995, %v1738
        %v2060 = vadd.f32 %v1996, %v1739
        %v2061 = vadd.f32 %v1997, %v1740
        %v2062 = vadd.f32 %v1998, %v1741
        %v2063 = vadd.f32 %v1999, %v1742
        %v2064 = vadd.f32 %v2000, %v1743
        %v2065 = vadd.f32 %v2001, %v1744
        %v2066 = vadd.f32 %v2002, %v1745
        %v2067 = vadd.f32 %v2003, %v1746
        %v2068 = vadd.f32 %v2004, %v1747
        %v2069 = vadd.f32 %v2005, %v1748
        %v2070 = vadd.f32 %v2006, %v1749
        %v2071 = vadd.f32 %v2007, %v1750
        %v2072 = vadd.f32 %v2008, %v1751
        %v2073 = vadd.f32 %v2009, %v1752
        %v2074 = vadd.f32 %v2010, %v1753
        %v2075 = vadd.f32 %v2011, %v1754
        %v2076 = vadd.f32 %v2012, %v1755
        %v2077 = vadd.f32 %v2013, %v1756
        %v2078 = vadd.f32 %v2014, %v1757
        %v2079 = vadd.f32 %v2015, %v1758
        %v2080 = vadd.f32 %v2016, %v1759
        %v2081 = vadd.f32 %v2017, %v1760
        %v2082 = vadd.f32 %v2018, %v1761
        %v2083 = vadd.f32 %v2019, %v1762
        %v2084 = vadd.f32 %v2020, %v1763
        %v2085 = vadd.f32 %v2021, %v1764
        %v2086 = vadd.f32 %v2022, %v1765
        %v2087 = vadd.f32 %v2023, %v1766
        %v2088 = vadd.f32 %v2024, %v1767
        %v2089 = vadd.f32 %v2025, %v1768
        %v2090 = vadd.f32 %v2026, %v1769
        %v2091 = vadd.f32 %v2027, %v1770
        %v2092 = vadd.f32 %v2028, %v1771
        %v2093 = vadd.f32 %v2029, %v1772
        %v2094 = vadd.f32 %v2030, %v1773
        %v2095 = vadd.f32 %v2031, %v1774
        %v2096 = vadd.f32 %v2032, %v1775
        %v2097 = vadd.f32 %v2033, %v1776
        %v2098 = vadd.f32 %v2034, %v1777
        %v2099 = vadd.f32 %v2035, %v1778
        %v2100 = vadd.f32 %v2036, %v1779
        %v2101 = vadd.f32 %v2037, %v1780
        %v2102 = vadd.f32 %v2038, %v1781
        %v2103 = vadd.f32 %v2039, %v1782
        %v2104 = vadd.f32 %v2040, %v1783
        %v2105 = vmax.f32 %v2041, %v2042
        %2106 = vmax.xlane.f32.xlu0 %v2105
        %v2107 = vpop.xlane.xlu0 %2106
        %v2108 = vmax.f32 %v2043, %v2044
        %2109 = vmax.xlane.f32.xlu0 %v2108
        %v2110 = vpop.xlane.xlu0 %2109
        %v2111 = vmax.f32 %v2045, %v2046
        %2112 = vmax.xlane.f32.xlu0 %v2111
        %v2113 = vpop.xlane.xlu0 %2112
        %v2114 = vmax.f32 %v2047, %v2048
        %2115 = vmax.xlane.f32.xlu0 %v2114
        %v2116 = vpop.xlane.xlu0 %2115
        %v2117 = vmax.f32 %v2049, %v2050
        %2118 = vmax.xlane.f32.xlu0 %v2117
        %v2119 = vpop.xlane.xlu0 %2118
        %v2120 = vmax.f32 %v2051, %v2052
        %2121 = vmax.xlane.f32.xlu0 %v2120
        %v2122 = vpop.xlane.xlu0 %2121
        %v2123 = vmax.f32 %v2053, %v2054
        %2124 = vmax.xlane.f32.xlu0 %v2123
        %v2125 = vpop.xlane.xlu0 %2124
        %v2126 = vmax.f32 %v2055, %v2056
        %2127 = vmax.xlane.f32.xlu0 %v2126
        %v2128 = vpop.xlane.xlu0 %2127
        %v2129 = vmax.f32 %v2057, %v2058
        %2130 = vmax.xlane.f32.xlu0 %v2129
        %v2131 = vpop.xlane.xlu0 %2130
        %v2132 = vmax.f32 %v2059, %v2060
        %2133 = vmax.xlane.f32.xlu0 %v2132
        %v2134 = vpop.xlane.xlu0 %2133
        %v2135 = vmax.f32 %v2061, %v2062
        %2136 = vmax.xlane.f32.xlu0 %v2135
        %v2137 = vpop.xlane.xlu0 %2136
        %v2138 = vmax.f32 %v2063, %v2064
        %2139 = vmax.xlane.f32.xlu0 %v2138
        %v2140 = vpop.xlane.xlu0 %2139
        %v2141 = vmax.f32 %v2065, %v2066
        %2142 = vmax.xlane.f32.xlu0 %v2141
        %v2143 = vpop.xlane.xlu0 %2142
        %v2144 = vmax.f32 %v2067, %v2068
        %2145 = vmax.xlane.f32.xlu0 %v2144
        %v2146 = vpop.xlane.xlu0 %2145
        %v2147 = vmax.f32 %v2069, %v2070
        %2148 = vmax.xlane.f32.xlu0 %v2147
        %v2149 = vpop.xlane.xlu0 %2148
        %v2150 = vmax.f32 %v2071, %v2072
        %2151 = vmax.xlane.f32.xlu0 %v2150
        %v2152 = vpop.xlane.xlu0 %2151
        %v2153 = vmax.f32 %v2073, %v2074
        %2154 = vmax.xlane.f32.xlu0 %v2153
        %v2155 = vpop.xlane.xlu0 %2154
        %v2156 = vmax.f32 %v2075, %v2076
        %2157 = vmax.xlane.f32.xlu0 %v2156
        %v2158 = vpop.xlane.xlu0 %2157
        %v2159 = vmax.f32 %v2077, %v2078
        %2160 = vmax.xlane.f32.xlu0 %v2159
        %v2161 = vpop.xlane.xlu0 %2160
        %v2162 = vmax.f32 %v2079, %v2080
        %2163 = vmax.xlane.f32.xlu0 %v2162
        %v2164 = vpop.xlane.xlu0 %2163
        %v2165 = vmax.f32 %v2081, %v2082
        %2166 = vmax.xlane.f32.xlu0 %v2165
        %v2167 = vpop.xlane.xlu0 %2166
        %v2168 = vmax.f32 %v2083, %v2084
        %2169 = vmax.xlane.f32.xlu0 %v2168
        %v2170 = vpop.xlane.xlu0 %2169
        %v2171 = vmax.f32 %v2085, %v2086
        %2172 = vmax.xlane.f32.xlu0 %v2171
        %v2173 = vpop.xlane.xlu0 %2172
        %v2174 = vmax.f32 %v2087, %v2088
        %2175 = vmax.xlane.f32.xlu0 %v2174
        %v2176 = vpop.xlane.xlu0 %2175
        %v2177 = vmax.f32 %v2089, %v2090
        %2178 = vmax.xlane.f32.xlu0 %v2177
        %v2179 = vpop.xlane.xlu0 %2178
        %v2180 = vmax.f32 %v2091, %v2092
        %2181 = vmax.xlane.f32.xlu0 %v2180
        %v2182 = vpop.xlane.xlu0 %2181
        %v2183 = vmax.f32 %v2093, %v2094
        %2184 = vmax.xlane.f32.xlu0 %v2183
        %v2185 = vpop.xlane.xlu0 %2184
        %v2186 = vmax.f32 %v2095, %v2096
        %2187 = vmax.xlane.f32.xlu0 %v2186
        %v2188 = vpop.xlane.xlu0 %2187
        %v2189 = vmax.f32 %v2097, %v2098
        %2190 = vmax.xlane.f32.xlu0 %v2189
        %v2191 = vpop.xlane.xlu0 %2190
        %v2192 = vmax.f32 %v2099, %v2100
        %2193 = vmax.xlane.f32.xlu0 %v2192
        %v2194 = vpop.xlane.xlu0 %2193
        %v2195 = vmax.f32 %v2101, %v2102
        %2196 = vmax.xlane.f32.xlu0 %v2195
        %v2197 = vpop.xlane.xlu0 %2196
        %v2198 = vmax.f32 %v2103, %v2104
        %2199 = vmax.xlane.f32.xlu0 %v2198
        %v2200 = vpop.xlane.xlu0 %2199
        %v2201 = vsub.f32 %v2041, %v2107
        %v2202 = vsub.f32 %v2042, %v2107
        %v2203 = vsub.f32 %v2043, %v2110
        %v2204 = vsub.f32 %v2044, %v2110
        %v2205 = vsub.f32 %v2045, %v2113
        %v2206 = vsub.f32 %v2046, %v2113
        %v2207 = vsub.f32 %v2047, %v2116
        %v2208 = vsub.f32 %v2048, %v2116
        %v2209 = vsub.f32 %v2049, %v2119
        %v2210 = vsub.f32 %v2050, %v2119
        %v2211 = vsub.f32 %v2051, %v2122
        %v2212 = vsub.f32 %v2052, %v2122
        %v2213 = vsub.f32 %v2053, %v2125
        %v2214 = vsub.f32 %v2054, %v2125
        %v2215 = vsub.f32 %v2055, %v2128
        %v2216 = vsub.f32 %v2056, %v2128
        %v2217 = vsub.f32 %v2057, %v2131
        %v2218 = vsub.f32 %v2058, %v2131
        %v2219 = vsub.f32 %v2059, %v2134
        %v2220 = vsub.f32 %v2060, %v2134
        %v2221 = vsub.f32 %v2061, %v2137
        %v2222 = vsub.f32 %v2062, %v2137
        %v2223 = vsub.f32 %v2063, %v2140
        %v2224 = vsub.f32 %v2064, %v2140
        %v2225 = vsub.f32 %v2065, %v2143
        %v2226 = vsub.f32 %v2066, %v2143
        %v2227 = vsub.f32 %v2067, %v2146
        %v2228 = vsub.f32 %v2068, %v2146
        %v2229 = vsub.f32 %v2069, %v2149
        %v2230 = vsub.f32 %v2070, %v2149
        %v2231 = vsub.f32 %v2071, %v2152
        %v2232 = vsub.f32 %v2072, %v2152
        %v2233 = vsub.f32 %v2073, %v2155
        %v2234 = vsub.f32 %v2074, %v2155
        %v2235 = vsub.f32 %v2075, %v2158
        %v2236 = vsub.f32 %v2076, %v2158
        %v2237 = vsub.f32 %v2077, %v2161
        %v2238 = vsub.f32 %v2078, %v2161
        %v2239 = vsub.f32 %v2079, %v2164
        %v2240 = vsub.f32 %v2080, %v2164
        %v2241 = vsub.f32 %v2081, %v2167
        %v2242 = vsub.f32 %v2082, %v2167
        %v2243 = vsub.f32 %v2083, %v2170
        %v2244 = vsub.f32 %v2084, %v2170
        %v2245 = vsub.f32 %v2085, %v2173
        %v2246 = vsub.f32 %v2086, %v2173
        %v2247 = vsub.f32 %v2087, %v2176
        %v2248 = vsub.f32 %v2088, %v2176
        %v2249 = vsub.f32 %v2089, %v2179
        %v2250 = vsub.f32 %v2090, %v2179
        %v2251 = vsub.f32 %v2091, %v2182
        %v2252 = vsub.f32 %v2092, %v2182
        %v2253 = vsub.f32 %v2093, %v2185
        %v2254 = vsub.f32 %v2094, %v2185
        %v2255 = vsub.f32 %v2095, %v2188
        %v2256 = vsub.f32 %v2096, %v2188
        %v2257 = vsub.f32 %v2097, %v2191
        %v2258 = vsub.f32 %v2098, %v2191
        %v2259 = vsub.f32 %v2099, %v2194
        %v2260 = vsub.f32 %v2100, %v2194
        %v2261 = vsub.f32 %v2101, %v2197
        %v2262 = vsub.f32 %v2102, %v2197
        %v2263 = vsub.f32 %v2103, %v2200
        %v2264 = vsub.f32 %v2104, %v2200
        %v2265 = vmul.f32 %v2201, 1.442695
        %v2266 = vpow.pop %v2265
        %v2267 = vmul.f32 %v2202, 1.442695
        %v2268 = vpow.pop %v2267
        %v2269 = vmul.f32 %v2203, 1.442695
        %v2270 = vpow.pop %v2269
        %v2271 = vmul.f32 %v2204, 1.442695
        %v2272 = vpow.pop %v2271
        %v2273 = vmul.f32 %v2205, 1.442695
        %v2274 = vpow.pop %v2273
        %v2275 = vmul.f32 %v2206, 1.442695
        %v2276 = vpow.pop %v2275
        %v2277 = vmul.f32 %v2207, 1.442695
        %v2278 = vpow.pop %v2277
        %v2279 = vmul.f32 %v2208, 1.442695
        %v2280 = vpow.pop %v2279
        %v2281 = vmul.f32 %v2209, 1.442695
        %v2282 = vpow.pop %v2281
        %v2283 = vmul.f32 %v2210, 1.442695
        %v2284 = vpow.pop %v2283
        %v2285 = vmul.f32 %v2211, 1.442695
        %v2286 = vpow.pop %v2285
        %v2287 = vmul.f32 %v2212, 1.442695
        %v2288 = vpow.pop %v2287
        %v2289 = vmul.f32 %v2213, 1.442695
        %v2290 = vpow.pop %v2289
        %v2291 = vmul.f32 %v2214, 1.442695
        %v2292 = vpow.pop %v2291
        %v2293 = vmul.f32 %v2215, 1.442695
        %v2294 = vpow.pop %v2293
        %v2295 = vmul.f32 %v2216, 1.442695
        %v2296 = vpow.pop %v2295
        %v2297 = vmul.f32 %v2217, 1.442695
        %v2298 = vpow.pop %v2297
        %v2299 = vmul.f32 %v2218, 1.442695
        %v2300 = vpow.pop %v2299
        %v2301 = vmul.f32 %v2219, 1.442695
        %v2302 = vpow.pop %v2301
        %v2303 = vmul.f32 %v2220, 1.442695
        %v2304 = vpow.pop %v2303
        %v2305 = vmul.f32 %v2221, 1.442695
        %v2306 = vpow.pop %v2305
        %v2307 = vmul.f32 %v2222, 1.442695
        %v2308 = vpow.pop %v2307
        %v2309 = vmul.f32 %v2223, 1.442695
        %v2310 = vpow.pop %v2309
        %v2311 = vmul.f32 %v2224, 1.442695
        %v2312 = vpow.pop %v2311
        %v2313 = vmul.f32 %v2225, 1.442695
        %v2314 = vpow.pop %v2313
        %v2315 = vmul.f32 %v2226, 1.442695
        %v2316 = vpow.pop %v2315
        %v2317 = vmul.f32 %v2227, 1.442695
        %v2318 = vpow.pop %v2317
        %v2319 = vmul.f32 %v2228, 1.442695
        %v2320 = vpow.pop %v2319
        %v2321 = vmul.f32 %v2229, 1.442695
        %v2322 = vpow.pop %v2321
        %v2323 = vmul.f32 %v2230, 1.442695
        %v2324 = vpow.pop %v2323
        %v2325 = vmul.f32 %v2231, 1.442695
        %v2326 = vpow.pop %v2325
        %v2327 = vmul.f32 %v2232, 1.442695
        %v2328 = vpow.pop %v2327
        %v2329 = vmul.f32 %v2233, 1.442695
        %v2330 = vpow.pop %v2329
        %v2331 = vmul.f32 %v2234, 1.442695
        %v2332 = vpow.pop %v2331
        %v2333 = vmul.f32 %v2235, 1.442695
        %v2334 = vpow.pop %v2333
        %v2335 = vmul.f32 %v2236, 1.442695
        %v2336 = vpow.pop %v2335
        %v2337 = vmul.f32 %v2237, 1.442695
        %v2338 = vpow.pop %v2337
        %v2339 = vmul.f32 %v2238, 1.442695
        %v2340 = vpow.pop %v2339
        %v2341 = vmul.f32 %v2239, 1.442695
        %v2342 = vpow.pop %v2341
        %v2343 = vmul.f32 %v2240, 1.442695
        %v2344 = vpow.pop %v2343
        %v2345 = vmul.f32 %v2241, 1.442695
        %v2346 = vpow.pop %v2345
        %v2347 = vmul.f32 %v2242, 1.442695
        %v2348 = vpow.pop %v2347
        %v2349 = vmul.f32 %v2243, 1.442695
        %v2350 = vpow.pop %v2349
        %v2351 = vmul.f32 %v2244, 1.442695
        %v2352 = vpow.pop %v2351
        %v2353 = vmul.f32 %v2245, 1.442695
        %v2354 = vpow.pop %v2353
        %v2355 = vmul.f32 %v2246, 1.442695
        %v2356 = vpow.pop %v2355
        %v2357 = vmul.f32 %v2247, 1.442695
        %v2358 = vpow.pop %v2357
        %v2359 = vmul.f32 %v2248, 1.442695
        %v2360 = vpow.pop %v2359
        %v2361 = vmul.f32 %v2249, 1.442695
        %v2362 = vpow.pop %v2361
        %v2363 = vmul.f32 %v2250, 1.442695
        %v2364 = vpow.pop %v2363
        %v2365 = vmul.f32 %v2251, 1.442695
        %v2366 = vpow.pop %v2365
        %v2367 = vmul.f32 %v2252, 1.442695
        %v2368 = vpow.pop %v2367
        %v2369 = vmul.f32 %v2253, 1.442695
        %v2370 = vpow.pop %v2369
        %v2371 = vmul.f32 %v2254, 1.442695
        %v2372 = vpow.pop %v2371
        %v2373 = vmul.f32 %v2255, 1.442695
        %v2374 = vpow.pop %v2373
        %v2375 = vmul.f32 %v2256, 1.442695
        %v2376 = vpow.pop %v2375
        %v2377 = vmul.f32 %v2257, 1.442695
        %v2378 = vpow.pop %v2377
        %v2379 = vmul.f32 %v2258, 1.442695
        %v2380 = vpow.pop %v2379
        %v2381 = vmul.f32 %v2259, 1.442695
        %v2382 = vpow.pop %v2381
        %v2383 = vmul.f32 %v2260, 1.442695
        %v2384 = vpow.pop %v2383
        %v2385 = vmul.f32 %v2261, 1.442695
        %v2386 = vpow.pop %v2385
        %v2387 = vmul.f32 %v2262, 1.442695
        %v2388 = vpow.pop %v2387
        %v2389 = vmul.f32 %v2263, 1.442695
        %v2390 = vpow.pop %v2389
        %v2391 = vmul.f32 %v2264, 1.442695
        %v2392 = vpow.pop %v2391
        %v2393 = vadd.f32 %v2266, %v2268
        %2394 = vadd.xlane.f32.xlu0 %v2393
        %v2395 = vpop.xlane.xlu0 %2394
        %v2396 = vadd.f32 %v2270, %v2272
        %2397 = vadd.xlane.f32.xlu0 %v2396
        %v2398 = vpop.xlane.xlu0 %2397
        %v2399 = vadd.f32 %v2274, %v2276
        %2400 = vadd.xlane.f32.xlu0 %v2399
        %v2401 = vpop.xlane.xlu0 %2400
        %v2402 = vadd.f32 %v2278, %v2280
        %2403 = vadd.xlane.f32.xlu0 %v2402
        %v2404 = vpop.xlane.xlu0 %2403
        %v2405 = vadd.f32 %v2282, %v2284
        %2406 = vadd.xlane.f32.xlu0 %v2405
        %v2407 = vpop.xlane.xlu0 %2406
        %v2408 = vadd.f32 %v2286, %v2288
        %2409 = vadd.xlane.f32.xlu0 %v2408
        %v2410 = vpop.xlane.xlu0 %2409
        %v2411 = vadd.f32 %v2290, %v2292
        %2412 = vadd.xlane.f32.xlu0 %v2411
        %v2413 = vpop.xlane.xlu0 %2412
        %v2414 = vadd.f32 %v2294, %v2296
        %2415 = vadd.xlane.f32.xlu0 %v2414
        %v2416 = vpop.xlane.xlu0 %2415
        %v2417 = vadd.f32 %v2298, %v2300
        %2418 = vadd.xlane.f32.xlu0 %v2417
        %v2419 = vpop.xlane.xlu0 %2418
        %v2420 = vadd.f32 %v2302, %v2304
        %2421 = vadd.xlane.f32.xlu0 %v2420
        %v2422 = vpop.xlane.xlu0 %2421
        %v2423 = vadd.f32 %v2306, %v2308
        %2424 = vadd.xlane.f32.xlu0 %v2423
        %v2425 = vpop.xlane.xlu0 %2424
        %v2426 = vadd.f32 %v2310, %v2312
        %2427 = vadd.xlane.f32.xlu0 %v2426
        %v2428 = vpop.xlane.xlu0 %2427
        %v2429 = vadd.f32 %v2314, %v2316
        %2430 = vadd.xlane.f32.xlu0 %v2429
        %v2431 = vpop.xlane.xlu0 %2430
        %v2432 = vadd.f32 %v2318, %v2320
        %2433 = vadd.xlane.f32.xlu0 %v2432
        %v2434 = vpop.xlane.xlu0 %2433
        %v2435 = vadd.f32 %v2322, %v2324
        %2436 = vadd.xlane.f32.xlu0 %v2435
        %v2437 = vpop.xlane.xlu0 %2436
        %v2438 = vadd.f32 %v2326, %v2328
        %2439 = vadd.xlane.f32.xlu0 %v2438
        %v2440 = vpop.xlane.xlu0 %2439
        %v2441 = vadd.f32 %v2330, %v2332
        %2442 = vadd.xlane.f32.xlu0 %v2441
        %v2443 = vpop.xlane.xlu0 %2442
        %v2444 = vadd.f32 %v2334, %v2336
        %2445 = vadd.xlane.f32.xlu0 %v2444
        %v2446 = vpop.xlane.xlu0 %2445
        %v2447 = vadd.f32 %v2338, %v2340
        %2448 = vadd.xlane.f32.xlu0 %v2447
        %v2449 = vpop.xlane.xlu0 %2448
        %v2450 = vadd.f32 %v2342, %v2344
        %2451 = vadd.xlane.f32.xlu0 %v2450
        %v2452 = vpop.xlane.xlu0 %2451
        %v2453 = vadd.f32 %v2346, %v2348
        %2454 = vadd.xlane.f32.xlu0 %v2453
        %v2455 = vpop.xlane.xlu0 %2454
        %v2456 = vadd.f32 %v2350, %v2352
        %2457 = vadd.xlane.f32.xlu0 %v2456
        %v2458 = vpop.xlane.xlu0 %2457
        %v2459 = vadd.f32 %v2354, %v2356
        %2460 = vadd.xlane.f32.xlu0 %v2459
        %v2461 = vpop.xlane.xlu0 %2460
        %v2462 = vadd.f32 %v2358, %v2360
        %2463 = vadd.xlane.f32.xlu0 %v2462
        %v2464 = vpop.xlane.xlu0 %2463
        %v2465 = vadd.f32 %v2362, %v2364
        %2466 = vadd.xlane.f32.xlu0 %v2465
        %v2467 = vpop.xlane.xlu0 %2466
        %v2468 = vadd.f32 %v2366, %v2368
        %2469 = vadd.xlane.f32.xlu0 %v2468
        %v2470 = vpop.xlane.xlu0 %2469
        %v2471 = vadd.f32 %v2370, %v2372
        %2472 = vadd.xlane.f32.xlu0 %v2471
        %v2473 = vpop.xlane.xlu0 %2472
        %v2474 = vadd.f32 %v2374, %v2376
        %2475 = vadd.xlane.f32.xlu0 %v2474
        %v2476 = vpop.xlane.xlu0 %2475
        %v2477 = vadd.f32 %v2378, %v2380
        %2478 = vadd.xlane.f32.xlu0 %v2477
        %v2479 = vpop.xlane.xlu0 %2478
        %v2480 = vadd.f32 %v2382, %v2384
        %2481 = vadd.xlane.f32.xlu0 %v2480
        %v2482 = vpop.xlane.xlu0 %2481
        %v2483 = vadd.f32 %v2386, %v2388
        %2484 = vadd.xlane.f32.xlu0 %v2483
        %v2485 = vpop.xlane.xlu0 %2484
        %v2486 = vadd.f32 %v2390, %v2392
        %2487 = vadd.xlane.f32.xlu0 %v2486
        %v2488 = vpop.xlane.xlu0 %2487
        %v2489 = vpack.c.bf16 %v2270, %v2266
        %v2490 = vpack.c.bf16 %v2272, %v2268
        %v2491 = vpack.c.bf16 %v2278, %v2274
        %v2492 = vpack.c.bf16 %v2280, %v2276
        %v2493 = vpack.c.bf16 %v2286, %v2282
        %v2494 = vpack.c.bf16 %v2288, %v2284
        %v2495 = vpack.c.bf16 %v2294, %v2290
        %v2496 = vpack.c.bf16 %v2296, %v2292
        %v2497 = vpack.c.bf16 %v2302, %v2298
        %v2498 = vpack.c.bf16 %v2304, %v2300
        %v2499 = vpack.c.bf16 %v2310, %v2306
        %v2500 = vpack.c.bf16 %v2312, %v2308
        %v2501 = vpack.c.bf16 %v2318, %v2314
        %v2502 = vpack.c.bf16 %v2320, %v2316
        %v2503 = vpack.c.bf16 %v2326, %v2322
        %v2504 = vpack.c.bf16 %v2328, %v2324
        %v2505 = vpack.c.bf16 %v2334, %v2330
        %v2506 = vpack.c.bf16 %v2336, %v2332
        %v2507 = vpack.c.bf16 %v2342, %v2338
        %v2508 = vpack.c.bf16 %v2344, %v2340
        %v2509 = vpack.c.bf16 %v2350, %v2346
        %v2510 = vpack.c.bf16 %v2352, %v2348
        %v2511 = vpack.c.bf16 %v2358, %v2354
        %v2512 = vpack.c.bf16 %v2360, %v2356
        %v2513 = vpack.c.bf16 %v2366, %v2362
        %v2514 = vpack.c.bf16 %v2368, %v2364
        %v2515 = vpack.c.bf16 %v2374, %v2370
        %v2516 = vpack.c.bf16 %v2376, %v2372
        %v2517 = vpack.c.bf16 %v2382, %v2378
        %v2518 = vpack.c.bf16 %v2384, %v2380
        %v2519 = vpack.c.bf16 %v2390, %v2386
        %v2520 = vpack.c.bf16 %v2392, %v2388
        %2521 = vmatprep.subr.bf16.mxu0 0
        %2522 = vmatpush1.bf16.msra.mxu0 %v1203
        %2523 = vmatprep.subr.bf16.mxu0 0
        %2524 = vmatpush1.bf16.msra.mxu0 %v1202
        %2525 = vmatprep.subr.bf16.mxu0 0
        %2526 = vmatpush1.bf16.msra.mxu0 %v1201
        %2527 = vmatprep.subr.bf16.mxu0 0
        %2528 = vmatpush1.bf16.msra.mxu0 %v1200
        %2529 = vmatprep.subr.bf16.mxu0 0
        %2530 = vmatpush1.bf16.msra.mxu0 %v1199
        %2531 = vmatprep.subr.bf16.mxu0 0
        %2532 = vmatpush1.bf16.msra.mxu0 %v1198
        %2533 = vmatprep.subr.bf16.mxu0 0
        %2534 = vmatpush1.bf16.msra.mxu0 %v1197
        %2535 = vmatprep.subr.bf16.mxu0 0
        %2536 = vmatpush1.bf16.msra.mxu0 %v1196
        %2537 = vmatprep.subr.bf16.mxu0 0
        %2538 = vmatpush2.bf16.msra.mxu0 %v1211
        %2539 = vmatprep.subr.bf16.mxu0 0
        %2540 = vmatpush2.bf16.msra.mxu0 %v1210
        %2541 = vmatprep.subr.bf16.mxu0 0
        %2542 = vmatpush2.bf16.msra.mxu0 %v1209
        %2543 = vmatprep.subr.bf16.mxu0 0
        %2544 = vmatpush2.bf16.msra.mxu0 %v1208
        %2545 = vmatprep.subr.bf16.mxu0 0
        %2546 = vmatpush2.bf16.msra.mxu0 %v1207
        %2547 = vmatprep.subr.bf16.mxu0 0
        %2548 = vmatpush2.bf16.msra.mxu0 %v1206
        %2549 = vmatprep.subr.bf16.mxu0 0
        %2550 = vmatpush2.bf16.msra.mxu0 %v1205
        %2551 = vmatprep.subr.bf16.mxu0 0
        %2552 = vmatpush2.bf16.msra.mxu0 %v1204
        %2553 = vmatprep.mubr.bf16.mxu0 %v2490
        %2554 = vmatmul.mubr.bf16.gmra.mxu0 %v2489
        %v2555 = vpop.f32.mrf.mxu0
        %v2556 = vadd.f32 0.0, %v2555
        %v2557 = vpop.f32.mrf.mxu0
        %v2558 = vpop.f32.mrf.mxu0
        %v2559 = vadd.f32 0.0, %v2558
        %v2560 = vpop.f32.mrf.mxu0
        %2561 = vmatprep.mubr.bf16.mxu0 %v2492
        %2562 = vmatmul.mubr.bf16.gmra.mxu0 %v2491
        %v2563 = vpop.f32.mrf.mxu0
        %v2564 = vadd.f32 0.0, %v2563
        %v2565 = vpop.f32.mrf.mxu0
        %v2566 = vpop.f32.mrf.mxu0
        %v2567 = vadd.f32 0.0, %v2566
        %v2568 = vpop.f32.mrf.mxu0
        %2569 = vmatprep.mubr.bf16.mxu0 %v2494
        %2570 = vmatmul.mubr.bf16.gmra.mxu0 %v2493
        %v2571 = vpop.f32.mrf.mxu0
        %v2572 = vadd.f32 0.0, %v2571
        %v2573 = vpop.f32.mrf.mxu0
        %v2574 = vpop.f32.mrf.mxu0
        %v2575 = vadd.f32 0.0, %v2574
        %v2576 = vpop.f32.mrf.mxu0
        %2577 = vmatprep.mubr.bf16.mxu0 %v2496
        %2578 = vmatmul.mubr.bf16.gmra.mxu0 %v2495
        %v2579 = vpop.f32.mrf.mxu0
        %v2580 = vadd.f32 0.0, %v2579
        %v2581 = vpop.f32.mrf.mxu0
        %v2582 = vpop.f32.mrf.mxu0
        %v2583 = vadd.f32 0.0, %v2582
        %v2584 = vpop.f32.mrf.mxu0
        %2585 = vmatprep.mubr.bf16.mxu0 %v2498
        %2586 = vmatmul.mubr.bf16.gmra.mxu0 %v2497
        %v2587 = vpop.f32.mrf.mxu0
        %v2588 = vadd.f32 0.0, %v2587
        %v2589 = vpop.f32.mrf.mxu0
        %v2590 = vpop.f32.mrf.mxu0
        %v2591 = vadd.f32 0.0, %v2590
        %v2592 = vpop.f32.mrf.mxu0
        %2593 = vmatprep.mubr.bf16.mxu0 %v2500
        %2594 = vmatmul.mubr.bf16.gmra.mxu0 %v2499
        %v2595 = vpop.f32.mrf.mxu0
        %v2596 = vadd.f32 0.0, %v2595
        %v2597 = vpop.f32.mrf.mxu0
        %v2598 = vpop.f32.mrf.mxu0
        %v2599 = vadd.f32 0.0, %v2598
        %v2600 = vpop.f32.mrf.mxu0
        %2601 = vmatprep.mubr.bf16.mxu0 %v2502
        %2602 = vmatmul.mubr.bf16.gmra.mxu0 %v2501
        %v2603 = vpop.f32.mrf.mxu0
        %v2604 = vadd.f32 0.0, %v2603
        %v2605 = vpop.f32.mrf.mxu0
        %v2606 = vpop.f32.mrf.mxu0
        %v2607 = vadd.f32 0.0, %v2606
        %v2608 = vpop.f32.mrf.mxu0
        %2609 = vmatprep.mubr.bf16.mxu0 %v2504
        %2610 = vmatmul.mubr.bf16.gmra.mxu0 %v2503
        %v2611 = vpop.f32.mrf.mxu0
        %v2612 = vadd.f32 0.0, %v2611
        %v2613 = vpop.f32.mrf.mxu0
        %v2614 = vpop.f32.mrf.mxu0
        %v2615 = vadd.f32 0.0, %v2614
        %v2616 = vpop.f32.mrf.mxu0
        %2617 = vmatprep.mubr.bf16.mxu0 %v2506
        %2618 = vmatmul.mubr.bf16.gmra.mxu0 %v2505
        %v2619 = vpop.f32.mrf.mxu0
        %v2620 = vadd.f32 0.0, %v2619
        %v2621 = vpop.f32.mrf.mxu0
        %v2622 = vpop.f32.mrf.mxu0
        %v2623 = vadd.f32 0.0, %v2622
        %v2624 = vpop.f32.mrf.mxu0
        %2625 = vmatprep.mubr.bf16.mxu0 %v2508
        %2626 = vmatmul.mubr.bf16.gmra.mxu0 %v2507
        %v2627 = vpop.f32.mrf.mxu0
        %v2628 = vadd.f32 0.0, %v2627
        %v2629 = vpop.f32.mrf.mxu0
        %v2630 = vpop.f32.mrf.mxu0
        %v2631 = vadd.f32 0.0, %v2630
        %v2632 = vpop.f32.mrf.mxu0
        %2633 = vmatprep.mubr.bf16.mxu0 %v2510
        %2634 = vmatmul.mubr.bf16.gmra.mxu0 %v2509
        %v2635 = vpop.f32.mrf.mxu0
        %v2636 = vadd.f32 0.0, %v2635
        %v2637 = vpop.f32.mrf.mxu0
        %v2638 = vpop.f32.mrf.mxu0
        %v2639 = vadd.f32 0.0, %v2638
        %v2640 = vpop.f32.mrf.mxu0
        %2641 = vmatprep.mubr.bf16.mxu0 %v2512
        %2642 = vmatmul.mubr.bf16.gmra.mxu0 %v2511
        %v2643 = vpop.f32.mrf.mxu0
        %v2644 = vadd.f32 0.0, %v2643
        %v2645 = vpop.f32.mrf.mxu0
        %v2646 = vpop.f32.mrf.mxu0
        %v2647 = vadd.f32 0.0, %v2646
        %v2648 = vpop.f32.mrf.mxu0
        %2649 = vmatprep.mubr.bf16.mxu0 %v2514
        %2650 = vmatmul.mubr.bf16.gmra.mxu0 %v2513
        %v2651 = vpop.f32.mrf.mxu0
        %v2652 = vadd.f32 0.0, %v2651
        %v2653 = vpop.f32.mrf.mxu0
        %v2654 = vpop.f32.mrf.mxu0
        %v2655 = vadd.f32 0.0, %v2654
        %v2656 = vpop.f32.mrf.mxu0
        %2657 = vmatprep.mubr.bf16.mxu0 %v2516
        %2658 = vmatmul.mubr.bf16.gmra.mxu0 %v2515
        %v2659 = vpop.f32.mrf.mxu0
        %v2660 = vadd.f32 0.0, %v2659
        %v2661 = vpop.f32.mrf.mxu0
        %v2662 = vpop.f32.mrf.mxu0
        %v2663 = vadd.f32 0.0, %v2662
        %v2664 = vpop.f32.mrf.mxu0
        %2665 = vmatprep.mubr.bf16.mxu0 %v2518
        %2666 = vmatmul.mubr.bf16.gmra.mxu0 %v2517
        %v2667 = vpop.f32.mrf.mxu0
        %v2668 = vadd.f32 0.0, %v2667
        %v2669 = vpop.f32.mrf.mxu0
        %v2670 = vpop.f32.mrf.mxu0
        %v2671 = vadd.f32 0.0, %v2670
        %v2672 = vpop.f32.mrf.mxu0
        %2673 = vmatprep.mubr.bf16.mxu0 %v2520
        %2674 = vmatmul.mubr.bf16.gmra.mxu0 %v2519
        %v2675 = vpop.f32.mrf.mxu0
        %v2676 = vadd.f32 0.0, %v2675
        %v2677 = vpop.f32.mrf.mxu0
        %v2678 = vpop.f32.mrf.mxu0
        %v2679 = vadd.f32 0.0, %v2678
        %v2680 = vpop.f32.mrf.mxu0
        %2681 = vdwg.mxu0
        %v2682 = vrcp.pop %v2395
        %v2683 = vrcp.pop %v2398
        %v2684 = vrcp.pop %v2401
        %v2685 = vrcp.pop %v2404
        %v2686 = vrcp.pop %v2407
        %v2687 = vrcp.pop %v2410
        %v2688 = vrcp.pop %v2413
        %v2689 = vrcp.pop %v2416
        %v2690 = vrcp.pop %v2419
        %v2691 = vrcp.pop %v2422
        %v2692 = vrcp.pop %v2425
        %v2693 = vrcp.pop %v2428
        %v2694 = vrcp.pop %v2431
        %v2695 = vrcp.pop %v2434
        %v2696 = vrcp.pop %v2437
        %v2697 = vrcp.pop %v2440
        %v2698 = vrcp.pop %v2443
        %v2699 = vrcp.pop %v2446
        %v2700 = vrcp.pop %v2449
        %v2701 = vrcp.pop %v2452
        %v2702 = vrcp.pop %v2455
        %v2703 = vrcp.pop %v2458
        %v2704 = vrcp.pop %v2461
        %v2705 = vrcp.pop %v2464
        %v2706 = vrcp.pop %v2467
        %v2707 = vrcp.pop %v2470
        %v2708 = vrcp.pop %v2473
        %v2709 = vrcp.pop %v2476
        %v2710 = vrcp.pop %v2479
        %v2711 = vrcp.pop %v2482
        %v2712 = vrcp.pop %v2485
        %v2713 = vrcp.pop %v2488
        %v2714 = vmul.f32 %v2556, %v2682
        %v2715 = vmul.f32 %v2559, %v2683
        %v2716 = vmul.f32 %v2564, %v2684
        %v2717 = vmul.f32 %v2567, %v2685
        %v2718 = vmul.f32 %v2572, %v2686
        %v2719 = vmul.f32 %v2575, %v2687
        %v2720 = vmul.f32 %v2580, %v2688
        %v2721 = vmul.f32 %v2583, %v2689
        %v2722 = vmul.f32 %v2588, %v2690
        %v2723 = vmul.f32 %v2591, %v2691
        %v2724 = vmul.f32 %v2596, %v2692
        %v2725 = vmul.f32 %v2599, %v2693
        %v2726 = vmul.f32 %v2604, %v2694
        %v2727 = vmul.f32 %v2607, %v2695
        %v2728 = vmul.f32 %v2612, %v2696
        %v2729 = vmul.f32 %v2615, %v2697
        %v2730 = vmul.f32 %v2620, %v2698
        %v2731 = vmul.f32 %v2623, %v2699
        %v2732 = vmul.f32 %v2628, %v2700
        %v2733 = vmul.f32 %v2631, %v2701
        %v2734 = vmul.f32 %v2636, %v2702
        %v2735 = vmul.f32 %v2639, %v2703
        %v2736 = vmul.f32 %v2644, %v2704
        %v2737 = vmul.f32 %v2647, %v2705
        %v2738 = vmul.f32 %v2652, %v2706
        %v2739 = vmul.f32 %v2655, %v2707
        %v2740 = vmul.f32 %v2660, %v2708
        %v2741 = vmul.f32 %v2663, %v2709
        %v2742 = vmul.f32 %v2668, %v2710
        %v2743 = vmul.f32 %v2671, %v2711
        %v2744 = vmul.f32 %v2676, %v2712
        %v2745 = vmul.f32 %v2679, %v2713
        %v2746 = vpack.c.bf16 %v2715, %v2714
        %v2747 = vpack.c.bf16 %v2717, %v2716
        %v2748 = vpack.c.bf16 %v2719, %v2718
        %v2749 = vpack.c.bf16 %v2721, %v2720
        %v2750 = vpack.c.bf16 %v2723, %v2722
        %v2751 = vpack.c.bf16 %v2725, %v2724
        %v2752 = vpack.c.bf16 %v2727, %v2726
        %v2753 = vpack.c.bf16 %v2729, %v2728
        %v2754 = vpack.c.bf16 %v2731, %v2730
        %v2755 = vpack.c.bf16 %v2733, %v2732
        %v2756 = vpack.c.bf16 %v2735, %v2734
        %v2757 = vpack.c.bf16 %v2737, %v2736
        %v2758 = vpack.c.bf16 %v2739, %v2738
        %v2759 = vpack.c.bf16 %v2741, %v2740
        %v2760 = vpack.c.bf16 %v2743, %v2742
        %v2761 = vpack.c.bf16 %v2745, %v2744
        %v2762 = vld [vmem:[%s3] sm:$0xf]
        %v2763 = vld [vmem:[%s3 + $0x4] sm:$0xf]
        %v2764 = vld [vmem:[%s3 + $0x8] sm:$0xf]
        %v2765 = vld [vmem:[%s3 + $0xc] sm:$0xf]
        %v2766 = vld [vmem:[%s3 + $0x10] sm:$0xf]
        %v2767 = vld [vmem:[%s3 + $0x14] sm:$0xf]
        %v2768 = vld [vmem:[%s3 + $0x18] sm:$0xf]
        %v2769 = vld [vmem:[%s3 + $0x1c] sm:$0xf]
        %v2770 = vld [vmem:[%s3 + $0x20] sm:$0xf]
        %v2771 = vld [vmem:[%s3 + $0x24] sm:$0xf]
        %v2772 = vld [vmem:[%s3 + $0x28] sm:$0xf]
        %v2773 = vld [vmem:[%s3 + $0x2c] sm:$0xf]
        %v2774 = vld [vmem:[%s3 + $0x30] sm:$0xf]
        %v2775 = vld [vmem:[%s3 + $0x34] sm:$0xf]
        %v2776 = vld [vmem:[%s3 + $0x38] sm:$0xf]
        %v2777 = vld [vmem:[%s3 + $0x3c] sm:$0xf]
        %v2778 = vld [vmem:[%s4] sm:$0x1]
        %v2780 = vlaneseq
        %v2781 = vshrl.u32 %v2780, 7
        %v2782 = vsub.s32 0, %v2781
        %v2783 = vrot.slane %v2778, %v2782
        %v2801 = vunpack.c.l.b16 %v2762
        %v2802 = vunpack.c.l.b16 %v2763
        %v2803 = vunpack.c.l.b16 %v2764
        %v2804 = vunpack.c.l.b16 %v2765
        %v2805 = vunpack.c.l.b16 %v2766
        %v2806 = vunpack.c.l.b16 %v2767
        %v2807 = vunpack.c.l.b16 %v2768
        %v2808 = vunpack.c.l.b16 %v2769
        %v2809 = vunpack.c.l.b16 %v2770
        %v2810 = vunpack.c.l.b16 %v2771
        %v2811 = vunpack.c.l.b16 %v2772
        %v2812 = vunpack.c.l.b16 %v2773
        %v2813 = vunpack.c.l.b16 %v2774
        %v2814 = vunpack.c.l.b16 %v2775
        %v2815 = vunpack.c.l.b16 %v2776
        %v2816 = vunpack.c.l.b16 %v2777
        %v2817 = vpack.c.b16 %v2802, %v2801
        %v2818 = vpack.c.b16 %v2804, %v2803
        %v2819 = vpack.c.b16 %v2806, %v2805
        %v2820 = vpack.c.b16 %v2808, %v2807
        %v2821 = vpack.c.b16 %v2810, %v2809
        %v2822 = vpack.c.b16 %v2812, %v2811
        %v2823 = vpack.c.b16 %v2814, %v2813
        %v2824 = vpack.c.b16 %v2816, %v2815
        %2833 = vmatprep.subr.bf16.mxu0 0
        %2834 = vmatpush1.bf16.msra.mxu0 %v2824
        %2835 = vmatprep.subr.bf16.mxu0 0
        %2836 = vmatpush1.bf16.msra.mxu0 %v2823
        %2837 = vmatprep.subr.bf16.mxu0 0
        %2838 = vmatpush1.bf16.msra.mxu0 %v2822
        %2839 = vmatprep.subr.bf16.mxu0 0
        %2840 = vmatpush1.bf16.msra.mxu0 %v2821
        %2841 = vmatprep.subr.bf16.mxu0 0
        %2842 = vmatpush1.bf16.msra.mxu0 %v2820
        %2843 = vmatprep.subr.bf16.mxu0 0
        %2844 = vmatpush1.bf16.msra.mxu0 %v2819
        %2845 = vmatprep.subr.bf16.mxu0 0
        %2846 = vmatpush1.bf16.msra.mxu0 %v2818
        %2847 = vmatprep.subr.bf16.mxu0 0
        %2848 = vmatpush1.bf16.msra.mxu0 %v2817
        %2849 = vmatprep.subr.bf16.mxu0 0
        %2850 = vmatpush2.bf16.msra.mxu0 0
        %2851 = vmatprep.subr.bf16.mxu0 0
        %2852 = vmatpush2.bf16.msra.mxu0 0
        %2853 = vmatprep.subr.bf16.mxu0 0
        %2854 = vmatpush2.bf16.msra.mxu0 0
        %2855 = vmatprep.subr.bf16.mxu0 0
        %2856 = vmatpush2.bf16.msra.mxu0 0
        %2857 = vmatprep.subr.bf16.mxu0 0
        %2858 = vmatpush2.bf16.msra.mxu0 0
        %2859 = vmatprep.subr.bf16.mxu0 0
        %2860 = vmatpush2.bf16.msra.mxu0 0
        %2861 = vmatprep.subr.bf16.mxu0 0
        %2862 = vmatpush2.bf16.msra.mxu0 0
        %2863 = vmatprep.subr.bf16.mxu0 0
        %2864 = vmatpush2.bf16.msra.mxu0 0
        %2865 = vmatprep.mubr.bf16.mxu0 0
        %2866 = vmatmul.mubr.bf16.gmra.mxu0 %v2746
        %v2867 = vpop.f32.mrf.mxu0
        %v2868 = vadd.f32 %v2783, %v2867
        %v2869 = vpop.f32.mrf.mxu0
        %v2870 = vpop.f32.mrf.mxu0
        %v2871 = vadd.f32 %v2783, %v2870
        %v2872 = vpop.f32.mrf.mxu0
        %2873 = vmatprep.mubr.bf16.mxu0 0
        %2874 = vmatmul.mubr.bf16.gmra.mxu0 %v2747
        %v2875 = vpop.f32.mrf.mxu0
        %v2876 = vadd.f32 %v2783, %v2875
        %v2877 = vpop.f32.mrf.mxu0
        %v2878 = vpop.f32.mrf.mxu0
        %v2879 = vadd.f32 %v2783, %v2878
        %v2880 = vpop.f32.mrf.mxu0
        %2881 = vmatprep.mubr.bf16.mxu0 0
        %2882 = vmatmul.mubr.bf16.gmra.mxu0 %v2748
        %v2883 = vpop.f32.mrf.mxu0
        %v2884 = vadd.f32 %v2783, %v2883
        %v2885 = vpop.f32.mrf.mxu0
        %v2886 = vpop.f32.mrf.mxu0
        %v2887 = vadd.f32 %v2783, %v2886
        %v2888 = vpop.f32.mrf.mxu0
        %2889 = vmatprep.mubr.bf16.mxu0 0
        %2890 = vmatmul.mubr.bf16.gmra.mxu0 %v2749
        %v2891 = vpop.f32.mrf.mxu0
        %v2892 = vadd.f32 %v2783, %v2891
        %v2893 = vpop.f32.mrf.mxu0
        %v2894 = vpop.f32.mrf.mxu0
        %v2895 = vadd.f32 %v2783, %v2894
        %v2896 = vpop.f32.mrf.mxu0
        %2897 = vmatprep.mubr.bf16.mxu0 0
        %2898 = vmatmul.mubr.bf16.gmra.mxu0 %v2750
        %v2899 = vpop.f32.mrf.mxu0
        %v2900 = vadd.f32 %v2783, %v2899
        %v2901 = vpop.f32.mrf.mxu0
        %v2902 = vpop.f32.mrf.mxu0
        %v2903 = vadd.f32 %v2783, %v2902
        %v2904 = vpop.f32.mrf.mxu0
        %2905 = vmatprep.mubr.bf16.mxu0 0
        %2906 = vmatmul.mubr.bf16.gmra.mxu0 %v2751
        %v2907 = vpop.f32.mrf.mxu0
        %v2908 = vadd.f32 %v2783, %v2907
        %v2909 = vpop.f32.mrf.mxu0
        %v2910 = vpop.f32.mrf.mxu0
        %v2911 = vadd.f32 %v2783, %v2910
        %v2912 = vpop.f32.mrf.mxu0
        %2913 = vmatprep.mubr.bf16.mxu0 0
        %2914 = vmatmul.mubr.bf16.gmra.mxu0 %v2752
        %v2915 = vpop.f32.mrf.mxu0
        %v2916 = vadd.f32 %v2783, %v2915
        %v2917 = vpop.f32.mrf.mxu0
        %v2918 = vpop.f32.mrf.mxu0
        %v2919 = vadd.f32 %v2783, %v2918
        %v2920 = vpop.f32.mrf.mxu0
        %2921 = vmatprep.mubr.bf16.mxu0 0
        %2922 = vmatmul.mubr.bf16.gmra.mxu0 %v2753
        %v2923 = vpop.f32.mrf.mxu0
        %v2924 = vadd.f32 %v2783, %v2923
        %v2925 = vpop.f32.mrf.mxu0
        %v2926 = vpop.f32.mrf.mxu0
        %v2927 = vadd.f32 %v2783, %v2926
        %v2928 = vpop.f32.mrf.mxu0
        %2929 = vmatprep.mubr.bf16.mxu0 0
        %2930 = vmatmul.mubr.bf16.gmra.mxu0 %v2754
        %v2931 = vpop.f32.mrf.mxu0
        %v2932 = vadd.f32 %v2783, %v2931
        %v2933 = vpop.f32.mrf.mxu0
        %v2934 = vpop.f32.mrf.mxu0
        %v2935 = vadd.f32 %v2783, %v2934
        %v2936 = vpop.f32.mrf.mxu0
        %2937 = vmatprep.mubr.bf16.mxu0 0
        %2938 = vmatmul.mubr.bf16.gmra.mxu0 %v2755
        %v2939 = vpop.f32.mrf.mxu0
        %v2940 = vadd.f32 %v2783, %v2939
        %v2941 = vpop.f32.mrf.mxu0
        %v2942 = vpop.f32.mrf.mxu0
        %v2943 = vadd.f32 %v2783, %v2942
        %v2944 = vpop.f32.mrf.mxu0
        %2945 = vmatprep.mubr.bf16.mxu0 0
        %2946 = vmatmul.mubr.bf16.gmra.mxu0 %v2756
        %v2947 = vpop.f32.mrf.mxu0
        %v2948 = vadd.f32 %v2783, %v2947
        %v2949 = vpop.f32.mrf.mxu0
        %v2950 = vpop.f32.mrf.mxu0
        %v2951 = vadd.f32 %v2783, %v2950
        %v2952 = vpop.f32.mrf.mxu0
        %2953 = vmatprep.mubr.bf16.mxu0 0
        %2954 = vmatmul.mubr.bf16.gmra.mxu0 %v2757
        %v2955 = vpop.f32.mrf.mxu0
        %v2956 = vadd.f32 %v2783, %v2955
        %v2957 = vpop.f32.mrf.mxu0
        %v2958 = vpop.f32.mrf.mxu0
        %v2959 = vadd.f32 %v2783, %v2958
        %v2960 = vpop.f32.mrf.mxu0
        %2961 = vmatprep.mubr.bf16.mxu0 0
        %2962 = vmatmul.mubr.bf16.gmra.mxu0 %v2758
        %v2963 = vpop.f32.mrf.mxu0
        %v2964 = vadd.f32 %v2783, %v2963
        %v2965 = vpop.f32.mrf.mxu0
        %v2966 = vpop.f32.mrf.mxu0
        %v2967 = vadd.f32 %v2783, %v2966
        %v2968 = vpop.f32.mrf.mxu0
        %2969 = vmatprep.mubr.bf16.mxu0 0
        %2970 = vmatmul.mubr.bf16.gmra.mxu0 %v2759
        %v2971 = vpop.f32.mrf.mxu0
        %v2972 = vadd.f32 %v2783, %v2971
        %v2973 = vpop.f32.mrf.mxu0
        %v2974 = vpop.f32.mrf.mxu0
        %v2975 = vadd.f32 %v2783, %v2974
        %v2976 = vpop.f32.mrf.mxu0
        %2977 = vmatprep.mubr.bf16.mxu0 0
        %2978 = vmatmul.mubr.bf16.gmra.mxu0 %v2760
        %v2979 = vpop.f32.mrf.mxu0
        %v2980 = vadd.f32 %v2783, %v2979
        %v2981 = vpop.f32.mrf.mxu0
        %v2982 = vpop.f32.mrf.mxu0
        %v2983 = vadd.f32 %v2783, %v2982
        %v2984 = vpop.f32.mrf.mxu0
        %2985 = vmatprep.mubr.bf16.mxu0 0
        %2986 = vmatmul.mubr.bf16.gmra.mxu0 %v2761
        %v2987 = vpop.f32.mrf.mxu0
        %v2988 = vadd.f32 %v2783, %v2987
        %v2989 = vpop.f32.mrf.mxu0
        %v2990 = vpop.f32.mrf.mxu0
        %v2991 = vadd.f32 %v2783, %v2990
        %v2992 = vpop.f32.mrf.mxu0
        %2993 = vdwg.mxu0
        %v2994 = vadd.f32 %v656, %v2868
        %v2995 = vadd.f32 %v657, %v2871
        %v2996 = vadd.f32 %v658, %v2876
        %v2997 = vadd.f32 %v659, %v2879
        %v2998 = vadd.f32 %v660, %v2884
        %v2999 = vadd.f32 %v661, %v2887
        %v3000 = vadd.f32 %v662, %v2892
        %v3001 = vadd.f32 %v663, %v2895
        %v3002 = vadd.f32 %v664, %v2900
        %v3003 = vadd.f32 %v665, %v2903
        %v3004 = vadd.f32 %v666, %v2908
        %v3005 = vadd.f32 %v667, %v2911
        %v3006 = vadd.f32 %v668, %v2916
        %v3007 = vadd.f32 %v669, %v2919
        %v3008 = vadd.f32 %v670, %v2924
        %v3009 = vadd.f32 %v671, %v2927
        %v3010 = vadd.f32 %v672, %v2932
        %v3011 = vadd.f32 %v673, %v2935
        %v3012 = vadd.f32 %v674, %v2940
        %v3013 = vadd.f32 %v675, %v2943
        %v3014 = vadd.f32 %v676, %v2948
        %v3015 = vadd.f32 %v677, %v2951
        %v3016 = vadd.f32 %v678, %v2956
        %v3017 = vadd.f32 %v679, %v2959
        %v3018 = vadd.f32 %v680, %v2964
        %v3019 = vadd.f32 %v681, %v2967
        %v3020 = vadd.f32 %v682, %v2972
        %v3021 = vadd.f32 %v683, %v2975
        %v3022 = vadd.f32 %v684, %v2980
        %v3023 = vadd.f32 %v685, %v2983
        %v3024 = vadd.f32 %v686, %v2988
        %v3025 = vadd.f32 %v687, %v2991
        %v3026 = vld [vmem:[%s5] sm:$0x1]
        %v3027 = vld [vmem:[%s6] sm:$0x1]
        %v3028 = vsel %vm761, %v2994, 0.0
        %3029 = vadd.xlane.f32.xlu0 %v3028
        %v3030 = vpop.xlane.xlu0 %3029
        %v3031 = vsel %vm761, %v2995, 0.0
        %3032 = vadd.xlane.f32.xlu0 %v3031
        %v3033 = vpop.xlane.xlu0 %3032
        %v3034 = vsel %vm761, %v2996, 0.0
        %3035 = vadd.xlane.f32.xlu0 %v3034
        %v3036 = vpop.xlane.xlu0 %3035
        %v3037 = vsel %vm761, %v2997, 0.0
        %3038 = vadd.xlane.f32.xlu0 %v3037
        %v3039 = vpop.xlane.xlu0 %3038
        %v3040 = vsel %vm761, %v2998, 0.0
        %3041 = vadd.xlane.f32.xlu0 %v3040
        %v3042 = vpop.xlane.xlu0 %3041
        %v3043 = vsel %vm761, %v2999, 0.0
        %3044 = vadd.xlane.f32.xlu0 %v3043
        %v3045 = vpop.xlane.xlu0 %3044
        %v3046 = vsel %vm761, %v3000, 0.0
        %3047 = vadd.xlane.f32.xlu0 %v3046
        %v3048 = vpop.xlane.xlu0 %3047
        %v3049 = vsel %vm761, %v3001, 0.0
        %3050 = vadd.xlane.f32.xlu0 %v3049
        %v3051 = vpop.xlane.xlu0 %3050
        %v3052 = vsel %vm761, %v3002, 0.0
        %3053 = vadd.xlane.f32.xlu0 %v3052
        %v3054 = vpop.xlane.xlu0 %3053
        %v3055 = vsel %vm761, %v3003, 0.0
        %3056 = vadd.xlane.f32.xlu0 %v3055
        %v3057 = vpop.xlane.xlu0 %3056
        %v3058 = vsel %vm761, %v3004, 0.0
        %3059 = vadd.xlane.f32.xlu0 %v3058
        %v3060 = vpop.xlane.xlu0 %3059
        %v3061 = vsel %vm761, %v3005, 0.0
        %3062 = vadd.xlane.f32.xlu0 %v3061
        %v3063 = vpop.xlane.xlu0 %3062
        %v3064 = vsel %vm761, %v3006, 0.0
        %3065 = vadd.xlane.f32.xlu0 %v3064
        %v3066 = vpop.xlane.xlu0 %3065
        %v3067 = vsel %vm761, %v3007, 0.0
        %3068 = vadd.xlane.f32.xlu0 %v3067
        %v3069 = vpop.xlane.xlu0 %3068
        %v3070 = vsel %vm761, %v3008, 0.0
        %3071 = vadd.xlane.f32.xlu0 %v3070
        %v3072 = vpop.xlane.xlu0 %3071
        %v3073 = vsel %vm761, %v3009, 0.0
        %3074 = vadd.xlane.f32.xlu0 %v3073
        %v3075 = vpop.xlane.xlu0 %3074
        %v3076 = vsel %vm761, %v3010, 0.0
        %3077 = vadd.xlane.f32.xlu0 %v3076
        %v3078 = vpop.xlane.xlu0 %3077
        %v3079 = vsel %vm761, %v3011, 0.0
        %3080 = vadd.xlane.f32.xlu0 %v3079
        %v3081 = vpop.xlane.xlu0 %3080
        %v3082 = vsel %vm761, %v3012, 0.0
        %3083 = vadd.xlane.f32.xlu0 %v3082
        %v3084 = vpop.xlane.xlu0 %3083
        %v3085 = vsel %vm761, %v3013, 0.0
        %3086 = vadd.xlane.f32.xlu0 %v3085
        %v3087 = vpop.xlane.xlu0 %3086
        %v3088 = vsel %vm761, %v3014, 0.0
        %3089 = vadd.xlane.f32.xlu0 %v3088
        %v3090 = vpop.xlane.xlu0 %3089
        %v3091 = vsel %vm761, %v3015, 0.0
        %3092 = vadd.xlane.f32.xlu0 %v3091
        %v3093 = vpop.xlane.xlu0 %3092
        %v3094 = vsel %vm761, %v3016, 0.0
        %3095 = vadd.xlane.f32.xlu0 %v3094
        %v3096 = vpop.xlane.xlu0 %3095
        %v3097 = vsel %vm761, %v3017, 0.0
        %3098 = vadd.xlane.f32.xlu0 %v3097
        %v3099 = vpop.xlane.xlu0 %3098
        %v3100 = vsel %vm761, %v3018, 0.0
        %3101 = vadd.xlane.f32.xlu0 %v3100
        %v3102 = vpop.xlane.xlu0 %3101
        %v3103 = vsel %vm761, %v3019, 0.0
        %3104 = vadd.xlane.f32.xlu0 %v3103
        %v3105 = vpop.xlane.xlu0 %3104
        %v3106 = vsel %vm761, %v3020, 0.0
        %3107 = vadd.xlane.f32.xlu0 %v3106
        %v3108 = vpop.xlane.xlu0 %3107
        %v3109 = vsel %vm761, %v3021, 0.0
        %3110 = vadd.xlane.f32.xlu0 %v3109
        %v3111 = vpop.xlane.xlu0 %3110
        %v3112 = vsel %vm761, %v3022, 0.0
        %3113 = vadd.xlane.f32.xlu0 %v3112
        %v3114 = vpop.xlane.xlu0 %3113
        %v3115 = vsel %vm761, %v3023, 0.0
        %3116 = vadd.xlane.f32.xlu0 %v3115
        %v3117 = vpop.xlane.xlu0 %3116
        %v3118 = vsel %vm761, %v3024, 0.0
        %3119 = vadd.xlane.f32.xlu0 %v3118
        %v3120 = vpop.xlane.xlu0 %3119
        %v3121 = vsel %vm761, %v3025, 0.0
        %3122 = vadd.xlane.f32.xlu0 %v3121
        %v3123 = vpop.xlane.xlu0 %3122
        %v3124 = vrcp.pop 32.0
        %v3125 = vmul.f32 %v3030, %v3124
        %v3126 = vmul.f32 %v3033, %v3124
        %v3127 = vmul.f32 %v3036, %v3124
        %v3128 = vmul.f32 %v3039, %v3124
        %v3129 = vmul.f32 %v3042, %v3124
        %v3130 = vmul.f32 %v3045, %v3124
        %v3131 = vmul.f32 %v3048, %v3124
        %v3132 = vmul.f32 %v3051, %v3124
        %v3133 = vmul.f32 %v3054, %v3124
        %v3134 = vmul.f32 %v3057, %v3124
        %v3135 = vmul.f32 %v3060, %v3124
        %v3136 = vmul.f32 %v3063, %v3124
        %v3137 = vmul.f32 %v3066, %v3124
        %v3138 = vmul.f32 %v3069, %v3124
        %v3139 = vmul.f32 %v3072, %v3124
        %v3140 = vmul.f32 %v3075, %v3124
        %v3141 = vmul.f32 %v3078, %v3124
        %v3142 = vmul.f32 %v3081, %v3124
        %v3143 = vmul.f32 %v3084, %v3124
        %v3144 = vmul.f32 %v3087, %v3124
        %v3145 = vmul.f32 %v3090, %v3124
        %v3146 = vmul.f32 %v3093, %v3124
        %v3147 = vmul.f32 %v3096, %v3124
        %v3148 = vmul.f32 %v3099, %v3124
        %v3149 = vmul.f32 %v3102, %v3124
        %v3150 = vmul.f32 %v3105, %v3124
        %v3151 = vmul.f32 %v3108, %v3124
        %v3152 = vmul.f32 %v3111, %v3124
        %v3153 = vmul.f32 %v3114, %v3124
        %v3154 = vmul.f32 %v3117, %v3124
        %v3155 = vmul.f32 %v3120, %v3124
        %v3156 = vmul.f32 %v3123, %v3124
        %v3157 = vmul.f32 %v2994, %v2994
        %v3158 = vmul.f32 %v2995, %v2995
        %v3159 = vmul.f32 %v2996, %v2996
        %v3160 = vmul.f32 %v2997, %v2997
        %v3161 = vmul.f32 %v2998, %v2998
        %v3162 = vmul.f32 %v2999, %v2999
        %v3163 = vmul.f32 %v3000, %v3000
        %v3164 = vmul.f32 %v3001, %v3001
        %v3165 = vmul.f32 %v3002, %v3002
        %v3166 = vmul.f32 %v3003, %v3003
        %v3167 = vmul.f32 %v3004, %v3004
        %v3168 = vmul.f32 %v3005, %v3005
        %v3169 = vmul.f32 %v3006, %v3006
        %v3170 = vmul.f32 %v3007, %v3007
        %v3171 = vmul.f32 %v3008, %v3008
        %v3172 = vmul.f32 %v3009, %v3009
        %v3173 = vmul.f32 %v3010, %v3010
        %v3174 = vmul.f32 %v3011, %v3011
        %v3175 = vmul.f32 %v3012, %v3012
        %v3176 = vmul.f32 %v3013, %v3013
        %v3177 = vmul.f32 %v3014, %v3014
        %v3178 = vmul.f32 %v3015, %v3015
        %v3179 = vmul.f32 %v3016, %v3016
        %v3180 = vmul.f32 %v3017, %v3017
        %v3181 = vmul.f32 %v3018, %v3018
        %v3182 = vmul.f32 %v3019, %v3019
        %v3183 = vmul.f32 %v3020, %v3020
        %v3184 = vmul.f32 %v3021, %v3021
        %v3185 = vmul.f32 %v3022, %v3022
        %v3186 = vmul.f32 %v3023, %v3023
        %v3187 = vmul.f32 %v3024, %v3024
        %v3188 = vmul.f32 %v3025, %v3025
        %v3189 = vsel %vm761, %v3157, 0.0
        %3190 = vadd.xlane.f32.xlu0 %v3189
        %v3191 = vpop.xlane.xlu0 %3190
        %v3192 = vsel %vm761, %v3158, 0.0
        %3193 = vadd.xlane.f32.xlu0 %v3192
        %v3194 = vpop.xlane.xlu0 %3193
        %v3195 = vsel %vm761, %v3159, 0.0
        %3196 = vadd.xlane.f32.xlu0 %v3195
        %v3197 = vpop.xlane.xlu0 %3196
        %v3198 = vsel %vm761, %v3160, 0.0
        %3199 = vadd.xlane.f32.xlu0 %v3198
        %v3200 = vpop.xlane.xlu0 %3199
        %v3201 = vsel %vm761, %v3161, 0.0
        %3202 = vadd.xlane.f32.xlu0 %v3201
        %v3203 = vpop.xlane.xlu0 %3202
        %v3204 = vsel %vm761, %v3162, 0.0
        %3205 = vadd.xlane.f32.xlu0 %v3204
        %v3206 = vpop.xlane.xlu0 %3205
        %v3207 = vsel %vm761, %v3163, 0.0
        %3208 = vadd.xlane.f32.xlu0 %v3207
        %v3209 = vpop.xlane.xlu0 %3208
        %v3210 = vsel %vm761, %v3164, 0.0
        %3211 = vadd.xlane.f32.xlu0 %v3210
        %v3212 = vpop.xlane.xlu0 %3211
        %v3213 = vsel %vm761, %v3165, 0.0
        %3214 = vadd.xlane.f32.xlu0 %v3213
        %v3215 = vpop.xlane.xlu0 %3214
        %v3216 = vsel %vm761, %v3166, 0.0
        %3217 = vadd.xlane.f32.xlu0 %v3216
        %v3218 = vpop.xlane.xlu0 %3217
        %v3219 = vsel %vm761, %v3167, 0.0
        %3220 = vadd.xlane.f32.xlu0 %v3219
        %v3221 = vpop.xlane.xlu0 %3220
        %v3222 = vsel %vm761, %v3168, 0.0
        %3223 = vadd.xlane.f32.xlu0 %v3222
        %v3224 = vpop.xlane.xlu0 %3223
        %v3225 = vsel %vm761, %v3169, 0.0
        %3226 = vadd.xlane.f32.xlu0 %v3225
        %v3227 = vpop.xlane.xlu0 %3226
        %v3228 = vsel %vm761, %v3170, 0.0
        %3229 = vadd.xlane.f32.xlu0 %v3228
        %v3230 = vpop.xlane.xlu0 %3229
        %v3231 = vsel %vm761, %v3171, 0.0
        %3232 = vadd.xlane.f32.xlu0 %v3231
        %v3233 = vpop.xlane.xlu0 %3232
        %v3234 = vsel %vm761, %v3172, 0.0
        %3235 = vadd.xlane.f32.xlu0 %v3234
        %v3236 = vpop.xlane.xlu0 %3235
        %v3237 = vsel %vm761, %v3173, 0.0
        %3238 = vadd.xlane.f32.xlu0 %v3237
        %v3239 = vpop.xlane.xlu0 %3238
        %v3240 = vsel %vm761, %v3174, 0.0
        %3241 = vadd.xlane.f32.xlu0 %v3240
        %v3242 = vpop.xlane.xlu0 %3241
        %v3243 = vsel %vm761, %v3175, 0.0
        %3244 = vadd.xlane.f32.xlu0 %v3243
        %v3245 = vpop.xlane.xlu0 %3244
        %v3246 = vsel %vm761, %v3176, 0.0
        %3247 = vadd.xlane.f32.xlu0 %v3246
        %v3248 = vpop.xlane.xlu0 %3247
        %v3249 = vsel %vm761, %v3177, 0.0
        %3250 = vadd.xlane.f32.xlu0 %v3249
        %v3251 = vpop.xlane.xlu0 %3250
        %v3252 = vsel %vm761, %v3178, 0.0
        %3253 = vadd.xlane.f32.xlu0 %v3252
        %v3254 = vpop.xlane.xlu0 %3253
        %v3255 = vsel %vm761, %v3179, 0.0
        %3256 = vadd.xlane.f32.xlu0 %v3255
        %v3257 = vpop.xlane.xlu0 %3256
        %v3258 = vsel %vm761, %v3180, 0.0
        %3259 = vadd.xlane.f32.xlu0 %v3258
        %v3260 = vpop.xlane.xlu0 %3259
        %v3261 = vsel %vm761, %v3181, 0.0
        %3262 = vadd.xlane.f32.xlu0 %v3261
        %v3263 = vpop.xlane.xlu0 %3262
        %v3264 = vsel %vm761, %v3182, 0.0
        %3265 = vadd.xlane.f32.xlu0 %v3264
        %v3266 = vpop.xlane.xlu0 %3265
        %v3267 = vsel %vm761, %v3183, 0.0
        %3268 = vadd.xlane.f32.xlu0 %v3267
        %v3269 = vpop.xlane.xlu0 %3268
        %v3270 = vsel %vm761, %v3184, 0.0
        %3271 = vadd.xlane.f32.xlu0 %v3270
        %v3272 = vpop.xlane.xlu0 %3271
        %v3273 = vsel %vm761, %v3185, 0.0
        %3274 = vadd.xlane.f32.xlu0 %v3273
        %v3275 = vpop.xlane.xlu0 %3274
        %v3276 = vsel %vm761, %v3186, 0.0
        %3277 = vadd.xlane.f32.xlu0 %v3276
        %v3278 = vpop.xlane.xlu0 %3277
        %v3279 = vsel %vm761, %v3187, 0.0
        %3280 = vadd.xlane.f32.xlu0 %v3279
        %v3281 = vpop.xlane.xlu0 %3280
        %v3282 = vsel %vm761, %v3188, 0.0
        %3283 = vadd.xlane.f32.xlu0 %v3282
        %v3284 = vpop.xlane.xlu0 %3283
        %v3285 = vmul.f32 %v3191, %v3124
        %v3286 = vmul.f32 %v3194, %v3124
        %v3287 = vmul.f32 %v3197, %v3124
        %v3288 = vmul.f32 %v3200, %v3124
        %v3289 = vmul.f32 %v3203, %v3124
        %v3290 = vmul.f32 %v3206, %v3124
        %v3291 = vmul.f32 %v3209, %v3124
        %v3292 = vmul.f32 %v3212, %v3124
        %v3293 = vmul.f32 %v3215, %v3124
        %v3294 = vmul.f32 %v3218, %v3124
        %v3295 = vmul.f32 %v3221, %v3124
        %v3296 = vmul.f32 %v3224, %v3124
        %v3297 = vmul.f32 %v3227, %v3124
        %v3298 = vmul.f32 %v3230, %v3124
        %v3299 = vmul.f32 %v3233, %v3124
        %v3300 = vmul.f32 %v3236, %v3124
        %v3301 = vmul.f32 %v3239, %v3124
        %v3302 = vmul.f32 %v3242, %v3124
        %v3303 = vmul.f32 %v3245, %v3124
        %v3304 = vmul.f32 %v3248, %v3124
        %v3305 = vmul.f32 %v3251, %v3124
        %v3306 = vmul.f32 %v3254, %v3124
        %v3307 = vmul.f32 %v3257, %v3124
        %v3308 = vmul.f32 %v3260, %v3124
        %v3309 = vmul.f32 %v3263, %v3124
        %v3310 = vmul.f32 %v3266, %v3124
        %v3311 = vmul.f32 %v3269, %v3124
        %v3312 = vmul.f32 %v3272, %v3124
        %v3313 = vmul.f32 %v3275, %v3124
        %v3314 = vmul.f32 %v3278, %v3124
        %v3315 = vmul.f32 %v3281, %v3124
        %v3316 = vmul.f32 %v3284, %v3124
        %v3317 = vmul.f32 %v3125, %v3125
        %v3318 = vmul.f32 %v3126, %v3126
        %v3319 = vmul.f32 %v3127, %v3127
        %v3320 = vmul.f32 %v3128, %v3128
        %v3321 = vmul.f32 %v3129, %v3129
        %v3322 = vmul.f32 %v3130, %v3130
        %v3323 = vmul.f32 %v3131, %v3131
        %v3324 = vmul.f32 %v3132, %v3132
        %v3325 = vmul.f32 %v3133, %v3133
        %v3326 = vmul.f32 %v3134, %v3134
        %v3327 = vmul.f32 %v3135, %v3135
        %v3328 = vmul.f32 %v3136, %v3136
        %v3329 = vmul.f32 %v3137, %v3137
        %v3330 = vmul.f32 %v3138, %v3138
        %v3331 = vmul.f32 %v3139, %v3139
        %v3332 = vmul.f32 %v3140, %v3140
        %v3333 = vmul.f32 %v3141, %v3141
        %v3334 = vmul.f32 %v3142, %v3142
        %v3335 = vmul.f32 %v3143, %v3143
        %v3336 = vmul.f32 %v3144, %v3144
        %v3337 = vmul.f32 %v3145, %v3145
        %v3338 = vmul.f32 %v3146, %v3146
        %v3339 = vmul.f32 %v3147, %v3147
        %v3340 = vmul.f32 %v3148, %v3148
        %v3341 = vmul.f32 %v3149, %v3149
        %v3342 = vmul.f32 %v3150, %v3150
        %v3343 = vmul.f32 %v3151, %v3151
        %v3344 = vmul.f32 %v3152, %v3152
        %v3345 = vmul.f32 %v3153, %v3153
        %v3346 = vmul.f32 %v3154, %v3154
        %v3347 = vmul.f32 %v3155, %v3155
        %v3348 = vmul.f32 %v3156, %v3156
        %v3349 = vsub.f32 %v3285, %v3317
        %v3350 = vsub.f32 %v3286, %v3318
        %v3351 = vsub.f32 %v3287, %v3319
        %v3352 = vsub.f32 %v3288, %v3320
        %v3353 = vsub.f32 %v3289, %v3321
        %v3354 = vsub.f32 %v3290, %v3322
        %v3355 = vsub.f32 %v3291, %v3323
        %v3356 = vsub.f32 %v3292, %v3324
        %v3357 = vsub.f32 %v3293, %v3325
        %v3358 = vsub.f32 %v3294, %v3326
        %v3359 = vsub.f32 %v3295, %v3327
        %v3360 = vsub.f32 %v3296, %v3328
        %v3361 = vsub.f32 %v3297, %v3329
        %v3362 = vsub.f32 %v3298, %v3330
        %v3363 = vsub.f32 %v3299, %v3331
        %v3364 = vsub.f32 %v3300, %v3332
        %v3365 = vsub.f32 %v3301, %v3333
        %v3366 = vsub.f32 %v3302, %v3334
        %v3367 = vsub.f32 %v3303, %v3335
        %v3368 = vsub.f32 %v3304, %v3336
        %v3369 = vsub.f32 %v3305, %v3337
        %v3370 = vsub.f32 %v3306, %v3338
        %v3371 = vsub.f32 %v3307, %v3339
        %v3372 = vsub.f32 %v3308, %v3340
        %v3373 = vsub.f32 %v3309, %v3341
        %v3374 = vsub.f32 %v3310, %v3342
        %v3375 = vsub.f32 %v3311, %v3343
        %v3376 = vsub.f32 %v3312, %v3344
        %v3377 = vsub.f32 %v3313, %v3345
        %v3378 = vsub.f32 %v3314, %v3346
        %v3379 = vsub.f32 %v3315, %v3347
        %v3380 = vsub.f32 %v3316, %v3348
        %v3381 = vmax.f32 %v3349, 0.0
        %v3382 = vmax.f32 %v3350, 0.0
        %v3383 = vmax.f32 %v3351, 0.0
        %v3384 = vmax.f32 %v3352, 0.0
        %v3385 = vmax.f32 %v3353, 0.0
        %v3386 = vmax.f32 %v3354, 0.0
        %v3387 = vmax.f32 %v3355, 0.0
        %v3388 = vmax.f32 %v3356, 0.0
        %v3389 = vmax.f32 %v3357, 0.0
        %v3390 = vmax.f32 %v3358, 0.0
        %v3391 = vmax.f32 %v3359, 0.0
        %v3392 = vmax.f32 %v3360, 0.0
        %v3393 = vmax.f32 %v3361, 0.0
        %v3394 = vmax.f32 %v3362, 0.0
        %v3395 = vmax.f32 %v3363, 0.0
        %v3396 = vmax.f32 %v3364, 0.0
        %v3397 = vmax.f32 %v3365, 0.0
        %v3398 = vmax.f32 %v3366, 0.0
        %v3399 = vmax.f32 %v3367, 0.0
        %v3400 = vmax.f32 %v3368, 0.0
        %v3401 = vmax.f32 %v3369, 0.0
        %v3402 = vmax.f32 %v3370, 0.0
        %v3403 = vmax.f32 %v3371, 0.0
        %v3404 = vmax.f32 %v3372, 0.0
        %v3405 = vmax.f32 %v3373, 0.0
        %v3406 = vmax.f32 %v3374, 0.0
        %v3407 = vmax.f32 %v3375, 0.0
        %v3408 = vmax.f32 %v3376, 0.0
        %v3409 = vmax.f32 %v3377, 0.0
        %v3410 = vmax.f32 %v3378, 0.0
        %v3411 = vmax.f32 %v3379, 0.0
        %v3412 = vmax.f32 %v3380, 0.0
        %v3413 = vsub.f32 %v2994, %v3125
        %v3414 = vsub.f32 %v2995, %v3126
        %v3415 = vsub.f32 %v2996, %v3127
        %v3416 = vsub.f32 %v2997, %v3128
        %v3417 = vsub.f32 %v2998, %v3129
        %v3418 = vsub.f32 %v2999, %v3130
        %v3419 = vsub.f32 %v3000, %v3131
        %v3420 = vsub.f32 %v3001, %v3132
        %v3421 = vsub.f32 %v3002, %v3133
        %v3422 = vsub.f32 %v3003, %v3134
        %v3423 = vsub.f32 %v3004, %v3135
        %v3424 = vsub.f32 %v3005, %v3136
        %v3425 = vsub.f32 %v3006, %v3137
        %v3426 = vsub.f32 %v3007, %v3138
        %v3427 = vsub.f32 %v3008, %v3139
        %v3428 = vsub.f32 %v3009, %v3140
        %v3429 = vsub.f32 %v3010, %v3141
        %v3430 = vsub.f32 %v3011, %v3142
        %v3431 = vsub.f32 %v3012, %v3143
        %v3432 = vsub.f32 %v3013, %v3144
        %v3433 = vsub.f32 %v3014, %v3145
        %v3434 = vsub.f32 %v3015, %v3146
        %v3435 = vsub.f32 %v3016, %v3147
        %v3436 = vsub.f32 %v3017, %v3148
        %v3437 = vsub.f32 %v3018, %v3149
        %v3438 = vsub.f32 %v3019, %v3150
        %v3439 = vsub.f32 %v3020, %v3151
        %v3440 = vsub.f32 %v3021, %v3152
        %v3441 = vsub.f32 %v3022, %v3153
        %v3442 = vsub.f32 %v3023, %v3154
        %v3443 = vsub.f32 %v3024, %v3155
        %v3444 = vsub.f32 %v3025, %v3156
        %v3445 = vadd.f32 %v3381, 1e-05
        %v3446 = vadd.f32 %v3382, 1e-05
        %v3447 = vadd.f32 %v3383, 1e-05
        %v3448 = vadd.f32 %v3384, 1e-05
        %v3449 = vadd.f32 %v3385, 1e-05
        %v3450 = vadd.f32 %v3386, 1e-05
        %v3451 = vadd.f32 %v3387, 1e-05
        %v3452 = vadd.f32 %v3388, 1e-05
        %v3453 = vadd.f32 %v3389, 1e-05
        %v3454 = vadd.f32 %v3390, 1e-05
        %v3455 = vadd.f32 %v3391, 1e-05
        %v3456 = vadd.f32 %v3392, 1e-05
        %v3457 = vadd.f32 %v3393, 1e-05
        %v3458 = vadd.f32 %v3394, 1e-05
        %v3459 = vadd.f32 %v3395, 1e-05
        %v3460 = vadd.f32 %v3396, 1e-05
        %v3461 = vadd.f32 %v3397, 1e-05
        %v3462 = vadd.f32 %v3398, 1e-05
        %v3463 = vadd.f32 %v3399, 1e-05
        %v3464 = vadd.f32 %v3400, 1e-05
        %v3465 = vadd.f32 %v3401, 1e-05
        %v3466 = vadd.f32 %v3402, 1e-05
        %v3467 = vadd.f32 %v3403, 1e-05
        %v3468 = vadd.f32 %v3404, 1e-05
        %v3469 = vadd.f32 %v3405, 1e-05
        %v3470 = vadd.f32 %v3406, 1e-05
        %v3471 = vadd.f32 %v3407, 1e-05
        %v3472 = vadd.f32 %v3408, 1e-05
        %v3473 = vadd.f32 %v3409, 1e-05
        %v3474 = vadd.f32 %v3410, 1e-05
        %v3475 = vadd.f32 %v3411, 1e-05
        %v3476 = vadd.f32 %v3412, 1e-05
        %v3477 = vrsqrt.pop %v3445
        %v3478 = vrsqrt.pop %v3446
        %v3479 = vrsqrt.pop %v3447
        %v3480 = vrsqrt.pop %v3448
        %v3481 = vrsqrt.pop %v3449
        %v3482 = vrsqrt.pop %v3450
        %v3483 = vrsqrt.pop %v3451
        %v3484 = vrsqrt.pop %v3452
        %v3485 = vrsqrt.pop %v3453
        %v3486 = vrsqrt.pop %v3454
        %v3487 = vrsqrt.pop %v3455
        %v3488 = vrsqrt.pop %v3456
        %v3489 = vrsqrt.pop %v3457
        %v3490 = vrsqrt.pop %v3458
        %v3491 = vrsqrt.pop %v3459
        %v3492 = vrsqrt.pop %v3460
        %v3493 = vrsqrt.pop %v3461
        %v3494 = vrsqrt.pop %v3462
        %v3495 = vrsqrt.pop %v3463
        %v3496 = vrsqrt.pop %v3464
        %v3497 = vrsqrt.pop %v3465
        %v3498 = vrsqrt.pop %v3466
        %v3499 = vrsqrt.pop %v3467
        %v3500 = vrsqrt.pop %v3468
        %v3501 = vrsqrt.pop %v3469
        %v3502 = vrsqrt.pop %v3470
        %v3503 = vrsqrt.pop %v3471
        %v3504 = vrsqrt.pop %v3472
        %v3505 = vrsqrt.pop %v3473
        %v3506 = vrsqrt.pop %v3474
        %v3507 = vrsqrt.pop %v3475
        %v3508 = vrsqrt.pop %v3476
        %v3509 = vmul.f32 %v3413, %v3477
        %v3510 = vmul.f32 %v3414, %v3478
        %v3511 = vmul.f32 %v3415, %v3479
        %v3512 = vmul.f32 %v3416, %v3480
        %v3513 = vmul.f32 %v3417, %v3481
        %v3514 = vmul.f32 %v3418, %v3482
        %v3515 = vmul.f32 %v3419, %v3483
        %v3516 = vmul.f32 %v3420, %v3484
        %v3517 = vmul.f32 %v3421, %v3485
        %v3518 = vmul.f32 %v3422, %v3486
        %v3519 = vmul.f32 %v3423, %v3487
        %v3520 = vmul.f32 %v3424, %v3488
        %v3521 = vmul.f32 %v3425, %v3489
        %v3522 = vmul.f32 %v3426, %v3490
        %v3523 = vmul.f32 %v3427, %v3491
        %v3524 = vmul.f32 %v3428, %v3492
        %v3525 = vmul.f32 %v3429, %v3493
        %v3526 = vmul.f32 %v3430, %v3494
        %v3527 = vmul.f32 %v3431, %v3495
        %v3528 = vmul.f32 %v3432, %v3496
        %v3529 = vmul.f32 %v3433, %v3497
        %v3530 = vmul.f32 %v3434, %v3498
        %v3531 = vmul.f32 %v3435, %v3499
        %v3532 = vmul.f32 %v3436, %v3500
        %v3533 = vmul.f32 %v3437, %v3501
        %v3534 = vmul.f32 %v3438, %v3502
        %v3535 = vmul.f32 %v3439, %v3503
        %v3536 = vmul.f32 %v3440, %v3504
        %v3537 = vmul.f32 %v3441, %v3505
        %v3538 = vmul.f32 %v3442, %v3506
        %v3539 = vmul.f32 %v3443, %v3507
        %v3540 = vmul.f32 %v3444, %v3508
        %v3542 = vlaneseq
        %v3543 = vshrl.u32 %v3542, 7
        %v3544 = vsub.s32 0, %v3543
        %v3545 = vrot.slane %v3026, %v3544
        %v3547 = vmul.f32 %v3509, %v3545
        %v3548 = vmul.f32 %v3510, %v3545
        %v3549 = vmul.f32 %v3511, %v3545
        %v3550 = vmul.f32 %v3512, %v3545
        %v3551 = vmul.f32 %v3513, %v3545
        %v3552 = vmul.f32 %v3514, %v3545
        %v3553 = vmul.f32 %v3515, %v3545
        %v3554 = vmul.f32 %v3516, %v3545
        %v3555 = vmul.f32 %v3517, %v3545
        %v3556 = vmul.f32 %v3518, %v3545
        %v3557 = vmul.f32 %v3519, %v3545
        %v3558 = vmul.f32 %v3520, %v3545
        %v3559 = vmul.f32 %v3521, %v3545
        %v3560 = vmul.f32 %v3522, %v3545
        %v3561 = vmul.f32 %v3523, %v3545
        %v3562 = vmul.f32 %v3524, %v3545
        %v3563 = vmul.f32 %v3525, %v3545
        %v3564 = vmul.f32 %v3526, %v3545
        %v3565 = vmul.f32 %v3527, %v3545
        %v3566 = vmul.f32 %v3528, %v3545
        %v3567 = vmul.f32 %v3529, %v3545
        %v3568 = vmul.f32 %v3530, %v3545
        %v3569 = vmul.f32 %v3531, %v3545
        %v3570 = vmul.f32 %v3532, %v3545
        %v3571 = vmul.f32 %v3533, %v3545
        %v3572 = vmul.f32 %v3534, %v3545
        %v3573 = vmul.f32 %v3535, %v3545
        %v3574 = vmul.f32 %v3536, %v3545
        %v3575 = vmul.f32 %v3537, %v3545
        %v3576 = vmul.f32 %v3538, %v3545
        %v3577 = vmul.f32 %v3539, %v3545
        %v3578 = vmul.f32 %v3540, %v3545
        %v3580 = vlaneseq
        %v3581 = vshrl.u32 %v3580, 7
        %v3582 = vsub.s32 0, %v3581
        %v3583 = vrot.slane %v3027, %v3582
        %v3585 = vadd.f32 %v3547, %v3583
        %v3586 = vadd.f32 %v3548, %v3583
        %v3587 = vadd.f32 %v3549, %v3583
        %v3588 = vadd.f32 %v3550, %v3583
        %v3589 = vadd.f32 %v3551, %v3583
        %v3590 = vadd.f32 %v3552, %v3583
        %v3591 = vadd.f32 %v3553, %v3583
        %v3592 = vadd.f32 %v3554, %v3583
        %v3593 = vadd.f32 %v3555, %v3583
        %v3594 = vadd.f32 %v3556, %v3583
        %v3595 = vadd.f32 %v3557, %v3583
        %v3596 = vadd.f32 %v3558, %v3583
        %v3597 = vadd.f32 %v3559, %v3583
        %v3598 = vadd.f32 %v3560, %v3583
        %v3599 = vadd.f32 %v3561, %v3583
        %v3600 = vadd.f32 %v3562, %v3583
        %v3601 = vadd.f32 %v3563, %v3583
        %v3602 = vadd.f32 %v3564, %v3583
        %v3603 = vadd.f32 %v3565, %v3583
        %v3604 = vadd.f32 %v3566, %v3583
        %v3605 = vadd.f32 %v3567, %v3583
        %v3606 = vadd.f32 %v3568, %v3583
        %v3607 = vadd.f32 %v3569, %v3583
        %v3608 = vadd.f32 %v3570, %v3583
        %v3609 = vadd.f32 %v3571, %v3583
        %v3610 = vadd.f32 %v3572, %v3583
        %v3611 = vadd.f32 %v3573, %v3583
        %v3612 = vadd.f32 %v3574, %v3583
        %v3613 = vadd.f32 %v3575, %v3583
        %v3614 = vadd.f32 %v3576, %v3583
        %v3615 = vadd.f32 %v3577, %v3583
        %v3616 = vadd.f32 %v3578, %v3583
        %v3617 = vpack.c.bf16 %v3586, %v3585
        %v3618 = vpack.c.bf16 %v3588, %v3587
        %v3619 = vpack.c.bf16 %v3590, %v3589
        %v3620 = vpack.c.bf16 %v3592, %v3591
        %v3621 = vpack.c.bf16 %v3594, %v3593
        %v3622 = vpack.c.bf16 %v3596, %v3595
        %v3623 = vpack.c.bf16 %v3598, %v3597
        %v3624 = vpack.c.bf16 %v3600, %v3599
        %v3625 = vpack.c.bf16 %v3602, %v3601
        %v3626 = vpack.c.bf16 %v3604, %v3603
        %v3627 = vpack.c.bf16 %v3606, %v3605
        %v3628 = vpack.c.bf16 %v3608, %v3607
        %v3629 = vpack.c.bf16 %v3610, %v3609
        %v3630 = vpack.c.bf16 %v3612, %v3611
        %v3631 = vpack.c.bf16 %v3614, %v3613
        %v3632 = vpack.c.bf16 %v3616, %v3615
        %v3633 = vld [vmem:[%s9] sm:$0xf]
        %v3634 = vld [vmem:[%s9 + $0x4] sm:$0xf]
        %v3635 = vld [vmem:[%s9 + $0x8] sm:$0xf]
        %v3636 = vld [vmem:[%s9 + $0xc] sm:$0xf]
        %v3637 = vld [vmem:[%s10] sm:$0x1]
        %v3639 = vlaneseq
        %v3640 = vshrl.u32 %v3639, 7
        %v3641 = vsub.s32 0, %v3640
        %v3642 = vrot.slane %v3637, %v3641
        %v3648 = vunpack.c.l.b16 %v3633
        %v3649 = vunpack.c.l.b16 %v3634
        %v3650 = vunpack.c.l.b16 %v3635
        %v3651 = vunpack.c.l.b16 %v3636
        %v3652 = vpack.c.b16 %v3649, %v3648
        %v3653 = vpack.c.b16 %v3651, %v3650
        %v3657 = vsel %vm761, %v3617, 0
        %v3660 = vsel %vm761, %v3618, 0
        %v3663 = vsel %vm761, %v3619, 0
        %v3666 = vsel %vm761, %v3620, 0
        %v3669 = vsel %vm761, %v3621, 0
        %v3672 = vsel %vm761, %v3622, 0
        %v3675 = vsel %vm761, %v3623, 0
        %v3678 = vsel %vm761, %v3624, 0
        %v3681 = vsel %vm761, %v3625, 0
        %v3684 = vsel %vm761, %v3626, 0
        %v3687 = vsel %vm761, %v3627, 0
        %v3690 = vsel %vm761, %v3628, 0
        %v3693 = vsel %vm761, %v3629, 0
        %v3696 = vsel %vm761, %v3630, 0
        %v3699 = vsel %vm761, %v3631, 0
        %v3702 = vsel %vm761, %v3632, 0
        %3704 = vmatprep.subr.bf16.mxu0 0
        %3705 = vmatpush1.bf16.msra.mxu0 0
        %3706 = vmatprep.subr.bf16.mxu0 0
        %3707 = vmatpush1.bf16.msra.mxu0 0
        %3708 = vmatprep.subr.bf16.mxu0 0
        %3709 = vmatpush1.bf16.msra.mxu0 0
        %3710 = vmatprep.subr.bf16.mxu0 0
        %3711 = vmatpush1.bf16.msra.mxu0 0
        %3712 = vmatprep.subr.bf16.mxu0 0
        %3713 = vmatpush1.bf16.msra.mxu0 0
        %3714 = vmatprep.subr.bf16.mxu0 0
        %3715 = vmatpush1.bf16.msra.mxu0 0
        %3716 = vmatprep.subr.bf16.mxu0 0
        %3717 = vmatpush1.bf16.msra.mxu0 %v3653
        %3718 = vmatprep.subr.bf16.mxu0 0
        %3719 = vmatpush1.bf16.msra.mxu0 %v3652
        %3720 = vmatprep.subr.bf16.mxu0 0
        %3721 = vmatpush2.bf16.msra.mxu0 0
        %3722 = vmatprep.subr.bf16.mxu0 0
        %3723 = vmatpush2.bf16.msra.mxu0 0
        %3724 = vmatprep.subr.bf16.mxu0 0
        %3725 = vmatpush2.bf16.msra.mxu0 0
        %3726 = vmatprep.subr.bf16.mxu0 0
        %3727 = vmatpush2.bf16.msra.mxu0 0
        %3728 = vmatprep.subr.bf16.mxu0 0
        %3729 = vmatpush2.bf16.msra.mxu0 0
        %3730 = vmatprep.subr.bf16.mxu0 0
        %3731 = vmatpush2.bf16.msra.mxu0 0
        %3732 = vmatprep.subr.bf16.mxu0 0
        %3733 = vmatpush2.bf16.msra.mxu0 0
        %3734 = vmatprep.subr.bf16.mxu0 0
        %3735 = vmatpush2.bf16.msra.mxu0 0
        %3736 = vmatprep.mubr.bf16.mxu0 0
        %3737 = vmatmul.mubr.bf16.gmra.mxu0 %v3657
        %v3738 = vpop.f32.mrf.mxu0
        %v3739 = vadd.f32 %v3642, %v3738
        %v3740 = vpop.f32.mrf.mxu0
        %v3741 = vpop.f32.mrf.mxu0
        %v3742 = vadd.f32 %v3642, %v3741
        %v3743 = vpop.f32.mrf.mxu0
        %3744 = vmatprep.mubr.bf16.mxu0 0
        %3745 = vmatmul.mubr.bf16.gmra.mxu0 %v3660
        %v3746 = vpop.f32.mrf.mxu0
        %v3747 = vadd.f32 %v3642, %v3746
        %v3748 = vpop.f32.mrf.mxu0
        %v3749 = vpop.f32.mrf.mxu0
        %v3750 = vadd.f32 %v3642, %v3749
        %v3751 = vpop.f32.mrf.mxu0
        %3752 = vmatprep.mubr.bf16.mxu0 0
        %3753 = vmatmul.mubr.bf16.gmra.mxu0 %v3663
        %v3754 = vpop.f32.mrf.mxu0
        %v3755 = vadd.f32 %v3642, %v3754
        %v3756 = vpop.f32.mrf.mxu0
        %v3757 = vpop.f32.mrf.mxu0
        %v3758 = vadd.f32 %v3642, %v3757
        %v3759 = vpop.f32.mrf.mxu0
        %3760 = vmatprep.mubr.bf16.mxu0 0
        %3761 = vmatmul.mubr.bf16.gmra.mxu0 %v3666
        %v3762 = vpop.f32.mrf.mxu0
        %v3763 = vadd.f32 %v3642, %v3762
        %v3764 = vpop.f32.mrf.mxu0
        %v3765 = vpop.f32.mrf.mxu0
        %v3766 = vadd.f32 %v3642, %v3765
        %v3767 = vpop.f32.mrf.mxu0
        %3768 = vmatprep.mubr.bf16.mxu0 0
        %3769 = vmatmul.mubr.bf16.gmra.mxu0 %v3669
        %v3770 = vpop.f32.mrf.mxu0
        %v3771 = vadd.f32 %v3642, %v3770
        %v3772 = vpop.f32.mrf.mxu0
        %v3773 = vpop.f32.mrf.mxu0
        %v3774 = vadd.f32 %v3642, %v3773
        %v3775 = vpop.f32.mrf.mxu0
        %3776 = vmatprep.mubr.bf16.mxu0 0
        %3777 = vmatmul.mubr.bf16.gmra.mxu0 %v3672
        %v3778 = vpop.f32.mrf.mxu0
        %v3779 = vadd.f32 %v3642, %v3778
        %v3780 = vpop.f32.mrf.mxu0
        %v3781 = vpop.f32.mrf.mxu0
        %v3782 = vadd.f32 %v3642, %v3781
        %v3783 = vpop.f32.mrf.mxu0
        %3784 = vmatprep.mubr.bf16.mxu0 0
        %3785 = vmatmul.mubr.bf16.gmra.mxu0 %v3675
        %v3786 = vpop.f32.mrf.mxu0
        %v3787 = vadd.f32 %v3642, %v3786
        %v3788 = vpop.f32.mrf.mxu0
        %v3789 = vpop.f32.mrf.mxu0
        %v3790 = vadd.f32 %v3642, %v3789
        %v3791 = vpop.f32.mrf.mxu0
        %3792 = vmatprep.mubr.bf16.mxu0 0
        %3793 = vmatmul.mubr.bf16.gmra.mxu0 %v3678
        %v3794 = vpop.f32.mrf.mxu0
        %v3795 = vadd.f32 %v3642, %v3794
        %v3796 = vpop.f32.mrf.mxu0
        %v3797 = vpop.f32.mrf.mxu0
        %v3798 = vadd.f32 %v3642, %v3797
        %v3799 = vpop.f32.mrf.mxu0
        %3800 = vmatprep.mubr.bf16.mxu0 0
        %3801 = vmatmul.mubr.bf16.gmra.mxu0 %v3681
        %v3802 = vpop.f32.mrf.mxu0
        %v3803 = vadd.f32 %v3642, %v3802
        %v3804 = vpop.f32.mrf.mxu0
        %v3805 = vpop.f32.mrf.mxu0
        %v3806 = vadd.f32 %v3642, %v3805
        %v3807 = vpop.f32.mrf.mxu0
        %3808 = vmatprep.mubr.bf16.mxu0 0
        %3809 = vmatmul.mubr.bf16.gmra.mxu0 %v3684
        %v3810 = vpop.f32.mrf.mxu0
        %v3811 = vadd.f32 %v3642, %v3810
        %v3812 = vpop.f32.mrf.mxu0
        %v3813 = vpop.f32.mrf.mxu0
        %v3814 = vadd.f32 %v3642, %v3813
        %v3815 = vpop.f32.mrf.mxu0
        %3816 = vmatprep.mubr.bf16.mxu0 0
        %3817 = vmatmul.mubr.bf16.gmra.mxu0 %v3687
        %v3818 = vpop.f32.mrf.mxu0
        %v3819 = vadd.f32 %v3642, %v3818
        %v3820 = vpop.f32.mrf.mxu0
        %v3821 = vpop.f32.mrf.mxu0
        %v3822 = vadd.f32 %v3642, %v3821
        %v3823 = vpop.f32.mrf.mxu0
        %3824 = vmatprep.mubr.bf16.mxu0 0
        %3825 = vmatmul.mubr.bf16.gmra.mxu0 %v3690
        %v3826 = vpop.f32.mrf.mxu0
        %v3827 = vadd.f32 %v3642, %v3826
        %v3828 = vpop.f32.mrf.mxu0
        %v3829 = vpop.f32.mrf.mxu0
        %v3830 = vadd.f32 %v3642, %v3829
        %v3831 = vpop.f32.mrf.mxu0
        %3832 = vmatprep.mubr.bf16.mxu0 0
        %3833 = vmatmul.mubr.bf16.gmra.mxu0 %v3693
        %v3834 = vpop.f32.mrf.mxu0
        %v3835 = vadd.f32 %v3642, %v3834
        %v3836 = vpop.f32.mrf.mxu0
        %v3837 = vpop.f32.mrf.mxu0
        %v3838 = vadd.f32 %v3642, %v3837
        %v3839 = vpop.f32.mrf.mxu0
        %3840 = vmatprep.mubr.bf16.mxu0 0
        %3841 = vmatmul.mubr.bf16.gmra.mxu0 %v3696
        %v3842 = vpop.f32.mrf.mxu0
        %v3843 = vadd.f32 %v3642, %v3842
        %v3844 = vpop.f32.mrf.mxu0
        %v3845 = vpop.f32.mrf.mxu0
        %v3846 = vadd.f32 %v3642, %v3845
        %v3847 = vpop.f32.mrf.mxu0
        %3848 = vmatprep.mubr.bf16.mxu0 0
        %3849 = vmatmul.mubr.bf16.gmra.mxu0 %v3699
        %v3850 = vpop.f32.mrf.mxu0
        %v3851 = vadd.f32 %v3642, %v3850
        %v3852 = vpop.f32.mrf.mxu0
        %v3853 = vpop.f32.mrf.mxu0
        %v3854 = vadd.f32 %v3642, %v3853
        %v3855 = vpop.f32.mrf.mxu0
        %3856 = vmatprep.mubr.bf16.mxu0 0
        %3857 = vmatmul.mubr.bf16.gmra.mxu0 %v3702
        %v3858 = vpop.f32.mrf.mxu0
        %v3859 = vadd.f32 %v3642, %v3858
        %v3860 = vpop.f32.mrf.mxu0
        %v3861 = vpop.f32.mrf.mxu0
        %v3862 = vadd.f32 %v3642, %v3861
        %v3863 = vpop.f32.mrf.mxu0
        %3864 = vdwg.mxu0
        %v3865 = vmax.f32 %v3739, 0.0
        %v3866 = vmax.f32 %v3742, 0.0
        %v3867 = vmax.f32 %v3747, 0.0
        %v3868 = vmax.f32 %v3750, 0.0
        %v3869 = vmax.f32 %v3755, 0.0
        %v3870 = vmax.f32 %v3758, 0.0
        %v3871 = vmax.f32 %v3763, 0.0
        %v3872 = vmax.f32 %v3766, 0.0
        %v3873 = vmax.f32 %v3771, 0.0
        %v3874 = vmax.f32 %v3774, 0.0
        %v3875 = vmax.f32 %v3779, 0.0
        %v3876 = vmax.f32 %v3782, 0.0
        %v3877 = vmax.f32 %v3787, 0.0
        %v3878 = vmax.f32 %v3790, 0.0
        %v3879 = vmax.f32 %v3795, 0.0
        %v3880 = vmax.f32 %v3798, 0.0
        %v3881 = vmax.f32 %v3803, 0.0
        %v3882 = vmax.f32 %v3806, 0.0
        %v3883 = vmax.f32 %v3811, 0.0
        %v3884 = vmax.f32 %v3814, 0.0
        %v3885 = vmax.f32 %v3819, 0.0
        %v3886 = vmax.f32 %v3822, 0.0
        %v3887 = vmax.f32 %v3827, 0.0
        %v3888 = vmax.f32 %v3830, 0.0
        %v3889 = vmax.f32 %v3835, 0.0
        %v3890 = vmax.f32 %v3838, 0.0
        %v3891 = vmax.f32 %v3843, 0.0
        %v3892 = vmax.f32 %v3846, 0.0
        %v3893 = vmax.f32 %v3851, 0.0
        %v3894 = vmax.f32 %v3854, 0.0
        %v3895 = vmax.f32 %v3859, 0.0
        %v3896 = vmax.f32 %v3862, 0.0
        %v3897 = vpack.c.bf16 %v3866, %v3865
        %v3898 = vpack.c.bf16 %v3868, %v3867
        %v3899 = vpack.c.bf16 %v3870, %v3869
        %v3900 = vpack.c.bf16 %v3872, %v3871
        %v3901 = vpack.c.bf16 %v3874, %v3873
        %v3902 = vpack.c.bf16 %v3876, %v3875
        %v3903 = vpack.c.bf16 %v3878, %v3877
        %v3904 = vpack.c.bf16 %v3880, %v3879
        %v3905 = vpack.c.bf16 %v3882, %v3881
        %v3906 = vpack.c.bf16 %v3884, %v3883
        %v3907 = vpack.c.bf16 %v3886, %v3885
        %v3908 = vpack.c.bf16 %v3888, %v3887
        %v3909 = vpack.c.bf16 %v3890, %v3889
        %v3910 = vpack.c.bf16 %v3892, %v3891
        %v3911 = vpack.c.bf16 %v3894, %v3893
        %v3912 = vpack.c.bf16 %v3896, %v3895
        %v3913 = vld [vmem:[%s11] sm:$0xf]
        %v3914 = vld [vmem:[%s11 + $0x4] sm:$0xf]
        %v3915 = vld [vmem:[%s11 + $0x8] sm:$0xf]
        %v3916 = vld [vmem:[%s11 + $0xc] sm:$0xf]
        %v3917 = vld [vmem:[%s11 + $0x10] sm:$0xf]
        %v3918 = vld [vmem:[%s11 + $0x14] sm:$0xf]
        %v3919 = vld [vmem:[%s11 + $0x18] sm:$0xf]
        %v3920 = vld [vmem:[%s11 + $0x1c] sm:$0xf]
        %v3921 = vld [vmem:[%s11 + $0x20] sm:$0xf]
        %v3922 = vld [vmem:[%s11 + $0x24] sm:$0xf]
        %v3923 = vld [vmem:[%s11 + $0x28] sm:$0xf]
        %v3924 = vld [vmem:[%s11 + $0x2c] sm:$0xf]
        %v3925 = vld [vmem:[%s11 + $0x30] sm:$0xf]
        %v3926 = vld [vmem:[%s11 + $0x34] sm:$0xf]
        %v3927 = vld [vmem:[%s11 + $0x38] sm:$0xf]
        %v3928 = vld [vmem:[%s11 + $0x3c] sm:$0xf]
        %v3929 = vld [vmem:[%s12] sm:$0x1]
        %v3931 = vlaneseq
        %v3932 = vshrl.u32 %v3931, 7
        %v3933 = vsub.s32 0, %v3932
        %v3934 = vrot.slane %v3929, %v3933
        %v3952 = vunpack.c.l.b16 %v3913
        %v3953 = vunpack.c.l.b16 %v3914
        %v3954 = vunpack.c.l.b16 %v3915
        %v3955 = vunpack.c.l.b16 %v3916
        %v3956 = vunpack.c.l.b16 %v3917
        %v3957 = vunpack.c.l.b16 %v3918
        %v3958 = vunpack.c.l.b16 %v3919
        %v3959 = vunpack.c.l.b16 %v3920
        %v3960 = vunpack.c.l.b16 %v3921
        %v3961 = vunpack.c.l.b16 %v3922
        %v3962 = vunpack.c.l.b16 %v3923
        %v3963 = vunpack.c.l.b16 %v3924
        %v3964 = vunpack.c.l.b16 %v3925
        %v3965 = vunpack.c.l.b16 %v3926
        %v3966 = vunpack.c.l.b16 %v3927
        %v3967 = vunpack.c.l.b16 %v3928
        %v3968 = vpack.c.b16 %v3953, %v3952
        %v3969 = vpack.c.b16 %v3955, %v3954
        %v3970 = vpack.c.b16 %v3957, %v3956
        %v3971 = vpack.c.b16 %v3959, %v3958
        %v3972 = vpack.c.b16 %v3961, %v3960
        %v3973 = vpack.c.b16 %v3963, %v3962
        %v3974 = vpack.c.b16 %v3965, %v3964
        %v3975 = vpack.c.b16 %v3967, %v3966
        %3984 = vmatprep.subr.bf16.mxu0 0
        %3985 = vmatpush1.bf16.msra.mxu0 %v3975
        %3986 = vmatprep.subr.bf16.mxu0 0
        %3987 = vmatpush1.bf16.msra.mxu0 %v3974
        %3988 = vmatprep.subr.bf16.mxu0 0
        %3989 = vmatpush1.bf16.msra.mxu0 %v3973
        %3990 = vmatprep.subr.bf16.mxu0 0
        %3991 = vmatpush1.bf16.msra.mxu0 %v3972
        %3992 = vmatprep.subr.bf16.mxu0 0
        %3993 = vmatpush1.bf16.msra.mxu0 %v3971
        %3994 = vmatprep.subr.bf16.mxu0 0
        %3995 = vmatpush1.bf16.msra.mxu0 %v3970
        %3996 = vmatprep.subr.bf16.mxu0 0
        %3997 = vmatpush1.bf16.msra.mxu0 %v3969
        %3998 = vmatprep.subr.bf16.mxu0 0
        %3999 = vmatpush1.bf16.msra.mxu0 %v3968
        %4000 = vmatprep.subr.bf16.mxu0 0
        %4001 = vmatpush2.bf16.msra.mxu0 0
        %4002 = vmatprep.subr.bf16.mxu0 0
        %4003 = vmatpush2.bf16.msra.mxu0 0
        %4004 = vmatprep.subr.bf16.mxu0 0
        %4005 = vmatpush2.bf16.msra.mxu0 0
        %4006 = vmatprep.subr.bf16.mxu0 0
        %4007 = vmatpush2.bf16.msra.mxu0 0
        %4008 = vmatprep.subr.bf16.mxu0 0
        %4009 = vmatpush2.bf16.msra.mxu0 0
        %4010 = vmatprep.subr.bf16.mxu0 0
        %4011 = vmatpush2.bf16.msra.mxu0 0
        %4012 = vmatprep.subr.bf16.mxu0 0
        %4013 = vmatpush2.bf16.msra.mxu0 0
        %4014 = vmatprep.subr.bf16.mxu0 0
        %4015 = vmatpush2.bf16.msra.mxu0 0
        %4016 = vmatprep.mubr.bf16.mxu0 0
        %4017 = vmatmul.mubr.bf16.gmra.mxu0 %v3897
        %v4018 = vpop.f32.mrf.mxu0
        %v4019 = vadd.f32 %v3934, %v4018
        %v4020 = vpop.f32.mrf.mxu0
        %v4021 = vpop.f32.mrf.mxu0
        %v4022 = vadd.f32 %v3934, %v4021
        %v4023 = vpop.f32.mrf.mxu0
        %4024 = vmatprep.mubr.bf16.mxu0 0
        %4025 = vmatmul.mubr.bf16.gmra.mxu0 %v3898
        %v4026 = vpop.f32.mrf.mxu0
        %v4027 = vadd.f32 %v3934, %v4026
        %v4028 = vpop.f32.mrf.mxu0
        %v4029 = vpop.f32.mrf.mxu0
        %v4030 = vadd.f32 %v3934, %v4029
        %v4031 = vpop.f32.mrf.mxu0
        %4032 = vmatprep.mubr.bf16.mxu0 0
        %4033 = vmatmul.mubr.bf16.gmra.mxu0 %v3899
        %v4034 = vpop.f32.mrf.mxu0
        %v4035 = vadd.f32 %v3934, %v4034
        %v4036 = vpop.f32.mrf.mxu0
        %v4037 = vpop.f32.mrf.mxu0
        %v4038 = vadd.f32 %v3934, %v4037
        %v4039 = vpop.f32.mrf.mxu0
        %4040 = vmatprep.mubr.bf16.mxu0 0
        %4041 = vmatmul.mubr.bf16.gmra.mxu0 %v3900
        %v4042 = vpop.f32.mrf.mxu0
        %v4043 = vadd.f32 %v3934, %v4042
        %v4044 = vpop.f32.mrf.mxu0
        %v4045 = vpop.f32.mrf.mxu0
        %v4046 = vadd.f32 %v3934, %v4045
        %v4047 = vpop.f32.mrf.mxu0
        %4048 = vmatprep.mubr.bf16.mxu0 0
        %4049 = vmatmul.mubr.bf16.gmra.mxu0 %v3901
        %v4050 = vpop.f32.mrf.mxu0
        %v4051 = vadd.f32 %v3934, %v4050
        %v4052 = vpop.f32.mrf.mxu0
        %v4053 = vpop.f32.mrf.mxu0
        %v4054 = vadd.f32 %v3934, %v4053
        %v4055 = vpop.f32.mrf.mxu0
        %4056 = vmatprep.mubr.bf16.mxu0 0
        %4057 = vmatmul.mubr.bf16.gmra.mxu0 %v3902
        %v4058 = vpop.f32.mrf.mxu0
        %v4059 = vadd.f32 %v3934, %v4058
        %v4060 = vpop.f32.mrf.mxu0
        %v4061 = vpop.f32.mrf.mxu0
        %v4062 = vadd.f32 %v3934, %v4061
        %v4063 = vpop.f32.mrf.mxu0
        %4064 = vmatprep.mubr.bf16.mxu0 0
        %4065 = vmatmul.mubr.bf16.gmra.mxu0 %v3903
        %v4066 = vpop.f32.mrf.mxu0
        %v4067 = vadd.f32 %v3934, %v4066
        %v4068 = vpop.f32.mrf.mxu0
        %v4069 = vpop.f32.mrf.mxu0
        %v4070 = vadd.f32 %v3934, %v4069
        %v4071 = vpop.f32.mrf.mxu0
        %4072 = vmatprep.mubr.bf16.mxu0 0
        %4073 = vmatmul.mubr.bf16.gmra.mxu0 %v3904
        %v4074 = vpop.f32.mrf.mxu0
        %v4075 = vadd.f32 %v3934, %v4074
        %v4076 = vpop.f32.mrf.mxu0
        %v4077 = vpop.f32.mrf.mxu0
        %v4078 = vadd.f32 %v3934, %v4077
        %v4079 = vpop.f32.mrf.mxu0
        %4080 = vmatprep.mubr.bf16.mxu0 0
        %4081 = vmatmul.mubr.bf16.gmra.mxu0 %v3905
        %v4082 = vpop.f32.mrf.mxu0
        %v4083 = vadd.f32 %v3934, %v4082
        %v4084 = vpop.f32.mrf.mxu0
        %v4085 = vpop.f32.mrf.mxu0
        %v4086 = vadd.f32 %v3934, %v4085
        %v4087 = vpop.f32.mrf.mxu0
        %4088 = vmatprep.mubr.bf16.mxu0 0
        %4089 = vmatmul.mubr.bf16.gmra.mxu0 %v3906
        %v4090 = vpop.f32.mrf.mxu0
        %v4091 = vadd.f32 %v3934, %v4090
        %v4092 = vpop.f32.mrf.mxu0
        %v4093 = vpop.f32.mrf.mxu0
        %v4094 = vadd.f32 %v3934, %v4093
        %v4095 = vpop.f32.mrf.mxu0
        %4096 = vmatprep.mubr.bf16.mxu0 0
        %4097 = vmatmul.mubr.bf16.gmra.mxu0 %v3907
        %v4098 = vpop.f32.mrf.mxu0
        %v4099 = vadd.f32 %v3934, %v4098
        %v4100 = vpop.f32.mrf.mxu0
        %v4101 = vpop.f32.mrf.mxu0
        %v4102 = vadd.f32 %v3934, %v4101
        %v4103 = vpop.f32.mrf.mxu0
        %4104 = vmatprep.mubr.bf16.mxu0 0
        %4105 = vmatmul.mubr.bf16.gmra.mxu0 %v3908
        %v4106 = vpop.f32.mrf.mxu0
        %v4107 = vadd.f32 %v3934, %v4106
        %v4108 = vpop.f32.mrf.mxu0
        %v4109 = vpop.f32.mrf.mxu0
        %v4110 = vadd.f32 %v3934, %v4109
        %v4111 = vpop.f32.mrf.mxu0
        %4112 = vmatprep.mubr.bf16.mxu0 0
        %4113 = vmatmul.mubr.bf16.gmra.mxu0 %v3909
        %v4114 = vpop.f32.mrf.mxu0
        %v4115 = vadd.f32 %v3934, %v4114
        %v4116 = vpop.f32.mrf.mxu0
        %v4117 = vpop.f32.mrf.mxu0
        %v4118 = vadd.f32 %v3934, %v4117
        %v4119 = vpop.f32.mrf.mxu0
        %4120 = vmatprep.mubr.bf16.mxu0 0
        %4121 = vmatmul.mubr.bf16.gmra.mxu0 %v3910
        %v4122 = vpop.f32.mrf.mxu0
        %v4123 = vadd.f32 %v3934, %v4122
        %v4124 = vpop.f32.mrf.mxu0
        %v4125 = vpop.f32.mrf.mxu0
        %v4126 = vadd.f32 %v3934, %v4125
        %v4127 = vpop.f32.mrf.mxu0
        %4128 = vmatprep.mubr.bf16.mxu0 0
        %4129 = vmatmul.mubr.bf16.gmra.mxu0 %v3911
        %v4130 = vpop.f32.mrf.mxu0
        %v4131 = vadd.f32 %v3934, %v4130
        %v4132 = vpop.f32.mrf.mxu0
        %v4133 = vpop.f32.mrf.mxu0
        %v4134 = vadd.f32 %v3934, %v4133
        %v4135 = vpop.f32.mrf.mxu0
        %4136 = vmatprep.mubr.bf16.mxu0 0
        %4137 = vmatmul.mubr.bf16.gmra.mxu0 %v3912
        %v4138 = vpop.f32.mrf.mxu0
        %v4139 = vadd.f32 %v3934, %v4138
        %v4140 = vpop.f32.mrf.mxu0
        %v4141 = vpop.f32.mrf.mxu0
        %v4142 = vadd.f32 %v3934, %v4141
        %v4143 = vpop.f32.mrf.mxu0
        %4144 = vdwg.mxu0
        %v4145 = vadd.f32 %v3585, %v4019
        %v4146 = vadd.f32 %v3586, %v4022
        %v4147 = vadd.f32 %v3587, %v4027
        %v4148 = vadd.f32 %v3588, %v4030
        %v4149 = vadd.f32 %v3589, %v4035
        %v4150 = vadd.f32 %v3590, %v4038
        %v4151 = vadd.f32 %v3591, %v4043
        %v4152 = vadd.f32 %v3592, %v4046
        %v4153 = vadd.f32 %v3593, %v4051
        %v4154 = vadd.f32 %v3594, %v4054
        %v4155 = vadd.f32 %v3595, %v4059
        %v4156 = vadd.f32 %v3596, %v4062
        %v4157 = vadd.f32 %v3597, %v4067
        %v4158 = vadd.f32 %v3598, %v4070
        %v4159 = vadd.f32 %v3599, %v4075
        %v4160 = vadd.f32 %v3600, %v4078
        %v4161 = vadd.f32 %v3601, %v4083
        %v4162 = vadd.f32 %v3602, %v4086
        %v4163 = vadd.f32 %v3603, %v4091
        %v4164 = vadd.f32 %v3604, %v4094
        %v4165 = vadd.f32 %v3605, %v4099
        %v4166 = vadd.f32 %v3606, %v4102
        %v4167 = vadd.f32 %v3607, %v4107
        %v4168 = vadd.f32 %v3608, %v4110
        %v4169 = vadd.f32 %v3609, %v4115
        %v4170 = vadd.f32 %v3610, %v4118
        %v4171 = vadd.f32 %v3611, %v4123
        %v4172 = vadd.f32 %v3612, %v4126
        %v4173 = vadd.f32 %v3613, %v4131
        %v4174 = vadd.f32 %v3614, %v4134
        %v4175 = vadd.f32 %v3615, %v4139
        %v4176 = vadd.f32 %v3616, %v4142
        %v4177 = vld [vmem:[%s7] sm:$0x1]
        %v4178 = vld [vmem:[%s8] sm:$0x1]
        %v4179 = vsel %vm761, %v4145, 0.0
        %4180 = vadd.xlane.f32.xlu0 %v4179
        %v4181 = vpop.xlane.xlu0 %4180
        %v4182 = vsel %vm761, %v4146, 0.0
        %4183 = vadd.xlane.f32.xlu0 %v4182
        %v4184 = vpop.xlane.xlu0 %4183
        %v4185 = vsel %vm761, %v4147, 0.0
        %4186 = vadd.xlane.f32.xlu0 %v4185
        %v4187 = vpop.xlane.xlu0 %4186
        %v4188 = vsel %vm761, %v4148, 0.0
        %4189 = vadd.xlane.f32.xlu0 %v4188
        %v4190 = vpop.xlane.xlu0 %4189
        %v4191 = vsel %vm761, %v4149, 0.0
        %4192 = vadd.xlane.f32.xlu0 %v4191
        %v4193 = vpop.xlane.xlu0 %4192
        %v4194 = vsel %vm761, %v4150, 0.0
        %4195 = vadd.xlane.f32.xlu0 %v4194
        %v4196 = vpop.xlane.xlu0 %4195
        %v4197 = vsel %vm761, %v4151, 0.0
        %4198 = vadd.xlane.f32.xlu0 %v4197
        %v4199 = vpop.xlane.xlu0 %4198
        %v4200 = vsel %vm761, %v4152, 0.0
        %4201 = vadd.xlane.f32.xlu0 %v4200
        %v4202 = vpop.xlane.xlu0 %4201
        %v4203 = vsel %vm761, %v4153, 0.0
        %4204 = vadd.xlane.f32.xlu0 %v4203
        %v4205 = vpop.xlane.xlu0 %4204
        %v4206 = vsel %vm761, %v4154, 0.0
        %4207 = vadd.xlane.f32.xlu0 %v4206
        %v4208 = vpop.xlane.xlu0 %4207
        %v4209 = vsel %vm761, %v4155, 0.0
        %4210 = vadd.xlane.f32.xlu0 %v4209
        %v4211 = vpop.xlane.xlu0 %4210
        %v4212 = vsel %vm761, %v4156, 0.0
        %4213 = vadd.xlane.f32.xlu0 %v4212
        %v4214 = vpop.xlane.xlu0 %4213
        %v4215 = vsel %vm761, %v4157, 0.0
        %4216 = vadd.xlane.f32.xlu0 %v4215
        %v4217 = vpop.xlane.xlu0 %4216
        %v4218 = vsel %vm761, %v4158, 0.0
        %4219 = vadd.xlane.f32.xlu0 %v4218
        %v4220 = vpop.xlane.xlu0 %4219
        %v4221 = vsel %vm761, %v4159, 0.0
        %4222 = vadd.xlane.f32.xlu0 %v4221
        %v4223 = vpop.xlane.xlu0 %4222
        %v4224 = vsel %vm761, %v4160, 0.0
        %4225 = vadd.xlane.f32.xlu0 %v4224
        %v4226 = vpop.xlane.xlu0 %4225
        %v4227 = vsel %vm761, %v4161, 0.0
        %4228 = vadd.xlane.f32.xlu0 %v4227
        %v4229 = vpop.xlane.xlu0 %4228
        %v4230 = vsel %vm761, %v4162, 0.0
        %4231 = vadd.xlane.f32.xlu0 %v4230
        %v4232 = vpop.xlane.xlu0 %4231
        %v4233 = vsel %vm761, %v4163, 0.0
        %4234 = vadd.xlane.f32.xlu0 %v4233
        %v4235 = vpop.xlane.xlu0 %4234
        %v4236 = vsel %vm761, %v4164, 0.0
        %4237 = vadd.xlane.f32.xlu0 %v4236
        %v4238 = vpop.xlane.xlu0 %4237
        %v4239 = vsel %vm761, %v4165, 0.0
        %4240 = vadd.xlane.f32.xlu0 %v4239
        %v4241 = vpop.xlane.xlu0 %4240
        %v4242 = vsel %vm761, %v4166, 0.0
        %4243 = vadd.xlane.f32.xlu0 %v4242
        %v4244 = vpop.xlane.xlu0 %4243
        %v4245 = vsel %vm761, %v4167, 0.0
        %4246 = vadd.xlane.f32.xlu0 %v4245
        %v4247 = vpop.xlane.xlu0 %4246
        %v4248 = vsel %vm761, %v4168, 0.0
        %4249 = vadd.xlane.f32.xlu0 %v4248
        %v4250 = vpop.xlane.xlu0 %4249
        %v4251 = vsel %vm761, %v4169, 0.0
        %4252 = vadd.xlane.f32.xlu0 %v4251
        %v4253 = vpop.xlane.xlu0 %4252
        %v4254 = vsel %vm761, %v4170, 0.0
        %4255 = vadd.xlane.f32.xlu0 %v4254
        %v4256 = vpop.xlane.xlu0 %4255
        %v4257 = vsel %vm761, %v4171, 0.0
        %4258 = vadd.xlane.f32.xlu0 %v4257
        %v4259 = vpop.xlane.xlu0 %4258
        %v4260 = vsel %vm761, %v4172, 0.0
        %4261 = vadd.xlane.f32.xlu0 %v4260
        %v4262 = vpop.xlane.xlu0 %4261
        %v4263 = vsel %vm761, %v4173, 0.0
        %4264 = vadd.xlane.f32.xlu0 %v4263
        %v4265 = vpop.xlane.xlu0 %4264
        %v4266 = vsel %vm761, %v4174, 0.0
        %4267 = vadd.xlane.f32.xlu0 %v4266
        %v4268 = vpop.xlane.xlu0 %4267
        %v4269 = vsel %vm761, %v4175, 0.0
        %4270 = vadd.xlane.f32.xlu0 %v4269
        %v4271 = vpop.xlane.xlu0 %4270
        %v4272 = vsel %vm761, %v4176, 0.0
        %4273 = vadd.xlane.f32.xlu0 %v4272
        %v4274 = vpop.xlane.xlu0 %4273
        %v4275 = vmul.f32 %v4181, %v3124
        %v4276 = vmul.f32 %v4184, %v3124
        %v4277 = vmul.f32 %v4187, %v3124
        %v4278 = vmul.f32 %v4190, %v3124
        %v4279 = vmul.f32 %v4193, %v3124
        %v4280 = vmul.f32 %v4196, %v3124
        %v4281 = vmul.f32 %v4199, %v3124
        %v4282 = vmul.f32 %v4202, %v3124
        %v4283 = vmul.f32 %v4205, %v3124
        %v4284 = vmul.f32 %v4208, %v3124
        %v4285 = vmul.f32 %v4211, %v3124
        %v4286 = vmul.f32 %v4214, %v3124
        %v4287 = vmul.f32 %v4217, %v3124
        %v4288 = vmul.f32 %v4220, %v3124
        %v4289 = vmul.f32 %v4223, %v3124
        %v4290 = vmul.f32 %v4226, %v3124
        %v4291 = vmul.f32 %v4229, %v3124
        %v4292 = vmul.f32 %v4232, %v3124
        %v4293 = vmul.f32 %v4235, %v3124
        %v4294 = vmul.f32 %v4238, %v3124
        %v4295 = vmul.f32 %v4241, %v3124
        %v4296 = vmul.f32 %v4244, %v3124
        %v4297 = vmul.f32 %v4247, %v3124
        %v4298 = vmul.f32 %v4250, %v3124
        %v4299 = vmul.f32 %v4253, %v3124
        %v4300 = vmul.f32 %v4256, %v3124
        %v4301 = vmul.f32 %v4259, %v3124
        %v4302 = vmul.f32 %v4262, %v3124
        %v4303 = vmul.f32 %v4265, %v3124
        %v4304 = vmul.f32 %v4268, %v3124
        %v4305 = vmul.f32 %v4271, %v3124
        %v4306 = vmul.f32 %v4274, %v3124
        %v4307 = vmul.f32 %v4145, %v4145
        %v4308 = vmul.f32 %v4146, %v4146
        %v4309 = vmul.f32 %v4147, %v4147
        %v4310 = vmul.f32 %v4148, %v4148
        %v4311 = vmul.f32 %v4149, %v4149
        %v4312 = vmul.f32 %v4150, %v4150
        %v4313 = vmul.f32 %v4151, %v4151
        %v4314 = vmul.f32 %v4152, %v4152
        %v4315 = vmul.f32 %v4153, %v4153
        %v4316 = vmul.f32 %v4154, %v4154
        %v4317 = vmul.f32 %v4155, %v4155
        %v4318 = vmul.f32 %v4156, %v4156
        %v4319 = vmul.f32 %v4157, %v4157
        %v4320 = vmul.f32 %v4158, %v4158
        %v4321 = vmul.f32 %v4159, %v4159
        %v4322 = vmul.f32 %v4160, %v4160
        %v4323 = vmul.f32 %v4161, %v4161
        %v4324 = vmul.f32 %v4162, %v4162
        %v4325 = vmul.f32 %v4163, %v4163
        %v4326 = vmul.f32 %v4164, %v4164
        %v4327 = vmul.f32 %v4165, %v4165
        %v4328 = vmul.f32 %v4166, %v4166
        %v4329 = vmul.f32 %v4167, %v4167
        %v4330 = vmul.f32 %v4168, %v4168
        %v4331 = vmul.f32 %v4169, %v4169
        %v4332 = vmul.f32 %v4170, %v4170
        %v4333 = vmul.f32 %v4171, %v4171
        %v4334 = vmul.f32 %v4172, %v4172
        %v4335 = vmul.f32 %v4173, %v4173
        %v4336 = vmul.f32 %v4174, %v4174
        %v4337 = vmul.f32 %v4175, %v4175
        %v4338 = vmul.f32 %v4176, %v4176
        %v4339 = vsel %vm761, %v4307, 0.0
        %4340 = vadd.xlane.f32.xlu0 %v4339
        %v4341 = vpop.xlane.xlu0 %4340
        %v4342 = vsel %vm761, %v4308, 0.0
        %4343 = vadd.xlane.f32.xlu0 %v4342
        %v4344 = vpop.xlane.xlu0 %4343
        %v4345 = vsel %vm761, %v4309, 0.0
        %4346 = vadd.xlane.f32.xlu0 %v4345
        %v4347 = vpop.xlane.xlu0 %4346
        %v4348 = vsel %vm761, %v4310, 0.0
        %4349 = vadd.xlane.f32.xlu0 %v4348
        %v4350 = vpop.xlane.xlu0 %4349
        %v4351 = vsel %vm761, %v4311, 0.0
        %4352 = vadd.xlane.f32.xlu0 %v4351
        %v4353 = vpop.xlane.xlu0 %4352
        %v4354 = vsel %vm761, %v4312, 0.0
        %4355 = vadd.xlane.f32.xlu0 %v4354
        %v4356 = vpop.xlane.xlu0 %4355
        %v4357 = vsel %vm761, %v4313, 0.0
        %4358 = vadd.xlane.f32.xlu0 %v4357
        %v4359 = vpop.xlane.xlu0 %4358
        %v4360 = vsel %vm761, %v4314, 0.0
        %4361 = vadd.xlane.f32.xlu0 %v4360
        %v4362 = vpop.xlane.xlu0 %4361
        %v4363 = vsel %vm761, %v4315, 0.0
        %4364 = vadd.xlane.f32.xlu0 %v4363
        %v4365 = vpop.xlane.xlu0 %4364
        %v4366 = vsel %vm761, %v4316, 0.0
        %4367 = vadd.xlane.f32.xlu0 %v4366
        %v4368 = vpop.xlane.xlu0 %4367
        %v4369 = vsel %vm761, %v4317, 0.0
        %4370 = vadd.xlane.f32.xlu0 %v4369
        %v4371 = vpop.xlane.xlu0 %4370
        %v4372 = vsel %vm761, %v4318, 0.0
        %4373 = vadd.xlane.f32.xlu0 %v4372
        %v4374 = vpop.xlane.xlu0 %4373
        %v4375 = vsel %vm761, %v4319, 0.0
        %4376 = vadd.xlane.f32.xlu0 %v4375
        %v4377 = vpop.xlane.xlu0 %4376
        %v4378 = vsel %vm761, %v4320, 0.0
        %4379 = vadd.xlane.f32.xlu0 %v4378
        %v4380 = vpop.xlane.xlu0 %4379
        %v4381 = vsel %vm761, %v4321, 0.0
        %4382 = vadd.xlane.f32.xlu0 %v4381
        %v4383 = vpop.xlane.xlu0 %4382
        %v4384 = vsel %vm761, %v4322, 0.0
        %4385 = vadd.xlane.f32.xlu0 %v4384
        %v4386 = vpop.xlane.xlu0 %4385
        %v4387 = vsel %vm761, %v4323, 0.0
        %4388 = vadd.xlane.f32.xlu0 %v4387
        %v4389 = vpop.xlane.xlu0 %4388
        %v4390 = vsel %vm761, %v4324, 0.0
        %4391 = vadd.xlane.f32.xlu0 %v4390
        %v4392 = vpop.xlane.xlu0 %4391
        %v4393 = vsel %vm761, %v4325, 0.0
        %4394 = vadd.xlane.f32.xlu0 %v4393
        %v4395 = vpop.xlane.xlu0 %4394
        %v4396 = vsel %vm761, %v4326, 0.0
        %4397 = vadd.xlane.f32.xlu0 %v4396
        %v4398 = vpop.xlane.xlu0 %4397
        %v4399 = vsel %vm761, %v4327, 0.0
        %4400 = vadd.xlane.f32.xlu0 %v4399
        %v4401 = vpop.xlane.xlu0 %4400
        %v4402 = vsel %vm761, %v4328, 0.0
        %4403 = vadd.xlane.f32.xlu0 %v4402
        %v4404 = vpop.xlane.xlu0 %4403
        %v4405 = vsel %vm761, %v4329, 0.0
        %4406 = vadd.xlane.f32.xlu0 %v4405
        %v4407 = vpop.xlane.xlu0 %4406
        %v4408 = vsel %vm761, %v4330, 0.0
        %4409 = vadd.xlane.f32.xlu0 %v4408
        %v4410 = vpop.xlane.xlu0 %4409
        %v4411 = vsel %vm761, %v4331, 0.0
        %4412 = vadd.xlane.f32.xlu0 %v4411
        %v4413 = vpop.xlane.xlu0 %4412
        %v4414 = vsel %vm761, %v4332, 0.0
        %4415 = vadd.xlane.f32.xlu0 %v4414
        %v4416 = vpop.xlane.xlu0 %4415
        %v4417 = vsel %vm761, %v4333, 0.0
        %4418 = vadd.xlane.f32.xlu0 %v4417
        %v4419 = vpop.xlane.xlu0 %4418
        %v4420 = vsel %vm761, %v4334, 0.0
        %4421 = vadd.xlane.f32.xlu0 %v4420
        %v4422 = vpop.xlane.xlu0 %4421
        %v4423 = vsel %vm761, %v4335, 0.0
        %4424 = vadd.xlane.f32.xlu0 %v4423
        %v4425 = vpop.xlane.xlu0 %4424
        %v4426 = vsel %vm761, %v4336, 0.0
        %4427 = vadd.xlane.f32.xlu0 %v4426
        %v4428 = vpop.xlane.xlu0 %4427
        %v4429 = vsel %vm761, %v4337, 0.0
        %4430 = vadd.xlane.f32.xlu0 %v4429
        %v4431 = vpop.xlane.xlu0 %4430
        %v4432 = vsel %vm761, %v4338, 0.0
        %4433 = vadd.xlane.f32.xlu0 %v4432
        %v4434 = vpop.xlane.xlu0 %4433
        %v4435 = vmul.f32 %v4341, %v3124
        %v4436 = vmul.f32 %v4344, %v3124
        %v4437 = vmul.f32 %v4347, %v3124
        %v4438 = vmul.f32 %v4350, %v3124
        %v4439 = vmul.f32 %v4353, %v3124
        %v4440 = vmul.f32 %v4356, %v3124
        %v4441 = vmul.f32 %v4359, %v3124
        %v4442 = vmul.f32 %v4362, %v3124
        %v4443 = vmul.f32 %v4365, %v3124
        %v4444 = vmul.f32 %v4368, %v3124
        %v4445 = vmul.f32 %v4371, %v3124
        %v4446 = vmul.f32 %v4374, %v3124
        %v4447 = vmul.f32 %v4377, %v3124
        %v4448 = vmul.f32 %v4380, %v3124
        %v4449 = vmul.f32 %v4383, %v3124
        %v4450 = vmul.f32 %v4386, %v3124
        %v4451 = vmul.f32 %v4389, %v3124
        %v4452 = vmul.f32 %v4392, %v3124
        %v4453 = vmul.f32 %v4395, %v3124
        %v4454 = vmul.f32 %v4398, %v3124
        %v4455 = vmul.f32 %v4401, %v3124
        %v4456 = vmul.f32 %v4404, %v3124
        %v4457 = vmul.f32 %v4407, %v3124
        %v4458 = vmul.f32 %v4410, %v3124
        %v4459 = vmul.f32 %v4413, %v3124
        %v4460 = vmul.f32 %v4416, %v3124
        %v4461 = vmul.f32 %v4419, %v3124
        %v4462 = vmul.f32 %v4422, %v3124
        %v4463 = vmul.f32 %v4425, %v3124
        %v4464 = vmul.f32 %v4428, %v3124
        %v4465 = vmul.f32 %v4431, %v3124
        %v4466 = vmul.f32 %v4434, %v3124
        %v4467 = vmul.f32 %v4275, %v4275
        %v4468 = vmul.f32 %v4276, %v4276
        %v4469 = vmul.f32 %v4277, %v4277
        %v4470 = vmul.f32 %v4278, %v4278
        %v4471 = vmul.f32 %v4279, %v4279
        %v4472 = vmul.f32 %v4280, %v4280
        %v4473 = vmul.f32 %v4281, %v4281
        %v4474 = vmul.f32 %v4282, %v4282
        %v4475 = vmul.f32 %v4283, %v4283
        %v4476 = vmul.f32 %v4284, %v4284
        %v4477 = vmul.f32 %v4285, %v4285
        %v4478 = vmul.f32 %v4286, %v4286
        %v4479 = vmul.f32 %v4287, %v4287
        %v4480 = vmul.f32 %v4288, %v4288
        %v4481 = vmul.f32 %v4289, %v4289
        %v4482 = vmul.f32 %v4290, %v4290
        %v4483 = vmul.f32 %v4291, %v4291
        %v4484 = vmul.f32 %v4292, %v4292
        %v4485 = vmul.f32 %v4293, %v4293
        %v4486 = vmul.f32 %v4294, %v4294
        %v4487 = vmul.f32 %v4295, %v4295
        %v4488 = vmul.f32 %v4296, %v4296
        %v4489 = vmul.f32 %v4297, %v4297
        %v4490 = vmul.f32 %v4298, %v4298
        %v4491 = vmul.f32 %v4299, %v4299
        %v4492 = vmul.f32 %v4300, %v4300
        %v4493 = vmul.f32 %v4301, %v4301
        %v4494 = vmul.f32 %v4302, %v4302
        %v4495 = vmul.f32 %v4303, %v4303
        %v4496 = vmul.f32 %v4304, %v4304
        %v4497 = vmul.f32 %v4305, %v4305
        %v4498 = vmul.f32 %v4306, %v4306
        %v4499 = vsub.f32 %v4435, %v4467
        %v4500 = vsub.f32 %v4436, %v4468
        %v4501 = vsub.f32 %v4437, %v4469
        %v4502 = vsub.f32 %v4438, %v4470
        %v4503 = vsub.f32 %v4439, %v4471
        %v4504 = vsub.f32 %v4440, %v4472
        %v4505 = vsub.f32 %v4441, %v4473
        %v4506 = vsub.f32 %v4442, %v4474
        %v4507 = vsub.f32 %v4443, %v4475
        %v4508 = vsub.f32 %v4444, %v4476
        %v4509 = vsub.f32 %v4445, %v4477
        %v4510 = vsub.f32 %v4446, %v4478
        %v4511 = vsub.f32 %v4447, %v4479
        %v4512 = vsub.f32 %v4448, %v4480
        %v4513 = vsub.f32 %v4449, %v4481
        %v4514 = vsub.f32 %v4450, %v4482
        %v4515 = vsub.f32 %v4451, %v4483
        %v4516 = vsub.f32 %v4452, %v4484
        %v4517 = vsub.f32 %v4453, %v4485
        %v4518 = vsub.f32 %v4454, %v4486
        %v4519 = vsub.f32 %v4455, %v4487
        %v4520 = vsub.f32 %v4456, %v4488
        %v4521 = vsub.f32 %v4457, %v4489
        %v4522 = vsub.f32 %v4458, %v4490
        %v4523 = vsub.f32 %v4459, %v4491
        %v4524 = vsub.f32 %v4460, %v4492
        %v4525 = vsub.f32 %v4461, %v4493
        %v4526 = vsub.f32 %v4462, %v4494
        %v4527 = vsub.f32 %v4463, %v4495
        %v4528 = vsub.f32 %v4464, %v4496
        %v4529 = vsub.f32 %v4465, %v4497
        %v4530 = vsub.f32 %v4466, %v4498
        %v4531 = vmax.f32 %v4499, 0.0
        %v4532 = vmax.f32 %v4500, 0.0
        %v4533 = vmax.f32 %v4501, 0.0
        %v4534 = vmax.f32 %v4502, 0.0
        %v4535 = vmax.f32 %v4503, 0.0
        %v4536 = vmax.f32 %v4504, 0.0
        %v4537 = vmax.f32 %v4505, 0.0
        %v4538 = vmax.f32 %v4506, 0.0
        %v4539 = vmax.f32 %v4507, 0.0
        %v4540 = vmax.f32 %v4508, 0.0
        %v4541 = vmax.f32 %v4509, 0.0
        %v4542 = vmax.f32 %v4510, 0.0
        %v4543 = vmax.f32 %v4511, 0.0
        %v4544 = vmax.f32 %v4512, 0.0
        %v4545 = vmax.f32 %v4513, 0.0
        %v4546 = vmax.f32 %v4514, 0.0
        %v4547 = vmax.f32 %v4515, 0.0
        %v4548 = vmax.f32 %v4516, 0.0
        %v4549 = vmax.f32 %v4517, 0.0
        %v4550 = vmax.f32 %v4518, 0.0
        %v4551 = vmax.f32 %v4519, 0.0
        %v4552 = vmax.f32 %v4520, 0.0
        %v4553 = vmax.f32 %v4521, 0.0
        %v4554 = vmax.f32 %v4522, 0.0
        %v4555 = vmax.f32 %v4523, 0.0
        %v4556 = vmax.f32 %v4524, 0.0
        %v4557 = vmax.f32 %v4525, 0.0
        %v4558 = vmax.f32 %v4526, 0.0
        %v4559 = vmax.f32 %v4527, 0.0
        %v4560 = vmax.f32 %v4528, 0.0
        %v4561 = vmax.f32 %v4529, 0.0
        %v4562 = vmax.f32 %v4530, 0.0
        %v4563 = vsub.f32 %v4145, %v4275
        %v4564 = vsub.f32 %v4146, %v4276
        %v4565 = vsub.f32 %v4147, %v4277
        %v4566 = vsub.f32 %v4148, %v4278
        %v4567 = vsub.f32 %v4149, %v4279
        %v4568 = vsub.f32 %v4150, %v4280
        %v4569 = vsub.f32 %v4151, %v4281
        %v4570 = vsub.f32 %v4152, %v4282
        %v4571 = vsub.f32 %v4153, %v4283
        %v4572 = vsub.f32 %v4154, %v4284
        %v4573 = vsub.f32 %v4155, %v4285
        %v4574 = vsub.f32 %v4156, %v4286
        %v4575 = vsub.f32 %v4157, %v4287
        %v4576 = vsub.f32 %v4158, %v4288
        %v4577 = vsub.f32 %v4159, %v4289
        %v4578 = vsub.f32 %v4160, %v4290
        %v4579 = vsub.f32 %v4161, %v4291
        %v4580 = vsub.f32 %v4162, %v4292
        %v4581 = vsub.f32 %v4163, %v4293
        %v4582 = vsub.f32 %v4164, %v4294
        %v4583 = vsub.f32 %v4165, %v4295
        %v4584 = vsub.f32 %v4166, %v4296
        %v4585 = vsub.f32 %v4167, %v4297
        %v4586 = vsub.f32 %v4168, %v4298
        %v4587 = vsub.f32 %v4169, %v4299
        %v4588 = vsub.f32 %v4170, %v4300
        %v4589 = vsub.f32 %v4171, %v4301
        %v4590 = vsub.f32 %v4172, %v4302
        %v4591 = vsub.f32 %v4173, %v4303
        %v4592 = vsub.f32 %v4174, %v4304
        %v4593 = vsub.f32 %v4175, %v4305
        %v4594 = vsub.f32 %v4176, %v4306
        %v4595 = vadd.f32 %v4531, 1e-05
        %v4596 = vadd.f32 %v4532, 1e-05
        %v4597 = vadd.f32 %v4533, 1e-05
        %v4598 = vadd.f32 %v4534, 1e-05
        %v4599 = vadd.f32 %v4535, 1e-05
        %v4600 = vadd.f32 %v4536, 1e-05
        %v4601 = vadd.f32 %v4537, 1e-05
        %v4602 = vadd.f32 %v4538, 1e-05
        %v4603 = vadd.f32 %v4539, 1e-05
        %v4604 = vadd.f32 %v4540, 1e-05
        %v4605 = vadd.f32 %v4541, 1e-05
        %v4606 = vadd.f32 %v4542, 1e-05
        %v4607 = vadd.f32 %v4543, 1e-05
        %v4608 = vadd.f32 %v4544, 1e-05
        %v4609 = vadd.f32 %v4545, 1e-05
        %v4610 = vadd.f32 %v4546, 1e-05
        %v4611 = vadd.f32 %v4547, 1e-05
        %v4612 = vadd.f32 %v4548, 1e-05
        %v4613 = vadd.f32 %v4549, 1e-05
        %v4614 = vadd.f32 %v4550, 1e-05
        %v4615 = vadd.f32 %v4551, 1e-05
        %v4616 = vadd.f32 %v4552, 1e-05
        %v4617 = vadd.f32 %v4553, 1e-05
        %v4618 = vadd.f32 %v4554, 1e-05
        %v4619 = vadd.f32 %v4555, 1e-05
        %v4620 = vadd.f32 %v4556, 1e-05
        %v4621 = vadd.f32 %v4557, 1e-05
        %v4622 = vadd.f32 %v4558, 1e-05
        %v4623 = vadd.f32 %v4559, 1e-05
        %v4624 = vadd.f32 %v4560, 1e-05
        %v4625 = vadd.f32 %v4561, 1e-05
        %v4626 = vadd.f32 %v4562, 1e-05
        %v4627 = vrsqrt.pop %v4595
        %v4628 = vrsqrt.pop %v4596
        %v4629 = vrsqrt.pop %v4597
        %v4630 = vrsqrt.pop %v4598
        %v4631 = vrsqrt.pop %v4599
        %v4632 = vrsqrt.pop %v4600
        %v4633 = vrsqrt.pop %v4601
        %v4634 = vrsqrt.pop %v4602
        %v4635 = vrsqrt.pop %v4603
        %v4636 = vrsqrt.pop %v4604
        %v4637 = vrsqrt.pop %v4605
        %v4638 = vrsqrt.pop %v4606
        %v4639 = vrsqrt.pop %v4607
        %v4640 = vrsqrt.pop %v4608
        %v4641 = vrsqrt.pop %v4609
        %v4642 = vrsqrt.pop %v4610
        %v4643 = vrsqrt.pop %v4611
        %v4644 = vrsqrt.pop %v4612
        %v4645 = vrsqrt.pop %v4613
        %v4646 = vrsqrt.pop %v4614
        %v4647 = vrsqrt.pop %v4615
        %v4648 = vrsqrt.pop %v4616
        %v4649 = vrsqrt.pop %v4617
        %v4650 = vrsqrt.pop %v4618
        %v4651 = vrsqrt.pop %v4619
        %v4652 = vrsqrt.pop %v4620
        %v4653 = vrsqrt.pop %v4621
        %v4654 = vrsqrt.pop %v4622
        %v4655 = vrsqrt.pop %v4623
        %v4656 = vrsqrt.pop %v4624
        %v4657 = vrsqrt.pop %v4625
        %v4658 = vrsqrt.pop %v4626
        %v4659 = vmul.f32 %v4563, %v4627
        %v4660 = vmul.f32 %v4564, %v4628
        %v4661 = vmul.f32 %v4565, %v4629
        %v4662 = vmul.f32 %v4566, %v4630
        %v4663 = vmul.f32 %v4567, %v4631
        %v4664 = vmul.f32 %v4568, %v4632
        %v4665 = vmul.f32 %v4569, %v4633
        %v4666 = vmul.f32 %v4570, %v4634
        %v4667 = vmul.f32 %v4571, %v4635
        %v4668 = vmul.f32 %v4572, %v4636
        %v4669 = vmul.f32 %v4573, %v4637
        %v4670 = vmul.f32 %v4574, %v4638
        %v4671 = vmul.f32 %v4575, %v4639
        %v4672 = vmul.f32 %v4576, %v4640
        %v4673 = vmul.f32 %v4577, %v4641
        %v4674 = vmul.f32 %v4578, %v4642
        %v4675 = vmul.f32 %v4579, %v4643
        %v4676 = vmul.f32 %v4580, %v4644
        %v4677 = vmul.f32 %v4581, %v4645
        %v4678 = vmul.f32 %v4582, %v4646
        %v4679 = vmul.f32 %v4583, %v4647
        %v4680 = vmul.f32 %v4584, %v4648
        %v4681 = vmul.f32 %v4585, %v4649
        %v4682 = vmul.f32 %v4586, %v4650
        %v4683 = vmul.f32 %v4587, %v4651
        %v4684 = vmul.f32 %v4588, %v4652
        %v4685 = vmul.f32 %v4589, %v4653
        %v4686 = vmul.f32 %v4590, %v4654
        %v4687 = vmul.f32 %v4591, %v4655
        %v4688 = vmul.f32 %v4592, %v4656
        %v4689 = vmul.f32 %v4593, %v4657
        %v4690 = vmul.f32 %v4594, %v4658
        %v4692 = vlaneseq
        %v4693 = vshrl.u32 %v4692, 7
        %v4694 = vsub.s32 0, %v4693
        %v4695 = vrot.slane %v4177, %v4694
        %v4697 = vmul.f32 %v4659, %v4695
        %v4698 = vmul.f32 %v4660, %v4695
        %v4699 = vmul.f32 %v4661, %v4695
        %v4700 = vmul.f32 %v4662, %v4695
        %v4701 = vmul.f32 %v4663, %v4695
        %v4702 = vmul.f32 %v4664, %v4695
        %v4703 = vmul.f32 %v4665, %v4695
        %v4704 = vmul.f32 %v4666, %v4695
        %v4705 = vmul.f32 %v4667, %v4695
        %v4706 = vmul.f32 %v4668, %v4695
        %v4707 = vmul.f32 %v4669, %v4695
        %v4708 = vmul.f32 %v4670, %v4695
        %v4709 = vmul.f32 %v4671, %v4695
        %v4710 = vmul.f32 %v4672, %v4695
        %v4711 = vmul.f32 %v4673, %v4695
        %v4712 = vmul.f32 %v4674, %v4695
        %v4713 = vmul.f32 %v4675, %v4695
        %v4714 = vmul.f32 %v4676, %v4695
        %v4715 = vmul.f32 %v4677, %v4695
        %v4716 = vmul.f32 %v4678, %v4695
        %v4717 = vmul.f32 %v4679, %v4695
        %v4718 = vmul.f32 %v4680, %v4695
        %v4719 = vmul.f32 %v4681, %v4695
        %v4720 = vmul.f32 %v4682, %v4695
        %v4721 = vmul.f32 %v4683, %v4695
        %v4722 = vmul.f32 %v4684, %v4695
        %v4723 = vmul.f32 %v4685, %v4695
        %v4724 = vmul.f32 %v4686, %v4695
        %v4725 = vmul.f32 %v4687, %v4695
        %v4726 = vmul.f32 %v4688, %v4695
        %v4727 = vmul.f32 %v4689, %v4695
        %v4728 = vmul.f32 %v4690, %v4695
        %v4730 = vlaneseq
        %v4731 = vshrl.u32 %v4730, 7
        %v4732 = vsub.s32 0, %v4731
        %v4733 = vrot.slane %v4178, %v4732
        %v4735 = vadd.f32 %v4697, %v4733
        %v4736 = vadd.f32 %v4698, %v4733
        %v4737 = vadd.f32 %v4699, %v4733
        %v4738 = vadd.f32 %v4700, %v4733
        %v4739 = vadd.f32 %v4701, %v4733
        %v4740 = vadd.f32 %v4702, %v4733
        %v4741 = vadd.f32 %v4703, %v4733
        %v4742 = vadd.f32 %v4704, %v4733
        %v4743 = vadd.f32 %v4705, %v4733
        %v4744 = vadd.f32 %v4706, %v4733
        %v4745 = vadd.f32 %v4707, %v4733
        %v4746 = vadd.f32 %v4708, %v4733
        %v4747 = vadd.f32 %v4709, %v4733
        %v4748 = vadd.f32 %v4710, %v4733
        %v4749 = vadd.f32 %v4711, %v4733
        %v4750 = vadd.f32 %v4712, %v4733
        %v4751 = vadd.f32 %v4713, %v4733
        %v4752 = vadd.f32 %v4714, %v4733
        %v4753 = vadd.f32 %v4715, %v4733
        %v4754 = vadd.f32 %v4716, %v4733
        %v4755 = vadd.f32 %v4717, %v4733
        %v4756 = vadd.f32 %v4718, %v4733
        %v4757 = vadd.f32 %v4719, %v4733
        %v4758 = vadd.f32 %v4720, %v4733
        %v4759 = vadd.f32 %v4721, %v4733
        %v4760 = vadd.f32 %v4722, %v4733
        %v4761 = vadd.f32 %v4723, %v4733
        %v4762 = vadd.f32 %v4724, %v4733
        %v4763 = vadd.f32 %v4725, %v4733
        %v4764 = vadd.f32 %v4726, %v4733
        %v4765 = vadd.f32 %v4727, %v4733
        %v4766 = vadd.f32 %v4728, %v4733
        %v4767 = vpack.c.bf16 %v4736, %v4735
        %v4768 = vpack.c.bf16 %v4738, %v4737
        %v4769 = vpack.c.bf16 %v4740, %v4739
        %v4770 = vpack.c.bf16 %v4742, %v4741
        %v4771 = vpack.c.bf16 %v4744, %v4743
        %v4772 = vpack.c.bf16 %v4746, %v4745
        %v4773 = vpack.c.bf16 %v4748, %v4747
        %v4774 = vpack.c.bf16 %v4750, %v4749
        %v4775 = vpack.c.bf16 %v4752, %v4751
        %v4776 = vpack.c.bf16 %v4754, %v4753
        %v4777 = vpack.c.bf16 %v4756, %v4755
        %v4778 = vpack.c.bf16 %v4758, %v4757
        %v4779 = vpack.c.bf16 %v4760, %v4759
        %v4780 = vpack.c.bf16 %v4762, %v4761
        %v4781 = vpack.c.bf16 %v4764, %v4763
        %v4782 = vpack.c.bf16 %v4766, %v4765
        %v4783 = vld [vmem:[%s13] sm:$0xf]
        %v4784 = vld [vmem:[%s13 + $0x4] sm:$0xf]
        %v4785 = vld [vmem:[%s13 + $0x8] sm:$0xf]
        %v4786 = vld [vmem:[%s13 + $0xc] sm:$0xf]
        %v4787 = vld [vmem:[%s14] sm:$0x1]
        %v4789 = vlaneseq
        %v4790 = vshrl.u32 %v4789, 7
        %v4791 = vsub.s32 0, %v4790
        %v4792 = vrot.slane %v4787, %v4791
        %v4798 = vunpack.c.l.b16 %v4783
        %v4799 = vunpack.c.l.b16 %v4784
        %v4800 = vunpack.c.l.b16 %v4785
        %v4801 = vunpack.c.l.b16 %v4786
        %v4802 = vpack.c.b16 %v4799, %v4798
        %v4803 = vpack.c.b16 %v4801, %v4800
        %v4807 = vsel %vm761, %v4767, 0
        %v4810 = vsel %vm761, %v4768, 0
        %v4813 = vsel %vm761, %v4769, 0
        %v4816 = vsel %vm761, %v4770, 0
        %v4819 = vsel %vm761, %v4771, 0
        %v4822 = vsel %vm761, %v4772, 0
        %v4825 = vsel %vm761, %v4773, 0
        %v4828 = vsel %vm761, %v4774, 0
        %v4831 = vsel %vm761, %v4775, 0
        %v4834 = vsel %vm761, %v4776, 0
        %v4837 = vsel %vm761, %v4777, 0
        %v4840 = vsel %vm761, %v4778, 0
        %v4843 = vsel %vm761, %v4779, 0
        %v4846 = vsel %vm761, %v4780, 0
        %v4849 = vsel %vm761, %v4781, 0
        %v4852 = vsel %vm761, %v4782, 0
        %4854 = vmatprep.subr.bf16.mxu0 0
        %4855 = vmatpush1.bf16.msra.mxu0 0
        %4856 = vmatprep.subr.bf16.mxu0 0
        %4857 = vmatpush1.bf16.msra.mxu0 0
        %4858 = vmatprep.subr.bf16.mxu0 0
        %4859 = vmatpush1.bf16.msra.mxu0 0
        %4860 = vmatprep.subr.bf16.mxu0 0
        %4861 = vmatpush1.bf16.msra.mxu0 0
        %4862 = vmatprep.subr.bf16.mxu0 0
        %4863 = vmatpush1.bf16.msra.mxu0 0
        %4864 = vmatprep.subr.bf16.mxu0 0
        %4865 = vmatpush1.bf16.msra.mxu0 0
        %4866 = vmatprep.subr.bf16.mxu0 0
        %4867 = vmatpush1.bf16.msra.mxu0 %v4803
        %4868 = vmatprep.subr.bf16.mxu0 0
        %4869 = vmatpush1.bf16.msra.mxu0 %v4802
        %4870 = vmatprep.subr.bf16.mxu0 0
        %4871 = vmatpush2.bf16.msra.mxu0 0
        %4872 = vmatprep.subr.bf16.mxu0 0
        %4873 = vmatpush2.bf16.msra.mxu0 0
        %4874 = vmatprep.subr.bf16.mxu0 0
        %4875 = vmatpush2.bf16.msra.mxu0 0
        %4876 = vmatprep.subr.bf16.mxu0 0
        %4877 = vmatpush2.bf16.msra.mxu0 0
        %4878 = vmatprep.subr.bf16.mxu0 0
        %4879 = vmatpush2.bf16.msra.mxu0 0
        %4880 = vmatprep.subr.bf16.mxu0 0
        %4881 = vmatpush2.bf16.msra.mxu0 0
        %4882 = vmatprep.subr.bf16.mxu0 0
        %4883 = vmatpush2.bf16.msra.mxu0 0
        %4884 = vmatprep.subr.bf16.mxu0 0
        %4885 = vmatpush2.bf16.msra.mxu0 0
        %4886 = vmatprep.mubr.bf16.mxu0 0
        %4887 = vmatmul.mubr.bf16.gmra.mxu0 %v4807
        %v4888 = vpop.f32.mrf.mxu0
        %v4889 = vadd.f32 %v4792, %v4888
        %v4890 = vpop.f32.mrf.mxu0
        %v4891 = vpop.f32.mrf.mxu0
        %v4892 = vadd.f32 %v4792, %v4891
        %v4893 = vpop.f32.mrf.mxu0
        %4894 = vmatprep.mubr.bf16.mxu0 0
        %4895 = vmatmul.mubr.bf16.gmra.mxu0 %v4810
        %v4896 = vpop.f32.mrf.mxu0
        %v4897 = vadd.f32 %v4792, %v4896
        %v4898 = vpop.f32.mrf.mxu0
        %v4899 = vpop.f32.mrf.mxu0
        %v4900 = vadd.f32 %v4792, %v4899
        %v4901 = vpop.f32.mrf.mxu0
        %4902 = vmatprep.mubr.bf16.mxu0 0
        %4903 = vmatmul.mubr.bf16.gmra.mxu0 %v4813
        %v4904 = vpop.f32.mrf.mxu0
        %v4905 = vadd.f32 %v4792, %v4904
        %v4906 = vpop.f32.mrf.mxu0
        %v4907 = vpop.f32.mrf.mxu0
        %v4908 = vadd.f32 %v4792, %v4907
        %v4909 = vpop.f32.mrf.mxu0
        %4910 = vmatprep.mubr.bf16.mxu0 0
        %4911 = vmatmul.mubr.bf16.gmra.mxu0 %v4816
        %v4912 = vpop.f32.mrf.mxu0
        %v4913 = vadd.f32 %v4792, %v4912
        %v4914 = vpop.f32.mrf.mxu0
        %v4915 = vpop.f32.mrf.mxu0
        %v4916 = vadd.f32 %v4792, %v4915
        %v4917 = vpop.f32.mrf.mxu0
        %4918 = vmatprep.mubr.bf16.mxu0 0
        %4919 = vmatmul.mubr.bf16.gmra.mxu0 %v4819
        %v4920 = vpop.f32.mrf.mxu0
        %v4921 = vadd.f32 %v4792, %v4920
        %v4922 = vpop.f32.mrf.mxu0
        %v4923 = vpop.f32.mrf.mxu0
        %v4924 = vadd.f32 %v4792, %v4923
        %v4925 = vpop.f32.mrf.mxu0
        %4926 = vmatprep.mubr.bf16.mxu0 0
        %4927 = vmatmul.mubr.bf16.gmra.mxu0 %v4822
        %v4928 = vpop.f32.mrf.mxu0
        %v4929 = vadd.f32 %v4792, %v4928
        %v4930 = vpop.f32.mrf.mxu0
        %v4931 = vpop.f32.mrf.mxu0
        %v4932 = vadd.f32 %v4792, %v4931
        %v4933 = vpop.f32.mrf.mxu0
        %4934 = vmatprep.mubr.bf16.mxu0 0
        %4935 = vmatmul.mubr.bf16.gmra.mxu0 %v4825
        %v4936 = vpop.f32.mrf.mxu0
        %v4937 = vadd.f32 %v4792, %v4936
        %v4938 = vpop.f32.mrf.mxu0
        %v4939 = vpop.f32.mrf.mxu0
        %v4940 = vadd.f32 %v4792, %v4939
        %v4941 = vpop.f32.mrf.mxu0
        %4942 = vmatprep.mubr.bf16.mxu0 0
        %4943 = vmatmul.mubr.bf16.gmra.mxu0 %v4828
        %v4944 = vpop.f32.mrf.mxu0
        %v4945 = vadd.f32 %v4792, %v4944
        %v4946 = vpop.f32.mrf.mxu0
        %v4947 = vpop.f32.mrf.mxu0
        %v4948 = vadd.f32 %v4792, %v4947
        %v4949 = vpop.f32.mrf.mxu0
        %4950 = vmatprep.mubr.bf16.mxu0 0
        %4951 = vmatmul.mubr.bf16.gmra.mxu0 %v4831
        %v4952 = vpop.f32.mrf.mxu0
        %v4953 = vadd.f32 %v4792, %v4952
        %v4954 = vpop.f32.mrf.mxu0
        %v4955 = vpop.f32.mrf.mxu0
        %v4956 = vadd.f32 %v4792, %v4955
        %v4957 = vpop.f32.mrf.mxu0
        %4958 = vmatprep.mubr.bf16.mxu0 0
        %4959 = vmatmul.mubr.bf16.gmra.mxu0 %v4834
        %v4960 = vpop.f32.mrf.mxu0
        %v4961 = vadd.f32 %v4792, %v4960
        %v4962 = vpop.f32.mrf.mxu0
        %v4963 = vpop.f32.mrf.mxu0
        %v4964 = vadd.f32 %v4792, %v4963
        %v4965 = vpop.f32.mrf.mxu0
        %4966 = vmatprep.mubr.bf16.mxu0 0
        %4967 = vmatmul.mubr.bf16.gmra.mxu0 %v4837
        %v4968 = vpop.f32.mrf.mxu0
        %v4969 = vadd.f32 %v4792, %v4968
        %v4970 = vpop.f32.mrf.mxu0
        %v4971 = vpop.f32.mrf.mxu0
        %v4972 = vadd.f32 %v4792, %v4971
        %v4973 = vpop.f32.mrf.mxu0
        %4974 = vmatprep.mubr.bf16.mxu0 0
        %4975 = vmatmul.mubr.bf16.gmra.mxu0 %v4840
        %v4976 = vpop.f32.mrf.mxu0
        %v4977 = vadd.f32 %v4792, %v4976
        %v4978 = vpop.f32.mrf.mxu0
        %v4979 = vpop.f32.mrf.mxu0
        %v4980 = vadd.f32 %v4792, %v4979
        %v4981 = vpop.f32.mrf.mxu0
        %4982 = vmatprep.mubr.bf16.mxu0 0
        %4983 = vmatmul.mubr.bf16.gmra.mxu0 %v4843
        %v4984 = vpop.f32.mrf.mxu0
        %v4985 = vadd.f32 %v4792, %v4984
        %v4986 = vpop.f32.mrf.mxu0
        %v4987 = vpop.f32.mrf.mxu0
        %v4988 = vadd.f32 %v4792, %v4987
        %v4989 = vpop.f32.mrf.mxu0
        %4990 = vmatprep.mubr.bf16.mxu0 0
        %4991 = vmatmul.mubr.bf16.gmra.mxu0 %v4846
        %v4992 = vpop.f32.mrf.mxu0
        %v4993 = vadd.f32 %v4792, %v4992
        %v4994 = vpop.f32.mrf.mxu0
        %v4995 = vpop.f32.mrf.mxu0
        %v4996 = vadd.f32 %v4792, %v4995
        %v4997 = vpop.f32.mrf.mxu0
        %4998 = vmatprep.mubr.bf16.mxu0 0
        %4999 = vmatmul.mubr.bf16.gmra.mxu0 %v4849
        %v5000 = vpop.f32.mrf.mxu0
        %v5001 = vadd.f32 %v4792, %v5000
        %v5002 = vpop.f32.mrf.mxu0
        %v5003 = vpop.f32.mrf.mxu0
        %v5004 = vadd.f32 %v4792, %v5003
        %v5005 = vpop.f32.mrf.mxu0
        %5006 = vmatprep.mubr.bf16.mxu0 0
        %5007 = vmatmul.mubr.bf16.gmra.mxu0 %v4852
        %v5008 = vpop.f32.mrf.mxu0
        %v5009 = vadd.f32 %v4792, %v5008
        %v5010 = vpop.f32.mrf.mxu0
        %v5011 = vpop.f32.mrf.mxu0
        %v5012 = vadd.f32 %v4792, %v5011
        %v5013 = vpop.f32.mrf.mxu0
        %5014 = vdwg.mxu0
        %5015 = vst [vmem:[%s652] sm:$0xff] %v4889
        %5016 = vst [vmem:[%s652 + $0x8] sm:$0xff] %v4892
        %5017 = vst [vmem:[%s652 + $0x10] sm:$0xff] %v4897
        %5018 = vst [vmem:[%s652 + $0x18] sm:$0xff] %v4900
        %5019 = vst [vmem:[%s652 + $0x20] sm:$0xff] %v4905
        %5020 = vst [vmem:[%s652 + $0x28] sm:$0xff] %v4908
        %5021 = vst [vmem:[%s652 + $0x30] sm:$0xff] %v4913
        %5022 = vst [vmem:[%s652 + $0x38] sm:$0xff] %v4916
        %5023 = vst [vmem:[%s652 + $0x40] sm:$0xff] %v4921
        %5024 = vst [vmem:[%s652 + $0x48] sm:$0xff] %v4924
        %5025 = vst [vmem:[%s652 + $0x50] sm:$0xff] %v4929
        %5026 = vst [vmem:[%s652 + $0x58] sm:$0xff] %v4932
        %5027 = vst [vmem:[%s652 + $0x60] sm:$0xff] %v4937
        %5028 = vst [vmem:[%s652 + $0x68] sm:$0xff] %v4940
        %5029 = vst [vmem:[%s652 + $0x70] sm:$0xff] %v4945
        %5030 = vst [vmem:[%s652 + $0x78] sm:$0xff] %v4948
        %5031 = vst [vmem:[%s652 + $0x80] sm:$0xff] %v4953
        %5032 = vst [vmem:[%s652 + $0x88] sm:$0xff] %v4956
        %5033 = vst [vmem:[%s652 + $0x90] sm:$0xff] %v4961
        %5034 = vst [vmem:[%s652 + $0x98] sm:$0xff] %v4964
        %5035 = vst [vmem:[%s652 + $0xa0] sm:$0xff] %v4969
        %5036 = vst [vmem:[%s652 + $0xa8] sm:$0xff] %v4972
        %5037 = vst [vmem:[%s652 + $0xb0] sm:$0xff] %v4977
        %5038 = vst [vmem:[%s652 + $0xb8] sm:$0xff] %v4980
        %5039 = vst [vmem:[%s652 + $0xc0] sm:$0xff] %v4985
        %5040 = vst [vmem:[%s652 + $0xc8] sm:$0xff] %v4988
        %5041 = vst [vmem:[%s652 + $0xd0] sm:$0xff] %v4993
        %5042 = vst [vmem:[%s652 + $0xd8] sm:$0xff] %v4996
        %5043 = vst [vmem:[%s652 + $0xe0] sm:$0xff] %v5001
        %5044 = vst [vmem:[%s652 + $0xe8] sm:$0xff] %v5004
        %5045 = vst [vmem:[%s652 + $0xf0] sm:$0xff] %v5009
        %5046 = vst [vmem:[%s652 + $0xf8] sm:$0xff] %v5012
        %s5047 = sand.u32 %s357, 1
        %s5048 = scalar_lea.sflag [#allocation4], %s5047
        %s5049 = sand.u32 %s357, 1
        %s5050 = smul.addr %s5049, 256
        %s5051 = scalar_lea.vmem [#allocation3], %s5050
        // Predicated region
        $region119: #{tpu_custom_call.1} parent=113 // pred_check
          %p5052 = pneg %p367
        $region120: #{tpu_custom_call.1} parent=113 // pred_check_branch
          %5054 = sbr.rel (%p5052) target = $region122
        $region121: #{tpu_custom_call.1} parent=113 // pred_region
          #allocation6 [shape = 'u32[6]{0}', space=smem, size = 0x18, scoped, tag = 'DMA stride descriptor']
          %s5055 = smul.u32 4, %s29
          %s5057 = ssub.s32 4096, 4096
          %5058 = vsyncadd %s5048, %s5057
          %s5059 = smul.addr %s5055, 128
          %s5060 = scalar_lea.hbm %s15, %s5059
          %s5062 = sshll.u32 1, 14
          %s5063 = sxor.u32 4294967295, %s5062
          %s5066 = sshll.u32 7, 18
          %s5067 = sxor.u32 4294967295, %s5066
          %s5068 = sand.u32 0, %s5067
          %s5070 = sor.u32 %s5068, 0
          %s5071 = sshll.u32 %s5051, 4
          %s5072 = int_to_ptr.vmem [resolvable:$true] %s5071
          %5078 = sst [smem:[#allocation6]] 512
          %s5079 = scalar_lea.smem [#allocation6], 1
          %5080 = sst [smem:[%s5079]] 1024
          %s5081 = scalar_lea.smem [#allocation6], 2
          %5082 = sst [smem:[%s5081]] 4
          %s5083 = scalar_lea.smem [#allocation6], 3
          %5084 = sst [smem:[%s5083]] 128
          %s5085 = scalar_lea.smem [#allocation6], 4
          %5086 = sst [smem:[%s5085]] 128
          %s5087 = scalar_lea.smem [#allocation6], 5
          %5088 = sst [smem:[%s5087]] 8
          %5090 = dma.general %s5072, 4096, %s5060, %s5048, 131072, [#allocation6], %s5070, 0
        $region122: #{tpu_custom_call.1} parent=113 // pred_fallthru
          _
      $region114: #{tpu_custom_call.1} parent=5 // pred_fallthru
        _
      %p5091 = scmp.le.s32.totalorder 2, %s24
      // Predicated region
      $region123: #{tpu_custom_call.1} parent=5 // pred_check
        %p5092 = pneg %p5091
      $region124: #{tpu_custom_call.1} parent=5 // pred_check_branch
        %5094 = sbr.rel (%p5092) target = $region126
      $region125: #{tpu_custom_call.1} parent=5 // pred_region
        %s5095 = ssub.s32 %s24, 2
        // Predicated region
        $region127: #{tpu_custom_call.1} parent=125 // pred_check
          %p5096 = pneg %p373
        $region128: #{tpu_custom_call.1} parent=125 // pred_check_branch
          %5098 = sbr.rel (%p5096) target = $region130
        $region129: #{tpu_custom_call.1} parent=125 // pred_region
          %s5099 = sand.u32 %s358, 1
          %s5100 = scalar_lea.sflag [#allocation4], %s5099
          %s5101 = sand.u32 %s358, 1
          %s5102 = smul.addr %s5101, 256
          %s5103 = scalar_lea.vmem [#allocation3], %s5102
          %5104 = dma.done %s5100, 4096
        $region130: #{tpu_custom_call.1} parent=125 // pred_fallthru
          _
      $region126: #{tpu_custom_call.1} parent=5 // pred_fallthru
        _
    $region6: #{tpu_custom_call.1} parent=1 // loop_footer
      %s28 = sadd.s32 1, %s24
    $region7: #{tpu_custom_call.1} parent=1 // loop_footer_branch
      %23 = sbr.rel target = $region3
    $region8: #{tpu_custom_call.1} parent=1 // loop_exit
      _
    %5105 = vsyncpa [#allocation4], 1
    %s5106 = scalar_lea.sflag [#allocation4], 1
    %5107 = vsyncpa %s5106, 1

// kernel: tpu_custom_call.1
$region0: #{tpu_custom_call.1}
  #allocation0 [shape = 'u32[]', space=smem, size = 0x4, offset = 0x4, fixed_abs, tag = 'smem constant byte address 0x4 - core index']
  #allocation1 [shape = 'u32[144,128]{1,0:T(1,128)}', space=vmem, size = 0x12000, scoped, tag = 'internal scratch']
  #allocation5 [shape = 's32[]', space=sflag, size = 0x4, offset = 0, fixed_abs, tag = 'sflag constant byte address 0x0 - dummy sync flag']
  %s0 = inlined_call_operand.vmem [shape: f32[8,64,32], index: 0, kind: input, shape index: {}]
  %s1 = inlined_call_operand.vmem [shape: bf16[32,384], index: 1, kind: input, shape index: {}]
  %s2 = inlined_call_operand.vmem [shape: f32[1,384], index: 2, kind: input, shape index: {}]
  %s3 = inlined_call_operand.vmem [shape: bf16[128,32], index: 3, kind: input, shape index: {}]
  %s4 = inlined_call_operand.vmem [shape: f32[1,32], index: 4, kind: input, shape index: {}]
  %s5 = inlined_call_operand.vmem [shape: f32[1,32], index: 5, kind: input, shape index: {}]
  %s6 = inlined_call_operand.vmem [shape: f32[1,32], index: 6, kind: input, shape index: {}]
  %s7 = inlined_call_operand.vmem [shape: f32[1,32], index: 7, kind: input, shape index: {}]
  %s8 = inlined_call_operand.vmem [shape: f32[1,32], index: 8, kind: input, shape index: {}]
  %s9 = inlined_call_operand.vmem [shape: bf16[32,128], index: 9, kind: input, shape index: {}]
  %s10 = inlined_call_operand.vmem [shape: f32[1,128], index: 10, kind: input, shape index: {}]
  %s11 = inlined_call_operand.vmem [shape: bf16[128,32], index: 11, kind: input, shape index: {}]
  %s12 = inlined_call_operand.vmem [shape: f32[1,32], index: 12, kind: input, shape index: {}]
  %s13 = inlined_call_operand.vmem [shape: bf16[32,128], index: 13, kind: input, shape index: {}]
  %s14 = inlined_call_operand.vmem [shape: f32[1,128], index: 14, kind: input, shape index: {}]
  %s15 = inlined_call_operand.hbm [shape: f32[8,64,128], index: 15, kind: output, shape index: {}]
  %s16 = sld [smem:[#allocation0]]
  $region131: #{tpu_custom_call.1} parent=0
    _
  %s18 = ssub.s32 1, %s16
  %s19 = scalar_select 0, %s18, %s16
  $region1: #{tpu_custom_call.1} parent=0
    #allocation2 [shape = 'u8[262144]{0}', space=vmem, size = 0x40000, scoped, tag = 'input window, operand 0']
    #allocation3 [shape = 'u8[262144]{0}', space=vmem, size = 0x40000, scoped, tag = 'output window, operand 0']
    #allocation4 [shape = 's32[2]{0}', space=sflag, size = 0x8, scoped, tag = 'scoped memory for tpu_custom_call.1']
    %20 = vsyncpa [#allocation4], 0
    %s21 = scalar_lea.sflag [#allocation4], 1
    %22 = vsyncpa %s21, 0
    loop: start=0, step=1, limit=4
    $region2: #{tpu_custom_call.1} parent=1 // loop_pre_header
      _
    $region3: #{tpu_custom_call.1} parent=1 // loop_header
      %s24 = sphi 0, %s28
      %p25 = scmp.ge.s32.totalorder %s24, 4
      %s34 = sphi 0, %s36
      %s37 = sphi 0, %s34
      %s38 = sphi 0, %s37
      %s54 = sphi 0, %s38
      %s58 = sphi 0, %s58
      %s60 = sphi 0, %s58
      %s61 = sphi 0, %s60
      %s75 = sphi 0, %s61
      %s79 = sphi 0, %s79
      %s81 = sphi 0, %s79
      %s82 = sphi 0, %s81
      %s96 = sphi 0, %s82
      %s100 = sphi 0, %s100
      %s102 = sphi 0, %s100
      %s103 = sphi 0, %s102
      %s117 = sphi 0, %s103
      %s121 = sphi 0, %s121
      %s123 = sphi 0, %s121
      %s124 = sphi 0, %s123
      %s138 = sphi 0, %s124
      %s142 = sphi 0, %s142
      %s144 = sphi 0, %s142
      %s145 = sphi 0, %s144
      %s159 = sphi 0, %s145
      %s163 = sphi 0, %s163
      %s165 = sphi 0, %s163
      %s166 = sphi 0, %s165
      %s180 = sphi 0, %s166
      %s184 = sphi 0, %s184
      %s186 = sphi 0, %s184
      %s187 = sphi 0, %s186
      %s201 = sphi 0, %s187
      %s205 = sphi 0, %s205
      %s207 = sphi 0, %s205
      %s208 = sphi 0, %s207
      %s222 = sphi 0, %s208
      %s226 = sphi 0, %s226
      %s228 = sphi 0, %s226
      %s229 = sphi 0, %s228
      %s243 = sphi 0, %s229
      %s247 = sphi 0, %s247
      %s249 = sphi 0, %s247
      %s250 = sphi 0, %s249
      %s264 = sphi 0, %s250
      %s268 = sphi 0, %s268
      %s270 = sphi 0, %s268
      %s271 = sphi 0, %s270
      %s285 = sphi 0, %s271
      %s289 = sphi 0, %s289
      %s291 = sphi 0, %s289
      %s292 = sphi 0, %s291
      %s306 = sphi 0, %s292
      %s310 = sphi 0, %s310
      %s312 = sphi 0, %s310
      %s313 = sphi 0, %s312
      %s327 = sphi 0, %s313
      %s331 = sphi 0, %s331
      %s333 = sphi 0, %s331
      %s334 = sphi 0, %s333
      %s348 = sphi 0, %s334
      %s354 = sphi 0, %s356
      %s357 = sphi 0, %s354
      %s358 = sphi 0, %s357
      %s374 = sphi 0, %s358
    $region4: #{tpu_custom_call.1} parent=1 // loop_header_branch
      %27 = sbr.rel (%p25) target = $region8
    $region5: #{tpu_custom_call.1} parent=1 // loop_body
      %s29 = ssub.s32 %s24, 1
      %s30 = ssub.s32 %s24, 2
      %s31 = sadd.s32 %s24, 1
      %s32 = ssub.s32 %s24, %s31
      %p33 = scmp.eq.s32.totalorder %s32, 0
      %s35 = sadd.s32 %s34, 1
      %s36 = scalar_select %p33, %s34, %s35
      %p39 = pneg %p33
      %p40 = scmp.eq.s32.totalorder %s24, 1
      %p41 = por %p39, %p40
      %p42 = scmp.ne.s32.totalorder %s34, %s37
      %p43 = scmp.eq.s32.totalorder %s24, 0
      %p44 = por %p42, %p43
      %p45 = scmp.ne.s32.totalorder %s34, %s37
      %p46 = scmp.eq.s32.totalorder %s29, 1
      %p47 = por %p45, %p46
      %p48 = scmp.ne.s32.totalorder %s37, %s38
      %p49 = scmp.eq.s32.totalorder %s29, 0
      %p50 = por %p48, %p49
      %p51 = scmp.ne.s32.totalorder %s37, %s38
      %p52 = scmp.eq.s32.totalorder %s30, 1
      %p53 = por %p51, %p52
      %p55 = scmp.ne.s32.totalorder %s38, %s54
      %p56 = scmp.eq.s32.totalorder %s30, 0
      %p57 = por %p55, %p56
      %s59 = sadd.s32 %s58, 1
      %p62 = scmp.eq.s32.totalorder %s24, 1
      %p63 = scmp.ne.s32.totalorder %s58, %s60
      %p64 = scmp.eq.s32.totalorder %s24, 0
      %p65 = por %p63, %p64
      %p66 = scmp.ne.s32.totalorder %s58, %s60
      %p67 = scmp.eq.s32.totalorder %s29, 1
      %p68 = por %p66, %p67
      %p69 = scmp.ne.s32.totalorder %s60, %s61
      %p70 = scmp.eq.s32.totalorder %s29, 0
      %p71 = por %p69, %p70
      %p72 = scmp.ne.s32.totalorder %s60, %s61
      %p73 = scmp.eq.s32.totalorder %s30, 1
      %p74 = por %p72, %p73
      %p76 = scmp.ne.s32.totalorder %s61, %s75
      %p77 = scmp.eq.s32.totalorder %s30, 0
      %p78 = por %p76, %p77
      %s80 = sadd.s32 %s79, 1
      %p83 = scmp.eq.s32.totalorder %s24, 1
      %p84 = scmp.ne.s32.totalorder %s79, %s81
      %p85 = scmp.eq.s32.totalorder %s24, 0
      %p86 = por %p84, %p85
      %p87 = scmp.ne.s32.totalorder %s79, %s81
      %p88 = scmp.eq.s32.totalorder %s29, 1
      %p89 = por %p87, %p88
      %p90 = scmp.ne.s32.totalorder %s81, %s82
      %p91 = scmp.eq.s32.totalorder %s29, 0
      %p92 = por %p90, %p91
      %p93 = scmp.ne.s32.totalorder %s81, %s82
      %p94 = scmp.eq.s32.totalorder %s30, 1
      %p95 = por %p93, %p94
      %p97 = scmp.ne.s32.totalorder %s82, %s96
      %p98 = scmp.eq.s32.totalorder %s30, 0
      %p99 = por %p97, %p98
      %s101 = sadd.s32 %s100, 1
      %p104 = scmp.eq.s32.totalorder %s24, 1
      %p105 = scmp.ne.s32.totalorder %s100, %s102
      %p106 = scmp.eq.s32.totalorder %s24, 0
      %p107 = por %p105, %p106
      %p108 = scmp.ne.s32.totalorder %s100, %s102
      %p109 = scmp.eq.s32.totalorder %s29, 1
      %p110 = por %p108, %p109
      %p111 = scmp.ne.s32.totalorder %s102, %s103
      %p112 = scmp.eq.s32.totalorder %s29, 0
      %p113 = por %p111, %p112
      %p114 = scmp.ne.s32.totalorder %s102, %s103
      %p115 = scmp.eq.s32.totalorder %s30, 1
      %p116 = por %p114, %p115
      %p118 = scmp.ne.s32.totalorder %s103, %s117
      %p119 = scmp.eq.s32.totalorder %s30, 0
      %p120 = por %p118, %p119
      %s122 = sadd.s32 %s121, 1
      %p125 = scmp.eq.s32.totalorder %s24, 1
      %p126 = scmp.ne.s32.totalorder %s121, %s123
      %p127 = scmp.eq.s32.totalorder %s24, 0
      %p128 = por %p126, %p127
      %p129 = scmp.ne.s32.totalorder %s121, %s123
      %p130 = scmp.eq.s32.totalorder %s29, 1
      %p131 = por %p129, %p130
      %p132 = scmp.ne.s32.totalorder %s123, %s124
      %p133 = scmp.eq.s32.totalorder %s29, 0
      %p134 = por %p132, %p133
      %p135 = scmp.ne.s32.totalorder %s123, %s124
      %p136 = scmp.eq.s32.totalorder %s30, 1
      %p137 = por %p135, %p136
      %p139 = scmp.ne.s32.totalorder %s124, %s138
      %p140 = scmp.eq.s32.totalorder %s30, 0
      %p141 = por %p139, %p140
      %s143 = sadd.s32 %s142, 1
      %p146 = scmp.eq.s32.totalorder %s24, 1
      %p147 = scmp.ne.s32.totalorder %s142, %s144
      %p148 = scmp.eq.s32.totalorder %s24, 0
      %p149 = por %p147, %p148
      %p150 = scmp.ne.s32.totalorder %s142, %s144
      %p151 = scmp.eq.s32.totalorder %s29, 1
      %p152 = por %p150, %p151
      %p153 = scmp.ne.s32.totalorder %s144, %s145
      %p154 = scmp.eq.s32.totalorder %s29, 0
      %p155 = por %p153, %p154
      %p156 = scmp.ne.s32.totalorder %s144, %s145
      %p157 = scmp.eq.s32.totalorder %s30, 1
      %p158 = por %p156, %p157
      %p160 = scmp.ne.s32.totalorder %s145, %s159
      %p161 = scmp.eq.s32.totalorder %s30, 0
      %p162 = por %p160, %p161
      %s164 = sadd.s32 %s163, 1
      %p167 = scmp.eq.s32.totalorder %s24, 1
      %p168 = scmp.ne.s32.totalorder %s163, %s165
      %p169 = scmp.eq.s32.totalorder %s24, 0
      %p170 = por %p168, %p169
      %p171 = scmp.ne.s32.totalorder %s163, %s165
      %p172 = scmp.eq.s32.totalorder %s29, 1
      %p173 = por %p171, %p172
      %p174 = scmp.ne.s32.totalorder %s165, %s166
      %p175 = scmp.eq.s32.totalorder %s29, 0
      %p176 = por %p174, %p175
      %p177 = scmp.ne.s32.totalorder %s165, %s166
      %p178 = scmp.eq.s32.totalorder %s30, 1
      %p179 = por %p177, %p178
      %p181 = scmp.ne.s32.totalorder %s166, %s180
      %p182 = scmp.eq.s32.totalorder %s30, 0
      %p183 = por %p181, %p182
      %s185 = sadd.s32 %s184, 1
      %p188 = scmp.eq.s32.totalorder %s24, 1
      %p189 = scmp.ne.s32.totalorder %s184, %s186
      %p190 = scmp.eq.s32.totalorder %s24, 0
      %p191 = por %p189, %p190
      %p192 = scmp.ne.s32.totalorder %s184, %s186
      %p193 = scmp.eq.s32.totalorder %s29, 1
      %p194 = por %p192, %p193
      %p195 = scmp.ne.s32.totalorder %s186, %s187
      %p196 = scmp.eq.s32.totalorder %s29, 0
      %p197 = por %p195, %p196
      %p198 = scmp.ne.s32.totalorder %s186, %s187
      %p199 = scmp.eq.s32.totalorder %s30, 1
      %p200 = por %p198, %p199
      %p202 = scmp.ne.s32.totalorder %s187, %s201
      %p203 = scmp.eq.s32.totalorder %s30, 0
      %p204 = por %p202, %p203
      %s206 = sadd.s32 %s205, 1
      %p209 = scmp.eq.s32.totalorder %s24, 1
      %p210 = scmp.ne.s32.totalorder %s205, %s207
      %p211 = scmp.eq.s32.totalorder %s24, 0
      %p212 = por %p210, %p211
      %p213 = scmp.ne.s32.totalorder %s205, %s207
      %p214 = scmp.eq.s32.totalorder %s29, 1
      %p215 = por %p213, %p214
      %p216 = scmp.ne.s32.totalorder %s207, %s208
      %p217 = scmp.eq.s32.totalorder %s29, 0
      %p218 = por %p216, %p217
      %p219 = scmp.ne.s32.totalorder %s207, %s208
      %p220 = scmp.eq.s32.totalorder %s30, 1
      %p221 = por %p219, %p220
      %p223 = scmp.ne.s32.totalorder %s208, %s222
      %p224 = scmp.eq.s32.totalorder %s30, 0
      %p225 = por %p223, %p224
      %s227 = sadd.s32 %s226, 1
      %p230 = scmp.eq.s32.totalorder %s24, 1
      %p231 = scmp.ne.s32.totalorder %s226, %s228
      %p232 = scmp.eq.s32.totalorder %s24, 0
      %p233 = por %p231, %p232
      %p234 = scmp.ne.s32.totalorder %s226, %s228
      %p235 = scmp.eq.s32.totalorder %s29, 1
      %p236 = por %p234, %p235
      %p237 = scmp.ne.s32.totalorder %s228, %s229
      %p238 = scmp.eq.s32.totalorder %s29, 0
      %p239 = por %p237, %p238
      %p240 = scmp.ne.s32.totalorder %s228, %s229
      %p241 = scmp.eq.s32.totalorder %s30, 1
      %p242 = por %p240, %p241
      %p244 = scmp.ne.s32.totalorder %s229, %s243
      %p245 = scmp.eq.s32.totalorder %s30, 0
      %p246 = por %p244, %p245
      %s248 = sadd.s32 %s247, 1
      %p251 = scmp.eq.s32.totalorder %s24, 1
      %p252 = scmp.ne.s32.totalorder %s247, %s249
      %p253 = scmp.eq.s32.totalorder %s24, 0
      %p254 = por %p252, %p253
      %p255 = scmp.ne.s32.totalorder %s247, %s249
      %p256 = scmp.eq.s32.totalorder %s29, 1
      %p257 = por %p255, %p256
      %p258 = scmp.ne.s32.totalorder %s249, %s250
      %p259 = scmp.eq.s32.totalorder %s29, 0
      %p260 = por %p258, %p259
      %p261 = scmp.ne.s32.totalorder %s249, %s250
      %p262 = scmp.eq.s32.totalorder %s30, 1
      %p263 = por %p261, %p262
      %p265 = scmp.ne.s32.totalorder %s250, %s264
      %p266 = scmp.eq.s32.totalorder %s30, 0
      %p267 = por %p265, %p266
      %s269 = sadd.s32 %s268, 1
      %p272 = scmp.eq.s32.totalorder %s24, 1
      %p273 = scmp.ne.s32.totalorder %s268, %s270
      %p274 = scmp.eq.s32.totalorder %s24, 0
      %p275 = por %p273, %p274
      %p276 = scmp.ne.s32.totalorder %s268, %s270
      %p277 = scmp.eq.s32.totalorder %s29, 1
      %p278 = por %p276, %p277
      %p279 = scmp.ne.s32.totalorder %s270, %s271
      %p280 = scmp.eq.s32.totalorder %s29, 0
      %p281 = por %p279, %p280
      %p282 = scmp.ne.s32.totalorder %s270, %s271
      %p283 = scmp.eq.s32.totalorder %s30, 1
      %p284 = por %p282, %p283
      %p286 = scmp.ne.s32.totalorder %s271, %s285
      %p287 = scmp.eq.s32.totalorder %s30, 0
      %p288 = por %p286, %p287
      %s290 = sadd.s32 %s289, 1
      %p293 = scmp.eq.s32.totalorder %s24, 1
      %p294 = scmp.ne.s32.totalorder %s289, %s291
      %p295 = scmp.eq.s32.totalorder %s24, 0
      %p296 = por %p294, %p295
      %p297 = scmp.ne.s32.totalorder %s289, %s291
      %p298 = scmp.eq.s32.totalorder %s29, 1
      %p299 = por %p297, %p298
      %p300 = scmp.ne.s32.totalorder %s291, %s292
      %p301 = scmp.eq.s32.totalorder %s29, 0
      %p302 = por %p300, %p301
      %p303 = scmp.ne.s32.totalorder %s291, %s292
      %p304 = scmp.eq.s32.totalorder %s30, 1
      %p305 = por %p303, %p304
      %p307 = scmp.ne.s32.totalorder %s292, %s306
      %p308 = scmp.eq.s32.totalorder %s30, 0
      %p309 = por %p307, %p308
      %s311 = sadd.s32 %s310, 1
      %p314 = scmp.eq.s32.totalorder %s24, 1
      %p315 = scmp.ne.s32.totalorder %s310, %s312
      %p316 = scmp.eq.s32.totalorder %s24, 0
      %p317 = por %p315, %p316
      %p318 = scmp.ne.s32.totalorder %s310, %s312
      %p319 = scmp.eq.s32.totalorder %s29, 1
      %p320 = por %p318, %p319
      %p321 = scmp.ne.s32.totalorder %s312, %s313
      %p322 = scmp.eq.s32.totalorder %s29, 0
      %p323 = por %p321, %p322
      %p324 = scmp.ne.s32.totalorder %s312, %s313
      %p325 = scmp.eq.s32.totalorder %s30, 1
      %p326 = por %p324, %p325
      %p328 = scmp.ne.s32.totalorder %s313, %s327
      %p329 = scmp.eq.s32.totalorder %s30, 0
      %p330 = por %p328, %p329
      %s332 = sadd.s32 %s331, 1
      %p335 = scmp.eq.s32.totalorder %s24, 1
      %p336 = scmp.ne.s32.totalorder %s331, %s333
      %p337 = scmp.eq.s32.totalorder %s24, 0
      %p338 = por %p336, %p337
      %p339 = scmp.ne.s32.totalorder %s331, %s333
      %p340 = scmp.eq.s32.totalorder %s29, 1
      %p341 = por %p339, %p340
      %p342 = scmp.ne.s32.totalorder %s333, %s334
      %p343 = scmp.eq.s32.totalorder %s29, 0
      %p344 = por %p342, %p343
      %p345 = scmp.ne.s32.totalorder %s333, %s334
      %p346 = scmp.eq.s32.totalorder %s30, 1
      %p347 = por %p345, %p346
      %p349 = scmp.ne.s32.totalorder %s334, %s348
      %p350 = scmp.eq.s32.totalorder %s30, 0
      %p351 = por %p349, %p350
      %s352 = ssub.s32 %s24, %s31
      %p353 = scmp.eq.s32.totalorder %s352, 0
      %s355 = sadd.s32 %s354, 1
      %s356 = scalar_select %p353, %s354, %s355
      %p359 = pneg %p353
      %p360 = scmp.eq.s32.totalorder %s24, 1
      %p361 = por %p359, %p360
      %p362 = scmp.ne.s32.totalorder %s354, %s357
      %p363 = scmp.eq.s32.totalorder %s24, 0
      %p364 = por %p362, %p363
      %p365 = scmp.ne.s32.totalorder %s354, %s357
      %p366 = scmp.eq.s32.totalorder %s29, 1
      %p367 = por %p365, %p366
      %p368 = scmp.ne.s32.totalorder %s357, %s358
      %p369 = scmp.eq.s32.totalorder %s29, 0
      %p370 = por %p368, %p369
      %p371 = scmp.ne.s32.totalorder %s357, %s358
      %p372 = scmp.eq.s32.totalorder %s30, 1
      %p373 = por %p371, %p372
      %p375 = scmp.ne.s32.totalorder %s358, %s374
      %p376 = scmp.eq.s32.totalorder %s30, 0
      %p377 = por %p375, %p376
      %p378 = scmp.le.s32.totalorder 1, %s24
      %p379 = scmp.lt.s32.totalorder %s24, 3
      %p380 = pnand %p378, %p379
      %p381 = pneg %p380
      // Predicated region
      $region9: #{tpu_custom_call.1} parent=5 // pred_check
        _
      $region10: #{tpu_custom_call.1} parent=5 // pred_check_branch
        %383 = sbr.rel (%p380) target = $region12
      $region11: #{tpu_custom_call.1} parent=5 // pred_region
        %s384 = ssub.s32 %s24, 1
        // Predicated region
        $region13: #{tpu_custom_call.1} parent=11 // pred_check
          %p385 = pneg %p71
        $region14: #{tpu_custom_call.1} parent=11 // pred_check_branch
          %387 = sbr.rel (%p385) target = $region16
        $region15: #{tpu_custom_call.1} parent=11 // pred_region
          _
        $region16: #{tpu_custom_call.1} parent=11 // pred_fallthru
          _
        // Predicated region
        $region17: #{tpu_custom_call.1} parent=11 // pred_check
          %p388 = pneg %p92
        $region18: #{tpu_custom_call.1} parent=11 // pred_check_branch
          %390 = sbr.rel (%p388) target = $region20
        $region19: #{tpu_custom_call.1} parent=11 // pred_region
          _
        $region20: #{tpu_custom_call.1} parent=11 // pred_fallthru
          _
        // Predicated region
        $region21: #{tpu_custom_call.1} parent=11 // pred_check
          %p391 = pneg %p113
        $region22: #{tpu_custom_call.1} parent=11 // pred_check_branch
          %393 = sbr.rel (%p391) target = $region24
        $region23: #{tpu_custom_call.1} parent=11 // pred_region
          _
        $region24: #{tpu_custom_call.1} parent=11 // pred_fallthru
          _
        // Predicated region
        $region25: #{tpu_custom_call.1} parent=11 // pred_check
          %p394 = pneg %p134
        $region26: #{tpu_custom_call.1} parent=11 // pred_check_branch
          %396 = sbr.rel (%p394) target = $region28
        $region27: #{tpu_custom_call.1} parent=11 // pred_region
          _
        $region28: #{tpu_custom_call.1} parent=11 // pred_fallthru
          _
        // Predicated region
        $region29: #{tpu_custom_call.1} parent=11 // pred_check
          %p397 = pneg %p155
        $region30: #{tpu_custom_call.1} parent=11 // pred_check_branch
          %399 = sbr.rel (%p397) target = $region32
        $region31: #{tpu_custom_call.1} parent=11 // pred_region
          _
        $region32: #{tpu_custom_call.1} parent=11 // pred_fallthru
          _
        // Predicated region
        $region33: #{tpu_custom_call.1} parent=11 // pred_check
          %p400 = pneg %p176
        $region34: #{tpu_custom_call.1} parent=11 // pred_check_branch
          %402 = sbr.rel (%p400) target = $region36
        $region35: #{tpu_custom_call.1} parent=11 // pred_region
          _
        $region36: #{tpu_custom_call.1} parent=11 // pred_fallthru
          _
        // Predicated region
        $region37: #{tpu_custom_call.1} parent=11 // pred_check
          %p403 = pneg %p197
        $region38: #{tpu_custom_call.1} parent=11 // pred_check_branch
          %405 = sbr.rel (%p403) target = $region40
        $region39: #{tpu_custom_call.1} parent=11 // pred_region
          _
        $region40: #{tpu_custom_call.1} parent=11 // pred_fallthru
          _
        // Predicated region
        $region41: #{tpu_custom_call.1} parent=11 // pred_check
          %p406 = pneg %p218
        $region42: #{tpu_custom_call.1} parent=11 // pred_check_branch
          %408 = sbr.rel (%p406) target = $region44
        $region43: #{tpu_custom_call.1} parent=11 // pred_region
          _
        $region44: #{tpu_custom_call.1} parent=11 // pred_fallthru
          _
        // Predicated region
        $region45: #{tpu_custom_call.1} parent=11 // pred_check
          %p409 = pneg %p239
        $region46: #{tpu_custom_call.1} parent=11 // pred_check_branch
          %411 = sbr.rel (%p409) target = $region48
        $region47: #{tpu_custom_call.1} parent=11 // pred_region
          _
        $region48: #{tpu_custom_call.1} parent=11 // pred_fallthru
          _
        // Predicated region
        $region49: #{tpu_custom_call.1} parent=11 // pred_check
          %p412 = pneg %p260
        $region50: #{tpu_custom_call.1} parent=11 // pred_check_branch
          %414 = sbr.rel (%p412) target = $region52
        $region51: #{tpu_custom_call.1} parent=11 // pred_region
          _
        $region52: #{tpu_custom_call.1} parent=11 // pred_fallthru
          _
        // Predicated region
        $region53: #{tpu_custom_call.1} parent=11 // pred_check
          %p415 = pneg %p281
        $region54: #{tpu_custom_call.1} parent=11 // pred_check_branch
          %417 = sbr.rel (%p415) target = $region56
        $region55: #{tpu_custom_call.1} parent=11 // pred_region
          _
        $region56: #{tpu_custom_call.1} parent=11 // pred_fallthru
          _
        // Predicated region
        $region57: #{tpu_custom_call.1} parent=11 // pred_check
          %p418 = pneg %p302
        $region58: #{tpu_custom_call.1} parent=11 // pred_check_branch
          %420 = sbr.rel (%p418) target = $region60
        $region59: #{tpu_custom_call.1} parent=11 // pred_region
          _
        $region60: #{tpu_custom_call.1} parent=11 // pred_fallthru
          _
        // Predicated region
        $region61: #{tpu_custom_call.1} parent=11 // pred_check
          %p421 = pneg %p323
        $region62: #{tpu_custom_call.1} parent=11 // pred_check_branch
          %423 = sbr.rel (%p421) target = $region64
        $region63: #{tpu_custom_call.1} parent=11 // pred_region
          _
        $region64: #{tpu_custom_call.1} parent=11 // pred_fallthru
          _
        // Predicated region
        $region65: #{tpu_custom_call.1} parent=11 // pred_check
          %p424 = pneg %p344
        $region66: #{tpu_custom_call.1} parent=11 // pred_check_branch
          %426 = sbr.rel (%p424) target = $region68
        $region67: #{tpu_custom_call.1} parent=11 // pred_region
          _
        $region68: #{tpu_custom_call.1} parent=11 // pred_fallthru
          _
      $region12: #{tpu_custom_call.1} parent=5 // pred_fallthru
        _
      %p427 = scmp.lt.s32.totalorder %s24, 2
      // Predicated region
      $region69: #{tpu_custom_call.1} parent=5 // pred_check
        %p428 = pneg %p427
      $region70: #{tpu_custom_call.1} parent=5 // pred_check_branch
        %430 = sbr.rel (%p428) target = $region72
      $region71: #{tpu_custom_call.1} parent=5 // pred_region
        // Predicated region
        $region73: #{tpu_custom_call.1} parent=71 // pred_check
          %p431 = pneg %p44
        $region74: #{tpu_custom_call.1} parent=71 // pred_check_branch
          %433 = sbr.rel (%p431) target = $region76
        $region75: #{tpu_custom_call.1} parent=71 // pred_region
          %s434 = sand.u32 %s34, 1
          %s435 = sand.u32 %s34, 1
          %s436 = smul.addr %s435, 256
          %s437 = scalar_lea.vmem [#allocation2], %s436
          %s438 = smul.u32 4, %s24
          %s439 = smul.addr %s438, 8
          %s440 = scalar_lea.vmem %s0, %s439
          // Predicated region
          $region77: #{tpu_custom_call.1} parent=75 // pred_check
            _
          $region78: #{tpu_custom_call.1} parent=75 // pred_check_branch
            %442 = sbr.rel (0) target = $region80
          $region79: #{tpu_custom_call.1} parent=75 // pred_region
            // Predicated region
            $region81: #{tpu_custom_call.1} parent=79 // pred_check
              _
            $region82: #{tpu_custom_call.1} parent=79 // pred_check_branch
              %444 = sbr.rel (0) target = $region84
            $region83: #{tpu_custom_call.1} parent=79 // pred_region
              // Predicated region
              $region96: #{tpu_custom_call.1} parent=83 // pred_check
                _
              $region97: #{tpu_custom_call.1} parent=83 // pred_check_branch
                %522 = sbr.rel (0) target = $region99
              $region98: #{tpu_custom_call.1} parent=83 // pred_region
                loop: start=0, step=1, limit=1
                $region100: #{tpu_custom_call.1} parent=98 // loop_pre_header
                  _
                $region101: #{tpu_custom_call.1} parent=98 // loop_header
                  %s524 = sphi 0, %s528
                  %p525 = scmp.ge.s32.totalorder %s524, 1
                  %s529 = sphi %s440, %s440
                  %s530 = sphi %s437, %s437
                $region102: #{tpu_custom_call.1} parent=98 // loop_header_branch
                  %527 = sbr.rel (%p525) target = $region106
                $region103: #{tpu_custom_call.1} parent=98 // loop_body
                  %v531 = vld [vmem:[%s529] sm:$0xff]
                  %532 = vst [vmem:[%s530] sm:$0xff] %v531
                  %v533 = vld [vmem:[%s529 + $0x8] sm:$0xff]
                  %534 = vst [vmem:[%s530 + $0x8] sm:$0xff] %v533
                  %v535 = vld [vmem:[%s529 + $0x10] sm:$0xff]
                  %536 = vst [vmem:[%s530 + $0x10] sm:$0xff] %v535
                  %v537 = vld [vmem:[%s529 + $0x18] sm:$0xff]
                  %538 = vst [vmem:[%s530 + $0x18] sm:$0xff] %v537
                  %v539 = vld [vmem:[%s529 + $0x40] sm:$0xff]
                  %540 = vst [vmem:[%s530 + $0x20] sm:$0xff] %v539
                  %v541 = vld [vmem:[%s529 + $0x48] sm:$0xff]
                  %542 = vst [vmem:[%s530 + $0x28] sm:$0xff] %v541
                  %v543 = vld [vmem:[%s529 + $0x50] sm:$0xff]
                  %544 = vst [vmem:[%s530 + $0x30] sm:$0xff] %v543
                  %v545 = vld [vmem:[%s529 + $0x58] sm:$0xff]
                  %546 = vst [vmem:[%s530 + $0x38] sm:$0xff] %v545
                  %v547 = vld [vmem:[%s529 + $0x80] sm:$0xff]
                  %548 = vst [vmem:[%s530 + $0x40] sm:$0xff] %v547
                  %v549 = vld [vmem:[%s529 + $0x88] sm:$0xff]
                  %550 = vst [vmem:[%s530 + $0x48] sm:$0xff] %v549
                  %v551 = vld [vmem:[%s529 + $0x90] sm:$0xff]
                  %552 = vst [vmem:[%s530 + $0x50] sm:$0xff] %v551
                  %v553 = vld [vmem:[%s529 + $0x98] sm:$0xff]
                  %554 = vst [vmem:[%s530 + $0x58] sm:$0xff] %v553
                  %v555 = vld [vmem:[%s529 + $0xc0] sm:$0xff]
                  %556 = vst [vmem:[%s530 + $0x60] sm:$0xff] %v555
                  %v557 = vld [vmem:[%s529 + $0xc8] sm:$0xff]
                  %558 = vst [vmem:[%s530 + $0x68] sm:$0xff] %v557
                  %v559 = vld [vmem:[%s529 + $0xd0] sm:$0xff]
                  %560 = vst [vmem:[%s530 + $0x70] sm:$0xff] %v559
                  %v561 = vld [vmem:[%s529 + $0xd8] sm:$0xff]
                  %562 = vst [vmem:[%s530 + $0x78] sm:$0xff] %v561
                  %v563 = vld [vmem:[%s529 + $0x100] sm:$0xff]
                  %564 = vst [vmem:[%s530 + $0x80] sm:$0xff] %v563
                  %v565 = vld [vmem:[%s529 + $0x108] sm:$0xff]
                  %566 = vst [vmem:[%s530 + $0x88] sm:$0xff] %v565
                  %v567 = vld [vmem:[%s529 + $0x110] sm:$0xff]
                  %568 = vst [vmem:[%s530 + $0x90] sm:$0xff] %v567
                  %v569 = vld [vmem:[%s529 + $0x118] sm:$0xff]
                  %570 = vst [vmem:[%s530 + $0x98] sm:$0xff] %v569
                  %v571 = vld [vmem:[%s529 + $0x140] sm:$0xff]
                  %572 = vst [vmem:[%s530 + $0xa0] sm:$0xff] %v571
                  %v573 = vld [vmem:[%s529 + $0x148] sm:$0xff]
                  %574 = vst [vmem:[%s530 + $0xa8] sm:$0xff] %v573
                  %v575 = vld [vmem:[%s529 + $0x150] sm:$0xff]
                  %576 = vst [vmem:[%s530 + $0xb0] sm:$0xff] %v575
                  %v577 = vld [vmem:[%s529 + $0x158] sm:$0xff]
                  %578 = vst [vmem:[%s530 + $0xb8] sm:$0xff] %v577
                  %v579 = vld [vmem:[%s529 + $0x180] sm:$0xff]
                  %580 = vst [vmem:[%s530 + $0xc0] sm:$0xff] %v579
                  %v581 = vld [vmem:[%s529 + $0x188] sm:$0xff]
                  %582 = vst [vmem:[%s530 + $0xc8] sm:$0xff] %v581
                  %v583 = vld [vmem:[%s529 + $0x190] sm:$0xff]
                  %584 = vst [vmem:[%s530 + $0xd0] sm:$0xff] %v583
                  %v585 = vld [vmem:[%s529 + $0x198] sm:$0xff]
                  %586 = vst [vmem:[%s530 + $0xd8] sm:$0xff] %v585
                  %v587 = vld [vmem:[%s529 + $0x1c0] sm:$0xff]
                  %588 = vst [vmem:[%s530 + $0xe0] sm:$0xff] %v587
                  %v589 = vld [vmem:[%s529 + $0x1c8] sm:$0xff]
                  %590 = vst [vmem:[%s530 + $0xe8] sm:$0xff] %v589
                  %v591 = vld [vmem:[%s529 + $0x1d0] sm:$0xff]
                  %592 = vst [vmem:[%s530 + $0xf0] sm:$0xff] %v591
                  %v593 = vld [vmem:[%s529 + $0x1d8] sm:$0xff]
                  %594 = vst [vmem:[%s530 + $0xf8] sm:$0xff] %v593
                $region104: #{tpu_custom_call.1} parent=98 // loop_footer
                  %s528 = sadd.s32 1, %s524
                $region105: #{tpu_custom_call.1} parent=98 // loop_footer_branch
                  %523 = sbr.rel target = $region101
                $region106: #{tpu_custom_call.1} parent=98 // loop_exit
                  _
              $region99: #{tpu_custom_call.1} parent=83 // pred_fallthru
                _
              // Predicated region
              $region107: #{tpu_custom_call.1} parent=83 // pred_check
                _
              $region108: #{tpu_custom_call.1} parent=83 // pred_check_branch
                %596 = sbr.rel target = $region110
              $region109: #{tpu_custom_call.1} parent=83 // pred_region
                _
              $region110: #{tpu_custom_call.1} parent=83 // pred_fallthru
                _
            $region84: #{tpu_custom_call.1} parent=79 // pred_fallthru
              _
            // Predicated region
            $region85: #{tpu_custom_call.1} parent=79 // pred_check
              _
            $region86: #{tpu_custom_call.1} parent=79 // pred_check_branch
              %446 = sbr.rel target = $region88
            $region87: #{tpu_custom_call.1} parent=79 // pred_region
              %s448 = ssub.s32 256, 1
              loop: start=0, step=1, limit=1
              $region89: #{tpu_custom_call.1} parent=87 // loop_pre_header
                _
              $region90: #{tpu_custom_call.1} parent=87 // loop_header
                %s450 = sphi 0, %s454
                %p451 = scmp.ge.s32.totalorder %s450, 1
                %s455 = sphi %s440, %s440
                %s456 = sphi %s437, %s437
              $region91: #{tpu_custom_call.1} parent=87 // loop_header_branch
                %453 = sbr.rel (%p451) target = $region95
              $region92: #{tpu_custom_call.1} parent=87 // loop_body
                %v457 = vld [vmem:[%s455] sm:%s448]
                %458 = vst [vmem:[%s456] sm:%s448] %v457
                %v459 = vld [vmem:[%s455 + $0x8] sm:%s448]
                %460 = vst [vmem:[%s456 + $0x8] sm:%s448] %v459
                %v461 = vld [vmem:[%s455 + $0x10] sm:%s448]
                %462 = vst [vmem:[%s456 + $0x10] sm:%s448] %v461
                %v463 = vld [vmem:[%s455 + $0x18] sm:%s448]
                %464 = vst [vmem:[%s456 + $0x18] sm:%s448] %v463
                %v465 = vld [vmem:[%s455 + $0x40] sm:%s448]
                %466 = vst [vmem:[%s456 + $0x20] sm:%s448] %v465
                %v467 = vld [vmem:[%s455 + $0x48] sm:%s448]
                %468 = vst [vmem:[%s456 + $0x28] sm:%s448] %v467
                %v469 = vld [vmem:[%s455 + $0x50] sm:%s448]
                %470 = vst [vmem:[%s456 + $0x30] sm:%s448] %v469
                %v471 = vld [vmem:[%s455 + $0x58] sm:%s448]
                %472 = vst [vmem:[%s456 + $0x38] sm:%s448] %v471
                %v473 = vld [vmem:[%s455 + $0x80] sm:%s448]
                %474 = vst [vmem:[%s456 + $0x40] sm:%s448] %v473
                %v475 = vld [vmem:[%s455 + $0x88] sm:%s448]
                %476 = vst [vmem:[%s456 + $0x48] sm:%s448] %v475
                %v477 = vld [vmem:[%s455 + $0x90] sm:%s448]
                %478 = vst [vmem:[%s456 + $0x50] sm:%s448] %v477
                %v479 = vld [vmem:[%s455 + $0x98] sm:%s448]
                %480 = vst [vmem:[%s456 + $0x58] sm:%s448] %v479
                %v481 = vld [vmem:[%s455 + $0xc0] sm:%s448]
                %482 = vst [vmem:[%s456 + $0x60] sm:%s448] %v481
                %v483 = vld [vmem:[%s455 + $0xc8] sm:%s448]
                %484 = vst [vmem:[%s456 + $0x68] sm:%s448] %v483
                %v485 = vld [vmem:[%s455 + $0xd0] sm:%s448]
                %486 = vst [vmem:[%s456 + $0x70] sm:%s448] %v485
                %v487 = vld [vmem:[%s455 + $0xd8] sm:%s448]
                %488 = vst [vmem:[%s456 + $0x78] sm:%s448] %v487
                %v489 = vld [vmem:[%s455 + $0x100] sm:%s448]
                %490 = vst [vmem:[%s456 + $0x80] sm:%s448] %v489
                %v491 = vld [vmem:[%s455 + $0x108] sm:%s448]
                %492 = vst [vmem:[%s456 + $0x88] sm:%s448] %v491
                %v493 = vld [vmem:[%s455 + $0x110] sm:%s448]
                %494 = vst [vmem:[%s456 + $0x90] sm:%s448] %v493
                %v495 = vld [vmem:[%s455 + $0x118] sm:%s448]
                %496 = vst [vmem:[%s456 + $0x98] sm:%s448] %v495
                %v497 = vld [vmem:[%s455 + $0x140] sm:%s448]
                %498 = vst [vmem:[%s456 + $0xa0] sm:%s448] %v497
                %v499 = vld [vmem:[%s455 + $0x148] sm:%s448]
                %500 = vst [vmem:[%s456 + $0xa8] sm:%s448] %v499
                %v501 = vld [vmem:[%s455 + $0x150] sm:%s448]
                %502 = vst [vmem:[%s456 + $0xb0] sm:%s448] %v501
                %v503 = vld [vmem:[%s455 + $0x158] sm:%s448]
                %504 = vst [vmem:[%s456 + $0xb8] sm:%s448] %v503
                %v505 = vld [vmem:[%s455 + $0x180] sm:%s448]
                %506 = vst [vmem:[%s456 + $0xc0] sm:%s448] %v505
                %v507 = vld [vmem:[%s455 + $0x188] sm:%s448]
                %508 = vst [vmem:[%s456 + $0xc8] sm:%s448] %v507
                %v509 = vld [vmem:[%s455 + $0x190] sm:%s448]
                %510 = vst [vmem:[%s456 + $0xd0] sm:%s448] %v509
                %v511 = vld [vmem:[%s455 + $0x198] sm:%s448]
                %512 = vst [vmem:[%s456 + $0xd8] sm:%s448] %v511
                %v513 = vld [vmem:[%s455 + $0x1c0] sm:%s448]
                %514 = vst [vmem:[%s456 + $0xe0] sm:%s448] %v513
                %v515 = vld [vmem:[%s455 + $0x1c8] sm:%s448]
                %516 = vst [vmem:[%s456 + $0xe8] sm:%s448] %v515
                %v517 = vld [vmem:[%s455 + $0x1d0] sm:%s448]
                %518 = vst [vmem:[%s456 + $0xf0] sm:%s448] %v517
                %v519 = vld [vmem:[%s455 + $0x1d8] sm:%s448]
                %520 = vst [vmem:[%s456 + $0xf8] sm:%s448] %v519
              $region93: #{tpu_custom_call.1} parent=87 // loop_footer
                %s454 = sadd.s32 1, %s450
              $region94: #{tpu_custom_call.1} parent=87 // loop_footer_branch
                %449 = sbr.rel target = $region90
              $region95: #{tpu_custom_call.1} parent=87 // loop_exit
                _
            $region88: #{tpu_custom_call.1} parent=79 // pred_fallthru
              _
          $region80: #{tpu_custom_call.1} parent=75 // pred_fallthru
            _
          %597 = vnop
        $region76: #{tpu_custom_call.1} parent=71 // pred_fallthru
          _
      $region72: #{tpu_custom_call.1} parent=5 // pred_fallthru
        _
      %p598 = scmp.le.s32.totalorder 1, %s24
      %p599 = scmp.lt.s32.totalorder %s24, 3
      %p600 = pnand %p598, %p599
      %p601 = pneg %p600
      // Predicated region
      $region111: #{tpu_custom_call.1} parent=5 // pred_check
        _
      $region112: #{tpu_custom_call.1} parent=5 // pred_check_branch
        %603 = sbr.rel (%p600) target = $region114
      $region113: #{tpu_custom_call.1} parent=5 // pred_region
        %s604 = ssub.s32 %s24, 1
        %s605 = sand.u32 %s37, 1
        %s606 = sand.u32 %s37, 1
        %s607 = smul.addr %s606, 256
        %s608 = scalar_lea.vmem [#allocation2], %s607
        // Predicated region
        $region115: #{tpu_custom_call.1} parent=113 // pred_check
          %p609 = pneg %p50
        $region116: #{tpu_custom_call.1} parent=113 // pred_check_branch
          %611 = sbr.rel (%p609) target = $region118
        $region117: #{tpu_custom_call.1} parent=113 // pred_region
          _
        $region118: #{tpu_custom_call.1} parent=113 // pred_fallthru
          _
        %s612 = sand.u32 %s37, 1
        %s613 = sand.u32 %s37, 1
        %s614 = smul.addr %s613, 256
        %s615 = scalar_lea.vmem [#allocation2], %s614
        %p616 = pneg %p50
        %p617 = pneg %p47
        %p618 = pneg %p71
        %p619 = pneg %p68
        %p620 = pneg %p92
        %p621 = pneg %p89
        %p622 = pneg %p113
        %p623 = pneg %p110
        %p624 = pneg %p134
        %p625 = pneg %p131
        %p626 = pneg %p155
        %p627 = pneg %p152
        %p628 = pneg %p176
        %p629 = pneg %p173
        %p630 = pneg %p197
        %p631 = pneg %p194
        %p632 = pneg %p218
        %p633 = pneg %p215
        %p634 = pneg %p239
        %p635 = pneg %p236
        %p636 = pneg %p260
        %p637 = pneg %p257
        %p638 = pneg %p281
        %p639 = pneg %p278
        %p640 = pneg %p302
        %p641 = pneg %p299
        %p642 = pneg %p323
        %p643 = pneg %p320
        %p644 = pneg %p344
        %p645 = pneg %p341
        %p646 = pneg %p370
        %p647 = pneg %p367
        %s648 = sand.u32 %s357, 1
        %s649 = scalar_lea.sflag [#allocation4], %s648
        %s650 = sand.u32 %s357, 1
        %s651 = smul.addr %s650, 256
        %s652 = scalar_lea.vmem [#allocation3], %s651
        %s653 = smul.u32 4, %s29
        %s654 = smul.u32 4, %s29
        %v656 = vld [vmem:[%s608] sm:$0xff]
        %v657 = vld [vmem:[%s608 + $0x8] sm:$0xff]
        %v658 = vld [vmem:[%s608 + $0x10] sm:$0xff]
        %v659 = vld [vmem:[%s608 + $0x18] sm:$0xff]
        %v660 = vld [vmem:[%s608 + $0x20] sm:$0xff]
        %v661 = vld [vmem:[%s608 + $0x28] sm:$0xff]
        %v662 = vld [vmem:[%s608 + $0x30] sm:$0xff]
        %v663 = vld [vmem:[%s608 + $0x38] sm:$0xff]
        %v664 = vld [vmem:[%s608 + $0x40] sm:$0xff]
        %v665 = vld [vmem:[%s608 + $0x48] sm:$0xff]
        %v666 = vld [vmem:[%s608 + $0x50] sm:$0xff]
        %v667 = vld [vmem:[%s608 + $0x58] sm:$0xff]
        %v668 = vld [vmem:[%s608 + $0x60] sm:$0xff]
        %v669 = vld [vmem:[%s608 + $0x68] sm:$0xff]
        %v670 = vld [vmem:[%s608 + $0x70] sm:$0xff]
        %v671 = vld [vmem:[%s608 + $0x78] sm:$0xff]
        %v672 = vld [vmem:[%s608 + $0x80] sm:$0xff]
        %v673 = vld [vmem:[%s608 + $0x88] sm:$0xff]
        %v674 = vld [vmem:[%s608 + $0x90] sm:$0xff]
        %v675 = vld [vmem:[%s608 + $0x98] sm:$0xff]
        %v676 = vld [vmem:[%s608 + $0xa0] sm:$0xff]
        %v677 = vld [vmem:[%s608 + $0xa8] sm:$0xff]
        %v678 = vld [vmem:[%s608 + $0xb0] sm:$0xff]
        %v679 = vld [vmem:[%s608 + $0xb8] sm:$0xff]
        %v680 = vld [vmem:[%s608 + $0xc0] sm:$0xff]
        %v681 = vld [vmem:[%s608 + $0xc8] sm:$0xff]
        %v682 = vld [vmem:[%s608 + $0xd0] sm:$0xff]
        %v683 = vld [vmem:[%s608 + $0xd8] sm:$0xff]
        %v684 = vld [vmem:[%s608 + $0xe0] sm:$0xff]
        %v685 = vld [vmem:[%s608 + $0xe8] sm:$0xff]
        %v686 = vld [vmem:[%s608 + $0xf0] sm:$0xff]
        %v687 = vld [vmem:[%s608 + $0xf8] sm:$0xff]
        %v688 = vpack.c.bf16 %v657, %v656
        %v689 = vpack.c.bf16 %v659, %v658
        %v690 = vpack.c.bf16 %v661, %v660
        %v691 = vpack.c.bf16 %v663, %v662
        %v692 = vpack.c.bf16 %v665, %v664
        %v693 = vpack.c.bf16 %v667, %v666
        %v694 = vpack.c.bf16 %v669, %v668
        %v695 = vpack.c.bf16 %v671, %v670
        %v696 = vpack.c.bf16 %v673, %v672
        %v697 = vpack.c.bf16 %v675, %v674
        %v698 = vpack.c.bf16 %v677, %v676
        %v699 = vpack.c.bf16 %v679, %v678
        %v700 = vpack.c.bf16 %v681, %v680
        %v701 = vpack.c.bf16 %v683, %v682
        %v702 = vpack.c.bf16 %v685, %v684
        %v703 = vpack.c.bf16 %v687, %v686
        %v704 = vld [vmem:[%s1] sm:$0xff]
        %v705 = vld [vmem:[%s1 + $0x8] sm:$0xf]
        %v706 = vld [vmem:[%s1 + $0xc] sm:$0xff]
        %v707 = vld [vmem:[%s1 + $0x14] sm:$0xf]
        %v708 = vld [vmem:[%s1 + $0x18] sm:$0xff]
        %v709 = vld [vmem:[%s1 + $0x20] sm:$0xf]
        %v710 = vld [vmem:[%s1 + $0x24] sm:$0xff]
        %v711 = vld [vmem:[%s1 + $0x2c] sm:$0xf]
        %v712 = vld [vmem:[%s2] sm:$0x7]
        %v714 = vlaneseq
        %v715 = vshrl.u32 %v714, 7
        %v716 = vsub.s32 0, %v715
        %v717 = vrot.slane %v712, %v716
        %v718 = vlaneseq
        %v719 = vshrl.u32 %v718, 7
        %v720 = vsub.s32 1, %v719
        %v721 = vrot.slane %v712, %v720
        %v722 = vlaneseq
        %v723 = vshrl.u32 %v722, 7
        %v724 = vsub.s32 2, %v723
        %v725 = vrot.slane %v712, %v724
        %v737 = vunpack.c.l.b16 %v704
        %v738 = vunpack.c.h.b16 %v704
        %v739 = vunpack.c.l.b16 %v705
        %v740 = vunpack.c.l.b16 %v706
        %v741 = vunpack.c.h.b16 %v706
        %v742 = vunpack.c.l.b16 %v707
        %v743 = vunpack.c.l.b16 %v708
        %v744 = vunpack.c.h.b16 %v708
        %v745 = vunpack.c.l.b16 %v709
        %v746 = vunpack.c.l.b16 %v710
        %v747 = vunpack.c.h.b16 %v710
        %v748 = vunpack.c.l.b16 %v711
        %v749 = vpack.c.b16 %v740, %v737
        %v750 = vpack.c.b16 %v741, %v738
        %v751 = vpack.c.b16 %v742, %v739
        %v752 = vpack.c.b16 %v746, %v743
        %v753 = vpack.c.b16 %v747, %v744
        %v754 = vpack.c.b16 %v748, %v745
        %vm761 = vcmask 261120
        %v763 = vsel %vm761, %v688, 0
        %v766 = vsel %vm761, %v689, 0
        %v769 = vsel %vm761, %v690, 0
        %v772 = vsel %vm761, %v691, 0
        %v775 = vsel %vm761, %v692, 0
        %v778 = vsel %vm761, %v693, 0
        %v781 = vsel %vm761, %v694, 0
        %v784 = vsel %vm761, %v695, 0
        %v787 = vsel %vm761, %v696, 0
        %v790 = vsel %vm761, %v697, 0
        %v793 = vsel %vm761, %v698, 0
        %v796 = vsel %vm761, %v699, 0
        %v799 = vsel %vm761, %v700, 0
        %v802 = vsel %vm761, %v701, 0
        %v805 = vsel %vm761, %v702, 0
        %v808 = vsel %vm761, %v703, 0
        %810 = vmatprep.subr.bf16.mxu0 0
        %811 = vmatpush1.bf16.msra.mxu0 0
        %812 = vmatprep.subr.bf16.mxu0 0
        %813 = vmatpush1.bf16.msra.mxu0 0
        %814 = vmatprep.subr.bf16.mxu0 0
        %815 = vmatpush1.bf16.msra.mxu0 0
        %816 = vmatprep.subr.bf16.mxu0 0
        %817 = vmatpush1.bf16.msra.mxu0 0
        %818 = vmatprep.subr.bf16.mxu0 0
        %819 = vmatpush1.bf16.msra.mxu0 0
        %820 = vmatprep.subr.bf16.mxu0 0
        %821 = vmatpush1.bf16.msra.mxu0 0
        %822 = vmatprep.subr.bf16.mxu0 %v753
        %823 = vmatpush1.bf16.msra.mxu0 %v752
        %824 = vmatprep.subr.bf16.mxu0 %v750
        %825 = vmatpush1.bf16.msra.mxu0 %v749
        %826 = vmatprep.subr.bf16.mxu0 0
        %827 = vmatpush2.bf16.msra.mxu0 0
        %828 = vmatprep.subr.bf16.mxu0 0
        %829 = vmatpush2.bf16.msra.mxu0 0
        %830 = vmatprep.subr.bf16.mxu0 0
        %831 = vmatpush2.bf16.msra.mxu0 0
        %832 = vmatprep.subr.bf16.mxu0 0
        %833 = vmatpush2.bf16.msra.mxu0 0
        %834 = vmatprep.subr.bf16.mxu0 0
        %835 = vmatpush2.bf16.msra.mxu0 0
        %836 = vmatprep.subr.bf16.mxu0 0
        %837 = vmatpush2.bf16.msra.mxu0 0
        %838 = vmatprep.subr.bf16.mxu0 0
        %839 = vmatpush2.bf16.msra.mxu0 0
        %840 = vmatprep.subr.bf16.mxu0 0
        %841 = vmatpush2.bf16.msra.mxu0 0
        %842 = vmatprep.mubr.bf16.mxu0 0
        %843 = vmatmul.mubr.bf16.gmra.mxu0 %v763
        %v844 = vpop.f32.mrf.mxu0
        %v845 = vadd.f32 %v717, %v844
        %v846 = vpop.f32.mrf.mxu0
        %v847 = vadd.f32 %v721, %v846
        %v848 = vpop.f32.mrf.mxu0
        %v849 = vadd.f32 %v717, %v848
        %v850 = vpop.f32.mrf.mxu0
        %v851 = vadd.f32 %v721, %v850
        %852 = vmatprep.mubr.bf16.mxu0 0
        %853 = vmatmul.mubr.bf16.gmra.mxu0 %v766
        %v854 = vpop.f32.mrf.mxu0
        %v855 = vadd.f32 %v717, %v854
        %v856 = vpop.f32.mrf.mxu0
        %v857 = vadd.f32 %v721, %v856
        %v858 = vpop.f32.mrf.mxu0
        %v859 = vadd.f32 %v717, %v858
        %v860 = vpop.f32.mrf.mxu0
        %v861 = vadd.f32 %v721, %v860
        %862 = vmatprep.mubr.bf16.mxu0 0
        %863 = vmatmul.mubr.bf16.gmra.mxu0 %v769
        %v864 = vpop.f32.mrf.mxu0
        %v865 = vadd.f32 %v717, %v864
        %v866 = vpop.f32.mrf.mxu0
        %v867 = vadd.f32 %v721, %v866
        %v868 = vpop.f32.mrf.mxu0
        %v869 = vadd.f32 %v717, %v868
        %v870 = vpop.f32.mrf.mxu0
        %v871 = vadd.f32 %v721, %v870
        %872 = vmatprep.mubr.bf16.mxu0 0
        %873 = vmatmul.mubr.bf16.gmra.mxu0 %v772
        %v874 = vpop.f32.mrf.mxu0
        %v875 = vadd.f32 %v717, %v874
        %v876 = vpop.f32.mrf.mxu0
        %v877 = vadd.f32 %v721, %v876
        %v878 = vpop.f32.mrf.mxu0
        %v879 = vadd.f32 %v717, %v878
        %v880 = vpop.f32.mrf.mxu0
        %v881 = vadd.f32 %v721, %v880
        %882 = vmatprep.mubr.bf16.mxu0 0
        %883 = vmatmul.mubr.bf16.gmra.mxu0 %v775
        %v884 = vpop.f32.mrf.mxu0
        %v885 = vadd.f32 %v717, %v884
        %v886 = vpop.f32.mrf.mxu0
        %v887 = vadd.f32 %v721, %v886
        %v888 = vpop.f32.mrf.mxu0
        %v889 = vadd.f32 %v717, %v888
        %v890 = vpop.f32.mrf.mxu0
        %v891 = vadd.f32 %v721, %v890
        %892 = vmatprep.mubr.bf16.mxu0 0
        %893 = vmatmul.mubr.bf16.gmra.mxu0 %v778
        %v894 = vpop.f32.mrf.mxu0
        %v895 = vadd.f32 %v717, %v894
        %v896 = vpop.f32.mrf.mxu0
        %v897 = vadd.f32 %v721, %v896
        %v898 = vpop.f32.mrf.mxu0
        %v899 = vadd.f32 %v717, %v898
        %v900 = vpop.f32.mrf.mxu0
        %v901 = vadd.f32 %v721, %v900
        %902 = vmatprep.mubr.bf16.mxu0 0
        %903 = vmatmul.mubr.bf16.gmra.mxu0 %v781
        %v904 = vpop.f32.mrf.mxu0
        %v905 = vadd.f32 %v717, %v904
        %v906 = vpop.f32.mrf.mxu0
        %v907 = vadd.f32 %v721, %v906
        %v908 = vpop.f32.mrf.mxu0
        %v909 = vadd.f32 %v717, %v908
        %v910 = vpop.f32.mrf.mxu0
        %v911 = vadd.f32 %v721, %v910
        %912 = vmatprep.mubr.bf16.mxu0 0
        %913 = vmatmul.mubr.bf16.gmra.mxu0 %v784
        %v914 = vpop.f32.mrf.mxu0
        %v915 = vadd.f32 %v717, %v914
        %v916 = vpop.f32.mrf.mxu0
        %v917 = vadd.f32 %v721, %v916
        %v918 = vpop.f32.mrf.mxu0
        %v919 = vadd.f32 %v717, %v918
        %v920 = vpop.f32.mrf.mxu0
        %v921 = vadd.f32 %v721, %v920
        %922 = vmatprep.mubr.bf16.mxu0 0
        %923 = vmatmul.mubr.bf16.gmra.mxu0 %v787
        %v924 = vpop.f32.mrf.mxu0
        %v925 = vadd.f32 %v717, %v924
        %v926 = vpop.f32.mrf.mxu0
        %v927 = vadd.f32 %v721, %v926
        %v928 = vpop.f32.mrf.mxu0
        %v929 = vadd.f32 %v717, %v928
        %v930 = vpop.f32.mrf.mxu0
        %v931 = vadd.f32 %v721, %v930
        %932 = vmatprep.mubr.bf16.mxu0 0
        %933 = vmatmul.mubr.bf16.gmra.mxu0 %v790
        %v934 = vpop.f32.mrf.mxu0
        %v935 = vadd.f32 %v717, %v934
        %v936 = vpop.f32.mrf.mxu0
        %v937 = vadd.f32 %v721, %v936
        %v938 = vpop.f32.mrf.mxu0
        %v939 = vadd.f32 %v717, %v938
        %v940 = vpop.f32.mrf.mxu0
        %v941 = vadd.f32 %v721, %v940
        %942 = vmatprep.mubr.bf16.mxu0 0
        %943 = vmatmul.mubr.bf16.gmra.mxu0 %v793
        %v944 = vpop.f32.mrf.mxu0
        %v945 = vadd.f32 %v717, %v944
        %v946 = vpop.f32.mrf.mxu0
        %v947 = vadd.f32 %v721, %v946
        %v948 = vpop.f32.mrf.mxu0
        %v949 = vadd.f32 %v717, %v948
        %v950 = vpop.f32.mrf.mxu0
        %v951 = vadd.f32 %v721, %v950
        %952 = vmatprep.mubr.bf16.mxu0 0
        %953 = vmatmul.mubr.bf16.gmra.mxu0 %v796
        %v954 = vpop.f32.mrf.mxu0
        %v955 = vadd.f32 %v717, %v954
        %v956 = vpop.f32.mrf.mxu0
        %v957 = vadd.f32 %v721, %v956
        %v958 = vpop.f32.mrf.mxu0
        %v959 = vadd.f32 %v717, %v958
        %v960 = vpop.f32.mrf.mxu0
        %v961 = vadd.f32 %v721, %v960
        %962 = vmatprep.mubr.bf16.mxu0 0
        %963 = vmatmul.mubr.bf16.gmra.mxu0 %v799
        %v964 = vpop.f32.mrf.mxu0
        %v965 = vadd.f32 %v717, %v964
        %v966 = vpop.f32.mrf.mxu0
        %v967 = vadd.f32 %v721, %v966
        %v968 = vpop.f32.mrf.mxu0
        %v969 = vadd.f32 %v717, %v968
        %v970 = vpop.f32.mrf.mxu0
        %v971 = vadd.f32 %v721, %v970
        %972 = vmatprep.mubr.bf16.mxu0 0
        %973 = vmatmul.mubr.bf16.gmra.mxu0 %v802
        %v974 = vpop.f32.mrf.mxu0
        %v975 = vadd.f32 %v717, %v974
        %v976 = vpop.f32.mrf.mxu0
        %v977 = vadd.f32 %v721, %v976
        %v978 = vpop.f32.mrf.mxu0
        %v979 = vadd.f32 %v717, %v978
        %v980 = vpop.f32.mrf.mxu0
        %v981 = vadd.f32 %v721, %v980
        %982 = vmatprep.mubr.bf16.mxu0 0
        %983 = vmatmul.mubr.bf16.gmra.mxu0 %v805
        %v984 = vpop.f32.mrf.mxu0
        %v985 = vadd.f32 %v717, %v984
        %v986 = vpop.f32.mrf.mxu0
        %v987 = vadd.f32 %v721, %v986
        %v988 = vpop.f32.mrf.mxu0
        %v989 = vadd.f32 %v717, %v988
        %v990 = vpop.f32.mrf.mxu0
        %v991 = vadd.f32 %v721, %v990
        %992 = vmatprep.mubr.bf16.mxu0 0
        %993 = vmatmul.mubr.bf16.gmra.mxu0 %v808
        %v994 = vpop.f32.mrf.mxu0
        %v995 = vadd.f32 %v717, %v994
        %v996 = vpop.f32.mrf.mxu0
        %v997 = vadd.f32 %v721, %v996
        %v998 = vpop.f32.mrf.mxu0
        %v999 = vadd.f32 %v717, %v998
        %v1000 = vpop.f32.mrf.mxu0
        %v1001 = vadd.f32 %v721, %v1000
        %1002 = vdwg.mxu0
        %1003 = vmatprep.subr.bf16.mxu0 0
        %1004 = vmatpush1.bf16.msra.mxu0 0
        %1005 = vmatprep.subr.bf16.mxu0 0
        %1006 = vmatpush1.bf16.msra.mxu0 0
        %1007 = vmatprep.subr.bf16.mxu0 0
        %1008 = vmatpush1.bf16.msra.mxu0 0
        %1009 = vmatprep.subr.bf16.mxu0 0
        %1010 = vmatpush1.bf16.msra.mxu0 0
        %1011 = vmatprep.subr.bf16.mxu0 0
        %1012 = vmatpush1.bf16.msra.mxu0 0
        %1013 = vmatprep.subr.bf16.mxu0 0
        %1014 = vmatpush1.bf16.msra.mxu0 0
        %1015 = vmatprep.subr.bf16.mxu0 0
        %1016 = vmatpush1.bf16.msra.mxu0 %v754
        %1017 = vmatprep.subr.bf16.mxu0 0
        %1018 = vmatpush1.bf16.msra.mxu0 %v751
        %1019 = vmatprep.subr.bf16.mxu0 0
        %1020 = vmatpush2.bf16.msra.mxu0 0
        %1021 = vmatprep.subr.bf16.mxu0 0
        %1022 = vmatpush2.bf16.msra.mxu0 0
        %1023 = vmatprep.subr.bf16.mxu0 0
        %1024 = vmatpush2.bf16.msra.mxu0 0
        %1025 = vmatprep.subr.bf16.mxu0 0
        %1026 = vmatpush2.bf16.msra.mxu0 0
        %1027 = vmatprep.subr.bf16.mxu0 0
        %1028 = vmatpush2.bf16.msra.mxu0 0
        %1029 = vmatprep.subr.bf16.mxu0 0
        %1030 = vmatpush2.bf16.msra.mxu0 0
        %1031 = vmatprep.subr.bf16.mxu0 0
        %1032 = vmatpush2.bf16.msra.mxu0 0
        %1033 = vmatprep.subr.bf16.mxu0 0
        %1034 = vmatpush2.bf16.msra.mxu0 0
        %1035 = vmatprep.mubr.bf16.mxu0 0
        %1036 = vmatmul.mubr.bf16.gmra.mxu0 %v763
        %v1037 = vpop.f32.mrf.mxu0
        %v1038 = vadd.f32 %v725, %v1037
        %v1039 = vpop.f32.mrf.mxu0
        %v1040 = vpop.f32.mrf.mxu0
        %v1041 = vadd.f32 %v725, %v1040
        %v1042 = vpop.f32.mrf.mxu0
        %1043 = vmatprep.mubr.bf16.mxu0 0
        %1044 = vmatmul.mubr.bf16.gmra.mxu0 %v766
        %v1045 = vpop.f32.mrf.mxu0
        %v1046 = vadd.f32 %v725, %v1045
        %v1047 = vpop.f32.mrf.mxu0
        %v1048 = vpop.f32.mrf.mxu0
        %v1049 = vadd.f32 %v725, %v1048
        %v1050 = vpop.f32.mrf.mxu0
        %1051 = vmatprep.mubr.bf16.mxu0 0
        %1052 = vmatmul.mubr.bf16.gmra.mxu0 %v769
        %v1053 = vpop.f32.mrf.mxu0
        %v1054 = vadd.f32 %v725, %v1053
        %v1055 = vpop.f32.mrf.mxu0
        %v1056 = vpop.f32.mrf.mxu0
        %v1057 = vadd.f32 %v725, %v1056
        %v1058 = vpop.f32.mrf.mxu0
        %1059 = vmatprep.mubr.bf16.mxu0 0
        %1060 = vmatmul.mubr.bf16.gmra.mxu0 %v772
        %v1061 = vpop.f32.mrf.mxu0
        %v1062 = vadd.f32 %v725, %v1061
        %v1063 = vpop.f32.mrf.mxu0
        %v1064 = vpop.f32.mrf.mxu0
        %v1065 = vadd.f32 %v725, %v1064
        %v1066 = vpop.f32.mrf.mxu0
        %1067 = vmatprep.mubr.bf16.mxu0 0
        %1068 = vmatmul.mubr.bf16.gmra.mxu0 %v775
        %v1069 = vpop.f32.mrf.mxu0
        %v1070 = vadd.f32 %v725, %v1069
        %v1071 = vpop.f32.mrf.mxu0
        %v1072 = vpop.f32.mrf.mxu0
        %v1073 = vadd.f32 %v725, %v1072
        %v1074 = vpop.f32.mrf.mxu0
        %1075 = vmatprep.mubr.bf16.mxu0 0
        %1076 = vmatmul.mubr.bf16.gmra.mxu0 %v778
        %v1077 = vpop.f32.mrf.mxu0
        %v1078 = vadd.f32 %v725, %v1077
        %v1079 = vpop.f32.mrf.mxu0
        %v1080 = vpop.f32.mrf.mxu0
        %v1081 = vadd.f32 %v725, %v1080
        %v1082 = vpop.f32.mrf.mxu0
        %1083 = vmatprep.mubr.bf16.mxu0 0
        %1084 = vmatmul.mubr.bf16.gmra.mxu0 %v781
        %v1085 = vpop.f32.mrf.mxu0
        %v1086 = vadd.f32 %v725, %v1085
        %v1087 = vpop.f32.mrf.mxu0
        %v1088 = vpop.f32.mrf.mxu0
        %v1089 = vadd.f32 %v725, %v1088
        %v1090 = vpop.f32.mrf.mxu0
        %1091 = vmatprep.mubr.bf16.mxu0 0
        %1092 = vmatmul.mubr.bf16.gmra.mxu0 %v784
        %v1093 = vpop.f32.mrf.mxu0
        %v1094 = vadd.f32 %v725, %v1093
        %v1095 = vpop.f32.mrf.mxu0
        %v1096 = vpop.f32.mrf.mxu0
        %v1097 = vadd.f32 %v725, %v1096
        %v1098 = vpop.f32.mrf.mxu0
        %1099 = vmatprep.mubr.bf16.mxu0 0
        %1100 = vmatmul.mubr.bf16.gmra.mxu0 %v787
        %v1101 = vpop.f32.mrf.mxu0
        %v1102 = vadd.f32 %v725, %v1101
        %v1103 = vpop.f32.mrf.mxu0
        %v1104 = vpop.f32.mrf.mxu0
        %v1105 = vadd.f32 %v725, %v1104
        %v1106 = vpop.f32.mrf.mxu0
        %1107 = vmatprep.mubr.bf16.mxu0 0
        %1108 = vmatmul.mubr.bf16.gmra.mxu0 %v790
        %v1109 = vpop.f32.mrf.mxu0
        %v1110 = vadd.f32 %v725, %v1109
        %v1111 = vpop.f32.mrf.mxu0
        %v1112 = vpop.f32.mrf.mxu0
        %v1113 = vadd.f32 %v725, %v1112
        %v1114 = vpop.f32.mrf.mxu0
        %1115 = vmatprep.mubr.bf16.mxu0 0
        %1116 = vmatmul.mubr.bf16.gmra.mxu0 %v793
        %v1117 = vpop.f32.mrf.mxu0
        %v1118 = vadd.f32 %v725, %v1117
        %v1119 = vpop.f32.mrf.mxu0
        %v1120 = vpop.f32.mrf.mxu0
        %v1121 = vadd.f32 %v725, %v1120
        %v1122 = vpop.f32.mrf.mxu0
        %1123 = vmatprep.mubr.bf16.mxu0 0
        %1124 = vmatmul.mubr.bf16.gmra.mxu0 %v796
        %v1125 = vpop.f32.mrf.mxu0
        %v1126 = vadd.f32 %v725, %v1125
        %v1127 = vpop.f32.mrf.mxu0
        %v1128 = vpop.f32.mrf.mxu0
        %v1129 = vadd.f32 %v725, %v1128
        %v1130 = vpop.f32.mrf.mxu0
        %1131 = vmatprep.mubr.bf16.mxu0 0
        %1132 = vmatmul.mubr.bf16.gmra.mxu0 %v799
        %v1133 = vpop.f32.mrf.mxu0
        %v1134 = vadd.f32 %v725, %v1133
        %v1135 = vpop.f32.mrf.mxu0
        %v1136 = vpop.f32.mrf.mxu0
        %v1137 = vadd.f32 %v725, %v1136
        %v1138 = vpop.f32.mrf.mxu0
        %1139 = vmatprep.mubr.bf16.mxu0 0
        %1140 = vmatmul.mubr.bf16.gmra.mxu0 %v802
        %v1141 = vpop.f32.mrf.mxu0
        %v1142 = vadd.f32 %v725, %v1141
        %v1143 = vpop.f32.mrf.mxu0
        %v1144 = vpop.f32.mrf.mxu0
        %v1145 = vadd.f32 %v725, %v1144
        %v1146 = vpop.f32.mrf.mxu0
        %1147 = vmatprep.mubr.bf16.mxu0 0
        %1148 = vmatmul.mubr.bf16.gmra.mxu0 %v805
        %v1149 = vpop.f32.mrf.mxu0
        %v1150 = vadd.f32 %v725, %v1149
        %v1151 = vpop.f32.mrf.mxu0
        %v1152 = vpop.f32.mrf.mxu0
        %v1153 = vadd.f32 %v725, %v1152
        %v1154 = vpop.f32.mrf.mxu0
        %1155 = vmatprep.mubr.bf16.mxu0 0
        %1156 = vmatmul.mubr.bf16.gmra.mxu0 %v808
        %v1157 = vpop.f32.mrf.mxu0
        %v1158 = vadd.f32 %v725, %v1157
        %v1159 = vpop.f32.mrf.mxu0
        %v1160 = vpop.f32.mrf.mxu0
        %v1161 = vadd.f32 %v725, %v1160
        %v1162 = vpop.f32.mrf.mxu0
        %1163 = vdwg.mxu0
        %v1164 = vpack.c.bf16 %v849, %v845
        %v1165 = vpack.c.bf16 %v859, %v855
        %v1166 = vpack.c.bf16 %v869, %v865
        %v1167 = vpack.c.bf16 %v879, %v875
        %v1168 = vpack.c.bf16 %v889, %v885
        %v1169 = vpack.c.bf16 %v899, %v895
        %v1170 = vpack.c.bf16 %v909, %v905
        %v1171 = vpack.c.bf16 %v919, %v915
        %v1172 = vpack.c.bf16 %v929, %v925
        %v1173 = vpack.c.bf16 %v939, %v935
        %v1174 = vpack.c.bf16 %v949, %v945
        %v1175 = vpack.c.bf16 %v959, %v955
        %v1176 = vpack.c.bf16 %v969, %v965
        %v1177 = vpack.c.bf16 %v979, %v975
        %v1178 = vpack.c.bf16 %v989, %v985
        %v1179 = vpack.c.bf16 %v999, %v995
        %v1180 = vpack.c.bf16 %v851, %v847
        %v1181 = vpack.c.bf16 %v861, %v857
        %v1182 = vpack.c.bf16 %v871, %v867
        %v1183 = vpack.c.bf16 %v881, %v877
        %v1184 = vpack.c.bf16 %v891, %v887
        %v1185 = vpack.c.bf16 %v901, %v897
        %v1186 = vpack.c.bf16 %v911, %v907
        %v1187 = vpack.c.bf16 %v921, %v917
        %v1188 = vpack.c.bf16 %v931, %v927
        %v1189 = vpack.c.bf16 %v941, %v937
        %v1190 = vpack.c.bf16 %v951, %v947
        %v1191 = vpack.c.bf16 %v961, %v957
        %v1192 = vpack.c.bf16 %v971, %v967
        %v1193 = vpack.c.bf16 %v981, %v977
        %v1194 = vpack.c.bf16 %v991, %v987
        %v1195 = vpack.c.bf16 %v1001, %v997
        %v1196 = vpack.c.bf16 %v1041, %v1038
        %v1197 = vpack.c.bf16 %v1049, %v1046
        %v1198 = vpack.c.bf16 %v1057, %v1054
        %v1199 = vpack.c.bf16 %v1065, %v1062
        %v1200 = vpack.c.bf16 %v1073, %v1070
        %v1201 = vpack.c.bf16 %v1081, %v1078
        %v1202 = vpack.c.bf16 %v1089, %v1086
        %v1203 = vpack.c.bf16 %v1097, %v1094
        %v1204 = vpack.c.bf16 %v1105, %v1102
        %v1205 = vpack.c.bf16 %v1113, %v1110
        %v1206 = vpack.c.bf16 %v1121, %v1118
        %v1207 = vpack.c.bf16 %v1129, %v1126
        %v1208 = vpack.c.bf16 %v1137, %v1134
        %v1209 = vpack.c.bf16 %v1145, %v1142
        %v1210 = vpack.c.bf16 %v1153, %v1150
        %v1211 = vpack.c.bf16 %v1161, %v1158
        %v1212 = vlaneseq
        %v1213 = vshrl.u32 %v1212, 7
        %v1214 = vadd.s32 %v1213, 8
        %v1215 = vadd.s32 %v1213, 16
        %v1216 = vadd.s32 %v1213, 24
        %v1217 = vadd.s32 %v1213, 32
        %v1218 = vadd.s32 %v1213, 40
        %v1219 = vadd.s32 %v1213, 48
        %v1220 = vadd.s32 %v1213, 56
        %v1221 = vadd.s32 %v1213, 64
        %v1222 = vadd.s32 %v1213, 72
        %v1223 = vadd.s32 %v1213, 80
        %v1224 = vadd.s32 %v1213, 88
        %v1225 = vadd.s32 %v1213, 96
        %v1226 = vadd.s32 %v1213, 104
        %v1227 = vadd.s32 %v1213, 112
        %v1228 = vadd.s32 %v1213, 120
        %v1229 = vadd.s32 %v1213, 128
        %v1230 = vadd.s32 %v1213, 136
        %v1231 = vadd.s32 %v1213, 144
        %v1232 = vadd.s32 %v1213, 152
        %v1233 = vadd.s32 %v1213, 160
        %v1234 = vadd.s32 %v1213, 168
        %v1235 = vadd.s32 %v1213, 176
        %v1236 = vadd.s32 %v1213, 184
        %v1237 = vadd.s32 %v1213, 192
        %v1238 = vadd.s32 %v1213, 200
        %v1239 = vadd.s32 %v1213, 208
        %v1240 = vadd.s32 %v1213, 216
        %v1241 = vadd.s32 %v1213, 224
        %v1242 = vadd.s32 %v1213, 232
        %v1243 = vadd.s32 %v1213, 240
        %v1244 = vadd.s32 %v1213, 248
        %vm1245 = vcmp.lt.s32.totalorder %v1213, 0
        %v1246 = vsub.s32 0, %v1213
        %v1247 = vsel %vm1245, %v1246, %v1213
        %v1248 = vshrl.u32 %v1247, 5
        %v1249 = vand.u32 %v1247, 31
        %v1250 = vsub.s32 0, %v1249
        %v1251 = vsel %vm1245, %v1250, %v1249
        %vm1252 = vcmp.lt.s32.totalorder %v1214, 0
        %v1253 = vsub.s32 0, %v1214
        %v1254 = vsel %vm1252, %v1253, %v1214
        %v1255 = vshrl.u32 %v1254, 5
        %v1256 = vand.u32 %v1254, 31
        %v1257 = vsub.s32 0, %v1256
        %v1258 = vsel %vm1252, %v1257, %v1256
        %vm1259 = vcmp.lt.s32.totalorder %v1215, 0
        %v1260 = vsub.s32 0, %v1215
        %v1261 = vsel %vm1259, %v1260, %v1215
        %v1262 = vshrl.u32 %v1261, 5
        %v1263 = vand.u32 %v1261, 31
        %v1264 = vsub.s32 0, %v1263
        %v1265 = vsel %vm1259, %v1264, %v1263
        %vm1266 = vcmp.lt.s32.totalorder %v1216, 0
        %v1267 = vsub.s32 0, %v1216
        %v1268 = vsel %vm1266, %v1267, %v1216
        %v1269 = vshrl.u32 %v1268, 5
        %v1270 = vand.u32 %v1268, 31
        %v1271 = vsub.s32 0, %v1270
        %v1272 = vsel %vm1266, %v1271, %v1270
        %vm1273 = vcmp.lt.s32.totalorder %v1217, 0
        %v1274 = vsub.s32 0, %v1217
        %v1275 = vsel %vm1273, %v1274, %v1217
        %v1276 = vshrl.u32 %v1275, 5
        %v1277 = vand.u32 %v1275, 31
        %v1278 = vsub.s32 0, %v1277
        %v1279 = vsel %vm1273, %v1278, %v1277
        %vm1280 = vcmp.lt.s32.totalorder %v1218, 0
        %v1281 = vsub.s32 0, %v1218
        %v1282 = vsel %vm1280, %v1281, %v1218
        %v1283 = vshrl.u32 %v1282, 5
        %v1284 = vand.u32 %v1282, 31
        %v1285 = vsub.s32 0, %v1284
        %v1286 = vsel %vm1280, %v1285, %v1284
        %vm1287 = vcmp.lt.s32.totalorder %v1219, 0
        %v1288 = vsub.s32 0, %v1219
        %v1289 = vsel %vm1287, %v1288, %v1219
        %v1290 = vshrl.u32 %v1289, 5
        %v1291 = vand.u32 %v1289, 31
        %v1292 = vsub.s32 0, %v1291
        %v1293 = vsel %vm1287, %v1292, %v1291
        %vm1294 = vcmp.lt.s32.totalorder %v1220, 0
        %v1295 = vsub.s32 0, %v1220
        %v1296 = vsel %vm1294, %v1295, %v1220
        %v1297 = vshrl.u32 %v1296, 5
        %v1298 = vand.u32 %v1296, 31
        %v1299 = vsub.s32 0, %v1298
        %v1300 = vsel %vm1294, %v1299, %v1298
        %vm1301 = vcmp.lt.s32.totalorder %v1221, 0
        %v1302 = vsub.s32 0, %v1221
        %v1303 = vsel %vm1301, %v1302, %v1221
        %v1304 = vshrl.u32 %v1303, 5
        %v1305 = vand.u32 %v1303, 31
        %v1306 = vsub.s32 0, %v1305
        %v1307 = vsel %vm1301, %v1306, %v1305
        %vm1308 = vcmp.lt.s32.totalorder %v1222, 0
        %v1309 = vsub.s32 0, %v1222
        %v1310 = vsel %vm1308, %v1309, %v1222
        %v1311 = vshrl.u32 %v1310, 5
        %v1312 = vand.u32 %v1310, 31
        %v1313 = vsub.s32 0, %v1312
        %v1314 = vsel %vm1308, %v1313, %v1312
        %vm1315 = vcmp.lt.s32.totalorder %v1223, 0
        %v1316 = vsub.s32 0, %v1223
        %v1317 = vsel %vm1315, %v1316, %v1223
        %v1318 = vshrl.u32 %v1317, 5
        %v1319 = vand.u32 %v1317, 31
        %v1320 = vsub.s32 0, %v1319
        %v1321 = vsel %vm1315, %v1320, %v1319
        %vm1322 = vcmp.lt.s32.totalorder %v1224, 0
        %v1323 = vsub.s32 0, %v1224
        %v1324 = vsel %vm1322, %v1323, %v1224
        %v1325 = vshrl.u32 %v1324, 5
        %v1326 = vand.u32 %v1324, 31
        %v1327 = vsub.s32 0, %v1326
        %v1328 = vsel %vm1322, %v1327, %v1326
        %vm1329 = vcmp.lt.s32.totalorder %v1225, 0
        %v1330 = vsub.s32 0, %v1225
        %v1331 = vsel %vm1329, %v1330, %v1225
        %v1332 = vshrl.u32 %v1331, 5
        %v1333 = vand.u32 %v1331, 31
        %v1334 = vsub.s32 0, %v1333
        %v1335 = vsel %vm1329, %v1334, %v1333
        %vm1336 = vcmp.lt.s32.totalorder %v1226, 0
        %v1337 = vsub.s32 0, %v1226
        %v1338 = vsel %vm1336, %v1337, %v1226
        %v1339 = vshrl.u32 %v1338, 5
        %v1340 = vand.u32 %v1338, 31
        %v1341 = vsub.s32 0, %v1340
        %v1342 = vsel %vm1336, %v1341, %v1340
        %vm1343 = vcmp.lt.s32.totalorder %v1227, 0
        %v1344 = vsub.s32 0, %v1227
        %v1345 = vsel %vm1343, %v1344, %v1227
        %v1346 = vshrl.u32 %v1345, 5
        %v1347 = vand.u32 %v1345, 31
        %v1348 = vsub.s32 0, %v1347
        %v1349 = vsel %vm1343, %v1348, %v1347
        %vm1350 = vcmp.lt.s32.totalorder %v1228, 0
        %v1351 = vsub.s32 0, %v1228
        %v1352 = vsel %vm1350, %v1351, %v1228
        %v1353 = vshrl.u32 %v1352, 5
        %v1354 = vand.u32 %v1352, 31
        %v1355 = vsub.s32 0, %v1354
        %v1356 = vsel %vm1350, %v1355, %v1354
        %vm1357 = vcmp.lt.s32.totalorder %v1229, 0
        %v1358 = vsub.s32 0, %v1229
        %v1359 = vsel %vm1357, %v1358, %v1229
        %v1360 = vshrl.u32 %v1359, 5
        %v1361 = vand.u32 %v1359, 31
        %v1362 = vsub.s32 0, %v1361
        %v1363 = vsel %vm1357, %v1362, %v1361
        %vm1364 = vcmp.lt.s32.totalorder %v1230, 0
        %v1365 = vsub.s32 0, %v1230
        %v1366 = vsel %vm1364, %v1365, %v1230
        %v1367 = vshrl.u32 %v1366, 5
        %v1368 = vand.u32 %v1366, 31
        %v1369 = vsub.s32 0, %v1368
        %v1370 = vsel %vm1364, %v1369, %v1368
        %vm1371 = vcmp.lt.s32.totalorder %v1231, 0
        %v1372 = vsub.s32 0, %v1231
        %v1373 = vsel %vm1371, %v1372, %v1231
        %v1374 = vshrl.u32 %v1373, 5
        %v1375 = vand.u32 %v1373, 31
        %v1376 = vsub.s32 0, %v1375
        %v1377 = vsel %vm1371, %v1376, %v1375
        %vm1378 = vcmp.lt.s32.totalorder %v1232, 0
        %v1379 = vsub.s32 0, %v1232
        %v1380 = vsel %vm1378, %v1379, %v1232
        %v1381 = vshrl.u32 %v1380, 5
        %v1382 = vand.u32 %v1380, 31
        %v1383 = vsub.s32 0, %v1382
        %v1384 = vsel %vm1378, %v1383, %v1382
        %vm1385 = vcmp.lt.s32.totalorder %v1233, 0
        %v1386 = vsub.s32 0, %v1233
        %v1387 = vsel %vm1385, %v1386, %v1233
        %v1388 = vshrl.u32 %v1387, 5
        %v1389 = vand.u32 %v1387, 31
        %v1390 = vsub.s32 0, %v1389
        %v1391 = vsel %vm1385, %v1390, %v1389
        %vm1392 = vcmp.lt.s32.totalorder %v1234, 0
        %v1393 = vsub.s32 0, %v1234
        %v1394 = vsel %vm1392, %v1393, %v1234
        %v1395 = vshrl.u32 %v1394, 5
        %v1396 = vand.u32 %v1394, 31
        %v1397 = vsub.s32 0, %v1396
        %v1398 = vsel %vm1392, %v1397, %v1396
        %vm1399 = vcmp.lt.s32.totalorder %v1235, 0
        %v1400 = vsub.s32 0, %v1235
        %v1401 = vsel %vm1399, %v1400, %v1235
        %v1402 = vshrl.u32 %v1401, 5
        %v1403 = vand.u32 %v1401, 31
        %v1404 = vsub.s32 0, %v1403
        %v1405 = vsel %vm1399, %v1404, %v1403
        %vm1406 = vcmp.lt.s32.totalorder %v1236, 0
        %v1407 = vsub.s32 0, %v1236
        %v1408 = vsel %vm1406, %v1407, %v1236
        %v1409 = vshrl.u32 %v1408, 5
        %v1410 = vand.u32 %v1408, 31
        %v1411 = vsub.s32 0, %v1410
        %v1412 = vsel %vm1406, %v1411, %v1410
        %vm1413 = vcmp.lt.s32.totalorder %v1237, 0
        %v1414 = vsub.s32 0, %v1237
        %v1415 = vsel %vm1413, %v1414, %v1237
        %v1416 = vshrl.u32 %v1415, 5
        %v1417 = vand.u32 %v1415, 31
        %v1418 = vsub.s32 0, %v1417
        %v1419 = vsel %vm1413, %v1418, %v1417
        %vm1420 = vcmp.lt.s32.totalorder %v1238, 0
        %v1421 = vsub.s32 0, %v1238
        %v1422 = vsel %vm1420, %v1421, %v1238
        %v1423 = vshrl.u32 %v1422, 5
        %v1424 = vand.u32 %v1422, 31
        %v1425 = vsub.s32 0, %v1424
        %v1426 = vsel %vm1420, %v1425, %v1424
        %vm1427 = vcmp.lt.s32.totalorder %v1239, 0
        %v1428 = vsub.s32 0, %v1239
        %v1429 = vsel %vm1427, %v1428, %v1239
        %v1430 = vshrl.u32 %v1429, 5
        %v1431 = vand.u32 %v1429, 31
        %v1432 = vsub.s32 0, %v1431
        %v1433 = vsel %vm1427, %v1432, %v1431
        %vm1434 = vcmp.lt.s32.totalorder %v1240, 0
        %v1435 = vsub.s32 0, %v1240
        %v1436 = vsel %vm1434, %v1435, %v1240
        %v1437 = vshrl.u32 %v1436, 5
        %v1438 = vand.u32 %v1436, 31
        %v1439 = vsub.s32 0, %v1438
        %v1440 = vsel %vm1434, %v1439, %v1438
        %vm1441 = vcmp.lt.s32.totalorder %v1241, 0
        %v1442 = vsub.s32 0, %v1241
        %v1443 = vsel %vm1441, %v1442, %v1241
        %v1444 = vshrl.u32 %v1443, 5
        %v1445 = vand.u32 %v1443, 31
        %v1446 = vsub.s32 0, %v1445
        %v1447 = vsel %vm1441, %v1446, %v1445
        %vm1448 = vcmp.lt.s32.totalorder %v1242, 0
        %v1449 = vsub.s32 0, %v1242
        %v1450 = vsel %vm1448, %v1449, %v1242
        %v1451 = vshrl.u32 %v1450, 5
        %v1452 = vand.u32 %v1450, 31
        %v1453 = vsub.s32 0, %v1452
        %v1454 = vsel %vm1448, %v1453, %v1452
        %vm1455 = vcmp.lt.s32.totalorder %v1243, 0
        %v1456 = vsub.s32 0, %v1243
        %v1457 = vsel %vm1455, %v1456, %v1243
        %v1458 = vshrl.u32 %v1457, 5
        %v1459 = vand.u32 %v1457, 31
        %v1460 = vsub.s32 0, %v1459
        %v1461 = vsel %vm1455, %v1460, %v1459
        %vm1462 = vcmp.lt.s32.totalorder %v1244, 0
        %v1463 = vsub.s32 0, %v1244
        %v1464 = vsel %vm1462, %v1463, %v1244
        %v1465 = vshrl.u32 %v1464, 5
        %v1466 = vand.u32 %v1464, 31
        %v1467 = vsub.s32 0, %v1466
        %v1468 = vsel %vm1462, %v1467, %v1466
        %vm1469 = vcmp.ne.s32.totalorder %v1251, 0
        %vm1470 = vcmp.ne.s32.totalorder %v1258, 0
        %vm1471 = vcmp.ne.s32.totalorder %v1265, 0
        %vm1472 = vcmp.ne.s32.totalorder %v1272, 0
        %vm1473 = vcmp.ne.s32.totalorder %v1279, 0
        %vm1474 = vcmp.ne.s32.totalorder %v1286, 0
        %vm1475 = vcmp.ne.s32.totalorder %v1293, 0
        %vm1476 = vcmp.ne.s32.totalorder %v1300, 0
        %vm1477 = vcmp.ne.s32.totalorder %v1307, 0
        %vm1478 = vcmp.ne.s32.totalorder %v1314, 0
        %vm1479 = vcmp.ne.s32.totalorder %v1321, 0
        %vm1480 = vcmp.ne.s32.totalorder %v1328, 0
        %vm1481 = vcmp.ne.s32.totalorder %v1335, 0
        %vm1482 = vcmp.ne.s32.totalorder %v1342, 0
        %vm1483 = vcmp.ne.s32.totalorder %v1349, 0
        %vm1484 = vcmp.ne.s32.totalorder %v1356, 0
        %vm1485 = vcmp.ne.s32.totalorder %v1363, 0
        %vm1486 = vcmp.ne.s32.totalorder %v1370, 0
        %vm1487 = vcmp.ne.s32.totalorder %v1377, 0
        %vm1488 = vcmp.ne.s32.totalorder %v1384, 0
        %vm1489 = vcmp.ne.s32.totalorder %v1391, 0
        %vm1490 = vcmp.ne.s32.totalorder %v1398, 0
        %vm1491 = vcmp.ne.s32.totalorder %v1405, 0
        %vm1492 = vcmp.ne.s32.totalorder %v1412, 0
        %vm1493 = vcmp.ne.s32.totalorder %v1419, 0
        %vm1494 = vcmp.ne.s32.totalorder %v1426, 0
        %vm1495 = vcmp.ne.s32.totalorder %v1433, 0
        %vm1496 = vcmp.ne.s32.totalorder %v1440, 0
        %vm1497 = vcmp.ne.s32.totalorder %v1447, 0
        %vm1498 = vcmp.ne.s32.totalorder %v1454, 0
        %vm1499 = vcmp.ne.s32.totalorder %v1461, 0
        %vm1500 = vcmp.ne.s32.totalorder %v1468, 0
        %vm1501 = vcmp.lt.s32.totalorder %v1251, 0
        %vm1502 = vcmp.lt.s32.totalorder %v1258, 0
        %vm1503 = vcmp.lt.s32.totalorder %v1265, 0
        %vm1504 = vcmp.lt.s32.totalorder %v1272, 0
        %vm1505 = vcmp.lt.s32.totalorder %v1279, 0
        %vm1506 = vcmp.lt.s32.totalorder %v1286, 0
        %vm1507 = vcmp.lt.s32.totalorder %v1293, 0
        %vm1508 = vcmp.lt.s32.totalorder %v1300, 0
        %vm1509 = vcmp.lt.s32.totalorder %v1307, 0
        %vm1510 = vcmp.lt.s32.totalorder %v1314, 0
        %vm1511 = vcmp.lt.s32.totalorder %v1321, 0
        %vm1512 = vcmp.lt.s32.totalorder %v1328, 0
        %vm1513 = vcmp.lt.s32.totalorder %v1335, 0
        %vm1514 = vcmp.lt.s32.totalorder %v1342, 0
        %vm1515 = vcmp.lt.s32.totalorder %v1349, 0
        %vm1516 = vcmp.lt.s32.totalorder %v1356, 0
        %vm1517 = vcmp.lt.s32.totalorder %v1363, 0
        %vm1518 = vcmp.lt.s32.totalorder %v1370, 0
        %vm1519 = vcmp.lt.s32.totalorder %v1377, 0
        %vm1520 = vcmp.lt.s32.totalorder %v1384, 0
        %vm1521 = vcmp.lt.s32.totalorder %v1391, 0
        %vm1522 = vcmp.lt.s32.totalorder %v1398, 0
        %vm1523 = vcmp.lt.s32.totalorder %v1405, 0
        %vm1524 = vcmp.lt.s32.totalorder %v1412, 0
        %vm1525 = vcmp.lt.s32.totalorder %v1419, 0
        %vm1526 = vcmp.lt.s32.totalorder %v1426, 0
        %vm1527 = vcmp.lt.s32.totalorder %v1433, 0
        %vm1528 = vcmp.lt.s32.totalorder %v1440, 0
        %vm1529 = vcmp.lt.s32.totalorder %v1447, 0
        %vm1530 = vcmp.lt.s32.totalorder %v1454, 0
        %vm1531 = vcmp.lt.s32.totalorder %v1461, 0
        %vm1532 = vcmp.lt.s32.totalorder %v1468, 0
        %vm1533 = vmand %vm1501, %vm1469
        %vm1534 = vmand %vm1502, %vm1470
        %vm1535 = vmand %vm1503, %vm1471
        %vm1536 = vmand %vm1504, %vm1472
        %vm1537 = vmand %vm1505, %vm1473
        %vm1538 = vmand %vm1506, %vm1474
        %vm1539 = vmand %vm1507, %vm1475
        %vm1540 = vmand %vm1508, %vm1476
        %vm1541 = vmand %vm1509, %vm1477
        %vm1542 = vmand %vm1510, %vm1478
        %vm1543 = vmand %vm1511, %vm1479
        %vm1544 = vmand %vm1512, %vm1480
        %vm1545 = vmand %vm1513, %vm1481
        %vm1546 = vmand %vm1514, %vm1482
        %vm1547 = vmand %vm1515, %vm1483
        %vm1548 = vmand %vm1516, %vm1484
        %vm1549 = vmand %vm1517, %vm1485
        %vm1550 = vmand %vm1518, %vm1486
        %vm1551 = vmand %vm1519, %vm1487
        %vm1552 = vmand %vm1520, %vm1488
        %vm1553 = vmand %vm1521, %vm1489
        %vm1554 = vmand %vm1522, %vm1490
        %vm1555 = vmand %vm1523, %vm1491
        %vm1556 = vmand %vm1524, %vm1492
        %vm1557 = vmand %vm1525, %vm1493
        %vm1558 = vmand %vm1526, %vm1494
        %vm1559 = vmand %vm1527, %vm1495
        %vm1560 = vmand %vm1528, %vm1496
        %vm1561 = vmand %vm1529, %vm1497
        %vm1562 = vmand %vm1530, %vm1498
        %vm1563 = vmand %vm1531, %vm1499
        %vm1564 = vmand %vm1532, %vm1500
        %v1565 = vadd.s32 %v1251, 32
        %v1566 = vadd.s32 %v1258, 32
        %v1567 = vadd.s32 %v1265, 32
        %v1568 = vadd.s32 %v1272, 32
        %v1569 = vadd.s32 %v1279, 32
        %v1570 = vadd.s32 %v1286, 32
        %v1571 = vadd.s32 %v1293, 32
        %v1572 = vadd.s32 %v1300, 32
        %v1573 = vadd.s32 %v1307, 32
        %v1574 = vadd.s32 %v1314, 32
        %v1575 = vadd.s32 %v1321, 32
        %v1576 = vadd.s32 %v1328, 32
        %v1577 = vadd.s32 %v1335, 32
        %v1578 = vadd.s32 %v1342, 32
        %v1579 = vadd.s32 %v1349, 32
        %v1580 = vadd.s32 %v1356, 32
        %v1581 = vadd.s32 %v1363, 32
        %v1582 = vadd.s32 %v1370, 32
        %v1583 = vadd.s32 %v1377, 32
        %v1584 = vadd.s32 %v1384, 32
        %v1585 = vadd.s32 %v1391, 32
        %v1586 = vadd.s32 %v1398, 32
        %v1587 = vadd.s32 %v1405, 32
        %v1588 = vadd.s32 %v1412, 32
        %v1589 = vadd.s32 %v1419, 32
        %v1590 = vadd.s32 %v1426, 32
        %v1591 = vadd.s32 %v1433, 32
        %v1592 = vadd.s32 %v1440, 32
        %v1593 = vadd.s32 %v1447, 32
        %v1594 = vadd.s32 %v1454, 32
        %v1595 = vadd.s32 %v1461, 32
        %v1596 = vadd.s32 %v1468, 32
        %v1597 = vsel %vm1533, %v1565, %v1251
        %v1598 = vsel %vm1534, %v1566, %v1258
        %v1599 = vsel %vm1535, %v1567, %v1265
        %v1600 = vsel %vm1536, %v1568, %v1272
        %v1601 = vsel %vm1537, %v1569, %v1279
        %v1602 = vsel %vm1538, %v1570, %v1286
        %v1603 = vsel %vm1539, %v1571, %v1293
        %v1604 = vsel %vm1540, %v1572, %v1300
        %v1605 = vsel %vm1541, %v1573, %v1307
        %v1606 = vsel %vm1542, %v1574, %v1314
        %v1607 = vsel %vm1543, %v1575, %v1321
        %v1608 = vsel %vm1544, %v1576, %v1328
        %v1609 = vsel %vm1545, %v1577, %v1335
        %v1610 = vsel %vm1546, %v1578, %v1342
        %v1611 = vsel %vm1547, %v1579, %v1349
        %v1612 = vsel %vm1548, %v1580, %v1356
        %v1613 = vsel %vm1549, %v1581, %v1363
        %v1614 = vsel %vm1550, %v1582, %v1370
        %v1615 = vsel %vm1551, %v1583, %v1377
        %v1616 = vsel %vm1552, %v1584, %v1384
        %v1617 = vsel %vm1553, %v1585, %v1391
        %v1618 = vsel %vm1554, %v1586, %v1398
        %v1619 = vsel %vm1555, %v1587, %v1405
        %v1620 = vsel %vm1556, %v1588, %v1412
        %v1621 = vsel %vm1557, %v1589, %v1419
        %v1622 = vsel %vm1558, %v1590, %v1426
        %v1623 = vsel %vm1559, %v1591, %v1433
        %v1624 = vsel %vm1560, %v1592, %v1440
        %v1625 = vsel %vm1561, %v1593, %v1447
        %v1626 = vsel %vm1562, %v1594, %v1454
        %v1627 = vsel %vm1563, %v1595, %v1461
        %v1628 = vsel %vm1564, %v1596, %v1468
        %v1629 = vlaneseq
        %v1630 = vand.u32 %v1629, 127
        %v1631 = vadd.s32 %v1630, 128
        %vm1632 = vcmp.lt.s32.totalorder %v1630, 0
        %v1633 = vsub.s32 0, %v1630
        %v1634 = vsel %vm1632, %v1633, %v1630
        %v1635 = vshrl.u32 %v1634, 5
        %v1636 = vand.u32 %v1634, 31
        %v1637 = vsub.s32 0, %v1636
        %v1638 = vsel %vm1632, %v1637, %v1636
        %vm1639 = vcmp.lt.s32.totalorder %v1631, 0
        %v1640 = vsub.s32 0, %v1631
        %v1641 = vsel %vm1639, %v1640, %v1631
        %v1642 = vshrl.u32 %v1641, 5
        %v1643 = vand.u32 %v1641, 31
        %v1644 = vsub.s32 0, %v1643
        %v1645 = vsel %vm1639, %v1644, %v1643
        %vm1646 = vcmp.ne.s32.totalorder %v1638, 0
        %vm1647 = vcmp.ne.s32.totalorder %v1645, 0
        %vm1648 = vcmp.lt.s32.totalorder %v1638, 0
        %vm1649 = vcmp.lt.s32.totalorder %v1645, 0
        %vm1650 = vmand %vm1648, %vm1646
        %vm1651 = vmand %vm1649, %vm1647
        %v1652 = vadd.s32 %v1638, 32
        %v1653 = vadd.s32 %v1645, 32
        %v1654 = vsel %vm1650, %v1652, %v1638
        %v1655 = vsel %vm1651, %v1653, %v1645
        %vm1656 = vcmp.eq.s32.totalorder %v1597, %v1654
        %vm1657 = vcmp.eq.s32.totalorder %v1597, %v1655
        %vm1658 = vcmp.eq.s32.totalorder %v1598, %v1654
        %vm1659 = vcmp.eq.s32.totalorder %v1598, %v1655
        %vm1660 = vcmp.eq.s32.totalorder %v1599, %v1654
        %vm1661 = vcmp.eq.s32.totalorder %v1599, %v1655
        %vm1662 = vcmp.eq.s32.totalorder %v1600, %v1654
        %vm1663 = vcmp.eq.s32.totalorder %v1600, %v1655
        %vm1664 = vcmp.eq.s32.totalorder %v1601, %v1654
        %vm1665 = vcmp.eq.s32.totalorder %v1601, %v1655
        %vm1666 = vcmp.eq.s32.totalorder %v1602, %v1654
        %vm1667 = vcmp.eq.s32.totalorder %v1602, %v1655
        %vm1668 = vcmp.eq.s32.totalorder %v1603, %v1654
        %vm1669 = vcmp.eq.s32.totalorder %v1603, %v1655
        %vm1670 = vcmp.eq.s32.totalorder %v1604, %v1654
        %vm1671 = vcmp.eq.s32.totalorder %v1604, %v1655
        %vm1672 = vcmp.eq.s32.totalorder %v1605, %v1654
        %vm1673 = vcmp.eq.s32.totalorder %v1605, %v1655
        %vm1674 = vcmp.eq.s32.totalorder %v1606, %v1654
        %vm1675 = vcmp.eq.s32.totalorder %v1606, %v1655
        %vm1676 = vcmp.eq.s32.totalorder %v1607, %v1654
        %vm1677 = vcmp.eq.s32.totalorder %v1607, %v1655
        %vm1678 = vcmp.eq.s32.totalorder %v1608, %v1654
        %vm1679 = vcmp.eq.s32.totalorder %v1608, %v1655
        %vm1680 = vcmp.eq.s32.totalorder %v1609, %v1654
        %vm1681 = vcmp.eq.s32.totalorder %v1609, %v1655
        %vm1682 = vcmp.eq.s32.totalorder %v1610, %v1654
        %vm1683 = vcmp.eq.s32.totalorder %v1610, %v1655
        %vm1684 = vcmp.eq.s32.totalorder %v1611, %v1654
        %vm1685 = vcmp.eq.s32.totalorder %v1611, %v1655
        %vm1686 = vcmp.eq.s32.totalorder %v1612, %v1654
        %vm1687 = vcmp.eq.s32.totalorder %v1612, %v1655
        %vm1688 = vcmp.eq.s32.totalorder %v1613, %v1654
        %vm1689 = vcmp.eq.s32.totalorder %v1613, %v1655
        %vm1690 = vcmp.eq.s32.totalorder %v1614, %v1654
        %vm1691 = vcmp.eq.s32.totalorder %v1614, %v1655
        %vm1692 = vcmp.eq.s32.totalorder %v1615, %v1654
        %vm1693 = vcmp.eq.s32.totalorder %v1615, %v1655
        %vm1694 = vcmp.eq.s32.totalorder %v1616, %v1654
        %vm1695 = vcmp.eq.s32.totalorder %v1616, %v1655
        %vm1696 = vcmp.eq.s32.totalorder %v1617, %v1654
        %vm1697 = vcmp.eq.s32.totalorder %v1617, %v1655
        %vm1698 = vcmp.eq.s32.totalorder %v1618, %v1654
        %vm1699 = vcmp.eq.s32.totalorder %v1618, %v1655
        %vm1700 = vcmp.eq.s32.totalorder %v1619, %v1654
        %vm1701 = vcmp.eq.s32.totalorder %v1619, %v1655
        %vm1702 = vcmp.eq.s32.totalorder %v1620, %v1654
        %vm1703 = vcmp.eq.s32.totalorder %v1620, %v1655
        %vm1704 = vcmp.eq.s32.totalorder %v1621, %v1654
        %vm1705 = vcmp.eq.s32.totalorder %v1621, %v1655
        %vm1706 = vcmp.eq.s32.totalorder %v1622, %v1654
        %vm1707 = vcmp.eq.s32.totalorder %v1622, %v1655
        %vm1708 = vcmp.eq.s32.totalorder %v1623, %v1654
        %vm1709 = vcmp.eq.s32.totalorder %v1623, %v1655
        %vm1710 = vcmp.eq.s32.totalorder %v1624, %v1654
        %vm1711 = vcmp.eq.s32.totalorder %v1624, %v1655
        %vm1712 = vcmp.eq.s32.totalorder %v1625, %v1654
        %vm1713 = vcmp.eq.s32.totalorder %v1625, %v1655
        %vm1714 = vcmp.eq.s32.totalorder %v1626, %v1654
        %vm1715 = vcmp.eq.s32.totalorder %v1626, %v1655
        %vm1716 = vcmp.eq.s32.totalorder %v1627, %v1654
        %vm1717 = vcmp.eq.s32.totalorder %v1627, %v1655
        %vm1718 = vcmp.eq.s32.totalorder %v1628, %v1654
        %vm1719 = vcmp.eq.s32.totalorder %v1628, %v1655
        %v1720 = vsel %vm1656, 0.0, -1e+30
        %v1721 = vsel %vm1657, 0.0, -1e+30
        %v1722 = vsel %vm1658, 0.0, -1e+30
        %v1723 = vsel %vm1659, 0.0, -1e+30
        %v1724 = vsel %vm1660, 0.0, -1e+30
        %v1725 = vsel %vm1661, 0.0, -1e+30
        %v1726 = vsel %vm1662, 0.0, -1e+30
        %v1727 = vsel %vm1663, 0.0, -1e+30
        %v1728 = vsel %vm1664, 0.0, -1e+30
        %v1729 = vsel %vm1665, 0.0, -1e+30
        %v1730 = vsel %vm1666, 0.0, -1e+30
        %v1731 = vsel %vm1667, 0.0, -1e+30
        %v1732 = vsel %vm1668, 0.0, -1e+30
        %v1733 = vsel %vm1669, 0.0, -1e+30
        %v1734 = vsel %vm1670, 0.0, -1e+30
        %v1735 = vsel %vm1671, 0.0, -1e+30
        %v1736 = vsel %vm1672, 0.0, -1e+30
        %v1737 = vsel %vm1673, 0.0, -1e+30
        %v1738 = vsel %vm1674, 0.0, -1e+30
        %v1739 = vsel %vm1675, 0.0, -1e+30
        %v1740 = vsel %vm1676, 0.0, -1e+30
        %v1741 = vsel %vm1677, 0.0, -1e+30
        %v1742 = vsel %vm1678, 0.0, -1e+30
        %v1743 = vsel %vm1679, 0.0, -1e+30
        %v1744 = vsel %vm1680, 0.0, -1e+30
        %v1745 = vsel %vm1681, 0.0, -1e+30
        %v1746 = vsel %vm1682, 0.0, -1e+30
        %v1747 = vsel %vm1683, 0.0, -1e+30
        %v1748 = vsel %vm1684, 0.0, -1e+30
        %v1749 = vsel %vm1685, 0.0, -1e+30
        %v1750 = vsel %vm1686, 0.0, -1e+30
        %v1751 = vsel %vm1687, 0.0, -1e+30
        %v1752 = vsel %vm1688, 0.0, -1e+30
        %v1753 = vsel %vm1689, 0.0, -1e+30
        %v1754 = vsel %vm1690, 0.0, -1e+30
        %v1755 = vsel %vm1691, 0.0, -1e+30
        %v1756 = vsel %vm1692, 0.0, -1e+30
        %v1757 = vsel %vm1693, 0.0, -1e+30
        %v1758 = vsel %vm1694, 0.0, -1e+30
        %v1759 = vsel %vm1695, 0.0, -1e+30
        %v1760 = vsel %vm1696, 0.0, -1e+30
        %v1761 = vsel %vm1697, 0.0, -1e+30
        %v1762 = vsel %vm1698, 0.0, -1e+30
        %v1763 = vsel %vm1699, 0.0, -1e+30
        %v1764 = vsel %vm1700, 0.0, -1e+30
        %v1765 = vsel %vm1701, 0.0, -1e+30
        %v1766 = vsel %vm1702, 0.0, -1e+30
        %v1767 = vsel %vm1703, 0.0, -1e+30
        %v1768 = vsel %vm1704, 0.0, -1e+30
        %v1769 = vsel %vm1705, 0.0, -1e+30
        %v1770 = vsel %vm1706, 0.0, -1e+30
        %v1771 = vsel %vm1707, 0.0, -1e+30
        %v1772 = vsel %vm1708, 0.0, -1e+30
        %v1773 = vsel %vm1709, 0.0, -1e+30
        %v1774 = vsel %vm1710, 0.0, -1e+30
        %v1775 = vsel %vm1711, 0.0, -1e+30
        %v1776 = vsel %vm1712, 0.0, -1e+30
        %v1777 = vsel %vm1713, 0.0, -1e+30
        %v1778 = vsel %vm1714, 0.0, -1e+30
        %v1779 = vsel %vm1715, 0.0, -1e+30
        %v1780 = vsel %vm1716, 0.0, -1e+30
        %v1781 = vsel %vm1717, 0.0, -1e+30
        %v1782 = vsel %vm1718, 0.0, -1e+30
        %v1783 = vsel %vm1719, 0.0, -1e+30
        %1784 = vmatprep.subr.bf16.mxu0 0
        %1785 = vmatpush1.bf16.xpose.msra.mxu0 %v1187
        %1786 = vmatprep.subr.bf16.mxu0 0
        %1787 = vmatpush1.bf16.xpose.msra.mxu0 %v1186
        %1788 = vmatprep.subr.bf16.mxu0 0
        %1789 = vmatpush1.bf16.xpose.msra.mxu0 %v1185
        %1790 = vmatprep.subr.bf16.mxu0 0
        %1791 = vmatpush1.bf16.xpose.msra.mxu0 %v1184
        %1792 = vmatprep.subr.bf16.mxu0 0
        %1793 = vmatpush1.bf16.xpose.msra.mxu0 %v1183
        %1794 = vmatprep.subr.bf16.mxu0 0
        %1795 = vmatpush1.bf16.xpose.msra.mxu0 %v1182
        %1796 = vmatprep.subr.bf16.mxu0 0
        %1797 = vmatpush1.bf16.xpose.msra.mxu0 %v1181
        %1798 = vmatprep.subr.bf16.mxu0 0
        %1799 = vmatpush1.bf16.xpose.msra.mxu0 %v1180
        %1800 = vmatprep.subr.bf16.mxu0 0
        %1801 = vmatpush2.bf16.xpose.msra.mxu0 %v1195
        %1802 = vmatprep.subr.bf16.mxu0 0
        %1803 = vmatpush2.bf16.xpose.msra.mxu0 %v1194
        %1804 = vmatprep.subr.bf16.mxu0 0
        %1805 = vmatpush2.bf16.xpose.msra.mxu0 %v1193
        %1806 = vmatprep.subr.bf16.mxu0 0
        %1807 = vmatpush2.bf16.xpose.msra.mxu0 %v1192
        %1808 = vmatprep.subr.bf16.mxu0 0
        %1809 = vmatpush2.bf16.xpose.msra.mxu0 %v1191
        %1810 = vmatprep.subr.bf16.mxu0 0
        %1811 = vmatpush2.bf16.xpose.msra.mxu0 %v1190
        %1812 = vmatprep.subr.bf16.mxu0 0
        %1813 = vmatpush2.bf16.xpose.msra.mxu0 %v1189
        %1814 = vmatprep.subr.bf16.mxu0 0
        %1815 = vmatpush2.bf16.xpose.msra.mxu0 %v1188
        %1816 = vmatprep.mubr.bf16.mxu0 0
        %1817 = vmatmul.mubr.bf16.gmra.mxu0 %v1164
        %v1818 = vpop.f32.mrf.mxu0
        %v1819 = vadd.f32 0.0, %v1818
        %v1820 = vpop.f32.mrf.mxu0
        %v1821 = vadd.f32 0.0, %v1820
        %v1822 = vpop.f32.mrf.mxu0
        %v1823 = vadd.f32 0.0, %v1822
        %v1824 = vpop.f32.mrf.mxu0
        %v1825 = vadd.f32 0.0, %v1824
        %1826 = vmatprep.mubr.bf16.mxu0 0
        %1827 = vmatmul.mubr.bf16.gmra.mxu0 %v1165
        %v1828 = vpop.f32.mrf.mxu0
        %v1829 = vadd.f32 0.0, %v1828
        %v1830 = vpop.f32.mrf.mxu0
        %v1831 = vadd.f32 0.0, %v1830
        %v1832 = vpop.f32.mrf.mxu0
        %v1833 = vadd.f32 0.0, %v1832
        %v1834 = vpop.f32.mrf.mxu0
        %v1835 = vadd.f32 0.0, %v1834
        %1836 = vmatprep.mubr.bf16.mxu0 0
        %1837 = vmatmul.mubr.bf16.gmra.mxu0 %v1166
        %v1838 = vpop.f32.mrf.mxu0
        %v1839 = vadd.f32 0.0, %v1838
        %v1840 = vpop.f32.mrf.mxu0
        %v1841 = vadd.f32 0.0, %v1840
        %v1842 = vpop.f32.mrf.mxu0
        %v1843 = vadd.f32 0.0, %v1842
        %v1844 = vpop.f32.mrf.mxu0
        %v1845 = vadd.f32 0.0, %v1844
        %1846 = vmatprep.mubr.bf16.mxu0 0
        %1847 = vmatmul.mubr.bf16.gmra.mxu0 %v1167
        %v1848 = vpop.f32.mrf.mxu0
        %v1849 = vadd.f32 0.0, %v1848
        %v1850 = vpop.f32.mrf.mxu0
        %v1851 = vadd.f32 0.0, %v1850
        %v1852 = vpop.f32.mrf.mxu0
        %v1853 = vadd.f32 0.0, %v1852
        %v1854 = vpop.f32.mrf.mxu0
        %v1855 = vadd.f32 0.0, %v1854
        %1856 = vmatprep.mubr.bf16.mxu0 0
        %1857 = vmatmul.mubr.bf16.gmra.mxu0 %v1168
        %v1858 = vpop.f32.mrf.mxu0
        %v1859 = vadd.f32 0.0, %v1858
        %v1860 = vpop.f32.mrf.mxu0
        %v1861 = vadd.f32 0.0, %v1860
        %v1862 = vpop.f32.mrf.mxu0
        %v1863 = vadd.f32 0.0, %v1862
        %v1864 = vpop.f32.mrf.mxu0
        %v1865 = vadd.f32 0.0, %v1864
        %1866 = vmatprep.mubr.bf16.mxu0 0
        %1867 = vmatmul.mubr.bf16.gmra.mxu0 %v1169
        %v1868 = vpop.f32.mrf.mxu0
        %v1869 = vadd.f32 0.0, %v1868
        %v1870 = vpop.f32.mrf.mxu0
        %v1871 = vadd.f32 0.0, %v1870
        %v1872 = vpop.f32.mrf.mxu0
        %v1873 = vadd.f32 0.0, %v1872
        %v1874 = vpop.f32.mrf.mxu0
        %v1875 = vadd.f32 0.0, %v1874
        %1876 = vmatprep.mubr.bf16.mxu0 0
        %1877 = vmatmul.mubr.bf16.gmra.mxu0 %v1170
        %v1878 = vpop.f32.mrf.mxu0
        %v1879 = vadd.f32 0.0, %v1878
        %v1880 = vpop.f32.mrf.mxu0
        %v1881 = vadd.f32 0.0, %v1880
        %v1882 = vpop.f32.mrf.mxu0
        %v1883 = vadd.f32 0.0, %v1882
        %v1884 = vpop.f32.mrf.mxu0
        %v1885 = vadd.f32 0.0, %v1884
        %1886 = vmatprep.mubr.bf16.mxu0 0
        %1887 = vmatmul.mubr.bf16.gmra.mxu0 %v1171
        %v1888 = vpop.f32.mrf.mxu0
        %v1889 = vadd.f32 0.0, %v1888
        %v1890 = vpop.f32.mrf.mxu0
        %v1891 = vadd.f32 0.0, %v1890
        %v1892 = vpop.f32.mrf.mxu0
        %v1893 = vadd.f32 0.0, %v1892
        %v1894 = vpop.f32.mrf.mxu0
        %v1895 = vadd.f32 0.0, %v1894
        %1896 = vmatprep.mubr.bf16.mxu0 0
        %1897 = vmatmul.mubr.bf16.gmra.mxu0 %v1172
        %v1898 = vpop.f32.mrf.mxu0
        %v1899 = vadd.f32 0.0, %v1898
        %v1900 = vpop.f32.mrf.mxu0
        %v1901 = vadd.f32 0.0, %v1900
        %v1902 = vpop.f32.mrf.mxu0
        %v1903 = vadd.f32 0.0, %v1902
        %v1904 = vpop.f32.mrf.mxu0
        %v1905 = vadd.f32 0.0, %v1904
        %1906 = vmatprep.mubr.bf16.mxu0 0
        %1907 = vmatmul.mubr.bf16.gmra.mxu0 %v1173
        %v1908 = vpop.f32.mrf.mxu0
        %v1909 = vadd.f32 0.0, %v1908
        %v1910 = vpop.f32.mrf.mxu0
        %v1911 = vadd.f32 0.0, %v1910
        %v1912 = vpop.f32.mrf.mxu0
        %v1913 = vadd.f32 0.0, %v1912
        %v1914 = vpop.f32.mrf.mxu0
        %v1915 = vadd.f32 0.0, %v1914
        %1916 = vmatprep.mubr.bf16.mxu0 0
        %1917 = vmatmul.mubr.bf16.gmra.mxu0 %v1174
        %v1918 = vpop.f32.mrf.mxu0
        %v1919 = vadd.f32 0.0, %v1918
        %v1920 = vpop.f32.mrf.mxu0
        %v1921 = vadd.f32 0.0, %v1920
        %v1922 = vpop.f32.mrf.mxu0
        %v1923 = vadd.f32 0.0, %v1922
        %v1924 = vpop.f32.mrf.mxu0
        %v1925 = vadd.f32 0.0, %v1924
        %1926 = vmatprep.mubr.bf16.mxu0 0
        %1927 = vmatmul.mubr.bf16.gmra.mxu0 %v1175
        %v1928 = vpop.f32.mrf.mxu0
        %v1929 = vadd.f32 0.0, %v1928
        %v1930 = vpop.f32.mrf.mxu0
        %v1931 = vadd.f32 0.0, %v1930
        %v1932 = vpop.f32.mrf.mxu0
        %v1933 = vadd.f32 0.0, %v1932
        %v1934 = vpop.f32.mrf.mxu0
        %v1935 = vadd.f32 0.0, %v1934
        %1936 = vmatprep.mubr.bf16.mxu0 0
        %1937 = vmatmul.mubr.bf16.gmra.mxu0 %v1176
        %v1938 = vpop.f32.mrf.mxu0
        %v1939 = vadd.f32 0.0, %v1938
        %v1940 = vpop.f32.mrf.mxu0
        %v1941 = vadd.f32 0.0, %v1940
        %v1942 = vpop.f32.mrf.mxu0
        %v1943 = vadd.f32 0.0, %v1942
        %v1944 = vpop.f32.mrf.mxu0
        %v1945 = vadd.f32 0.0, %v1944
        %1946 = vmatprep.mubr.bf16.mxu0 0
        %1947 = vmatmul.mubr.bf16.gmra.mxu0 %v1177
        %v1948 = vpop.f32.mrf.mxu0
        %v1949 = vadd.f32 0.0, %v1948
        %v1950 = vpop.f32.mrf.mxu0
        %v1951 = vadd.f32 0.0, %v1950
        %v1952 = vpop.f32.mrf.mxu0
        %v1953 = vadd.f32 0.0, %v1952
        %v1954 = vpop.f32.mrf.mxu0
        %v1955 = vadd.f32 0.0, %v1954
        %1956 = vmatprep.mubr.bf16.mxu0 0
        %1957 = vmatmul.mubr.bf16.gmra.mxu0 %v1178
        %v1958 = vpop.f32.mrf.mxu0
        %v1959 = vadd.f32 0.0, %v1958
        %v1960 = vpop.f32.mrf.mxu0
        %v1961 = vadd.f32 0.0, %v1960
        %v1962 = vpop.f32.mrf.mxu0
        %v1963 = vadd.f32 0.0, %v1962
        %v1964 = vpop.f32.mrf.mxu0
        %v1965 = vadd.f32 0.0, %v1964
        %1966 = vmatprep.mubr.bf16.mxu0 0
        %1967 = vmatmul.mubr.bf16.gmra.mxu0 %v1179
        %v1968 = vpop.f32.mrf.mxu0
        %v1969 = vadd.f32 0.0, %v1968
        %v1970 = vpop.f32.mrf.mxu0
        %v1971 = vadd.f32 0.0, %v1970
        %v1972 = vpop.f32.mrf.mxu0
        %v1973 = vadd.f32 0.0, %v1972
        %v1974 = vpop.f32.mrf.mxu0
        %v1975 = vadd.f32 0.0, %v1974
        %1976 = vdwg.mxu0
        %v1977 = vmul.f32 %v1819, 0.17677669
        %v1978 = vmul.f32 %v1821, 0.17677669
        %v1979 = vmul.f32 %v1823, 0.17677669
        %v1980 = vmul.f32 %v1825, 0.17677669
        %v1981 = vmul.f32 %v1829, 0.17677669
        %v1982 = vmul.f32 %v1831, 0.17677669
        %v1983 = vmul.f32 %v1833, 0.17677669
        %v1984 = vmul.f32 %v1835, 0.17677669
        %v1985 = vmul.f32 %v1839, 0.17677669
        %v1986 = vmul.f32 %v1841, 0.17677669
        %v1987 = vmul.f32 %v1843, 0.17677669
        %v1988 = vmul.f32 %v1845, 0.17677669
        %v1989 = vmul.f32 %v1849, 0.17677669
        %v1990 = vmul.f32 %v1851, 0.17677669
        %v1991 = vmul.f32 %v1853, 0.17677669
        %v1992 = vmul.f32 %v1855, 0.17677669
        %v1993 = vmul.f32 %v1859, 0.17677669
        %v1994 = vmul.f32 %v1861, 0.17677669
        %v1995 = vmul.f32 %v1863, 0.17677669
        %v1996 = vmul.f32 %v1865, 0.17677669
        %v1997 = vmul.f32 %v1869, 0.17677669
        %v1998 = vmul.f32 %v1871, 0.17677669
        %v1999 = vmul.f32 %v1873, 0.17677669
        %v2000 = vmul.f32 %v1875, 0.17677669
        %v2001 = vmul.f32 %v1879, 0.17677669
        %v2002 = vmul.f32 %v1881, 0.17677669
        %v2003 = vmul.f32 %v1883, 0.17677669
        %v2004 = vmul.f32 %v1885, 0.17677669
        %v2005 = vmul.f32 %v1889, 0.17677669
        %v2006 = vmul.f32 %v1891, 0.17677669
        %v2007 = vmul.f32 %v1893, 0.17677669
        %v2008 = vmul.f32 %v1895, 0.17677669
        %v2009 = vmul.f32 %v1899, 0.17677669
        %v2010 = vmul.f32 %v1901, 0.17677669
        %v2011 = vmul.f32 %v1903, 0.17677669
        %v2012 = vmul.f32 %v1905, 0.17677669
        %v2013 = vmul.f32 %v1909, 0.17677669
        %v2014 = vmul.f32 %v1911, 0.17677669
        %v2015 = vmul.f32 %v1913, 0.17677669
        %v2016 = vmul.f32 %v1915, 0.17677669
        %v2017 = vmul.f32 %v1919, 0.17677669
        %v2018 = vmul.f32 %v1921, 0.17677669
        %v2019 = vmul.f32 %v1923, 0.17677669
        %v2020 = vmul.f32 %v1925, 0.17677669
        %v2021 = vmul.f32 %v1929, 0.17677669
        %v2022 = vmul.f32 %v1931, 0.17677669
        %v2023 = vmul.f32 %v1933, 0.17677669
        %v2024 = vmul.f32 %v1935, 0.17677669
        %v2025 = vmul.f32 %v1939, 0.17677669
        %v2026 = vmul.f32 %v1941, 0.17677669
        %v2027 = vmul.f32 %v1943, 0.17677669
        %v2028 = vmul.f32 %v1945, 0.17677669
        %v2029 = vmul.f32 %v1949, 0.17677669
        %v2030 = vmul.f32 %v1951, 0.17677669
        %v2031 = vmul.f32 %v1953, 0.17677669
        %v2032 = vmul.f32 %v1955, 0.17677669
        %v2033 = vmul.f32 %v1959, 0.17677669
        %v2034 = vmul.f32 %v1961, 0.17677669
        %v2035 = vmul.f32 %v1963, 0.17677669
        %v2036 = vmul.f32 %v1965, 0.17677669
        %v2037 = vmul.f32 %v1969, 0.17677669
        %v2038 = vmul.f32 %v1971, 0.17677669
        %v2039 = vmul.f32 %v1973, 0.17677669
        %v2040 = vmul.f32 %v1975, 0.17677669
        %v2041 = vadd.f32 %v1977, %v1720
        %v2042 = vadd.f32 %v1978, %v1721
        %v2043 = vadd.f32 %v1979, %v1722
        %v2044 = vadd.f32 %v1980, %v1723
        %v2045 = vadd.f32 %v1981, %v1724
        %v2046 = vadd.f32 %v1982, %v1725
        %v2047 = vadd.f32 %v1983, %v1726
        %v2048 = vadd.f32 %v1984, %v1727
        %v2049 = vadd.f32 %v1985, %v1728
        %v2050 = vadd.f32 %v1986, %v1729
        %v2051 = vadd.f32 %v1987, %v1730
        %v2052 = vadd.f32 %v1988, %v1731
        %v2053 = vadd.f32 %v1989, %v1732
        %v2054 = vadd.f32 %v1990, %v1733
        %v2055 = vadd.f32 %v1991, %v1734
        %v2056 = vadd.f32 %v1992, %v1735
        %v2057 = vadd.f32 %v1993, %v1736
        %v2058 = vadd.f32 %v1994, %v1737
        %v2059 = vadd.f32 %v1995, %v1738
        %v2060 = vadd.f32 %v1996, %v1739
        %v2061 = vadd.f32 %v1997, %v1740
        %v2062 = vadd.f32 %v1998, %v1741
        %v2063 = vadd.f32 %v1999, %v1742
        %v2064 = vadd.f32 %v2000, %v1743
        %v2065 = vadd.f32 %v2001, %v1744
        %v2066 = vadd.f32 %v2002, %v1745
        %v2067 = vadd.f32 %v2003, %v1746
        %v2068 = vadd.f32 %v2004, %v1747
        %v2069 = vadd.f32 %v2005, %v1748
        %v2070 = vadd.f32 %v2006, %v1749
        %v2071 = vadd.f32 %v2007, %v1750
        %v2072 = vadd.f32 %v2008, %v1751
        %v2073 = vadd.f32 %v2009, %v1752
        %v2074 = vadd.f32 %v2010, %v1753
        %v2075 = vadd.f32 %v2011, %v1754
        %v2076 = vadd.f32 %v2012, %v1755
        %v2077 = vadd.f32 %v2013, %v1756
        %v2078 = vadd.f32 %v2014, %v1757
        %v2079 = vadd.f32 %v2015, %v1758
        %v2080 = vadd.f32 %v2016, %v1759
        %v2081 = vadd.f32 %v2017, %v1760
        %v2082 = vadd.f32 %v2018, %v1761
        %v2083 = vadd.f32 %v2019, %v1762
        %v2084 = vadd.f32 %v2020, %v1763
        %v2085 = vadd.f32 %v2021, %v1764
        %v2086 = vadd.f32 %v2022, %v1765
        %v2087 = vadd.f32 %v2023, %v1766
        %v2088 = vadd.f32 %v2024, %v1767
        %v2089 = vadd.f32 %v2025, %v1768
        %v2090 = vadd.f32 %v2026, %v1769
        %v2091 = vadd.f32 %v2027, %v1770
        %v2092 = vadd.f32 %v2028, %v1771
        %v2093 = vadd.f32 %v2029, %v1772
        %v2094 = vadd.f32 %v2030, %v1773
        %v2095 = vadd.f32 %v2031, %v1774
        %v2096 = vadd.f32 %v2032, %v1775
        %v2097 = vadd.f32 %v2033, %v1776
        %v2098 = vadd.f32 %v2034, %v1777
        %v2099 = vadd.f32 %v2035, %v1778
        %v2100 = vadd.f32 %v2036, %v1779
        %v2101 = vadd.f32 %v2037, %v1780
        %v2102 = vadd.f32 %v2038, %v1781
        %v2103 = vadd.f32 %v2039, %v1782
        %v2104 = vadd.f32 %v2040, %v1783
        %v2105 = vmax.f32 %v2041, %v2042
        %2106 = vmax.xlane.f32.xlu0 %v2105
        %v2107 = vpop.xlane.xlu0 %2106
        %v2108 = vmax.f32 %v2043, %v2044
        %2109 = vmax.xlane.f32.xlu0 %v2108
        %v2110 = vpop.xlane.xlu0 %2109
        %v2111 = vmax.f32 %v2045, %v2046
        %2112 = vmax.xlane.f32.xlu0 %v2111
        %v2113 = vpop.xlane.xlu0 %2112
        %v2114 = vmax.f32 %v2047, %v2048
        %2115 = vmax.xlane.f32.xlu0 %v2114
        %v2116 = vpop.xlane.xlu0 %2115
        %v2117 = vmax.f32 %v2049, %v2050
        %2118 = vmax.xlane.f32.xlu0 %v2117
        %v2119 = vpop.xlane.xlu0 %2118
        %v2120 = vmax.f32 %v2051, %v2052
        %2121 = vmax.xlane.f32.xlu0 %v2120
        %v2122 = vpop.xlane.xlu0 %2121
        %v2123 = vmax.f32 %v2053, %v2054
        %2124 = vmax.xlane.f32.xlu0 %v2123
        %v2125 = vpop.xlane.xlu0 %2124
        %v2126 = vmax.f32 %v2055, %v2056
        %2127 = vmax.xlane.f32.xlu0 %v2126
        %v2128 = vpop.xlane.xlu0 %2127
        %v2129 = vmax.f32 %v2057, %v2058
        %2130 = vmax.xlane.f32.xlu0 %v2129
        %v2131 = vpop.xlane.xlu0 %2130
        %v2132 = vmax.f32 %v2059, %v2060
        %2133 = vmax.xlane.f32.xlu0 %v2132
        %v2134 = vpop.xlane.xlu0 %2133
        %v2135 = vmax.f32 %v2061, %v2062
        %2136 = vmax.xlane.f32.xlu0 %v2135
        %v2137 = vpop.xlane.xlu0 %2136
        %v2138 = vmax.f32 %v2063, %v2064
        %2139 = vmax.xlane.f32.xlu0 %v2138
        %v2140 = vpop.xlane.xlu0 %2139
        %v2141 = vmax.f32 %v2065, %v2066
        %2142 = vmax.xlane.f32.xlu0 %v2141
        %v2143 = vpop.xlane.xlu0 %2142
        %v2144 = vmax.f32 %v2067, %v2068
        %2145 = vmax.xlane.f32.xlu0 %v2144
        %v2146 = vpop.xlane.xlu0 %2145
        %v2147 = vmax.f32 %v2069, %v2070
        %2148 = vmax.xlane.f32.xlu0 %v2147
        %v2149 = vpop.xlane.xlu0 %2148
        %v2150 = vmax.f32 %v2071, %v2072
        %2151 = vmax.xlane.f32.xlu0 %v2150
        %v2152 = vpop.xlane.xlu0 %2151
        %v2153 = vmax.f32 %v2073, %v2074
        %2154 = vmax.xlane.f32.xlu0 %v2153
        %v2155 = vpop.xlane.xlu0 %2154
        %v2156 = vmax.f32 %v2075, %v2076
        %2157 = vmax.xlane.f32.xlu0 %v2156
        %v2158 = vpop.xlane.xlu0 %2157
        %v2159 = vmax.f32 %v2077, %v2078
        %2160 = vmax.xlane.f32.xlu0 %v2159
        %v2161 = vpop.xlane.xlu0 %2160
        %v2162 = vmax.f32 %v2079, %v2080
        %2163 = vmax.xlane.f32.xlu0 %v2162
        %v2164 = vpop.xlane.xlu0 %2163
        %v2165 = vmax.f32 %v2081, %v2082
        %2166 = vmax.xlane.f32.xlu0 %v2165
        %v2167 = vpop.xlane.xlu0 %2166
        %v2168 = vmax.f32 %v2083, %v2084
        %2169 = vmax.xlane.f32.xlu0 %v2168
        %v2170 = vpop.xlane.xlu0 %2169
        %v2171 = vmax.f32 %v2085, %v2086
        %2172 = vmax.xlane.f32.xlu0 %v2171
        %v2173 = vpop.xlane.xlu0 %2172
        %v2174 = vmax.f32 %v2087, %v2088
        %2175 = vmax.xlane.f32.xlu0 %v2174
        %v2176 = vpop.xlane.xlu0 %2175
        %v2177 = vmax.f32 %v2089, %v2090
        %2178 = vmax.xlane.f32.xlu0 %v2177
        %v2179 = vpop.xlane.xlu0 %2178
        %v2180 = vmax.f32 %v2091, %v2092
        %2181 = vmax.xlane.f32.xlu0 %v2180
        %v2182 = vpop.xlane.xlu0 %2181
        %v2183 = vmax.f32 %v2093, %v2094
        %2184 = vmax.xlane.f32.xlu0 %v2183
        %v2185 = vpop.xlane.xlu0 %2184
        %v2186 = vmax.f32 %v2095, %v2096
        %2187 = vmax.xlane.f32.xlu0 %v2186
        %v2188 = vpop.xlane.xlu0 %2187
        %v2189 = vmax.f32 %v2097, %v2098
        %2190 = vmax.xlane.f32.xlu0 %v2189
        %v2191 = vpop.xlane.xlu0 %2190
        %v2192 = vmax.f32 %v2099, %v2100
        %2193 = vmax.xlane.f32.xlu0 %v2192
        %v2194 = vpop.xlane.xlu0 %2193
        %v2195 = vmax.f32 %v2101, %v2102
        %2196 = vmax.xlane.f32.xlu0 %v2195
        %v2197 = vpop.xlane.xlu0 %2196
        %v2198 = vmax.f32 %v2103, %v2104
        %2199 = vmax.xlane.f32.xlu0 %v2198
        %v2200 = vpop.xlane.xlu0 %2199
        %v2201 = vsub.f32 %v2041, %v2107
        %v2202 = vsub.f32 %v2042, %v2107
        %v2203 = vsub.f32 %v2043, %v2110
        %v2204 = vsub.f32 %v2044, %v2110
        %v2205 = vsub.f32 %v2045, %v2113
        %v2206 = vsub.f32 %v2046, %v2113
        %v2207 = vsub.f32 %v2047, %v2116
        %v2208 = vsub.f32 %v2048, %v2116
        %v2209 = vsub.f32 %v2049, %v2119
        %v2210 = vsub.f32 %v2050, %v2119
        %v2211 = vsub.f32 %v2051, %v2122
        %v2212 = vsub.f32 %v2052, %v2122
        %v2213 = vsub.f32 %v2053, %v2125
        %v2214 = vsub.f32 %v2054, %v2125
        %v2215 = vsub.f32 %v2055, %v2128
        %v2216 = vsub.f32 %v2056, %v2128
        %v2217 = vsub.f32 %v2057, %v2131
        %v2218 = vsub.f32 %v2058, %v2131
        %v2219 = vsub.f32 %v2059, %v2134
        %v2220 = vsub.f32 %v2060, %v2134
        %v2221 = vsub.f32 %v2061, %v2137
        %v2222 = vsub.f32 %v2062, %v2137
        %v2223 = vsub.f32 %v2063, %v2140
        %v2224 = vsub.f32 %v2064, %v2140
        %v2225 = vsub.f32 %v2065, %v2143
        %v2226 = vsub.f32 %v2066, %v2143
        %v2227 = vsub.f32 %v2067, %v2146
        %v2228 = vsub.f32 %v2068, %v2146
        %v2229 = vsub.f32 %v2069, %v2149
        %v2230 = vsub.f32 %v2070, %v2149
        %v2231 = vsub.f32 %v2071, %v2152
        %v2232 = vsub.f32 %v2072, %v2152
        %v2233 = vsub.f32 %v2073, %v2155
        %v2234 = vsub.f32 %v2074, %v2155
        %v2235 = vsub.f32 %v2075, %v2158
        %v2236 = vsub.f32 %v2076, %v2158
        %v2237 = vsub.f32 %v2077, %v2161
        %v2238 = vsub.f32 %v2078, %v2161
        %v2239 = vsub.f32 %v2079, %v2164
        %v2240 = vsub.f32 %v2080, %v2164
        %v2241 = vsub.f32 %v2081, %v2167
        %v2242 = vsub.f32 %v2082, %v2167
        %v2243 = vsub.f32 %v2083, %v2170
        %v2244 = vsub.f32 %v2084, %v2170
        %v2245 = vsub.f32 %v2085, %v2173
        %v2246 = vsub.f32 %v2086, %v2173
        %v2247 = vsub.f32 %v2087, %v2176
        %v2248 = vsub.f32 %v2088, %v2176
        %v2249 = vsub.f32 %v2089, %v2179
        %v2250 = vsub.f32 %v2090, %v2179
        %v2251 = vsub.f32 %v2091, %v2182
        %v2252 = vsub.f32 %v2092, %v2182
        %v2253 = vsub.f32 %v2093, %v2185
        %v2254 = vsub.f32 %v2094, %v2185
        %v2255 = vsub.f32 %v2095, %v2188
        %v2256 = vsub.f32 %v2096, %v2188
        %v2257 = vsub.f32 %v2097, %v2191
        %v2258 = vsub.f32 %v2098, %v2191
        %v2259 = vsub.f32 %v2099, %v2194
        %v2260 = vsub.f32 %v2100, %v2194
        %v2261 = vsub.f32 %v2101, %v2197
        %v2262 = vsub.f32 %v2102, %v2197
        %v2263 = vsub.f32 %v2103, %v2200
        %v2264 = vsub.f32 %v2104, %v2200
        %v2265 = vmul.f32 %v2201, 1.442695
        %v2266 = vpow.pop %v2265
        %v2267 = vmul.f32 %v2202, 1.442695
        %v2268 = vpow.pop %v2267
        %v2269 = vmul.f32 %v2203, 1.442695
        %v2270 = vpow.pop %v2269
        %v2271 = vmul.f32 %v2204, 1.442695
        %v2272 = vpow.pop %v2271
        %v2273 = vmul.f32 %v2205, 1.442695
        %v2274 = vpow.pop %v2273
        %v2275 = vmul.f32 %v2206, 1.442695
        %v2276 = vpow.pop %v2275
        %v2277 = vmul.f32 %v2207, 1.442695
        %v2278 = vpow.pop %v2277
        %v2279 = vmul.f32 %v2208, 1.442695
        %v2280 = vpow.pop %v2279
        %v2281 = vmul.f32 %v2209, 1.442695
        %v2282 = vpow.pop %v2281
        %v2283 = vmul.f32 %v2210, 1.442695
        %v2284 = vpow.pop %v2283
        %v2285 = vmul.f32 %v2211, 1.442695
        %v2286 = vpow.pop %v2285
        %v2287 = vmul.f32 %v2212, 1.442695
        %v2288 = vpow.pop %v2287
        %v2289 = vmul.f32 %v2213, 1.442695
        %v2290 = vpow.pop %v2289
        %v2291 = vmul.f32 %v2214, 1.442695
        %v2292 = vpow.pop %v2291
        %v2293 = vmul.f32 %v2215, 1.442695
        %v2294 = vpow.pop %v2293
        %v2295 = vmul.f32 %v2216, 1.442695
        %v2296 = vpow.pop %v2295
        %v2297 = vmul.f32 %v2217, 1.442695
        %v2298 = vpow.pop %v2297
        %v2299 = vmul.f32 %v2218, 1.442695
        %v2300 = vpow.pop %v2299
        %v2301 = vmul.f32 %v2219, 1.442695
        %v2302 = vpow.pop %v2301
        %v2303 = vmul.f32 %v2220, 1.442695
        %v2304 = vpow.pop %v2303
        %v2305 = vmul.f32 %v2221, 1.442695
        %v2306 = vpow.pop %v2305
        %v2307 = vmul.f32 %v2222, 1.442695
        %v2308 = vpow.pop %v2307
        %v2309 = vmul.f32 %v2223, 1.442695
        %v2310 = vpow.pop %v2309
        %v2311 = vmul.f32 %v2224, 1.442695
        %v2312 = vpow.pop %v2311
        %v2313 = vmul.f32 %v2225, 1.442695
        %v2314 = vpow.pop %v2313
        %v2315 = vmul.f32 %v2226, 1.442695
        %v2316 = vpow.pop %v2315
        %v2317 = vmul.f32 %v2227, 1.442695
        %v2318 = vpow.pop %v2317
        %v2319 = vmul.f32 %v2228, 1.442695
        %v2320 = vpow.pop %v2319
        %v2321 = vmul.f32 %v2229, 1.442695
        %v2322 = vpow.pop %v2321
        %v2323 = vmul.f32 %v2230, 1.442695
        %v2324 = vpow.pop %v2323
        %v2325 = vmul.f32 %v2231, 1.442695
        %v2326 = vpow.pop %v2325
        %v2327 = vmul.f32 %v2232, 1.442695
        %v2328 = vpow.pop %v2327
        %v2329 = vmul.f32 %v2233, 1.442695
        %v2330 = vpow.pop %v2329
        %v2331 = vmul.f32 %v2234, 1.442695
        %v2332 = vpow.pop %v2331
        %v2333 = vmul.f32 %v2235, 1.442695
        %v2334 = vpow.pop %v2333
        %v2335 = vmul.f32 %v2236, 1.442695
        %v2336 = vpow.pop %v2335
        %v2337 = vmul.f32 %v2237, 1.442695
        %v2338 = vpow.pop %v2337
        %v2339 = vmul.f32 %v2238, 1.442695
        %v2340 = vpow.pop %v2339
        %v2341 = vmul.f32 %v2239, 1.442695
        %v2342 = vpow.pop %v2341
        %v2343 = vmul.f32 %v2240, 1.442695
        %v2344 = vpow.pop %v2343
        %v2345 = vmul.f32 %v2241, 1.442695
        %v2346 = vpow.pop %v2345
        %v2347 = vmul.f32 %v2242, 1.442695
        %v2348 = vpow.pop %v2347
        %v2349 = vmul.f32 %v2243, 1.442695
        %v2350 = vpow.pop %v2349
        %v2351 = vmul.f32 %v2244, 1.442695
        %v2352 = vpow.pop %v2351
        %v2353 = vmul.f32 %v2245, 1.442695
        %v2354 = vpow.pop %v2353
        %v2355 = vmul.f32 %v2246, 1.442695
        %v2356 = vpow.pop %v2355
        %v2357 = vmul.f32 %v2247, 1.442695
        %v2358 = vpow.pop %v2357
        %v2359 = vmul.f32 %v2248, 1.442695
        %v2360 = vpow.pop %v2359
        %v2361 = vmul.f32 %v2249, 1.442695
        %v2362 = vpow.pop %v2361
        %v2363 = vmul.f32 %v2250, 1.442695
        %v2364 = vpow.pop %v2363
        %v2365 = vmul.f32 %v2251, 1.442695
        %v2366 = vpow.pop %v2365
        %v2367 = vmul.f32 %v2252, 1.442695
        %v2368 = vpow.pop %v2367
        %v2369 = vmul.f32 %v2253, 1.442695
        %v2370 = vpow.pop %v2369
        %v2371 = vmul.f32 %v2254, 1.442695
        %v2372 = vpow.pop %v2371
        %v2373 = vmul.f32 %v2255, 1.442695
        %v2374 = vpow.pop %v2373
        %v2375 = vmul.f32 %v2256, 1.442695
        %v2376 = vpow.pop %v2375
        %v2377 = vmul.f32 %v2257, 1.442695
        %v2378 = vpow.pop %v2377
        %v2379 = vmul.f32 %v2258, 1.442695
        %v2380 = vpow.pop %v2379
        %v2381 = vmul.f32 %v2259, 1.442695
        %v2382 = vpow.pop %v2381
        %v2383 = vmul.f32 %v2260, 1.442695
        %v2384 = vpow.pop %v2383
        %v2385 = vmul.f32 %v2261, 1.442695
        %v2386 = vpow.pop %v2385
        %v2387 = vmul.f32 %v2262, 1.442695
        %v2388 = vpow.pop %v2387
        %v2389 = vmul.f32 %v2263, 1.442695
        %v2390 = vpow.pop %v2389
        %v2391 = vmul.f32 %v2264, 1.442695
        %v2392 = vpow.pop %v2391
        %v2393 = vadd.f32 %v2266, %v2268
        %2394 = vadd.xlane.f32.xlu0 %v2393
        %v2395 = vpop.xlane.xlu0 %2394
        %v2396 = vadd.f32 %v2270, %v2272
        %2397 = vadd.xlane.f32.xlu0 %v2396
        %v2398 = vpop.xlane.xlu0 %2397
        %v2399 = vadd.f32 %v2274, %v2276
        %2400 = vadd.xlane.f32.xlu0 %v2399
        %v2401 = vpop.xlane.xlu0 %2400
        %v2402 = vadd.f32 %v2278, %v2280
        %2403 = vadd.xlane.f32.xlu0 %v2402
        %v2404 = vpop.xlane.xlu0 %2403
        %v2405 = vadd.f32 %v2282, %v2284
        %2406 = vadd.xlane.f32.xlu0 %v2405
        %v2407 = vpop.xlane.xlu0 %2406
        %v2408 = vadd.f32 %v2286, %v2288
        %2409 = vadd.xlane.f32.xlu0 %v2408
        %v2410 = vpop.xlane.xlu0 %2409
        %v2411 = vadd.f32 %v2290, %v2292
        %2412 = vadd.xlane.f32.xlu0 %v2411
        %v2413 = vpop.xlane.xlu0 %2412
        %v2414 = vadd.f32 %v2294, %v2296
        %2415 = vadd.xlane.f32.xlu0 %v2414
        %v2416 = vpop.xlane.xlu0 %2415
        %v2417 = vadd.f32 %v2298, %v2300
        %2418 = vadd.xlane.f32.xlu0 %v2417
        %v2419 = vpop.xlane.xlu0 %2418
        %v2420 = vadd.f32 %v2302, %v2304
        %2421 = vadd.xlane.f32.xlu0 %v2420
        %v2422 = vpop.xlane.xlu0 %2421
        %v2423 = vadd.f32 %v2306, %v2308
        %2424 = vadd.xlane.f32.xlu0 %v2423
        %v2425 = vpop.xlane.xlu0 %2424
        %v2426 = vadd.f32 %v2310, %v2312
        %2427 = vadd.xlane.f32.xlu0 %v2426
        %v2428 = vpop.xlane.xlu0 %2427
        %v2429 = vadd.f32 %v2314, %v2316
        %2430 = vadd.xlane.f32.xlu0 %v2429
        %v2431 = vpop.xlane.xlu0 %2430
        %v2432 = vadd.f32 %v2318, %v2320
        %2433 = vadd.xlane.f32.xlu0 %v2432
        %v2434 = vpop.xlane.xlu0 %2433
        %v2435 = vadd.f32 %v2322, %v2324
        %2436 = vadd.xlane.f32.xlu0 %v2435
        %v2437 = vpop.xlane.xlu0 %2436
        %v2438 = vadd.f32 %v2326, %v2328
        %2439 = vadd.xlane.f32.xlu0 %v2438
        %v2440 = vpop.xlane.xlu0 %2439
        %v2441 = vadd.f32 %v2330, %v2332
        %2442 = vadd.xlane.f32.xlu0 %v2441
        %v2443 = vpop.xlane.xlu0 %2442
        %v2444 = vadd.f32 %v2334, %v2336
        %2445 = vadd.xlane.f32.xlu0 %v2444
        %v2446 = vpop.xlane.xlu0 %2445
        %v2447 = vadd.f32 %v2338, %v2340
        %2448 = vadd.xlane.f32.xlu0 %v2447
        %v2449 = vpop.xlane.xlu0 %2448
        %v2450 = vadd.f32 %v2342, %v2344
        %2451 = vadd.xlane.f32.xlu0 %v2450
        %v2452 = vpop.xlane.xlu0 %2451
        %v2453 = vadd.f32 %v2346, %v2348
        %2454 = vadd.xlane.f32.xlu0 %v2453
        %v2455 = vpop.xlane.xlu0 %2454
        %v2456 = vadd.f32 %v2350, %v2352
        %2457 = vadd.xlane.f32.xlu0 %v2456
        %v2458 = vpop.xlane.xlu0 %2457
        %v2459 = vadd.f32 %v2354, %v2356
        %2460 = vadd.xlane.f32.xlu0 %v2459
        %v2461 = vpop.xlane.xlu0 %2460
        %v2462 = vadd.f32 %v2358, %v2360
        %2463 = vadd.xlane.f32.xlu0 %v2462
        %v2464 = vpop.xlane.xlu0 %2463
        %v2465 = vadd.f32 %v2362, %v2364
        %2466 = vadd.xlane.f32.xlu0 %v2465
        %v2467 = vpop.xlane.xlu0 %2466
        %v2468 = vadd.f32 %v2366, %v2368
        %2469 = vadd.xlane.f32.xlu0 %v2468
        %v2470 = vpop.xlane.xlu0 %2469
        %v2471 = vadd.f32 %v2370, %v2372
        %2472 = vadd.xlane.f32.xlu0 %v2471
        %v2473 = vpop.xlane.xlu0 %2472
        %v2474 = vadd.f32 %v2374, %v2376
        %2475 = vadd.xlane.f32.xlu0 %v2474
        %v2476 = vpop.xlane.xlu0 %2475
        %v2477 = vadd.f32 %v2378, %v2380
        %2478 = vadd.xlane.f32.xlu0 %v2477
        %v2479 = vpop.xlane.xlu0 %2478
        %v2480 = vadd.f32 %v2382, %v2384
        %2481 = vadd.xlane.f32.xlu0 %v2480
        %v2482 = vpop.xlane.xlu0 %2481
        %v2483 = vadd.f32 %v2386, %v2388
        %2484 = vadd.xlane.f32.xlu0 %v2483
        %v2485 = vpop.xlane.xlu0 %2484
        %v2486 = vadd.f32 %v2390, %v2392
        %2487 = vadd.xlane.f32.xlu0 %v2486
        %v2488 = vpop.xlane.xlu0 %2487
        %v2489 = vpack.c.bf16 %v2270, %v2266
        %v2490 = vpack.c.bf16 %v2272, %v2268
        %v2491 = vpack.c.bf16 %v2278, %v2274
        %v2492 = vpack.c.bf16 %v2280, %v2276
        %v2493 = vpack.c.bf16 %v2286, %v2282
        %v2494 = vpack.c.bf16 %v2288, %v2284
        %v2495 = vpack.c.bf16 %v2294, %v2290
        %v2496 = vpack.c.bf16 %v2296, %v2292
        %v2497 = vpack.c.bf16 %v2302, %v2298
        %v2498 = vpack.c.bf16 %v2304, %v2300
        %v2499 = vpack.c.bf16 %v2310, %v2306
        %v2500 = vpack.c.bf16 %v2312, %v2308
        %v2501 = vpack.c.bf16 %v2318, %v2314
        %v2502 = vpack.c.bf16 %v2320, %v2316
        %v2503 = vpack.c.bf16 %v2326, %v2322
        %v2504 = vpack.c.bf16 %v2328, %v2324
        %v2505 = vpack.c.bf16 %v2334, %v2330
        %v2506 = vpack.c.bf16 %v2336, %v2332
        %v2507 = vpack.c.bf16 %v2342, %v2338
        %v2508 = vpack.c.bf16 %v2344, %v2340
        %v2509 = vpack.c.bf16 %v2350, %v2346
        %v2510 = vpack.c.bf16 %v2352, %v2348
        %v2511 = vpack.c.bf16 %v2358, %v2354
        %v2512 = vpack.c.bf16 %v2360, %v2356
        %v2513 = vpack.c.bf16 %v2366, %v2362
        %v2514 = vpack.c.bf16 %v2368, %v2364
        %v2515 = vpack.c.bf16 %v2374, %v2370
        %v2516 = vpack.c.bf16 %v2376, %v2372
        %v2517 = vpack.c.bf16 %v2382, %v2378
        %v2518 = vpack.c.bf16 %v2384, %v2380
        %v2519 = vpack.c.bf16 %v2390, %v2386
        %v2520 = vpack.c.bf16 %v2392, %v2388
        %2521 = vmatprep.subr.bf16.mxu0 0
        %2522 = vmatpush1.bf16.msra.mxu0 %v1203
        %2523 = vmatprep.subr.bf16.mxu0 0
        %2524 = vmatpush1.bf16.msra.mxu0 %v1202
        %2525 = vmatprep.subr.bf16.mxu0 0
        %2526 = vmatpush1.bf16.msra.mxu0 %v1201
        %2527 = vmatprep.subr.bf16.mxu0 0
        %2528 = vmatpush1.bf16.msra.mxu0 %v1200
        %2529 = vmatprep.subr.bf16.mxu0 0
        %2530 = vmatpush1.bf16.msra.mxu0 %v1199
        %2531 = vmatprep.subr.bf16.mxu0 0
        %2532 = vmatpush1.bf16.msra.mxu0 %v1198
        %2533 = vmatprep.subr.bf16.mxu0 0
        %2534 = vmatpush1.bf16.msra.mxu0 %v1197
        %2535 = vmatprep.subr.bf16.mxu0 0
        %2536 = vmatpush1.bf16.msra.mxu0 %v1196
        %2537 = vmatprep.subr.bf16.mxu0 0
        %2538 = vmatpush2.bf16.msra.mxu0 %v1211
        %2539 = vmatprep.subr.bf16.mxu0 0
        %2540 = vmatpush2.bf16.msra.mxu0 %v1210
        %2541 = vmatprep.subr.bf16.mxu0 0
        %2542 = vmatpush2.bf16.msra.mxu0 %v1209
        %2543 = vmatprep.subr.bf16.mxu0 0
        %2544 = vmatpush2.bf16.msra.mxu0 %v1208
        %2545 = vmatprep.subr.bf16.mxu0 0
        %2546 = vmatpush2.bf16.msra.mxu0 %v1207
        %2547 = vmatprep.subr.bf16.mxu0 0
        %2548 = vmatpush2.bf16.msra.mxu0 %v1206
        %2549 = vmatprep.subr.bf16.mxu0 0
        %2550 = vmatpush2.bf16.msra.mxu0 %v1205
        %2551 = vmatprep.subr.bf16.mxu0 0
        %2552 = vmatpush2.bf16.msra.mxu0 %v1204
        %2553 = vmatprep.mubr.bf16.mxu0 %v2490
        %2554 = vmatmul.mubr.bf16.gmra.mxu0 %v2489
        %v2555 = vpop.f32.mrf.mxu0
        %v2556 = vadd.f32 0.0, %v2555
        %v2557 = vpop.f32.mrf.mxu0
        %v2558 = vpop.f32.mrf.mxu0
        %v2559 = vadd.f32 0.0, %v2558
        %v2560 = vpop.f32.mrf.mxu0
        %2561 = vmatprep.mubr.bf16.mxu0 %v2492
        %2562 = vmatmul.mubr.bf16.gmra.mxu0 %v2491
        %v2563 = vpop.f32.mrf.mxu0
        %v2564 = vadd.f32 0.0, %v2563
        %v2565 = vpop.f32.mrf.mxu0
        %v2566 = vpop.f32.mrf.mxu0
        %v2567 = vadd.f32 0.0, %v2566
        %v2568 = vpop.f32.mrf.mxu0
        %2569 = vmatprep.mubr.bf16.mxu0 %v2494
        %2570 = vmatmul.mubr.bf16.gmra.mxu0 %v2493
        %v2571 = vpop.f32.mrf.mxu0
        %v2572 = vadd.f32 0.0, %v2571
        %v2573 = vpop.f32.mrf.mxu0
        %v2574 = vpop.f32.mrf.mxu0
        %v2575 = vadd.f32 0.0, %v2574
        %v2576 = vpop.f32.mrf.mxu0
        %2577 = vmatprep.mubr.bf16.mxu0 %v2496
        %2578 = vmatmul.mubr.bf16.gmra.mxu0 %v2495
        %v2579 = vpop.f32.mrf.mxu0
        %v2580 = vadd.f32 0.0, %v2579
        %v2581 = vpop.f32.mrf.mxu0
        %v2582 = vpop.f32.mrf.mxu0
        %v2583 = vadd.f32 0.0, %v2582
        %v2584 = vpop.f32.mrf.mxu0
        %2585 = vmatprep.mubr.bf16.mxu0 %v2498
        %2586 = vmatmul.mubr.bf16.gmra.mxu0 %v2497
        %v2587 = vpop.f32.mrf.mxu0
        %v2588 = vadd.f32 0.0, %v2587
        %v2589 = vpop.f32.mrf.mxu0
        %v2590 = vpop.f32.mrf.mxu0
        %v2591 = vadd.f32 0.0, %v2590
        %v2592 = vpop.f32.mrf.mxu0
        %2593 = vmatprep.mubr.bf16.mxu0 %v2500
        %2594 = vmatmul.mubr.bf16.gmra.mxu0 %v2499
        %v2595 = vpop.f32.mrf.mxu0
        %v2596 = vadd.f32 0.0, %v2595
        %v2597 = vpop.f32.mrf.mxu0
        %v2598 = vpop.f32.mrf.mxu0
        %v2599 = vadd.f32 0.0, %v2598
        %v2600 = vpop.f32.mrf.mxu0
        %2601 = vmatprep.mubr.bf16.mxu0 %v2502
        %2602 = vmatmul.mubr.bf16.gmra.mxu0 %v2501
        %v2603 = vpop.f32.mrf.mxu0
        %v2604 = vadd.f32 0.0, %v2603
        %v2605 = vpop.f32.mrf.mxu0
        %v2606 = vpop.f32.mrf.mxu0
        %v2607 = vadd.f32 0.0, %v2606
        %v2608 = vpop.f32.mrf.mxu0
        %2609 = vmatprep.mubr.bf16.mxu0 %v2504
        %2610 = vmatmul.mubr.bf16.gmra.mxu0 %v2503
        %v2611 = vpop.f32.mrf.mxu0
        %v2612 = vadd.f32 0.0, %v2611
        %v2613 = vpop.f32.mrf.mxu0
        %v2614 = vpop.f32.mrf.mxu0
        %v2615 = vadd.f32 0.0, %v2614
        %v2616 = vpop.f32.mrf.mxu0
        %2617 = vmatprep.mubr.bf16.mxu0 %v2506
        %2618 = vmatmul.mubr.bf16.gmra.mxu0 %v2505
        %v2619 = vpop.f32.mrf.mxu0
        %v2620 = vadd.f32 0.0, %v2619
        %v2621 = vpop.f32.mrf.mxu0
        %v2622 = vpop.f32.mrf.mxu0
        %v2623 = vadd.f32 0.0, %v2622
        %v2624 = vpop.f32.mrf.mxu0
        %2625 = vmatprep.mubr.bf16.mxu0 %v2508
        %2626 = vmatmul.mubr.bf16.gmra.mxu0 %v2507
        %v2627 = vpop.f32.mrf.mxu0
        %v2628 = vadd.f32 0.0, %v2627
        %v2629 = vpop.f32.mrf.mxu0
        %v2630 = vpop.f32.mrf.mxu0
        %v2631 = vadd.f32 0.0, %v2630
        %v2632 = vpop.f32.mrf.mxu0
        %2633 = vmatprep.mubr.bf16.mxu0 %v2510
        %2634 = vmatmul.mubr.bf16.gmra.mxu0 %v2509
        %v2635 = vpop.f32.mrf.mxu0
        %v2636 = vadd.f32 0.0, %v2635
        %v2637 = vpop.f32.mrf.mxu0
        %v2638 = vpop.f32.mrf.mxu0
        %v2639 = vadd.f32 0.0, %v2638
        %v2640 = vpop.f32.mrf.mxu0
        %2641 = vmatprep.mubr.bf16.mxu0 %v2512
        %2642 = vmatmul.mubr.bf16.gmra.mxu0 %v2511
        %v2643 = vpop.f32.mrf.mxu0
        %v2644 = vadd.f32 0.0, %v2643
        %v2645 = vpop.f32.mrf.mxu0
        %v2646 = vpop.f32.mrf.mxu0
        %v2647 = vadd.f32 0.0, %v2646
        %v2648 = vpop.f32.mrf.mxu0
        %2649 = vmatprep.mubr.bf16.mxu0 %v2514
        %2650 = vmatmul.mubr.bf16.gmra.mxu0 %v2513
        %v2651 = vpop.f32.mrf.mxu0
        %v2652 = vadd.f32 0.0, %v2651
        %v2653 = vpop.f32.mrf.mxu0
        %v2654 = vpop.f32.mrf.mxu0
        %v2655 = vadd.f32 0.0, %v2654
        %v2656 = vpop.f32.mrf.mxu0
        %2657 = vmatprep.mubr.bf16.mxu0 %v2516
        %2658 = vmatmul.mubr.bf16.gmra.mxu0 %v2515
        %v2659 = vpop.f32.mrf.mxu0
        %v2660 = vadd.f32 0.0, %v2659
        %v2661 = vpop.f32.mrf.mxu0
        %v2662 = vpop.f32.mrf.mxu0
        %v2663 = vadd.f32 0.0, %v2662
        %v2664 = vpop.f32.mrf.mxu0
        %2665 = vmatprep.mubr.bf16.mxu0 %v2518
        %2666 = vmatmul.mubr.bf16.gmra.mxu0 %v2517
        %v2667 = vpop.f32.mrf.mxu0
        %v2668 = vadd.f32 0.0, %v2667
        %v2669 = vpop.f32.mrf.mxu0
        %v2670 = vpop.f32.mrf.mxu0
        %v2671 = vadd.f32 0.0, %v2670
        %v2672 = vpop.f32.mrf.mxu0
        %2673 = vmatprep.mubr.bf16.mxu0 %v2520
        %2674 = vmatmul.mubr.bf16.gmra.mxu0 %v2519
        %v2675 = vpop.f32.mrf.mxu0
        %v2676 = vadd.f32 0.0, %v2675
        %v2677 = vpop.f32.mrf.mxu0
        %v2678 = vpop.f32.mrf.mxu0
        %v2679 = vadd.f32 0.0, %v2678
        %v2680 = vpop.f32.mrf.mxu0
        %2681 = vdwg.mxu0
        %v2682 = vrcp.pop %v2395
        %v2683 = vrcp.pop %v2398
        %v2684 = vrcp.pop %v2401
        %v2685 = vrcp.pop %v2404
        %v2686 = vrcp.pop %v2407
        %v2687 = vrcp.pop %v2410
        %v2688 = vrcp.pop %v2413
        %v2689 = vrcp.pop %v2416
        %v2690 = vrcp.pop %v2419
        %v2691 = vrcp.pop %v2422
        %v2692 = vrcp.pop %v2425
        %v2693 = vrcp.pop %v2428
        %v2694 = vrcp.pop %v2431
        %v2695 = vrcp.pop %v2434
        %v2696 = vrcp.pop %v2437
        %v2697 = vrcp.pop %v2440
        %v2698 = vrcp.pop %v2443
        %v2699 = vrcp.pop %v2446
        %v2700 = vrcp.pop %v2449
        %v2701 = vrcp.pop %v2452
        %v2702 = vrcp.pop %v2455
        %v2703 = vrcp.pop %v2458
        %v2704 = vrcp.pop %v2461
        %v2705 = vrcp.pop %v2464
        %v2706 = vrcp.pop %v2467
        %v2707 = vrcp.pop %v2470
        %v2708 = vrcp.pop %v2473
        %v2709 = vrcp.pop %v2476
        %v2710 = vrcp.pop %v2479
        %v2711 = vrcp.pop %v2482
        %v2712 = vrcp.pop %v2485
        %v2713 = vrcp.pop %v2488
        %v2714 = vmul.f32 %v2556, %v2682
        %v2715 = vmul.f32 %v2559, %v2683
        %v2716 = vmul.f32 %v2564, %v2684
        %v2717 = vmul.f32 %v2567, %v2685
        %v2718 = vmul.f32 %v2572, %v2686
        %v2719 = vmul.f32 %v2575, %v2687
        %v2720 = vmul.f32 %v2580, %v2688
        %v2721 = vmul.f32 %v2583, %v2689
        %v2722 = vmul.f32 %v2588, %v2690
        %v2723 = vmul.f32 %v2591, %v2691
        %v2724 = vmul.f32 %v2596, %v2692
        %v2725 = vmul.f32 %v2599, %v2693
        %v2726 = vmul.f32 %v2604, %v2694
        %v2727 = vmul.f32 %v2607, %v2695
        %v2728 = vmul.f32 %v2612, %v2696
        %v2729 = vmul.f32 %v2615, %v2697
        %v2730 = vmul.f32 %v2620, %v2698
        %v2731 = vmul.f32 %v2623, %v2699
        %v2732 = vmul.f32 %v2628, %v2700
        %v2733 = vmul.f32 %v2631, %v2701
        %v2734 = vmul.f32 %v2636, %v2702
        %v2735 = vmul.f32 %v2639, %v2703
        %v2736 = vmul.f32 %v2644, %v2704
        %v2737 = vmul.f32 %v2647, %v2705
        %v2738 = vmul.f32 %v2652, %v2706
        %v2739 = vmul.f32 %v2655, %v2707
        %v2740 = vmul.f32 %v2660, %v2708
        %v2741 = vmul.f32 %v2663, %v2709
        %v2742 = vmul.f32 %v2668, %v2710
        %v2743 = vmul.f32 %v2671, %v2711
        %v2744 = vmul.f32 %v2676, %v2712
        %v2745 = vmul.f32 %v2679, %v2713
        %v2746 = vpack.c.bf16 %v2715, %v2714
        %v2747 = vpack.c.bf16 %v2717, %v2716
        %v2748 = vpack.c.bf16 %v2719, %v2718
        %v2749 = vpack.c.bf16 %v2721, %v2720
        %v2750 = vpack.c.bf16 %v2723, %v2722
        %v2751 = vpack.c.bf16 %v2725, %v2724
        %v2752 = vpack.c.bf16 %v2727, %v2726
        %v2753 = vpack.c.bf16 %v2729, %v2728
        %v2754 = vpack.c.bf16 %v2731, %v2730
        %v2755 = vpack.c.bf16 %v2733, %v2732
        %v2756 = vpack.c.bf16 %v2735, %v2734
        %v2757 = vpack.c.bf16 %v2737, %v2736
        %v2758 = vpack.c.bf16 %v2739, %v2738
        %v2759 = vpack.c.bf16 %v2741, %v2740
        %v2760 = vpack.c.bf16 %v2743, %v2742
        %v2761 = vpack.c.bf16 %v2745, %v2744
        %v2762 = vld [vmem:[%s3] sm:$0xf]
        %v2763 = vld [vmem:[%s3 + $0x4] sm:$0xf]
        %v2764 = vld [vmem:[%s3 + $0x8] sm:$0xf]
        %v2765 = vld [vmem:[%s3 + $0xc] sm:$0xf]
        %v2766 = vld [vmem:[%s3 + $0x10] sm:$0xf]
        %v2767 = vld [vmem:[%s3 + $0x14] sm:$0xf]
        %v2768 = vld [vmem:[%s3 + $0x18] sm:$0xf]
        %v2769 = vld [vmem:[%s3 + $0x1c] sm:$0xf]
        %v2770 = vld [vmem:[%s3 + $0x20] sm:$0xf]
        %v2771 = vld [vmem:[%s3 + $0x24] sm:$0xf]
        %v2772 = vld [vmem:[%s3 + $0x28] sm:$0xf]
        %v2773 = vld [vmem:[%s3 + $0x2c] sm:$0xf]
        %v2774 = vld [vmem:[%s3 + $0x30] sm:$0xf]
        %v2775 = vld [vmem:[%s3 + $0x34] sm:$0xf]
        %v2776 = vld [vmem:[%s3 + $0x38] sm:$0xf]
        %v2777 = vld [vmem:[%s3 + $0x3c] sm:$0xf]
        %v2778 = vld [vmem:[%s4] sm:$0x1]
        %v2780 = vlaneseq
        %v2781 = vshrl.u32 %v2780, 7
        %v2782 = vsub.s32 0, %v2781
        %v2783 = vrot.slane %v2778, %v2782
        %v2801 = vunpack.c.l.b16 %v2762
        %v2802 = vunpack.c.l.b16 %v2763
        %v2803 = vunpack.c.l.b16 %v2764
        %v2804 = vunpack.c.l.b16 %v2765
        %v2805 = vunpack.c.l.b16 %v2766
        %v2806 = vunpack.c.l.b16 %v2767
        %v2807 = vunpack.c.l.b16 %v2768
        %v2808 = vunpack.c.l.b16 %v2769
        %v2809 = vunpack.c.l.b16 %v2770
        %v2810 = vunpack.c.l.b16 %v2771
        %v2811 = vunpack.c.l.b16 %v2772
        %v2812 = vunpack.c.l.b16 %v2773
        %v2813 = vunpack.c.l.b16 %v2774
        %v2814 = vunpack.c.l.b16 %v2775
        %v2815 = vunpack.c.l.b16 %v2776
        %v2816 = vunpack.c.l.b16 %v2777
        %v2817 = vpack.c.b16 %v2802, %v2801
        %v2818 = vpack.c.b16 %v2804, %v2803
        %v2819 = vpack.c.b16 %v2806, %v2805
        %v2820 = vpack.c.b16 %v2808, %v2807
        %v2821 = vpack.c.b16 %v2810, %v2809
        %v2822 = vpack.c.b16 %v2812, %v2811
        %v2823 = vpack.c.b16 %v2814, %v2813
        %v2824 = vpack.c.b16 %v2816, %v2815
        %2833 = vmatprep.subr.bf16.mxu0 0
        %2834 = vmatpush1.bf16.msra.mxu0 %v2824
        %2835 = vmatprep.subr.bf16.mxu0 0
        %2836 = vmatpush1.bf16.msra.mxu0 %v2823
        %2837 = vmatprep.subr.bf16.mxu0 0
        %2838 = vmatpush1.bf16.msra.mxu0 %v2822
        %2839 = vmatprep.subr.bf16.mxu0 0
        %2840 = vmatpush1.bf16.msra.mxu0 %v2821
        %2841 = vmatprep.subr.bf16.mxu0 0
        %2842 = vmatpush1.bf16.msra.mxu0 %v2820
        %2843 = vmatprep.subr.bf16.mxu0 0
        %2844 = vmatpush1.bf16.msra.mxu0 %v2819
        %2845 = vmatprep.subr.bf16.mxu0 0
        %2846 = vmatpush1.bf16.msra.mxu0 %v2818
        %2847 = vmatprep.subr.bf16.mxu0 0
        %2848 = vmatpush1.bf16.msra.mxu0 %v2817
        %2849 = vmatprep.subr.bf16.mxu0 0
        %2850 = vmatpush2.bf16.msra.mxu0 0
        %2851 = vmatprep.subr.bf16.mxu0 0
        %2852 = vmatpush2.bf16.msra.mxu0 0
        %2853 = vmatprep.subr.bf16.mxu0 0
        %2854 = vmatpush2.bf16.msra.mxu0 0
        %2855 = vmatprep.subr.bf16.mxu0 0
        %2856 = vmatpush2.bf16.msra.mxu0 0
        %2857 = vmatprep.subr.bf16.mxu0 0
        %2858 = vmatpush2.bf16.msra.mxu0 0
        %2859 = vmatprep.subr.bf16.mxu0 0
        %2860 = vmatpush2.bf16.msra.mxu0 0
        %2861 = vmatprep.subr.bf16.mxu0 0
        %2862 = vmatpush2.bf16.msra.mxu0 0
        %2863 = vmatprep.subr.bf16.mxu0 0
        %2864 = vmatpush2.bf16.msra.mxu0 0
        %2865 = vmatprep.mubr.bf16.mxu0 0
        %2866 = vmatmul.mubr.bf16.gmra.mxu0 %v2746
        %v2867 = vpop.f32.mrf.mxu0
        %v2868 = vadd.f32 %v2783, %v2867
        %v2869 = vpop.f32.mrf.mxu0
        %v2870 = vpop.f32.mrf.mxu0
        %v2871 = vadd.f32 %v2783, %v2870
        %v2872 = vpop.f32.mrf.mxu0
        %2873 = vmatprep.mubr.bf16.mxu0 0
        %2874 = vmatmul.mubr.bf16.gmra.mxu0 %v2747
        %v2875 = vpop.f32.mrf.mxu0
        %v2876 = vadd.f32 %v2783, %v2875
        %v2877 = vpop.f32.mrf.mxu0
        %v2878 = vpop.f32.mrf.mxu0
        %v2879 = vadd.f32 %v2783, %v2878
        %v2880 = vpop.f32.mrf.mxu0
        %2881 = vmatprep.mubr.bf16.mxu0 0
        %2882 = vmatmul.mubr.bf16.gmra.mxu0 %v2748
        %v2883 = vpop.f32.mrf.mxu0
        %v2884 = vadd.f32 %v2783, %v2883
        %v2885 = vpop.f32.mrf.mxu0
        %v2886 = vpop.f32.mrf.mxu0
        %v2887 = vadd.f32 %v2783, %v2886
        %v2888 = vpop.f32.mrf.mxu0
        %2889 = vmatprep.mubr.bf16.mxu0 0
        %2890 = vmatmul.mubr.bf16.gmra.mxu0 %v2749
        %v2891 = vpop.f32.mrf.mxu0
        %v2892 = vadd.f32 %v2783, %v2891
        %v2893 = vpop.f32.mrf.mxu0
        %v2894 = vpop.f32.mrf.mxu0
        %v2895 = vadd.f32 %v2783, %v2894
        %v2896 = vpop.f32.mrf.mxu0
        %2897 = vmatprep.mubr.bf16.mxu0 0
        %2898 = vmatmul.mubr.bf16.gmra.mxu0 %v2750
        %v2899 = vpop.f32.mrf.mxu0
        %v2900 = vadd.f32 %v2783, %v2899
        %v2901 = vpop.f32.mrf.mxu0
        %v2902 = vpop.f32.mrf.mxu0
        %v2903 = vadd.f32 %v2783, %v2902
        %v2904 = vpop.f32.mrf.mxu0
        %2905 = vmatprep.mubr.bf16.mxu0 0
        %2906 = vmatmul.mubr.bf16.gmra.mxu0 %v2751
        %v2907 = vpop.f32.mrf.mxu0
        %v2908 = vadd.f32 %v2783, %v2907
        %v2909 = vpop.f32.mrf.mxu0
        %v2910 = vpop.f32.mrf.mxu0
        %v2911 = vadd.f32 %v2783, %v2910
        %v2912 = vpop.f32.mrf.mxu0
        %2913 = vmatprep.mubr.bf16.mxu0 0
        %2914 = vmatmul.mubr.bf16.gmra.mxu0 %v2752
        %v2915 = vpop.f32.mrf.mxu0
        %v2916 = vadd.f32 %v2783, %v2915
        %v2917 = vpop.f32.mrf.mxu0
        %v2918 = vpop.f32.mrf.mxu0
        %v2919 = vadd.f32 %v2783, %v2918
        %v2920 = vpop.f32.mrf.mxu0
        %2921 = vmatprep.mubr.bf16.mxu0 0
        %2922 = vmatmul.mubr.bf16.gmra.mxu0 %v2753
        %v2923 = vpop.f32.mrf.mxu0
        %v2924 = vadd.f32 %v2783, %v2923
        %v2925 = vpop.f32.mrf.mxu0
        %v2926 = vpop.f32.mrf.mxu0
        %v2927 = vadd.f32 %v2783, %v2926
        %v2928 = vpop.f32.mrf.mxu0
        %2929 = vmatprep.mubr.bf16.mxu0 0
        %2930 = vmatmul.mubr.bf16.gmra.mxu0 %v2754
        %v2931 = vpop.f32.mrf.mxu0
        %v2932 = vadd.f32 %v2783, %v2931
        %v2933 = vpop.f32.mrf.mxu0
        %v2934 = vpop.f32.mrf.mxu0
        %v2935 = vadd.f32 %v2783, %v2934
        %v2936 = vpop.f32.mrf.mxu0
        %2937 = vmatprep.mubr.bf16.mxu0 0
        %2938 = vmatmul.mubr.bf16.gmra.mxu0 %v2755
        %v2939 = vpop.f32.mrf.mxu0
        %v2940 = vadd.f32 %v2783, %v2939
        %v2941 = vpop.f32.mrf.mxu0
        %v2942 = vpop.f32.mrf.mxu0
        %v2943 = vadd.f32 %v2783, %v2942
        %v2944 = vpop.f32.mrf.mxu0
        %2945 = vmatprep.mubr.bf16.mxu0 0
        %2946 = vmatmul.mubr.bf16.gmra.mxu0 %v2756
        %v2947 = vpop.f32.mrf.mxu0
        %v2948 = vadd.f32 %v2783, %v2947
        %v2949 = vpop.f32.mrf.mxu0
        %v2950 = vpop.f32.mrf.mxu0
        %v2951 = vadd.f32 %v2783, %v2950
        %v2952 = vpop.f32.mrf.mxu0
        %2953 = vmatprep.mubr.bf16.mxu0 0
        %2954 = vmatmul.mubr.bf16.gmra.mxu0 %v2757
        %v2955 = vpop.f32.mrf.mxu0
        %v2956 = vadd.f32 %v2783, %v2955
        %v2957 = vpop.f32.mrf.mxu0
        %v2958 = vpop.f32.mrf.mxu0
        %v2959 = vadd.f32 %v2783, %v2958
        %v2960 = vpop.f32.mrf.mxu0
        %2961 = vmatprep.mubr.bf16.mxu0 0
        %2962 = vmatmul.mubr.bf16.gmra.mxu0 %v2758
        %v2963 = vpop.f32.mrf.mxu0
        %v2964 = vadd.f32 %v2783, %v2963
        %v2965 = vpop.f32.mrf.mxu0
        %v2966 = vpop.f32.mrf.mxu0
        %v2967 = vadd.f32 %v2783, %v2966
        %v2968 = vpop.f32.mrf.mxu0
        %2969 = vmatprep.mubr.bf16.mxu0 0
        %2970 = vmatmul.mubr.bf16.gmra.mxu0 %v2759
        %v2971 = vpop.f32.mrf.mxu0
        %v2972 = vadd.f32 %v2783, %v2971
        %v2973 = vpop.f32.mrf.mxu0
        %v2974 = vpop.f32.mrf.mxu0
        %v2975 = vadd.f32 %v2783, %v2974
        %v2976 = vpop.f32.mrf.mxu0
        %2977 = vmatprep.mubr.bf16.mxu0 0
        %2978 = vmatmul.mubr.bf16.gmra.mxu0 %v2760
        %v2979 = vpop.f32.mrf.mxu0
        %v2980 = vadd.f32 %v2783, %v2979
        %v2981 = vpop.f32.mrf.mxu0
        %v2982 = vpop.f32.mrf.mxu0
        %v2983 = vadd.f32 %v2783, %v2982
        %v2984 = vpop.f32.mrf.mxu0
        %2985 = vmatprep.mubr.bf16.mxu0 0
        %2986 = vmatmul.mubr.bf16.gmra.mxu0 %v2761
        %v2987 = vpop.f32.mrf.mxu0
        %v2988 = vadd.f32 %v2783, %v2987
        %v2989 = vpop.f32.mrf.mxu0
        %v2990 = vpop.f32.mrf.mxu0
        %v2991 = vadd.f32 %v2783, %v2990
        %v2992 = vpop.f32.mrf.mxu0
        %2993 = vdwg.mxu0
        %v2994 = vadd.f32 %v656, %v2868
        %v2995 = vadd.f32 %v657, %v2871
        %v2996 = vadd.f32 %v658, %v2876
        %v2997 = vadd.f32 %v659, %v2879
        %v2998 = vadd.f32 %v660, %v2884
        %v2999 = vadd.f32 %v661, %v2887
        %v3000 = vadd.f32 %v662, %v2892
        %v3001 = vadd.f32 %v663, %v2895
        %v3002 = vadd.f32 %v664, %v2900
        %v3003 = vadd.f32 %v665, %v2903
        %v3004 = vadd.f32 %v666, %v2908
        %v3005 = vadd.f32 %v667, %v2911
        %v3006 = vadd.f32 %v668, %v2916
        %v3007 = vadd.f32 %v669, %v2919
        %v3008 = vadd.f32 %v670, %v2924
        %v3009 = vadd.f32 %v671, %v2927
        %v3010 = vadd.f32 %v672, %v2932
        %v3011 = vadd.f32 %v673, %v2935
        %v3012 = vadd.f32 %v674, %v2940
        %v3013 = vadd.f32 %v675, %v2943
        %v3014 = vadd.f32 %v676, %v2948
        %v3015 = vadd.f32 %v677, %v2951
        %v3016 = vadd.f32 %v678, %v2956
        %v3017 = vadd.f32 %v679, %v2959
        %v3018 = vadd.f32 %v680, %v2964
        %v3019 = vadd.f32 %v681, %v2967
        %v3020 = vadd.f32 %v682, %v2972
        %v3021 = vadd.f32 %v683, %v2975
        %v3022 = vadd.f32 %v684, %v2980
        %v3023 = vadd.f32 %v685, %v2983
        %v3024 = vadd.f32 %v686, %v2988
        %v3025 = vadd.f32 %v687, %v2991
        %v3026 = vld [vmem:[%s5] sm:$0x1]
        %v3027 = vld [vmem:[%s6] sm:$0x1]
        %v3028 = vsel %vm761, %v2994, 0.0
        %3029 = vadd.xlane.f32.xlu0 %v3028
        %v3030 = vpop.xlane.xlu0 %3029
        %v3031 = vsel %vm761, %v2995, 0.0
        %3032 = vadd.xlane.f32.xlu0 %v3031
        %v3033 = vpop.xlane.xlu0 %3032
        %v3034 = vsel %vm761, %v2996, 0.0
        %3035 = vadd.xlane.f32.xlu0 %v3034
        %v3036 = vpop.xlane.xlu0 %3035
        %v3037 = vsel %vm761, %v2997, 0.0
        %3038 = vadd.xlane.f32.xlu0 %v3037
        %v3039 = vpop.xlane.xlu0 %3038
        %v3040 = vsel %vm761, %v2998, 0.0
        %3041 = vadd.xlane.f32.xlu0 %v3040
        %v3042 = vpop.xlane.xlu0 %3041
        %v3043 = vsel %vm761, %v2999, 0.0
        %3044 = vadd.xlane.f32.xlu0 %v3043
        %v3045 = vpop.xlane.xlu0 %3044
        %v3046 = vsel %vm761, %v3000, 0.0
        %3047 = vadd.xlane.f32.xlu0 %v3046
        %v3048 = vpop.xlane.xlu0 %3047
        %v3049 = vsel %vm761, %v3001, 0.0
        %3050 = vadd.xlane.f32.xlu0 %v3049
        %v3051 = vpop.xlane.xlu0 %3050
        %v3052 = vsel %vm761, %v3002, 0.0
        %3053 = vadd.xlane.f32.xlu0 %v3052
        %v3054 = vpop.xlane.xlu0 %3053
        %v3055 = vsel %vm761, %v3003, 0.0
        %3056 = vadd.xlane.f32.xlu0 %v3055
        %v3057 = vpop.xlane.xlu0 %3056
        %v3058 = vsel %vm761, %v3004, 0.0
        %3059 = vadd.xlane.f32.xlu0 %v3058
        %v3060 = vpop.xlane.xlu0 %3059
        %v3061 = vsel %vm761, %v3005, 0.0
        %3062 = vadd.xlane.f32.xlu0 %v3061
        %v3063 = vpop.xlane.xlu0 %3062
        %v3064 = vsel %vm761, %v3006, 0.0
        %3065 = vadd.xlane.f32.xlu0 %v3064
        %v3066 = vpop.xlane.xlu0 %3065
        %v3067 = vsel %vm761, %v3007, 0.0
        %3068 = vadd.xlane.f32.xlu0 %v3067
        %v3069 = vpop.xlane.xlu0 %3068
        %v3070 = vsel %vm761, %v3008, 0.0
        %3071 = vadd.xlane.f32.xlu0 %v3070
        %v3072 = vpop.xlane.xlu0 %3071
        %v3073 = vsel %vm761, %v3009, 0.0
        %3074 = vadd.xlane.f32.xlu0 %v3073
        %v3075 = vpop.xlane.xlu0 %3074
        %v3076 = vsel %vm761, %v3010, 0.0
        %3077 = vadd.xlane.f32.xlu0 %v3076
        %v3078 = vpop.xlane.xlu0 %3077
        %v3079 = vsel %vm761, %v3011, 0.0
        %3080 = vadd.xlane.f32.xlu0 %v3079
        %v3081 = vpop.xlane.xlu0 %3080
        %v3082 = vsel %vm761, %v3012, 0.0
        %3083 = vadd.xlane.f32.xlu0 %v3082
        %v3084 = vpop.xlane.xlu0 %3083
        %v3085 = vsel %vm761, %v3013, 0.0
        %3086 = vadd.xlane.f32.xlu0 %v3085
        %v3087 = vpop.xlane.xlu0 %3086
        %v3088 = vsel %vm761, %v3014, 0.0
        %3089 = vadd.xlane.f32.xlu0 %v3088
        %v3090 = vpop.xlane.xlu0 %3089
        %v3091 = vsel %vm761, %v3015, 0.0
        %3092 = vadd.xlane.f32.xlu0 %v3091
        %v3093 = vpop.xlane.xlu0 %3092
        %v3094 = vsel %vm761, %v3016, 0.0
        %3095 = vadd.xlane.f32.xlu0 %v3094
        %v3096 = vpop.xlane.xlu0 %3095
        %v3097 = vsel %vm761, %v3017, 0.0
        %3098 = vadd.xlane.f32.xlu0 %v3097
        %v3099 = vpop.xlane.xlu0 %3098
        %v3100 = vsel %vm761, %v3018, 0.0
        %3101 = vadd.xlane.f32.xlu0 %v3100
        %v3102 = vpop.xlane.xlu0 %3101
        %v3103 = vsel %vm761, %v3019, 0.0
        %3104 = vadd.xlane.f32.xlu0 %v3103
        %v3105 = vpop.xlane.xlu0 %3104
        %v3106 = vsel %vm761, %v3020, 0.0
        %3107 = vadd.xlane.f32.xlu0 %v3106
        %v3108 = vpop.xlane.xlu0 %3107
        %v3109 = vsel %vm761, %v3021, 0.0
        %3110 = vadd.xlane.f32.xlu0 %v3109
        %v3111 = vpop.xlane.xlu0 %3110
        %v3112 = vsel %vm761, %v3022, 0.0
        %3113 = vadd.xlane.f32.xlu0 %v3112
        %v3114 = vpop.xlane.xlu0 %3113
        %v3115 = vsel %vm761, %v3023, 0.0
        %3116 = vadd.xlane.f32.xlu0 %v3115
        %v3117 = vpop.xlane.xlu0 %3116
        %v3118 = vsel %vm761, %v3024, 0.0
        %3119 = vadd.xlane.f32.xlu0 %v3118
        %v3120 = vpop.xlane.xlu0 %3119
        %v3121 = vsel %vm761, %v3025, 0.0
        %3122 = vadd.xlane.f32.xlu0 %v3121
        %v3123 = vpop.xlane.xlu0 %3122
        %v3124 = vrcp.pop 32.0
        %v3125 = vmul.f32 %v3030, %v3124
        %v3126 = vmul.f32 %v3033, %v3124
        %v3127 = vmul.f32 %v3036, %v3124
        %v3128 = vmul.f32 %v3039, %v3124
        %v3129 = vmul.f32 %v3042, %v3124
        %v3130 = vmul.f32 %v3045, %v3124
        %v3131 = vmul.f32 %v3048, %v3124
        %v3132 = vmul.f32 %v3051, %v3124
        %v3133 = vmul.f32 %v3054, %v3124
        %v3134 = vmul.f32 %v3057, %v3124
        %v3135 = vmul.f32 %v3060, %v3124
        %v3136 = vmul.f32 %v3063, %v3124
        %v3137 = vmul.f32 %v3066, %v3124
        %v3138 = vmul.f32 %v3069, %v3124
        %v3139 = vmul.f32 %v3072, %v3124
        %v3140 = vmul.f32 %v3075, %v3124
        %v3141 = vmul.f32 %v3078, %v3124
        %v3142 = vmul.f32 %v3081, %v3124
        %v3143 = vmul.f32 %v3084, %v3124
        %v3144 = vmul.f32 %v3087, %v3124
        %v3145 = vmul.f32 %v3090, %v3124
        %v3146 = vmul.f32 %v3093, %v3124
        %v3147 = vmul.f32 %v3096, %v3124
        %v3148 = vmul.f32 %v3099, %v3124
        %v3149 = vmul.f32 %v3102, %v3124
        %v3150 = vmul.f32 %v3105, %v3124
        %v3151 = vmul.f32 %v3108, %v3124
        %v3152 = vmul.f32 %v3111, %v3124
        %v3153 = vmul.f32 %v3114, %v3124
        %v3154 = vmul.f32 %v3117, %v3124
        %v3155 = vmul.f32 %v3120, %v3124
        %v3156 = vmul.f32 %v3123, %v3124
        %v3157 = vmul.f32 %v2994, %v2994
        %v3158 = vmul.f32 %v2995, %v2995
        %v3159 = vmul.f32 %v2996, %v2996
        %v3160 = vmul.f32 %v2997, %v2997
        %v3161 = vmul.f32 %v2998, %v2998
        %v3162 = vmul.f32 %v2999, %v2999
        %v3163 = vmul.f32 %v3000, %v3000
        %v3164 = vmul.f32 %v3001, %v3001
        %v3165 = vmul.f32 %v3002, %v3002
        %v3166 = vmul.f32 %v3003, %v3003
        %v3167 = vmul.f32 %v3004, %v3004
        %v3168 = vmul.f32 %v3005, %v3005
        %v3169 = vmul.f32 %v3006, %v3006
        %v3170 = vmul.f32 %v3007, %v3007
        %v3171 = vmul.f32 %v3008, %v3008
        %v3172 = vmul.f32 %v3009, %v3009
        %v3173 = vmul.f32 %v3010, %v3010
        %v3174 = vmul.f32 %v3011, %v3011
        %v3175 = vmul.f32 %v3012, %v3012
        %v3176 = vmul.f32 %v3013, %v3013
        %v3177 = vmul.f32 %v3014, %v3014
        %v3178 = vmul.f32 %v3015, %v3015
        %v3179 = vmul.f32 %v3016, %v3016
        %v3180 = vmul.f32 %v3017, %v3017
        %v3181 = vmul.f32 %v3018, %v3018
        %v3182 = vmul.f32 %v3019, %v3019
        %v3183 = vmul.f32 %v3020, %v3020
        %v3184 = vmul.f32 %v3021, %v3021
        %v3185 = vmul.f32 %v3022, %v3022
        %v3186 = vmul.f32 %v3023, %v3023
        %v3187 = vmul.f32 %v3024, %v3024
        %v3188 = vmul.f32 %v3025, %v3025
        %v3189 = vsel %vm761, %v3157, 0.0
        %3190 = vadd.xlane.f32.xlu0 %v3189
        %v3191 = vpop.xlane.xlu0 %3190
        %v3192 = vsel %vm761, %v3158, 0.0
        %3193 = vadd.xlane.f32.xlu0 %v3192
        %v3194 = vpop.xlane.xlu0 %3193
        %v3195 = vsel %vm761, %v3159, 0.0
        %3196 = vadd.xlane.f32.xlu0 %v3195
        %v3197 = vpop.xlane.xlu0 %3196
        %v3198 = vsel %vm761, %v3160, 0.0
        %3199 = vadd.xlane.f32.xlu0 %v3198
        %v3200 = vpop.xlane.xlu0 %3199
        %v3201 = vsel %vm761, %v3161, 0.0
        %3202 = vadd.xlane.f32.xlu0 %v3201
        %v3203 = vpop.xlane.xlu0 %3202
        %v3204 = vsel %vm761, %v3162, 0.0
        %3205 = vadd.xlane.f32.xlu0 %v3204
        %v3206 = vpop.xlane.xlu0 %3205
        %v3207 = vsel %vm761, %v3163, 0.0
        %3208 = vadd.xlane.f32.xlu0 %v3207
        %v3209 = vpop.xlane.xlu0 %3208
        %v3210 = vsel %vm761, %v3164, 0.0
        %3211 = vadd.xlane.f32.xlu0 %v3210
        %v3212 = vpop.xlane.xlu0 %3211
        %v3213 = vsel %vm761, %v3165, 0.0
        %3214 = vadd.xlane.f32.xlu0 %v3213
        %v3215 = vpop.xlane.xlu0 %3214
        %v3216 = vsel %vm761, %v3166, 0.0
        %3217 = vadd.xlane.f32.xlu0 %v3216
        %v3218 = vpop.xlane.xlu0 %3217
        %v3219 = vsel %vm761, %v3167, 0.0
        %3220 = vadd.xlane.f32.xlu0 %v3219
        %v3221 = vpop.xlane.xlu0 %3220
        %v3222 = vsel %vm761, %v3168, 0.0
        %3223 = vadd.xlane.f32.xlu0 %v3222
        %v3224 = vpop.xlane.xlu0 %3223
        %v3225 = vsel %vm761, %v3169, 0.0
        %3226 = vadd.xlane.f32.xlu0 %v3225
        %v3227 = vpop.xlane.xlu0 %3226
        %v3228 = vsel %vm761, %v3170, 0.0
        %3229 = vadd.xlane.f32.xlu0 %v3228
        %v3230 = vpop.xlane.xlu0 %3229
        %v3231 = vsel %vm761, %v3171, 0.0
        %3232 = vadd.xlane.f32.xlu0 %v3231
        %v3233 = vpop.xlane.xlu0 %3232
        %v3234 = vsel %vm761, %v3172, 0.0
        %3235 = vadd.xlane.f32.xlu0 %v3234
        %v3236 = vpop.xlane.xlu0 %3235
        %v3237 = vsel %vm761, %v3173, 0.0
        %3238 = vadd.xlane.f32.xlu0 %v3237
        %v3239 = vpop.xlane.xlu0 %3238
        %v3240 = vsel %vm761, %v3174, 0.0
        %3241 = vadd.xlane.f32.xlu0 %v3240
        %v3242 = vpop.xlane.xlu0 %3241
        %v3243 = vsel %vm761, %v3175, 0.0
        %3244 = vadd.xlane.f32.xlu0 %v3243
        %v3245 = vpop.xlane.xlu0 %3244
        %v3246 = vsel %vm761, %v3176, 0.0
        %3247 = vadd.xlane.f32.xlu0 %v3246
        %v3248 = vpop.xlane.xlu0 %3247
        %v3249 = vsel %vm761, %v3177, 0.0
        %3250 = vadd.xlane.f32.xlu0 %v3249
        %v3251 = vpop.xlane.xlu0 %3250
        %v3252 = vsel %vm761, %v3178, 0.0
        %3253 = vadd.xlane.f32.xlu0 %v3252
        %v3254 = vpop.xlane.xlu0 %3253
        %v3255 = vsel %vm761, %v3179, 0.0
        %3256 = vadd.xlane.f32.xlu0 %v3255
        %v3257 = vpop.xlane.xlu0 %3256
        %v3258 = vsel %vm761, %v3180, 0.0
        %3259 = vadd.xlane.f32.xlu0 %v3258
        %v3260 = vpop.xlane.xlu0 %3259
        %v3261 = vsel %vm761, %v3181, 0.0
        %3262 = vadd.xlane.f32.xlu0 %v3261
        %v3263 = vpop.xlane.xlu0 %3262
        %v3264 = vsel %vm761, %v3182, 0.0
        %3265 = vadd.xlane.f32.xlu0 %v3264
        %v3266 = vpop.xlane.xlu0 %3265
        %v3267 = vsel %vm761, %v3183, 0.0
        %3268 = vadd.xlane.f32.xlu0 %v3267
        %v3269 = vpop.xlane.xlu0 %3268
        %v3270 = vsel %vm761, %v3184, 0.0
        %3271 = vadd.xlane.f32.xlu0 %v3270
        %v3272 = vpop.xlane.xlu0 %3271
        %v3273 = vsel %vm761, %v3185, 0.0
        %3274 = vadd.xlane.f32.xlu0 %v3273
        %v3275 = vpop.xlane.xlu0 %3274
        %v3276 = vsel %vm761, %v3186, 0.0
        %3277 = vadd.xlane.f32.xlu0 %v3276
        %v3278 = vpop.xlane.xlu0 %3277
        %v3279 = vsel %vm761, %v3187, 0.0
        %3280 = vadd.xlane.f32.xlu0 %v3279
        %v3281 = vpop.xlane.xlu0 %3280
        %v3282 = vsel %vm761, %v3188, 0.0
        %3283 = vadd.xlane.f32.xlu0 %v3282
        %v3284 = vpop.xlane.xlu0 %3283
        %v3285 = vmul.f32 %v3191, %v3124
        %v3286 = vmul.f32 %v3194, %v3124
        %v3287 = vmul.f32 %v3197, %v3124
        %v3288 = vmul.f32 %v3200, %v3124
        %v3289 = vmul.f32 %v3203, %v3124
        %v3290 = vmul.f32 %v3206, %v3124
        %v3291 = vmul.f32 %v3209, %v3124
        %v3292 = vmul.f32 %v3212, %v3124
        %v3293 = vmul.f32 %v3215, %v3124
        %v3294 = vmul.f32 %v3218, %v3124
        %v3295 = vmul.f32 %v3221, %v3124
        %v3296 = vmul.f32 %v3224, %v3124
        %v3297 = vmul.f32 %v3227, %v3124
        %v3298 = vmul.f32 %v3230, %v3124
        %v3299 = vmul.f32 %v3233, %v3124
        %v3300 = vmul.f32 %v3236, %v3124
        %v3301 = vmul.f32 %v3239, %v3124
        %v3302 = vmul.f32 %v3242, %v3124
        %v3303 = vmul.f32 %v3245, %v3124
        %v3304 = vmul.f32 %v3248, %v3124
        %v3305 = vmul.f32 %v3251, %v3124
        %v3306 = vmul.f32 %v3254, %v3124
        %v3307 = vmul.f32 %v3257, %v3124
        %v3308 = vmul.f32 %v3260, %v3124
        %v3309 = vmul.f32 %v3263, %v3124
        %v3310 = vmul.f32 %v3266, %v3124
        %v3311 = vmul.f32 %v3269, %v3124
        %v3312 = vmul.f32 %v3272, %v3124
        %v3313 = vmul.f32 %v3275, %v3124
        %v3314 = vmul.f32 %v3278, %v3124
        %v3315 = vmul.f32 %v3281, %v3124
        %v3316 = vmul.f32 %v3284, %v3124
        %v3317 = vmul.f32 %v3125, %v3125
        %v3318 = vmul.f32 %v3126, %v3126
        %v3319 = vmul.f32 %v3127, %v3127
        %v3320 = vmul.f32 %v3128, %v3128
        %v3321 = vmul.f32 %v3129, %v3129
        %v3322 = vmul.f32 %v3130, %v3130
        %v3323 = vmul.f32 %v3131, %v3131
        %v3324 = vmul.f32 %v3132, %v3132
        %v3325 = vmul.f32 %v3133, %v3133
        %v3326 = vmul.f32 %v3134, %v3134
        %v3327 = vmul.f32 %v3135, %v3135
        %v3328 = vmul.f32 %v3136, %v3136
        %v3329 = vmul.f32 %v3137, %v3137
        %v3330 = vmul.f32 %v3138, %v3138
        %v3331 = vmul.f32 %v3139, %v3139
        %v3332 = vmul.f32 %v3140, %v3140
        %v3333 = vmul.f32 %v3141, %v3141
        %v3334 = vmul.f32 %v3142, %v3142
        %v3335 = vmul.f32 %v3143, %v3143
        %v3336 = vmul.f32 %v3144, %v3144
        %v3337 = vmul.f32 %v3145, %v3145
        %v3338 = vmul.f32 %v3146, %v3146
        %v3339 = vmul.f32 %v3147, %v3147
        %v3340 = vmul.f32 %v3148, %v3148
        %v3341 = vmul.f32 %v3149, %v3149
        %v3342 = vmul.f32 %v3150, %v3150
        %v3343 = vmul.f32 %v3151, %v3151
        %v3344 = vmul.f32 %v3152, %v3152
        %v3345 = vmul.f32 %v3153, %v3153
        %v3346 = vmul.f32 %v3154, %v3154
        %v3347 = vmul.f32 %v3155, %v3155
        %v3348 = vmul.f32 %v3156, %v3156
        %v3349 = vsub.f32 %v3285, %v3317
        %v3350 = vsub.f32 %v3286, %v3318
        %v3351 = vsub.f32 %v3287, %v3319
        %v3352 = vsub.f32 %v3288, %v3320
        %v3353 = vsub.f32 %v3289, %v3321
        %v3354 = vsub.f32 %v3290, %v3322
        %v3355 = vsub.f32 %v3291, %v3323
        %v3356 = vsub.f32 %v3292, %v3324
        %v3357 = vsub.f32 %v3293, %v3325
        %v3358 = vsub.f32 %v3294, %v3326
        %v3359 = vsub.f32 %v3295, %v3327
        %v3360 = vsub.f32 %v3296, %v3328
        %v3361 = vsub.f32 %v3297, %v3329
        %v3362 = vsub.f32 %v3298, %v3330
        %v3363 = vsub.f32 %v3299, %v3331
        %v3364 = vsub.f32 %v3300, %v3332
        %v3365 = vsub.f32 %v3301, %v3333
        %v3366 = vsub.f32 %v3302, %v3334
        %v3367 = vsub.f32 %v3303, %v3335
        %v3368 = vsub.f32 %v3304, %v3336
        %v3369 = vsub.f32 %v3305, %v3337
        %v3370 = vsub.f32 %v3306, %v3338
        %v3371 = vsub.f32 %v3307, %v3339
        %v3372 = vsub.f32 %v3308, %v3340
        %v3373 = vsub.f32 %v3309, %v3341
        %v3374 = vsub.f32 %v3310, %v3342
        %v3375 = vsub.f32 %v3311, %v3343
        %v3376 = vsub.f32 %v3312, %v3344
        %v3377 = vsub.f32 %v3313, %v3345
        %v3378 = vsub.f32 %v3314, %v3346
        %v3379 = vsub.f32 %v3315, %v3347
        %v3380 = vsub.f32 %v3316, %v3348
        %v3381 = vmax.f32 %v3349, 0.0
        %v3382 = vmax.f32 %v3350, 0.0
        %v3383 = vmax.f32 %v3351, 0.0
        %v3384 = vmax.f32 %v3352, 0.0
        %v3385 = vmax.f32 %v3353, 0.0
        %v3386 = vmax.f32 %v3354, 0.0
        %v3387 = vmax.f32 %v3355, 0.0
        %v3388 = vmax.f32 %v3356, 0.0
        %v3389 = vmax.f32 %v3357, 0.0
        %v3390 = vmax.f32 %v3358, 0.0
        %v3391 = vmax.f32 %v3359, 0.0
        %v3392 = vmax.f32 %v3360, 0.0
        %v3393 = vmax.f32 %v3361, 0.0
        %v3394 = vmax.f32 %v3362, 0.0
        %v3395 = vmax.f32 %v3363, 0.0
        %v3396 = vmax.f32 %v3364, 0.0
        %v3397 = vmax.f32 %v3365, 0.0
        %v3398 = vmax.f32 %v3366, 0.0
        %v3399 = vmax.f32 %v3367, 0.0
        %v3400 = vmax.f32 %v3368, 0.0
        %v3401 = vmax.f32 %v3369, 0.0
        %v3402 = vmax.f32 %v3370, 0.0
        %v3403 = vmax.f32 %v3371, 0.0
        %v3404 = vmax.f32 %v3372, 0.0
        %v3405 = vmax.f32 %v3373, 0.0
        %v3406 = vmax.f32 %v3374, 0.0
        %v3407 = vmax.f32 %v3375, 0.0
        %v3408 = vmax.f32 %v3376, 0.0
        %v3409 = vmax.f32 %v3377, 0.0
        %v3410 = vmax.f32 %v3378, 0.0
        %v3411 = vmax.f32 %v3379, 0.0
        %v3412 = vmax.f32 %v3380, 0.0
        %v3413 = vsub.f32 %v2994, %v3125
        %v3414 = vsub.f32 %v2995, %v3126
        %v3415 = vsub.f32 %v2996, %v3127
        %v3416 = vsub.f32 %v2997, %v3128
        %v3417 = vsub.f32 %v2998, %v3129
        %v3418 = vsub.f32 %v2999, %v3130
        %v3419 = vsub.f32 %v3000, %v3131
        %v3420 = vsub.f32 %v3001, %v3132
        %v3421 = vsub.f32 %v3002, %v3133
        %v3422 = vsub.f32 %v3003, %v3134
        %v3423 = vsub.f32 %v3004, %v3135
        %v3424 = vsub.f32 %v3005, %v3136
        %v3425 = vsub.f32 %v3006, %v3137
        %v3426 = vsub.f32 %v3007, %v3138
        %v3427 = vsub.f32 %v3008, %v3139
        %v3428 = vsub.f32 %v3009, %v3140
        %v3429 = vsub.f32 %v3010, %v3141
        %v3430 = vsub.f32 %v3011, %v3142
        %v3431 = vsub.f32 %v3012, %v3143
        %v3432 = vsub.f32 %v3013, %v3144
        %v3433 = vsub.f32 %v3014, %v3145
        %v3434 = vsub.f32 %v3015, %v3146
        %v3435 = vsub.f32 %v3016, %v3147
        %v3436 = vsub.f32 %v3017, %v3148
        %v3437 = vsub.f32 %v3018, %v3149
        %v3438 = vsub.f32 %v3019, %v3150
        %v3439 = vsub.f32 %v3020, %v3151
        %v3440 = vsub.f32 %v3021, %v3152
        %v3441 = vsub.f32 %v3022, %v3153
        %v3442 = vsub.f32 %v3023, %v3154
        %v3443 = vsub.f32 %v3024, %v3155
        %v3444 = vsub.f32 %v3025, %v3156
        %v3445 = vadd.f32 %v3381, 1e-05
        %v3446 = vadd.f32 %v3382, 1e-05
        %v3447 = vadd.f32 %v3383, 1e-05
        %v3448 = vadd.f32 %v3384, 1e-05
        %v3449 = vadd.f32 %v3385, 1e-05
        %v3450 = vadd.f32 %v3386, 1e-05
        %v3451 = vadd.f32 %v3387, 1e-05
        %v3452 = vadd.f32 %v3388, 1e-05
        %v3453 = vadd.f32 %v3389, 1e-05
        %v3454 = vadd.f32 %v3390, 1e-05
        %v3455 = vadd.f32 %v3391, 1e-05
        %v3456 = vadd.f32 %v3392, 1e-05
        %v3457 = vadd.f32 %v3393, 1e-05
        %v3458 = vadd.f32 %v3394, 1e-05
        %v3459 = vadd.f32 %v3395, 1e-05
        %v3460 = vadd.f32 %v3396, 1e-05
        %v3461 = vadd.f32 %v3397, 1e-05
        %v3462 = vadd.f32 %v3398, 1e-05
        %v3463 = vadd.f32 %v3399, 1e-05
        %v3464 = vadd.f32 %v3400, 1e-05
        %v3465 = vadd.f32 %v3401, 1e-05
        %v3466 = vadd.f32 %v3402, 1e-05
        %v3467 = vadd.f32 %v3403, 1e-05
        %v3468 = vadd.f32 %v3404, 1e-05
        %v3469 = vadd.f32 %v3405, 1e-05
        %v3470 = vadd.f32 %v3406, 1e-05
        %v3471 = vadd.f32 %v3407, 1e-05
        %v3472 = vadd.f32 %v3408, 1e-05
        %v3473 = vadd.f32 %v3409, 1e-05
        %v3474 = vadd.f32 %v3410, 1e-05
        %v3475 = vadd.f32 %v3411, 1e-05
        %v3476 = vadd.f32 %v3412, 1e-05
        %v3477 = vrsqrt.pop %v3445
        %v3478 = vrsqrt.pop %v3446
        %v3479 = vrsqrt.pop %v3447
        %v3480 = vrsqrt.pop %v3448
        %v3481 = vrsqrt.pop %v3449
        %v3482 = vrsqrt.pop %v3450
        %v3483 = vrsqrt.pop %v3451
        %v3484 = vrsqrt.pop %v3452
        %v3485 = vrsqrt.pop %v3453
        %v3486 = vrsqrt.pop %v3454
        %v3487 = vrsqrt.pop %v3455
        %v3488 = vrsqrt.pop %v3456
        %v3489 = vrsqrt.pop %v3457
        %v3490 = vrsqrt.pop %v3458
        %v3491 = vrsqrt.pop %v3459
        %v3492 = vrsqrt.pop %v3460
        %v3493 = vrsqrt.pop %v3461
        %v3494 = vrsqrt.pop %v3462
        %v3495 = vrsqrt.pop %v3463
        %v3496 = vrsqrt.pop %v3464
        %v3497 = vrsqrt.pop %v3465
        %v3498 = vrsqrt.pop %v3466
        %v3499 = vrsqrt.pop %v3467
        %v3500 = vrsqrt.pop %v3468
        %v3501 = vrsqrt.pop %v3469
        %v3502 = vrsqrt.pop %v3470
        %v3503 = vrsqrt.pop %v3471
        %v3504 = vrsqrt.pop %v3472
        %v3505 = vrsqrt.pop %v3473
        %v3506 = vrsqrt.pop %v3474
        %v3507 = vrsqrt.pop %v3475
        %v3508 = vrsqrt.pop %v3476
        %v3509 = vmul.f32 %v3413, %v3477
        %v3510 = vmul.f32 %v3414, %v3478
        %v3511 = vmul.f32 %v3415, %v3479
        %v3512 = vmul.f32 %v3416, %v3480
        %v3513 = vmul.f32 %v3417, %v3481
        %v3514 = vmul.f32 %v3418, %v3482
        %v3515 = vmul.f32 %v3419, %v3483
        %v3516 = vmul.f32 %v3420, %v3484
        %v3517 = vmul.f32 %v3421, %v3485
        %v3518 = vmul.f32 %v3422, %v3486
        %v3519 = vmul.f32 %v3423, %v3487
        %v3520 = vmul.f32 %v3424, %v3488
        %v3521 = vmul.f32 %v3425, %v3489
        %v3522 = vmul.f32 %v3426, %v3490
        %v3523 = vmul.f32 %v3427, %v3491
        %v3524 = vmul.f32 %v3428, %v3492
        %v3525 = vmul.f32 %v3429, %v3493
        %v3526 = vmul.f32 %v3430, %v3494
        %v3527 = vmul.f32 %v3431, %v3495
        %v3528 = vmul.f32 %v3432, %v3496
        %v3529 = vmul.f32 %v3433, %v3497
        %v3530 = vmul.f32 %v3434, %v3498
        %v3531 = vmul.f32 %v3435, %v3499
        %v3532 = vmul.f32 %v3436, %v3500
        %v3533 = vmul.f32 %v3437, %v3501
        %v3534 = vmul.f32 %v3438, %v3502
        %v3535 = vmul.f32 %v3439, %v3503
        %v3536 = vmul.f32 %v3440, %v3504
        %v3537 = vmul.f32 %v3441, %v3505
        %v3538 = vmul.f32 %v3442, %v3506
        %v3539 = vmul.f32 %v3443, %v3507
        %v3540 = vmul.f32 %v3444, %v3508
        %v3542 = vlaneseq
        %v3543 = vshrl.u32 %v3542, 7
        %v3544 = vsub.s32 0, %v3543
        %v3545 = vrot.slane %v3026, %v3544
        %v3547 = vmul.f32 %v3509, %v3545
        %v3548 = vmul.f32 %v3510, %v3545
        %v3549 = vmul.f32 %v3511, %v3545
        %v3550 = vmul.f32 %v3512, %v3545
        %v3551 = vmul.f32 %v3513, %v3545
        %v3552 = vmul.f32 %v3514, %v3545
        %v3553 = vmul.f32 %v3515, %v3545
        %v3554 = vmul.f32 %v3516, %v3545
        %v3555 = vmul.f32 %v3517, %v3545
        %v3556 = vmul.f32 %v3518, %v3545
        %v3557 = vmul.f32 %v3519, %v3545
        %v3558 = vmul.f32 %v3520, %v3545
        %v3559 = vmul.f32 %v3521, %v3545
        %v3560 = vmul.f32 %v3522, %v3545
        %v3561 = vmul.f32 %v3523, %v3545
        %v3562 = vmul.f32 %v3524, %v3545
        %v3563 = vmul.f32 %v3525, %v3545
        %v3564 = vmul.f32 %v3526, %v3545
        %v3565 = vmul.f32 %v3527, %v3545
        %v3566 = vmul.f32 %v3528, %v3545
        %v3567 = vmul.f32 %v3529, %v3545
        %v3568 = vmul.f32 %v3530, %v3545
        %v3569 = vmul.f32 %v3531, %v3545
        %v3570 = vmul.f32 %v3532, %v3545
        %v3571 = vmul.f32 %v3533, %v3545
        %v3572 = vmul.f32 %v3534, %v3545
        %v3573 = vmul.f32 %v3535, %v3545
        %v3574 = vmul.f32 %v3536, %v3545
        %v3575 = vmul.f32 %v3537, %v3545
        %v3576 = vmul.f32 %v3538, %v3545
        %v3577 = vmul.f32 %v3539, %v3545
        %v3578 = vmul.f32 %v3540, %v3545
        %v3580 = vlaneseq
        %v3581 = vshrl.u32 %v3580, 7
        %v3582 = vsub.s32 0, %v3581
        %v3583 = vrot.slane %v3027, %v3582
        %v3585 = vadd.f32 %v3547, %v3583
        %v3586 = vadd.f32 %v3548, %v3583
        %v3587 = vadd.f32 %v3549, %v3583
        %v3588 = vadd.f32 %v3550, %v3583
        %v3589 = vadd.f32 %v3551, %v3583
        %v3590 = vadd.f32 %v3552, %v3583
        %v3591 = vadd.f32 %v3553, %v3583
        %v3592 = vadd.f32 %v3554, %v3583
        %v3593 = vadd.f32 %v3555, %v3583
        %v3594 = vadd.f32 %v3556, %v3583
        %v3595 = vadd.f32 %v3557, %v3583
        %v3596 = vadd.f32 %v3558, %v3583
        %v3597 = vadd.f32 %v3559, %v3583
        %v3598 = vadd.f32 %v3560, %v3583
        %v3599 = vadd.f32 %v3561, %v3583
        %v3600 = vadd.f32 %v3562, %v3583
        %v3601 = vadd.f32 %v3563, %v3583
        %v3602 = vadd.f32 %v3564, %v3583
        %v3603 = vadd.f32 %v3565, %v3583
        %v3604 = vadd.f32 %v3566, %v3583
        %v3605 = vadd.f32 %v3567, %v3583
        %v3606 = vadd.f32 %v3568, %v3583
        %v3607 = vadd.f32 %v3569, %v3583
        %v3608 = vadd.f32 %v3570, %v3583
        %v3609 = vadd.f32 %v3571, %v3583
        %v3610 = vadd.f32 %v3572, %v3583
        %v3611 = vadd.f32 %v3573, %v3583
        %v3612 = vadd.f32 %v3574, %v3583
        %v3613 = vadd.f32 %v3575, %v3583
        %v3614 = vadd.f32 %v3576, %v3583
        %v3615 = vadd.f32 %v3577, %v3583
        %v3616 = vadd.f32 %v3578, %v3583
        %v3617 = vpack.c.bf16 %v3586, %v3585
        %v3618 = vpack.c.bf16 %v3588, %v3587
        %v3619 = vpack.c.bf16 %v3590, %v3589
        %v3620 = vpack.c.bf16 %v3592, %v3591
        %v3621 = vpack.c.bf16 %v3594, %v3593
        %v3622 = vpack.c.bf16 %v3596, %v3595
        %v3623 = vpack.c.bf16 %v3598, %v3597
        %v3624 = vpack.c.bf16 %v3600, %v3599
        %v3625 = vpack.c.bf16 %v3602, %v3601
        %v3626 = vpack.c.bf16 %v3604, %v3603
        %v3627 = vpack.c.bf16 %v3606, %v3605
        %v3628 = vpack.c.bf16 %v3608, %v3607
        %v3629 = vpack.c.bf16 %v3610, %v3609
        %v3630 = vpack.c.bf16 %v3612, %v3611
        %v3631 = vpack.c.bf16 %v3614, %v3613
        %v3632 = vpack.c.bf16 %v3616, %v3615
        %v3633 = vld [vmem:[%s9] sm:$0xf]
        %v3634 = vld [vmem:[%s9 + $0x4] sm:$0xf]
        %v3635 = vld [vmem:[%s9 + $0x8] sm:$0xf]
        %v3636 = vld [vmem:[%s9 + $0xc] sm:$0xf]
        %v3637 = vld [vmem:[%s10] sm:$0x1]
        %v3639 = vlaneseq
        %v3640 = vshrl.u32 %v3639, 7
        %v3641 = vsub.s32 0, %v3640
        %v3642 = vrot.slane %v3637, %v3641
        %v3648 = vunpack.c.l.b16 %v3633
        %v3649 = vunpack.c.l.b16 %v3634
        %v3650 = vunpack.c.l.b16 %v3635
        %v3651 = vunpack.c.l.b16 %v3636
        %v3652 = vpack.c.b16 %v3649, %v3648
        %v3653 = vpack.c.b16 %v3651, %v3650
        %v3657 = vsel %vm761, %v3617, 0
        %v3660 = vsel %vm761, %v3618, 0
        %v3663 = vsel %vm761, %v3619, 0
        %v3666 = vsel %vm761, %v3620, 0
        %v3669 = vsel %vm761, %v3621, 0
        %v3672 = vsel %vm761, %v3622, 0
        %v3675 = vsel %vm761, %v3623, 0
        %v3678 = vsel %vm761, %v3624, 0
        %v3681 = vsel %vm761, %v3625, 0
        %v3684 = vsel %vm761, %v3626, 0
        %v3687 = vsel %vm761, %v3627, 0
        %v3690 = vsel %vm761, %v3628, 0
        %v3693 = vsel %vm761, %v3629, 0
        %v3696 = vsel %vm761, %v3630, 0
        %v3699 = vsel %vm761, %v3631, 0
        %v3702 = vsel %vm761, %v3632, 0
        %3704 = vmatprep.subr.bf16.mxu0 0
        %3705 = vmatpush1.bf16.msra.mxu0 0
        %3706 = vmatprep.subr.bf16.mxu0 0
        %3707 = vmatpush1.bf16.msra.mxu0 0
        %3708 = vmatprep.subr.bf16.mxu0 0
        %3709 = vmatpush1.bf16.msra.mxu0 0
        %3710 = vmatprep.subr.bf16.mxu0 0
        %3711 = vmatpush1.bf16.msra.mxu0 0
        %3712 = vmatprep.subr.bf16.mxu0 0
        %3713 = vmatpush1.bf16.msra.mxu0 0
        %3714 = vmatprep.subr.bf16.mxu0 0
        %3715 = vmatpush1.bf16.msra.mxu0 0
        %3716 = vmatprep.subr.bf16.mxu0 0
        %3717 = vmatpush1.bf16.msra.mxu0 %v3653
        %3718 = vmatprep.subr.bf16.mxu0 0
        %3719 = vmatpush1.bf16.msra.mxu0 %v3652
        %3720 = vmatprep.subr.bf16.mxu0 0
        %3721 = vmatpush2.bf16.msra.mxu0 0
        %3722 = vmatprep.subr.bf16.mxu0 0
        %3723 = vmatpush2.bf16.msra.mxu0 0
        %3724 = vmatprep.subr.bf16.mxu0 0
        %3725 = vmatpush2.bf16.msra.mxu0 0
        %3726 = vmatprep.subr.bf16.mxu0 0
        %3727 = vmatpush2.bf16.msra.mxu0 0
        %3728 = vmatprep.subr.bf16.mxu0 0
        %3729 = vmatpush2.bf16.msra.mxu0 0
        %3730 = vmatprep.subr.bf16.mxu0 0
        %3731 = vmatpush2.bf16.msra.mxu0 0
        %3732 = vmatprep.subr.bf16.mxu0 0
        %3733 = vmatpush2.bf16.msra.mxu0 0
        %3734 = vmatprep.subr.bf16.mxu0 0
        %3735 = vmatpush2.bf16.msra.mxu0 0
        %3736 = vmatprep.mubr.bf16.mxu0 0
        %3737 = vmatmul.mubr.bf16.gmra.mxu0 %v3657
        %v3738 = vpop.f32.mrf.mxu0
        %v3739 = vadd.f32 %v3642, %v3738
        %v3740 = vpop.f32.mrf.mxu0
        %v3741 = vpop.f32.mrf.mxu0
        %v3742 = vadd.f32 %v3642, %v3741
        %v3743 = vpop.f32.mrf.mxu0
        %3744 = vmatprep.mubr.bf16.mxu0 0
        %3745 = vmatmul.mubr.bf16.gmra.mxu0 %v3660
        %v3746 = vpop.f32.mrf.mxu0
        %v3747 = vadd.f32 %v3642, %v3746
        %v3748 = vpop.f32.mrf.mxu0
        %v3749 = vpop.f32.mrf.mxu0
        %v3750 = vadd.f32 %v3642, %v3749
        %v3751 = vpop.f32.mrf.mxu0
        %3752 = vmatprep.mubr.bf16.mxu0 0
        %3753 = vmatmul.mubr.bf16.gmra.mxu0 %v3663
        %v3754 = vpop.f32.mrf.mxu0
        %v3755 = vadd.f32 %v3642, %v3754
        %v3756 = vpop.f32.mrf.mxu0
        %v3757 = vpop.f32.mrf.mxu0
        %v3758 = vadd.f32 %v3642, %v3757
        %v3759 = vpop.f32.mrf.mxu0
        %3760 = vmatprep.mubr.bf16.mxu0 0
        %3761 = vmatmul.mubr.bf16.gmra.mxu0 %v3666
        %v3762 = vpop.f32.mrf.mxu0
        %v3763 = vadd.f32 %v3642, %v3762
        %v3764 = vpop.f32.mrf.mxu0
        %v3765 = vpop.f32.mrf.mxu0
        %v3766 = vadd.f32 %v3642, %v3765
        %v3767 = vpop.f32.mrf.mxu0
        %3768 = vmatprep.mubr.bf16.mxu0 0
        %3769 = vmatmul.mubr.bf16.gmra.mxu0 %v3669
        %v3770 = vpop.f32.mrf.mxu0
        %v3771 = vadd.f32 %v3642, %v3770
        %v3772 = vpop.f32.mrf.mxu0
        %v3773 = vpop.f32.mrf.mxu0
        %v3774 = vadd.f32 %v3642, %v3773
        %v3775 = vpop.f32.mrf.mxu0
        %3776 = vmatprep.mubr.bf16.mxu0 0
        %3777 = vmatmul.mubr.bf16.gmra.mxu0 %v3672
        %v3778 = vpop.f32.mrf.mxu0
        %v3779 = vadd.f32 %v3642, %v3778
        %v3780 = vpop.f32.mrf.mxu0
        %v3781 = vpop.f32.mrf.mxu0
        %v3782 = vadd.f32 %v3642, %v3781
        %v3783 = vpop.f32.mrf.mxu0
        %3784 = vmatprep.mubr.bf16.mxu0 0
        %3785 = vmatmul.mubr.bf16.gmra.mxu0 %v3675
        %v3786 = vpop.f32.mrf.mxu0
        %v3787 = vadd.f32 %v3642, %v3786
        %v3788 = vpop.f32.mrf.mxu0
        %v3789 = vpop.f32.mrf.mxu0
        %v3790 = vadd.f32 %v3642, %v3789
        %v3791 = vpop.f32.mrf.mxu0
        %3792 = vmatprep.mubr.bf16.mxu0 0
        %3793 = vmatmul.mubr.bf16.gmra.mxu0 %v3678
        %v3794 = vpop.f32.mrf.mxu0
        %v3795 = vadd.f32 %v3642, %v3794
        %v3796 = vpop.f32.mrf.mxu0
        %v3797 = vpop.f32.mrf.mxu0
        %v3798 = vadd.f32 %v3642, %v3797
        %v3799 = vpop.f32.mrf.mxu0
        %3800 = vmatprep.mubr.bf16.mxu0 0
        %3801 = vmatmul.mubr.bf16.gmra.mxu0 %v3681
        %v3802 = vpop.f32.mrf.mxu0
        %v3803 = vadd.f32 %v3642, %v3802
        %v3804 = vpop.f32.mrf.mxu0
        %v3805 = vpop.f32.mrf.mxu0
        %v3806 = vadd.f32 %v3642, %v3805
        %v3807 = vpop.f32.mrf.mxu0
        %3808 = vmatprep.mubr.bf16.mxu0 0
        %3809 = vmatmul.mubr.bf16.gmra.mxu0 %v3684
        %v3810 = vpop.f32.mrf.mxu0
        %v3811 = vadd.f32 %v3642, %v3810
        %v3812 = vpop.f32.mrf.mxu0
        %v3813 = vpop.f32.mrf.mxu0
        %v3814 = vadd.f32 %v3642, %v3813
        %v3815 = vpop.f32.mrf.mxu0
        %3816 = vmatprep.mubr.bf16.mxu0 0
        %3817 = vmatmul.mubr.bf16.gmra.mxu0 %v3687
        %v3818 = vpop.f32.mrf.mxu0
        %v3819 = vadd.f32 %v3642, %v3818
        %v3820 = vpop.f32.mrf.mxu0
        %v3821 = vpop.f32.mrf.mxu0
        %v3822 = vadd.f32 %v3642, %v3821
        %v3823 = vpop.f32.mrf.mxu0
        %3824 = vmatprep.mubr.bf16.mxu0 0
        %3825 = vmatmul.mubr.bf16.gmra.mxu0 %v3690
        %v3826 = vpop.f32.mrf.mxu0
        %v3827 = vadd.f32 %v3642, %v3826
        %v3828 = vpop.f32.mrf.mxu0
        %v3829 = vpop.f32.mrf.mxu0
        %v3830 = vadd.f32 %v3642, %v3829
        %v3831 = vpop.f32.mrf.mxu0
        %3832 = vmatprep.mubr.bf16.mxu0 0
        %3833 = vmatmul.mubr.bf16.gmra.mxu0 %v3693
        %v3834 = vpop.f32.mrf.mxu0
        %v3835 = vadd.f32 %v3642, %v3834
        %v3836 = vpop.f32.mrf.mxu0
        %v3837 = vpop.f32.mrf.mxu0
        %v3838 = vadd.f32 %v3642, %v3837
        %v3839 = vpop.f32.mrf.mxu0
        %3840 = vmatprep.mubr.bf16.mxu0 0
        %3841 = vmatmul.mubr.bf16.gmra.mxu0 %v3696
        %v3842 = vpop.f32.mrf.mxu0
        %v3843 = vadd.f32 %v3642, %v3842
        %v3844 = vpop.f32.mrf.mxu0
        %v3845 = vpop.f32.mrf.mxu0
        %v3846 = vadd.f32 %v3642, %v3845
        %v3847 = vpop.f32.mrf.mxu0
        %3848 = vmatprep.mubr.bf16.mxu0 0
        %3849 = vmatmul.mubr.bf16.gmra.mxu0 %v3699
        %v3850 = vpop.f32.mrf.mxu0
        %v3851 = vadd.f32 %v3642, %v3850
        %v3852 = vpop.f32.mrf.mxu0
        %v3853 = vpop.f32.mrf.mxu0
        %v3854 = vadd.f32 %v3642, %v3853
        %v3855 = vpop.f32.mrf.mxu0
        %3856 = vmatprep.mubr.bf16.mxu0 0
        %3857 = vmatmul.mubr.bf16.gmra.mxu0 %v3702
        %v3858 = vpop.f32.mrf.mxu0
        %v3859 = vadd.f32 %v3642, %v3858
        %v3860 = vpop.f32.mrf.mxu0
        %v3861 = vpop.f32.mrf.mxu0
        %v3862 = vadd.f32 %v3642, %v3861
        %v3863 = vpop.f32.mrf.mxu0
        %3864 = vdwg.mxu0
        %v3865 = vmax.f32 %v3739, 0.0
        %v3866 = vmax.f32 %v3742, 0.0
        %v3867 = vmax.f32 %v3747, 0.0
        %v3868 = vmax.f32 %v3750, 0.0
        %v3869 = vmax.f32 %v3755, 0.0
        %v3870 = vmax.f32 %v3758, 0.0
        %v3871 = vmax.f32 %v3763, 0.0
        %v3872 = vmax.f32 %v3766, 0.0
        %v3873 = vmax.f32 %v3771, 0.0
        %v3874 = vmax.f32 %v3774, 0.0
        %v3875 = vmax.f32 %v3779, 0.0
        %v3876 = vmax.f32 %v3782, 0.0
        %v3877 = vmax.f32 %v3787, 0.0
        %v3878 = vmax.f32 %v3790, 0.0
        %v3879 = vmax.f32 %v3795, 0.0
        %v3880 = vmax.f32 %v3798, 0.0
        %v3881 = vmax.f32 %v3803, 0.0
        %v3882 = vmax.f32 %v3806, 0.0
        %v3883 = vmax.f32 %v3811, 0.0
        %v3884 = vmax.f32 %v3814, 0.0
        %v3885 = vmax.f32 %v3819, 0.0
        %v3886 = vmax.f32 %v3822, 0.0
        %v3887 = vmax.f32 %v3827, 0.0
        %v3888 = vmax.f32 %v3830, 0.0
        %v3889 = vmax.f32 %v3835, 0.0
        %v3890 = vmax.f32 %v3838, 0.0
        %v3891 = vmax.f32 %v3843, 0.0
        %v3892 = vmax.f32 %v3846, 0.0
        %v3893 = vmax.f32 %v3851, 0.0
        %v3894 = vmax.f32 %v3854, 0.0
        %v3895 = vmax.f32 %v3859, 0.0
        %v3896 = vmax.f32 %v3862, 0.0
        %v3897 = vpack.c.bf16 %v3866, %v3865
        %v3898 = vpack.c.bf16 %v3868, %v3867
        %v3899 = vpack.c.bf16 %v3870, %v3869
        %v3900 = vpack.c.bf16 %v3872, %v3871
        %v3901 = vpack.c.bf16 %v3874, %v3873
        %v3902 = vpack.c.bf16 %v3876, %v3875
        %v3903 = vpack.c.bf16 %v3878, %v3877
        %v3904 = vpack.c.bf16 %v3880, %v3879
        %v3905 = vpack.c.bf16 %v3882, %v3881
        %v3906 = vpack.c.bf16 %v3884, %v3883
        %v3907 = vpack.c.bf16 %v3886, %v3885
        %v3908 = vpack.c.bf16 %v3888, %v3887
        %v3909 = vpack.c.bf16 %v3890, %v3889
        %v3910 = vpack.c.bf16 %v3892, %v3891
        %v3911 = vpack.c.bf16 %v3894, %v3893
        %v3912 = vpack.c.bf16 %v3896, %v3895
        %v3913 = vld [vmem:[%s11] sm:$0xf]
        %v3914 = vld [vmem:[%s11 + $0x4] sm:$0xf]
        %v3915 = vld [vmem:[%s11 + $0x8] sm:$0xf]
        %v3916 = vld [vmem:[%s11 + $0xc] sm:$0xf]
        %v3917 = vld [vmem:[%s11 + $0x10] sm:$0xf]
        %v3918 = vld [vmem:[%s11 + $0x14] sm:$0xf]
        %v3919 = vld [vmem:[%s11 + $0x18] sm:$0xf]
        %v3920 = vld [vmem:[%s11 + $0x1c] sm:$0xf]
        %v3921 = vld [vmem:[%s11 + $0x20] sm:$0xf]
        %v3922 = vld [vmem:[%s11 + $0x24] sm:$0xf]
        %v3923 = vld [vmem:[%s11 + $0x28] sm:$0xf]
        %v3924 = vld [vmem:[%s11 + $0x2c] sm:$0xf]
        %v3925 = vld [vmem:[%s11 + $0x30] sm:$0xf]
        %v3926 = vld [vmem:[%s11 + $0x34] sm:$0xf]
        %v3927 = vld [vmem:[%s11 + $0x38] sm:$0xf]
        %v3928 = vld [vmem:[%s11 + $0x3c] sm:$0xf]
        %v3929 = vld [vmem:[%s12] sm:$0x1]
        %v3931 = vlaneseq
        %v3932 = vshrl.u32 %v3931, 7
        %v3933 = vsub.s32 0, %v3932
        %v3934 = vrot.slane %v3929, %v3933
        %v3952 = vunpack.c.l.b16 %v3913
        %v3953 = vunpack.c.l.b16 %v3914
        %v3954 = vunpack.c.l.b16 %v3915
        %v3955 = vunpack.c.l.b16 %v3916
        %v3956 = vunpack.c.l.b16 %v3917
        %v3957 = vunpack.c.l.b16 %v3918
        %v3958 = vunpack.c.l.b16 %v3919
        %v3959 = vunpack.c.l.b16 %v3920
        %v3960 = vunpack.c.l.b16 %v3921
        %v3961 = vunpack.c.l.b16 %v3922
        %v3962 = vunpack.c.l.b16 %v3923
        %v3963 = vunpack.c.l.b16 %v3924
        %v3964 = vunpack.c.l.b16 %v3925
        %v3965 = vunpack.c.l.b16 %v3926
        %v3966 = vunpack.c.l.b16 %v3927
        %v3967 = vunpack.c.l.b16 %v3928
        %v3968 = vpack.c.b16 %v3953, %v3952
        %v3969 = vpack.c.b16 %v3955, %v3954
        %v3970 = vpack.c.b16 %v3957, %v3956
        %v3971 = vpack.c.b16 %v3959, %v3958
        %v3972 = vpack.c.b16 %v3961, %v3960
        %v3973 = vpack.c.b16 %v3963, %v3962
        %v3974 = vpack.c.b16 %v3965, %v3964
        %v3975 = vpack.c.b16 %v3967, %v3966
        %3984 = vmatprep.subr.bf16.mxu0 0
        %3985 = vmatpush1.bf16.msra.mxu0 %v3975
        %3986 = vmatprep.subr.bf16.mxu0 0
        %3987 = vmatpush1.bf16.msra.mxu0 %v3974
        %3988 = vmatprep.subr.bf16.mxu0 0
        %3989 = vmatpush1.bf16.msra.mxu0 %v3973
        %3990 = vmatprep.subr.bf16.mxu0 0
        %3991 = vmatpush1.bf16.msra.mxu0 %v3972
        %3992 = vmatprep.subr.bf16.mxu0 0
        %3993 = vmatpush1.bf16.msra.mxu0 %v3971
        %3994 = vmatprep.subr.bf16.mxu0 0
        %3995 = vmatpush1.bf16.msra.mxu0 %v3970
        %3996 = vmatprep.subr.bf16.mxu0 0
        %3997 = vmatpush1.bf16.msra.mxu0 %v3969
        %3998 = vmatprep.subr.bf16.mxu0 0
        %3999 = vmatpush1.bf16.msra.mxu0 %v3968
        %4000 = vmatprep.subr.bf16.mxu0 0
        %4001 = vmatpush2.bf16.msra.mxu0 0
        %4002 = vmatprep.subr.bf16.mxu0 0
        %4003 = vmatpush2.bf16.msra.mxu0 0
        %4004 = vmatprep.subr.bf16.mxu0 0
        %4005 = vmatpush2.bf16.msra.mxu0 0
        %4006 = vmatprep.subr.bf16.mxu0 0
        %4007 = vmatpush2.bf16.msra.mxu0 0
        %4008 = vmatprep.subr.bf16.mxu0 0
        %4009 = vmatpush2.bf16.msra.mxu0 0
        %4010 = vmatprep.subr.bf16.mxu0 0
        %4011 = vmatpush2.bf16.msra.mxu0 0
        %4012 = vmatprep.subr.bf16.mxu0 0
        %4013 = vmatpush2.bf16.msra.mxu0 0
        %4014 = vmatprep.subr.bf16.mxu0 0
        %4015 = vmatpush2.bf16.msra.mxu0 0
        %4016 = vmatprep.mubr.bf16.mxu0 0
        %4017 = vmatmul.mubr.bf16.gmra.mxu0 %v3897
        %v4018 = vpop.f32.mrf.mxu0
        %v4019 = vadd.f32 %v3934, %v4018
        %v4020 = vpop.f32.mrf.mxu0
        %v4021 = vpop.f32.mrf.mxu0
        %v4022 = vadd.f32 %v3934, %v4021
        %v4023 = vpop.f32.mrf.mxu0
        %4024 = vmatprep.mubr.bf16.mxu0 0
        %4025 = vmatmul.mubr.bf16.gmra.mxu0 %v3898
        %v4026 = vpop.f32.mrf.mxu0
        %v4027 = vadd.f32 %v3934, %v4026
        %v4028 = vpop.f32.mrf.mxu0
        %v4029 = vpop.f32.mrf.mxu0
        %v4030 = vadd.f32 %v3934, %v4029
        %v4031 = vpop.f32.mrf.mxu0
        %4032 = vmatprep.mubr.bf16.mxu0 0
        %4033 = vmatmul.mubr.bf16.gmra.mxu0 %v3899
        %v4034 = vpop.f32.mrf.mxu0
        %v4035 = vadd.f32 %v3934, %v4034
        %v4036 = vpop.f32.mrf.mxu0
        %v4037 = vpop.f32.mrf.mxu0
        %v4038 = vadd.f32 %v3934, %v4037
        %v4039 = vpop.f32.mrf.mxu0
        %4040 = vmatprep.mubr.bf16.mxu0 0
        %4041 = vmatmul.mubr.bf16.gmra.mxu0 %v3900
        %v4042 = vpop.f32.mrf.mxu0
        %v4043 = vadd.f32 %v3934, %v4042
        %v4044 = vpop.f32.mrf.mxu0
        %v4045 = vpop.f32.mrf.mxu0
        %v4046 = vadd.f32 %v3934, %v4045
        %v4047 = vpop.f32.mrf.mxu0
        %4048 = vmatprep.mubr.bf16.mxu0 0
        %4049 = vmatmul.mubr.bf16.gmra.mxu0 %v3901
        %v4050 = vpop.f32.mrf.mxu0
        %v4051 = vadd.f32 %v3934, %v4050
        %v4052 = vpop.f32.mrf.mxu0
        %v4053 = vpop.f32.mrf.mxu0
        %v4054 = vadd.f32 %v3934, %v4053
        %v4055 = vpop.f32.mrf.mxu0
        %4056 = vmatprep.mubr.bf16.mxu0 0
        %4057 = vmatmul.mubr.bf16.gmra.mxu0 %v3902
        %v4058 = vpop.f32.mrf.mxu0
        %v4059 = vadd.f32 %v3934, %v4058
        %v4060 = vpop.f32.mrf.mxu0
        %v4061 = vpop.f32.mrf.mxu0
        %v4062 = vadd.f32 %v3934, %v4061
        %v4063 = vpop.f32.mrf.mxu0
        %4064 = vmatprep.mubr.bf16.mxu0 0
        %4065 = vmatmul.mubr.bf16.gmra.mxu0 %v3903
        %v4066 = vpop.f32.mrf.mxu0
        %v4067 = vadd.f32 %v3934, %v4066
        %v4068 = vpop.f32.mrf.mxu0
        %v4069 = vpop.f32.mrf.mxu0
        %v4070 = vadd.f32 %v3934, %v4069
        %v4071 = vpop.f32.mrf.mxu0
        %4072 = vmatprep.mubr.bf16.mxu0 0
        %4073 = vmatmul.mubr.bf16.gmra.mxu0 %v3904
        %v4074 = vpop.f32.mrf.mxu0
        %v4075 = vadd.f32 %v3934, %v4074
        %v4076 = vpop.f32.mrf.mxu0
        %v4077 = vpop.f32.mrf.mxu0
        %v4078 = vadd.f32 %v3934, %v4077
        %v4079 = vpop.f32.mrf.mxu0
        %4080 = vmatprep.mubr.bf16.mxu0 0
        %4081 = vmatmul.mubr.bf16.gmra.mxu0 %v3905
        %v4082 = vpop.f32.mrf.mxu0
        %v4083 = vadd.f32 %v3934, %v4082
        %v4084 = vpop.f32.mrf.mxu0
        %v4085 = vpop.f32.mrf.mxu0
        %v4086 = vadd.f32 %v3934, %v4085
        %v4087 = vpop.f32.mrf.mxu0
        %4088 = vmatprep.mubr.bf16.mxu0 0
        %4089 = vmatmul.mubr.bf16.gmra.mxu0 %v3906
        %v4090 = vpop.f32.mrf.mxu0
        %v4091 = vadd.f32 %v3934, %v4090
        %v4092 = vpop.f32.mrf.mxu0
        %v4093 = vpop.f32.mrf.mxu0
        %v4094 = vadd.f32 %v3934, %v4093
        %v4095 = vpop.f32.mrf.mxu0
        %4096 = vmatprep.mubr.bf16.mxu0 0
        %4097 = vmatmul.mubr.bf16.gmra.mxu0 %v3907
        %v4098 = vpop.f32.mrf.mxu0
        %v4099 = vadd.f32 %v3934, %v4098
        %v4100 = vpop.f32.mrf.mxu0
        %v4101 = vpop.f32.mrf.mxu0
        %v4102 = vadd.f32 %v3934, %v4101
        %v4103 = vpop.f32.mrf.mxu0
        %4104 = vmatprep.mubr.bf16.mxu0 0
        %4105 = vmatmul.mubr.bf16.gmra.mxu0 %v3908
        %v4106 = vpop.f32.mrf.mxu0
        %v4107 = vadd.f32 %v3934, %v4106
        %v4108 = vpop.f32.mrf.mxu0
        %v4109 = vpop.f32.mrf.mxu0
        %v4110 = vadd.f32 %v3934, %v4109
        %v4111 = vpop.f32.mrf.mxu0
        %4112 = vmatprep.mubr.bf16.mxu0 0
        %4113 = vmatmul.mubr.bf16.gmra.mxu0 %v3909
        %v4114 = vpop.f32.mrf.mxu0
        %v4115 = vadd.f32 %v3934, %v4114
        %v4116 = vpop.f32.mrf.mxu0
        %v4117 = vpop.f32.mrf.mxu0
        %v4118 = vadd.f32 %v3934, %v4117
        %v4119 = vpop.f32.mrf.mxu0
        %4120 = vmatprep.mubr.bf16.mxu0 0
        %4121 = vmatmul.mubr.bf16.gmra.mxu0 %v3910
        %v4122 = vpop.f32.mrf.mxu0
        %v4123 = vadd.f32 %v3934, %v4122
        %v4124 = vpop.f32.mrf.mxu0
        %v4125 = vpop.f32.mrf.mxu0
        %v4126 = vadd.f32 %v3934, %v4125
        %v4127 = vpop.f32.mrf.mxu0
        %4128 = vmatprep.mubr.bf16.mxu0 0
        %4129 = vmatmul.mubr.bf16.gmra.mxu0 %v3911
        %v4130 = vpop.f32.mrf.mxu0
        %v4131 = vadd.f32 %v3934, %v4130
        %v4132 = vpop.f32.mrf.mxu0
        %v4133 = vpop.f32.mrf.mxu0
        %v4134 = vadd.f32 %v3934, %v4133
        %v4135 = vpop.f32.mrf.mxu0
        %4136 = vmatprep.mubr.bf16.mxu0 0
        %4137 = vmatmul.mubr.bf16.gmra.mxu0 %v3912
        %v4138 = vpop.f32.mrf.mxu0
        %v4139 = vadd.f32 %v3934, %v4138
        %v4140 = vpop.f32.mrf.mxu0
        %v4141 = vpop.f32.mrf.mxu0
        %v4142 = vadd.f32 %v3934, %v4141
        %v4143 = vpop.f32.mrf.mxu0
        %4144 = vdwg.mxu0
        %v4145 = vadd.f32 %v3585, %v4019
        %v4146 = vadd.f32 %v3586, %v4022
        %v4147 = vadd.f32 %v3587, %v4027
        %v4148 = vadd.f32 %v3588, %v4030
        %v4149 = vadd.f32 %v3589, %v4035
        %v4150 = vadd.f32 %v3590, %v4038
        %v4151 = vadd.f32 %v3591, %v4043
        %v4152 = vadd.f32 %v3592, %v4046
        %v4153 = vadd.f32 %v3593, %v4051
        %v4154 = vadd.f32 %v3594, %v4054
        %v4155 = vadd.f32 %v3595, %v4059
        %v4156 = vadd.f32 %v3596, %v4062
        %v4157 = vadd.f32 %v3597, %v4067
        %v4158 = vadd.f32 %v3598, %v4070
        %v4159 = vadd.f32 %v3599, %v4075
        %v4160 = vadd.f32 %v3600, %v4078
        %v4161 = vadd.f32 %v3601, %v4083
        %v4162 = vadd.f32 %v3602, %v4086
        %v4163 = vadd.f32 %v3603, %v4091
        %v4164 = vadd.f32 %v3604, %v4094
        %v4165 = vadd.f32 %v3605, %v4099
        %v4166 = vadd.f32 %v3606, %v4102
        %v4167 = vadd.f32 %v3607, %v4107
        %v4168 = vadd.f32 %v3608, %v4110
        %v4169 = vadd.f32 %v3609, %v4115
        %v4170 = vadd.f32 %v3610, %v4118
        %v4171 = vadd.f32 %v3611, %v4123
        %v4172 = vadd.f32 %v3612, %v4126
        %v4173 = vadd.f32 %v3613, %v4131
        %v4174 = vadd.f32 %v3614, %v4134
        %v4175 = vadd.f32 %v3615, %v4139
        %v4176 = vadd.f32 %v3616, %v4142
        %v4177 = vld [vmem:[%s7] sm:$0x1]
        %v4178 = vld [vmem:[%s8] sm:$0x1]
        %v4179 = vsel %vm761, %v4145, 0.0
        %4180 = vadd.xlane.f32.xlu0 %v4179
        %v4181 = vpop.xlane.xlu0 %4180
        %v4182 = vsel %vm761, %v4146, 0.0
        %4183 = vadd.xlane.f32.xlu0 %v4182
        %v4184 = vpop.xlane.xlu0 %4183
        %v4185 = vsel %vm761, %v4147, 0.0
        %4186 = vadd.xlane.f32.xlu0 %v4185
        %v4187 = vpop.xlane.xlu0 %4186
        %v4188 = vsel %vm761, %v4148, 0.0
        %4189 = vadd.xlane.f32.xlu0 %v4188
        %v4190 = vpop.xlane.xlu0 %4189
        %v4191 = vsel %vm761, %v4149, 0.0
        %4192 = vadd.xlane.f32.xlu0 %v4191
        %v4193 = vpop.xlane.xlu0 %4192
        %v4194 = vsel %vm761, %v4150, 0.0
        %4195 = vadd.xlane.f32.xlu0 %v4194
        %v4196 = vpop.xlane.xlu0 %4195
        %v4197 = vsel %vm761, %v4151, 0.0
        %4198 = vadd.xlane.f32.xlu0 %v4197
        %v4199 = vpop.xlane.xlu0 %4198
        %v4200 = vsel %vm761, %v4152, 0.0
        %4201 = vadd.xlane.f32.xlu0 %v4200
        %v4202 = vpop.xlane.xlu0 %4201
        %v4203 = vsel %vm761, %v4153, 0.0
        %4204 = vadd.xlane.f32.xlu0 %v4203
        %v4205 = vpop.xlane.xlu0 %4204
        %v4206 = vsel %vm761, %v4154, 0.0
        %4207 = vadd.xlane.f32.xlu0 %v4206
        %v4208 = vpop.xlane.xlu0 %4207
        %v4209 = vsel %vm761, %v4155, 0.0
        %4210 = vadd.xlane.f32.xlu0 %v4209
        %v4211 = vpop.xlane.xlu0 %4210
        %v4212 = vsel %vm761, %v4156, 0.0
        %4213 = vadd.xlane.f32.xlu0 %v4212
        %v4214 = vpop.xlane.xlu0 %4213
        %v4215 = vsel %vm761, %v4157, 0.0
        %4216 = vadd.xlane.f32.xlu0 %v4215
        %v4217 = vpop.xlane.xlu0 %4216
        %v4218 = vsel %vm761, %v4158, 0.0
        %4219 = vadd.xlane.f32.xlu0 %v4218
        %v4220 = vpop.xlane.xlu0 %4219
        %v4221 = vsel %vm761, %v4159, 0.0
        %4222 = vadd.xlane.f32.xlu0 %v4221
        %v4223 = vpop.xlane.xlu0 %4222
        %v4224 = vsel %vm761, %v4160, 0.0
        %4225 = vadd.xlane.f32.xlu0 %v4224
        %v4226 = vpop.xlane.xlu0 %4225
        %v4227 = vsel %vm761, %v4161, 0.0
        %4228 = vadd.xlane.f32.xlu0 %v4227
        %v4229 = vpop.xlane.xlu0 %4228
        %v4230 = vsel %vm761, %v4162, 0.0
        %4231 = vadd.xlane.f32.xlu0 %v4230
        %v4232 = vpop.xlane.xlu0 %4231
        %v4233 = vsel %vm761, %v4163, 0.0
        %4234 = vadd.xlane.f32.xlu0 %v4233
        %v4235 = vpop.xlane.xlu0 %4234
        %v4236 = vsel %vm761, %v4164, 0.0
        %4237 = vadd.xlane.f32.xlu0 %v4236
        %v4238 = vpop.xlane.xlu0 %4237
        %v4239 = vsel %vm761, %v4165, 0.0
        %4240 = vadd.xlane.f32.xlu0 %v4239
        %v4241 = vpop.xlane.xlu0 %4240
        %v4242 = vsel %vm761, %v4166, 0.0
        %4243 = vadd.xlane.f32.xlu0 %v4242
        %v4244 = vpop.xlane.xlu0 %4243
        %v4245 = vsel %vm761, %v4167, 0.0
        %4246 = vadd.xlane.f32.xlu0 %v4245
        %v4247 = vpop.xlane.xlu0 %4246
        %v4248 = vsel %vm761, %v4168, 0.0
        %4249 = vadd.xlane.f32.xlu0 %v4248
        %v4250 = vpop.xlane.xlu0 %4249
        %v4251 = vsel %vm761, %v4169, 0.0
        %4252 = vadd.xlane.f32.xlu0 %v4251
        %v4253 = vpop.xlane.xlu0 %4252
        %v4254 = vsel %vm761, %v4170, 0.0
        %4255 = vadd.xlane.f32.xlu0 %v4254
        %v4256 = vpop.xlane.xlu0 %4255
        %v4257 = vsel %vm761, %v4171, 0.0
        %4258 = vadd.xlane.f32.xlu0 %v4257
        %v4259 = vpop.xlane.xlu0 %4258
        %v4260 = vsel %vm761, %v4172, 0.0
        %4261 = vadd.xlane.f32.xlu0 %v4260
        %v4262 = vpop.xlane.xlu0 %4261
        %v4263 = vsel %vm761, %v4173, 0.0
        %4264 = vadd.xlane.f32.xlu0 %v4263
        %v4265 = vpop.xlane.xlu0 %4264
        %v4266 = vsel %vm761, %v4174, 0.0
        %4267 = vadd.xlane.f32.xlu0 %v4266
        %v4268 = vpop.xlane.xlu0 %4267
        %v4269 = vsel %vm761, %v4175, 0.0
        %4270 = vadd.xlane.f32.xlu0 %v4269
        %v4271 = vpop.xlane.xlu0 %4270
        %v4272 = vsel %vm761, %v4176, 0.0
        %4273 = vadd.xlane.f32.xlu0 %v4272
        %v4274 = vpop.xlane.xlu0 %4273
        %v4275 = vmul.f32 %v4181, %v3124
        %v4276 = vmul.f32 %v4184, %v3124
        %v4277 = vmul.f32 %v4187, %v3124
        %v4278 = vmul.f32 %v4190, %v3124
        %v4279 = vmul.f32 %v4193, %v3124
        %v4280 = vmul.f32 %v4196, %v3124
        %v4281 = vmul.f32 %v4199, %v3124
        %v4282 = vmul.f32 %v4202, %v3124
        %v4283 = vmul.f32 %v4205, %v3124
        %v4284 = vmul.f32 %v4208, %v3124
        %v4285 = vmul.f32 %v4211, %v3124
        %v4286 = vmul.f32 %v4214, %v3124
        %v4287 = vmul.f32 %v4217, %v3124
        %v4288 = vmul.f32 %v4220, %v3124
        %v4289 = vmul.f32 %v4223, %v3124
        %v4290 = vmul.f32 %v4226, %v3124
        %v4291 = vmul.f32 %v4229, %v3124
        %v4292 = vmul.f32 %v4232, %v3124
        %v4293 = vmul.f32 %v4235, %v3124
        %v4294 = vmul.f32 %v4238, %v3124
        %v4295 = vmul.f32 %v4241, %v3124
        %v4296 = vmul.f32 %v4244, %v3124
        %v4297 = vmul.f32 %v4247, %v3124
        %v4298 = vmul.f32 %v4250, %v3124
        %v4299 = vmul.f32 %v4253, %v3124
        %v4300 = vmul.f32 %v4256, %v3124
        %v4301 = vmul.f32 %v4259, %v3124
        %v4302 = vmul.f32 %v4262, %v3124
        %v4303 = vmul.f32 %v4265, %v3124
        %v4304 = vmul.f32 %v4268, %v3124
        %v4305 = vmul.f32 %v4271, %v3124
        %v4306 = vmul.f32 %v4274, %v3124
        %v4307 = vmul.f32 %v4145, %v4145
        %v4308 = vmul.f32 %v4146, %v4146
        %v4309 = vmul.f32 %v4147, %v4147
        %v4310 = vmul.f32 %v4148, %v4148
        %v4311 = vmul.f32 %v4149, %v4149
        %v4312 = vmul.f32 %v4150, %v4150
        %v4313 = vmul.f32 %v4151, %v4151
        %v4314 = vmul.f32 %v4152, %v4152
        %v4315 = vmul.f32 %v4153, %v4153
        %v4316 = vmul.f32 %v4154, %v4154
        %v4317 = vmul.f32 %v4155, %v4155
        %v4318 = vmul.f32 %v4156, %v4156
        %v4319 = vmul.f32 %v4157, %v4157
        %v4320 = vmul.f32 %v4158, %v4158
        %v4321 = vmul.f32 %v4159, %v4159
        %v4322 = vmul.f32 %v4160, %v4160
        %v4323 = vmul.f32 %v4161, %v4161
        %v4324 = vmul.f32 %v4162, %v4162
        %v4325 = vmul.f32 %v4163, %v4163
        %v4326 = vmul.f32 %v4164, %v4164
        %v4327 = vmul.f32 %v4165, %v4165
        %v4328 = vmul.f32 %v4166, %v4166
        %v4329 = vmul.f32 %v4167, %v4167
        %v4330 = vmul.f32 %v4168, %v4168
        %v4331 = vmul.f32 %v4169, %v4169
        %v4332 = vmul.f32 %v4170, %v4170
        %v4333 = vmul.f32 %v4171, %v4171
        %v4334 = vmul.f32 %v4172, %v4172
        %v4335 = vmul.f32 %v4173, %v4173
        %v4336 = vmul.f32 %v4174, %v4174
        %v4337 = vmul.f32 %v4175, %v4175
        %v4338 = vmul.f32 %v4176, %v4176
        %v4339 = vsel %vm761, %v4307, 0.0
        %4340 = vadd.xlane.f32.xlu0 %v4339
        %v4341 = vpop.xlane.xlu0 %4340
        %v4342 = vsel %vm761, %v4308, 0.0
        %4343 = vadd.xlane.f32.xlu0 %v4342
        %v4344 = vpop.xlane.xlu0 %4343
        %v4345 = vsel %vm761, %v4309, 0.0
        %4346 = vadd.xlane.f32.xlu0 %v4345
        %v4347 = vpop.xlane.xlu0 %4346
        %v4348 = vsel %vm761, %v4310, 0.0
        %4349 = vadd.xlane.f32.xlu0 %v4348
        %v4350 = vpop.xlane.xlu0 %4349
        %v4351 = vsel %vm761, %v4311, 0.0
        %4352 = vadd.xlane.f32.xlu0 %v4351
        %v4353 = vpop.xlane.xlu0 %4352
        %v4354 = vsel %vm761, %v4312, 0.0
        %4355 = vadd.xlane.f32.xlu0 %v4354
        %v4356 = vpop.xlane.xlu0 %4355
        %v4357 = vsel %vm761, %v4313, 0.0
        %4358 = vadd.xlane.f32.xlu0 %v4357
        %v4359 = vpop.xlane.xlu0 %4358
        %v4360 = vsel %vm761, %v4314, 0.0
        %4361 = vadd.xlane.f32.xlu0 %v4360
        %v4362 = vpop.xlane.xlu0 %4361
        %v4363 = vsel %vm761, %v4315, 0.0
        %4364 = vadd.xlane.f32.xlu0 %v4363
        %v4365 = vpop.xlane.xlu0 %4364
        %v4366 = vsel %vm761, %v4316, 0.0
        %4367 = vadd.xlane.f32.xlu0 %v4366
        %v4368 = vpop.xlane.xlu0 %4367
        %v4369 = vsel %vm761, %v4317, 0.0
        %4370 = vadd.xlane.f32.xlu0 %v4369
        %v4371 = vpop.xlane.xlu0 %4370
        %v4372 = vsel %vm761, %v4318, 0.0
        %4373 = vadd.xlane.f32.xlu0 %v4372
        %v4374 = vpop.xlane.xlu0 %4373
        %v4375 = vsel %vm761, %v4319, 0.0
        %4376 = vadd.xlane.f32.xlu0 %v4375
        %v4377 = vpop.xlane.xlu0 %4376
        %v4378 = vsel %vm761, %v4320, 0.0
        %4379 = vadd.xlane.f32.xlu0 %v4378
        %v4380 = vpop.xlane.xlu0 %4379
        %v4381 = vsel %vm761, %v4321, 0.0
        %4382 = vadd.xlane.f32.xlu0 %v4381
        %v4383 = vpop.xlane.xlu0 %4382
        %v4384 = vsel %vm761, %v4322, 0.0
        %4385 = vadd.xlane.f32.xlu0 %v4384
        %v4386 = vpop.xlane.xlu0 %4385
        %v4387 = vsel %vm761, %v4323, 0.0
        %4388 = vadd.xlane.f32.xlu0 %v4387
        %v4389 = vpop.xlane.xlu0 %4388
        %v4390 = vsel %vm761, %v4324, 0.0
        %4391 = vadd.xlane.f32.xlu0 %v4390
        %v4392 = vpop.xlane.xlu0 %4391
        %v4393 = vsel %vm761, %v4325, 0.0
        %4394 = vadd.xlane.f32.xlu0 %v4393
        %v4395 = vpop.xlane.xlu0 %4394
        %v4396 = vsel %vm761, %v4326, 0.0
        %4397 = vadd.xlane.f32.xlu0 %v4396
        %v4398 = vpop.xlane.xlu0 %4397
        %v4399 = vsel %vm761, %v4327, 0.0
        %4400 = vadd.xlane.f32.xlu0 %v4399
        %v4401 = vpop.xlane.xlu0 %4400
        %v4402 = vsel %vm761, %v4328, 0.0
        %4403 = vadd.xlane.f32.xlu0 %v4402
        %v4404 = vpop.xlane.xlu0 %4403
        %v4405 = vsel %vm761, %v4329, 0.0
        %4406 = vadd.xlane.f32.xlu0 %v4405
        %v4407 = vpop.xlane.xlu0 %4406
        %v4408 = vsel %vm761, %v4330, 0.0
        %4409 = vadd.xlane.f32.xlu0 %v4408
        %v4410 = vpop.xlane.xlu0 %4409
        %v4411 = vsel %vm761, %v4331, 0.0
        %4412 = vadd.xlane.f32.xlu0 %v4411
        %v4413 = vpop.xlane.xlu0 %4412
        %v4414 = vsel %vm761, %v4332, 0.0
        %4415 = vadd.xlane.f32.xlu0 %v4414
        %v4416 = vpop.xlane.xlu0 %4415
        %v4417 = vsel %vm761, %v4333, 0.0
        %4418 = vadd.xlane.f32.xlu0 %v4417
        %v4419 = vpop.xlane.xlu0 %4418
        %v4420 = vsel %vm761, %v4334, 0.0
        %4421 = vadd.xlane.f32.xlu0 %v4420
        %v4422 = vpop.xlane.xlu0 %4421
        %v4423 = vsel %vm761, %v4335, 0.0
        %4424 = vadd.xlane.f32.xlu0 %v4423
        %v4425 = vpop.xlane.xlu0 %4424
        %v4426 = vsel %vm761, %v4336, 0.0
        %4427 = vadd.xlane.f32.xlu0 %v4426
        %v4428 = vpop.xlane.xlu0 %4427
        %v4429 = vsel %vm761, %v4337, 0.0
        %4430 = vadd.xlane.f32.xlu0 %v4429
        %v4431 = vpop.xlane.xlu0 %4430
        %v4432 = vsel %vm761, %v4338, 0.0
        %4433 = vadd.xlane.f32.xlu0 %v4432
        %v4434 = vpop.xlane.xlu0 %4433
        %v4435 = vmul.f32 %v4341, %v3124
        %v4436 = vmul.f32 %v4344, %v3124
        %v4437 = vmul.f32 %v4347, %v3124
        %v4438 = vmul.f32 %v4350, %v3124
        %v4439 = vmul.f32 %v4353, %v3124
        %v4440 = vmul.f32 %v4356, %v3124
        %v4441 = vmul.f32 %v4359, %v3124
        %v4442 = vmul.f32 %v4362, %v3124
        %v4443 = vmul.f32 %v4365, %v3124
        %v4444 = vmul.f32 %v4368, %v3124
        %v4445 = vmul.f32 %v4371, %v3124
        %v4446 = vmul.f32 %v4374, %v3124
        %v4447 = vmul.f32 %v4377, %v3124
        %v4448 = vmul.f32 %v4380, %v3124
        %v4449 = vmul.f32 %v4383, %v3124
        %v4450 = vmul.f32 %v4386, %v3124
        %v4451 = vmul.f32 %v4389, %v3124
        %v4452 = vmul.f32 %v4392, %v3124
        %v4453 = vmul.f32 %v4395, %v3124
        %v4454 = vmul.f32 %v4398, %v3124
        %v4455 = vmul.f32 %v4401, %v3124
        %v4456 = vmul.f32 %v4404, %v3124
        %v4457 = vmul.f32 %v4407, %v3124
        %v4458 = vmul.f32 %v4410, %v3124
        %v4459 = vmul.f32 %v4413, %v3124
        %v4460 = vmul.f32 %v4416, %v3124
        %v4461 = vmul.f32 %v4419, %v3124
        %v4462 = vmul.f32 %v4422, %v3124
        %v4463 = vmul.f32 %v4425, %v3124
        %v4464 = vmul.f32 %v4428, %v3124
        %v4465 = vmul.f32 %v4431, %v3124
        %v4466 = vmul.f32 %v4434, %v3124
        %v4467 = vmul.f32 %v4275, %v4275
        %v4468 = vmul.f32 %v4276, %v4276
        %v4469 = vmul.f32 %v4277, %v4277
        %v4470 = vmul.f32 %v4278, %v4278
        %v4471 = vmul.f32 %v4279, %v4279
        %v4472 = vmul.f32 %v4280, %v4280
        %v4473 = vmul.f32 %v4281, %v4281
        %v4474 = vmul.f32 %v4282, %v4282
        %v4475 = vmul.f32 %v4283, %v4283
        %v4476 = vmul.f32 %v4284, %v4284
        %v4477 = vmul.f32 %v4285, %v4285
        %v4478 = vmul.f32 %v4286, %v4286
        %v4479 = vmul.f32 %v4287, %v4287
        %v4480 = vmul.f32 %v4288, %v4288
        %v4481 = vmul.f32 %v4289, %v4289
        %v4482 = vmul.f32 %v4290, %v4290
        %v4483 = vmul.f32 %v4291, %v4291
        %v4484 = vmul.f32 %v4292, %v4292
        %v4485 = vmul.f32 %v4293, %v4293
        %v4486 = vmul.f32 %v4294, %v4294
        %v4487 = vmul.f32 %v4295, %v4295
        %v4488 = vmul.f32 %v4296, %v4296
        %v4489 = vmul.f32 %v4297, %v4297
        %v4490 = vmul.f32 %v4298, %v4298
        %v4491 = vmul.f32 %v4299, %v4299
        %v4492 = vmul.f32 %v4300, %v4300
        %v4493 = vmul.f32 %v4301, %v4301
        %v4494 = vmul.f32 %v4302, %v4302
        %v4495 = vmul.f32 %v4303, %v4303
        %v4496 = vmul.f32 %v4304, %v4304
        %v4497 = vmul.f32 %v4305, %v4305
        %v4498 = vmul.f32 %v4306, %v4306
        %v4499 = vsub.f32 %v4435, %v4467
        %v4500 = vsub.f32 %v4436, %v4468
        %v4501 = vsub.f32 %v4437, %v4469
        %v4502 = vsub.f32 %v4438, %v4470
        %v4503 = vsub.f32 %v4439, %v4471
        %v4504 = vsub.f32 %v4440, %v4472
        %v4505 = vsub.f32 %v4441, %v4473
        %v4506 = vsub.f32 %v4442, %v4474
        %v4507 = vsub.f32 %v4443, %v4475
        %v4508 = vsub.f32 %v4444, %v4476
        %v4509 = vsub.f32 %v4445, %v4477
        %v4510 = vsub.f32 %v4446, %v4478
        %v4511 = vsub.f32 %v4447, %v4479
        %v4512 = vsub.f32 %v4448, %v4480
        %v4513 = vsub.f32 %v4449, %v4481
        %v4514 = vsub.f32 %v4450, %v4482
        %v4515 = vsub.f32 %v4451, %v4483
        %v4516 = vsub.f32 %v4452, %v4484
        %v4517 = vsub.f32 %v4453, %v4485
        %v4518 = vsub.f32 %v4454, %v4486
        %v4519 = vsub.f32 %v4455, %v4487
        %v4520 = vsub.f32 %v4456, %v4488
        %v4521 = vsub.f32 %v4457, %v4489
        %v4522 = vsub.f32 %v4458, %v4490
        %v4523 = vsub.f32 %v4459, %v4491
        %v4524 = vsub.f32 %v4460, %v4492
        %v4525 = vsub.f32 %v4461, %v4493
        %v4526 = vsub.f32 %v4462, %v4494
        %v4527 = vsub.f32 %v4463, %v4495
        %v4528 = vsub.f32 %v4464, %v4496
        %v4529 = vsub.f32 %v4465, %v4497
        %v4530 = vsub.f32 %v4466, %v4498
        %v4531 = vmax.f32 %v4499, 0.0
        %v4532 = vmax.f32 %v4500, 0.0
        %v4533 = vmax.f32 %v4501, 0.0
        %v4534 = vmax.f32 %v4502, 0.0
        %v4535 = vmax.f32 %v4503, 0.0
        %v4536 = vmax.f32 %v4504, 0.0
        %v4537 = vmax.f32 %v4505, 0.0
        %v4538 = vmax.f32 %v4506, 0.0
        %v4539 = vmax.f32 %v4507, 0.0
        %v4540 = vmax.f32 %v4508, 0.0
        %v4541 = vmax.f32 %v4509, 0.0
        %v4542 = vmax.f32 %v4510, 0.0
        %v4543 = vmax.f32 %v4511, 0.0
        %v4544 = vmax.f32 %v4512, 0.0
        %v4545 = vmax.f32 %v4513, 0.0
        %v4546 = vmax.f32 %v4514, 0.0
        %v4547 = vmax.f32 %v4515, 0.0
        %v4548 = vmax.f32 %v4516, 0.0
        %v4549 = vmax.f32 %v4517, 0.0
        %v4550 = vmax.f32 %v4518, 0.0
        %v4551 = vmax.f32 %v4519, 0.0
        %v4552 = vmax.f32 %v4520, 0.0
        %v4553 = vmax.f32 %v4521, 0.0
        %v4554 = vmax.f32 %v4522, 0.0
        %v4555 = vmax.f32 %v4523, 0.0
        %v4556 = vmax.f32 %v4524, 0.0
        %v4557 = vmax.f32 %v4525, 0.0
        %v4558 = vmax.f32 %v4526, 0.0
        %v4559 = vmax.f32 %v4527, 0.0
        %v4560 = vmax.f32 %v4528, 0.0
        %v4561 = vmax.f32 %v4529, 0.0
        %v4562 = vmax.f32 %v4530, 0.0
        %v4563 = vsub.f32 %v4145, %v4275
        %v4564 = vsub.f32 %v4146, %v4276
        %v4565 = vsub.f32 %v4147, %v4277
        %v4566 = vsub.f32 %v4148, %v4278
        %v4567 = vsub.f32 %v4149, %v4279
        %v4568 = vsub.f32 %v4150, %v4280
        %v4569 = vsub.f32 %v4151, %v4281
        %v4570 = vsub.f32 %v4152, %v4282
        %v4571 = vsub.f32 %v4153, %v4283
        %v4572 = vsub.f32 %v4154, %v4284
        %v4573 = vsub.f32 %v4155, %v4285
        %v4574 = vsub.f32 %v4156, %v4286
        %v4575 = vsub.f32 %v4157, %v4287
        %v4576 = vsub.f32 %v4158, %v4288
        %v4577 = vsub.f32 %v4159, %v4289
        %v4578 = vsub.f32 %v4160, %v4290
        %v4579 = vsub.f32 %v4161, %v4291
        %v4580 = vsub.f32 %v4162, %v4292
        %v4581 = vsub.f32 %v4163, %v4293
        %v4582 = vsub.f32 %v4164, %v4294
        %v4583 = vsub.f32 %v4165, %v4295
        %v4584 = vsub.f32 %v4166, %v4296
        %v4585 = vsub.f32 %v4167, %v4297
        %v4586 = vsub.f32 %v4168, %v4298
        %v4587 = vsub.f32 %v4169, %v4299
        %v4588 = vsub.f32 %v4170, %v4300
        %v4589 = vsub.f32 %v4171, %v4301
        %v4590 = vsub.f32 %v4172, %v4302
        %v4591 = vsub.f32 %v4173, %v4303
        %v4592 = vsub.f32 %v4174, %v4304
        %v4593 = vsub.f32 %v4175, %v4305
        %v4594 = vsub.f32 %v4176, %v4306
        %v4595 = vadd.f32 %v4531, 1e-05
        %v4596 = vadd.f32 %v4532, 1e-05
        %v4597 = vadd.f32 %v4533, 1e-05
        %v4598 = vadd.f32 %v4534, 1e-05
        %v4599 = vadd.f32 %v4535, 1e-05
        %v4600 = vadd.f32 %v4536, 1e-05
        %v4601 = vadd.f32 %v4537, 1e-05
        %v4602 = vadd.f32 %v4538, 1e-05
        %v4603 = vadd.f32 %v4539, 1e-05
        %v4604 = vadd.f32 %v4540, 1e-05
        %v4605 = vadd.f32 %v4541, 1e-05
        %v4606 = vadd.f32 %v4542, 1e-05
        %v4607 = vadd.f32 %v4543, 1e-05
        %v4608 = vadd.f32 %v4544, 1e-05
        %v4609 = vadd.f32 %v4545, 1e-05
        %v4610 = vadd.f32 %v4546, 1e-05
        %v4611 = vadd.f32 %v4547, 1e-05
        %v4612 = vadd.f32 %v4548, 1e-05
        %v4613 = vadd.f32 %v4549, 1e-05
        %v4614 = vadd.f32 %v4550, 1e-05
        %v4615 = vadd.f32 %v4551, 1e-05
        %v4616 = vadd.f32 %v4552, 1e-05
        %v4617 = vadd.f32 %v4553, 1e-05
        %v4618 = vadd.f32 %v4554, 1e-05
        %v4619 = vadd.f32 %v4555, 1e-05
        %v4620 = vadd.f32 %v4556, 1e-05
        %v4621 = vadd.f32 %v4557, 1e-05
        %v4622 = vadd.f32 %v4558, 1e-05
        %v4623 = vadd.f32 %v4559, 1e-05
        %v4624 = vadd.f32 %v4560, 1e-05
        %v4625 = vadd.f32 %v4561, 1e-05
        %v4626 = vadd.f32 %v4562, 1e-05
        %v4627 = vrsqrt.pop %v4595
        %v4628 = vrsqrt.pop %v4596
        %v4629 = vrsqrt.pop %v4597
        %v4630 = vrsqrt.pop %v4598
        %v4631 = vrsqrt.pop %v4599
        %v4632 = vrsqrt.pop %v4600
        %v4633 = vrsqrt.pop %v4601
        %v4634 = vrsqrt.pop %v4602
        %v4635 = vrsqrt.pop %v4603
        %v4636 = vrsqrt.pop %v4604
        %v4637 = vrsqrt.pop %v4605
        %v4638 = vrsqrt.pop %v4606
        %v4639 = vrsqrt.pop %v4607
        %v4640 = vrsqrt.pop %v4608
        %v4641 = vrsqrt.pop %v4609
        %v4642 = vrsqrt.pop %v4610
        %v4643 = vrsqrt.pop %v4611
        %v4644 = vrsqrt.pop %v4612
        %v4645 = vrsqrt.pop %v4613
        %v4646 = vrsqrt.pop %v4614
        %v4647 = vrsqrt.pop %v4615
        %v4648 = vrsqrt.pop %v4616
        %v4649 = vrsqrt.pop %v4617
        %v4650 = vrsqrt.pop %v4618
        %v4651 = vrsqrt.pop %v4619
        %v4652 = vrsqrt.pop %v4620
        %v4653 = vrsqrt.pop %v4621
        %v4654 = vrsqrt.pop %v4622
        %v4655 = vrsqrt.pop %v4623
        %v4656 = vrsqrt.pop %v4624
        %v4657 = vrsqrt.pop %v4625
        %v4658 = vrsqrt.pop %v4626
        %v4659 = vmul.f32 %v4563, %v4627
        %v4660 = vmul.f32 %v4564, %v4628
        %v4661 = vmul.f32 %v4565, %v4629
        %v4662 = vmul.f32 %v4566, %v4630
        %v4663 = vmul.f32 %v4567, %v4631
        %v4664 = vmul.f32 %v4568, %v4632
        %v4665 = vmul.f32 %v4569, %v4633
        %v4666 = vmul.f32 %v4570, %v4634
        %v4667 = vmul.f32 %v4571, %v4635
        %v4668 = vmul.f32 %v4572, %v4636
        %v4669 = vmul.f32 %v4573, %v4637
        %v4670 = vmul.f32 %v4574, %v4638
        %v4671 = vmul.f32 %v4575, %v4639
        %v4672 = vmul.f32 %v4576, %v4640
        %v4673 = vmul.f32 %v4577, %v4641
        %v4674 = vmul.f32 %v4578, %v4642
        %v4675 = vmul.f32 %v4579, %v4643
        %v4676 = vmul.f32 %v4580, %v4644
        %v4677 = vmul.f32 %v4581, %v4645
        %v4678 = vmul.f32 %v4582, %v4646
        %v4679 = vmul.f32 %v4583, %v4647
        %v4680 = vmul.f32 %v4584, %v4648
        %v4681 = vmul.f32 %v4585, %v4649
        %v4682 = vmul.f32 %v4586, %v4650
        %v4683 = vmul.f32 %v4587, %v4651
        %v4684 = vmul.f32 %v4588, %v4652
        %v4685 = vmul.f32 %v4589, %v4653
        %v4686 = vmul.f32 %v4590, %v4654
        %v4687 = vmul.f32 %v4591, %v4655
        %v4688 = vmul.f32 %v4592, %v4656
        %v4689 = vmul.f32 %v4593, %v4657
        %v4690 = vmul.f32 %v4594, %v4658
        %v4692 = vlaneseq
        %v4693 = vshrl.u32 %v4692, 7
        %v4694 = vsub.s32 0, %v4693
        %v4695 = vrot.slane %v4177, %v4694
        %v4697 = vmul.f32 %v4659, %v4695
        %v4698 = vmul.f32 %v4660, %v4695
        %v4699 = vmul.f32 %v4661, %v4695
        %v4700 = vmul.f32 %v4662, %v4695
        %v4701 = vmul.f32 %v4663, %v4695
        %v4702 = vmul.f32 %v4664, %v4695
        %v4703 = vmul.f32 %v4665, %v4695
        %v4704 = vmul.f32 %v4666, %v4695
        %v4705 = vmul.f32 %v4667, %v4695
        %v4706 = vmul.f32 %v4668, %v4695
        %v4707 = vmul.f32 %v4669, %v4695
        %v4708 = vmul.f32 %v4670, %v4695
        %v4709 = vmul.f32 %v4671, %v4695
        %v4710 = vmul.f32 %v4672, %v4695
        %v4711 = vmul.f32 %v4673, %v4695
        %v4712 = vmul.f32 %v4674, %v4695
        %v4713 = vmul.f32 %v4675, %v4695
        %v4714 = vmul.f32 %v4676, %v4695
        %v4715 = vmul.f32 %v4677, %v4695
        %v4716 = vmul.f32 %v4678, %v4695
        %v4717 = vmul.f32 %v4679, %v4695
        %v4718 = vmul.f32 %v4680, %v4695
        %v4719 = vmul.f32 %v4681, %v4695
        %v4720 = vmul.f32 %v4682, %v4695
        %v4721 = vmul.f32 %v4683, %v4695
        %v4722 = vmul.f32 %v4684, %v4695
        %v4723 = vmul.f32 %v4685, %v4695
        %v4724 = vmul.f32 %v4686, %v4695
        %v4725 = vmul.f32 %v4687, %v4695
        %v4726 = vmul.f32 %v4688, %v4695
        %v4727 = vmul.f32 %v4689, %v4695
        %v4728 = vmul.f32 %v4690, %v4695
        %v4730 = vlaneseq
        %v4731 = vshrl.u32 %v4730, 7
        %v4732 = vsub.s32 0, %v4731
        %v4733 = vrot.slane %v4178, %v4732
        %v4735 = vadd.f32 %v4697, %v4733
        %v4736 = vadd.f32 %v4698, %v4733
        %v4737 = vadd.f32 %v4699, %v4733
        %v4738 = vadd.f32 %v4700, %v4733
        %v4739 = vadd.f32 %v4701, %v4733
        %v4740 = vadd.f32 %v4702, %v4733
        %v4741 = vadd.f32 %v4703, %v4733
        %v4742 = vadd.f32 %v4704, %v4733
        %v4743 = vadd.f32 %v4705, %v4733
        %v4744 = vadd.f32 %v4706, %v4733
        %v4745 = vadd.f32 %v4707, %v4733
        %v4746 = vadd.f32 %v4708, %v4733
        %v4747 = vadd.f32 %v4709, %v4733
        %v4748 = vadd.f32 %v4710, %v4733
        %v4749 = vadd.f32 %v4711, %v4733
        %v4750 = vadd.f32 %v4712, %v4733
        %v4751 = vadd.f32 %v4713, %v4733
        %v4752 = vadd.f32 %v4714, %v4733
        %v4753 = vadd.f32 %v4715, %v4733
        %v4754 = vadd.f32 %v4716, %v4733
        %v4755 = vadd.f32 %v4717, %v4733
        %v4756 = vadd.f32 %v4718, %v4733
        %v4757 = vadd.f32 %v4719, %v4733
        %v4758 = vadd.f32 %v4720, %v4733
        %v4759 = vadd.f32 %v4721, %v4733
        %v4760 = vadd.f32 %v4722, %v4733
        %v4761 = vadd.f32 %v4723, %v4733
        %v4762 = vadd.f32 %v4724, %v4733
        %v4763 = vadd.f32 %v4725, %v4733
        %v4764 = vadd.f32 %v4726, %v4733
        %v4765 = vadd.f32 %v4727, %v4733
        %v4766 = vadd.f32 %v4728, %v4733
        %v4767 = vpack.c.bf16 %v4736, %v4735
        %v4768 = vpack.c.bf16 %v4738, %v4737
        %v4769 = vpack.c.bf16 %v4740, %v4739
        %v4770 = vpack.c.bf16 %v4742, %v4741
        %v4771 = vpack.c.bf16 %v4744, %v4743
        %v4772 = vpack.c.bf16 %v4746, %v4745
        %v4773 = vpack.c.bf16 %v4748, %v4747
        %v4774 = vpack.c.bf16 %v4750, %v4749
        %v4775 = vpack.c.bf16 %v4752, %v4751
        %v4776 = vpack.c.bf16 %v4754, %v4753
        %v4777 = vpack.c.bf16 %v4756, %v4755
        %v4778 = vpack.c.bf16 %v4758, %v4757
        %v4779 = vpack.c.bf16 %v4760, %v4759
        %v4780 = vpack.c.bf16 %v4762, %v4761
        %v4781 = vpack.c.bf16 %v4764, %v4763
        %v4782 = vpack.c.bf16 %v4766, %v4765
        %v4783 = vld [vmem:[%s13] sm:$0xf]
        %v4784 = vld [vmem:[%s13 + $0x4] sm:$0xf]
        %v4785 = vld [vmem:[%s13 + $0x8] sm:$0xf]
        %v4786 = vld [vmem:[%s13 + $0xc] sm:$0xf]
        %v4787 = vld [vmem:[%s14] sm:$0x1]
        %v4789 = vlaneseq
        %v4790 = vshrl.u32 %v4789, 7
        %v4791 = vsub.s32 0, %v4790
        %v4792 = vrot.slane %v4787, %v4791
        %v4798 = vunpack.c.l.b16 %v4783
        %v4799 = vunpack.c.l.b16 %v4784
        %v4800 = vunpack.c.l.b16 %v4785
        %v4801 = vunpack.c.l.b16 %v4786
        %v4802 = vpack.c.b16 %v4799, %v4798
        %v4803 = vpack.c.b16 %v4801, %v4800
        %v4807 = vsel %vm761, %v4767, 0
        %v4810 = vsel %vm761, %v4768, 0
        %v4813 = vsel %vm761, %v4769, 0
        %v4816 = vsel %vm761, %v4770, 0
        %v4819 = vsel %vm761, %v4771, 0
        %v4822 = vsel %vm761, %v4772, 0
        %v4825 = vsel %vm761, %v4773, 0
        %v4828 = vsel %vm761, %v4774, 0
        %v4831 = vsel %vm761, %v4775, 0
        %v4834 = vsel %vm761, %v4776, 0
        %v4837 = vsel %vm761, %v4777, 0
        %v4840 = vsel %vm761, %v4778, 0
        %v4843 = vsel %vm761, %v4779, 0
        %v4846 = vsel %vm761, %v4780, 0
        %v4849 = vsel %vm761, %v4781, 0
        %v4852 = vsel %vm761, %v4782, 0
        %4854 = vmatprep.subr.bf16.mxu0 0
        %4855 = vmatpush1.bf16.msra.mxu0 0
        %4856 = vmatprep.subr.bf16.mxu0 0
        %4857 = vmatpush1.bf16.msra.mxu0 0
        %4858 = vmatprep.subr.bf16.mxu0 0
        %4859 = vmatpush1.bf16.msra.mxu0 0
        %4860 = vmatprep.subr.bf16.mxu0 0
        %4861 = vmatpush1.bf16.msra.mxu0 0
        %4862 = vmatprep.subr.bf16.mxu0 0
        %4863 = vmatpush1.bf16.msra.mxu0 0
        %4864 = vmatprep.subr.bf16.mxu0 0
        %4865 = vmatpush1.bf16.msra.mxu0 0
        %4866 = vmatprep.subr.bf16.mxu0 0
        %4867 = vmatpush1.bf16.msra.mxu0 %v4803
        %4868 = vmatprep.subr.bf16.mxu0 0
        %4869 = vmatpush1.bf16.msra.mxu0 %v4802
        %4870 = vmatprep.subr.bf16.mxu0 0
        %4871 = vmatpush2.bf16.msra.mxu0 0
        %4872 = vmatprep.subr.bf16.mxu0 0
        %4873 = vmatpush2.bf16.msra.mxu0 0
        %4874 = vmatprep.subr.bf16.mxu0 0
        %4875 = vmatpush2.bf16.msra.mxu0 0
        %4876 = vmatprep.subr.bf16.mxu0 0
        %4877 = vmatpush2.bf16.msra.mxu0 0
        %4878 = vmatprep.subr.bf16.mxu0 0
        %4879 = vmatpush2.bf16.msra.mxu0 0
        %4880 = vmatprep.subr.bf16.mxu0 0
        %4881 = vmatpush2.bf16.msra.mxu0 0
        %4882 = vmatprep.subr.bf16.mxu0 0
        %4883 = vmatpush2.bf16.msra.mxu0 0
        %4884 = vmatprep.subr.bf16.mxu0 0
        %4885 = vmatpush2.bf16.msra.mxu0 0
        %4886 = vmatprep.mubr.bf16.mxu0 0
        %4887 = vmatmul.mubr.bf16.gmra.mxu0 %v4807
        %v4888 = vpop.f32.mrf.mxu0
        %v4889 = vadd.f32 %v4792, %v4888
        %v4890 = vpop.f32.mrf.mxu0
        %v4891 = vpop.f32.mrf.mxu0
        %v4892 = vadd.f32 %v4792, %v4891
        %v4893 = vpop.f32.mrf.mxu0
        %4894 = vmatprep.mubr.bf16.mxu0 0
        %4895 = vmatmul.mubr.bf16.gmra.mxu0 %v4810
        %v4896 = vpop.f32.mrf.mxu0
        %v4897 = vadd.f32 %v4792, %v4896
        %v4898 = vpop.f32.mrf.mxu0
        %v4899 = vpop.f32.mrf.mxu0
        %v4900 = vadd.f32 %v4792, %v4899
        %v4901 = vpop.f32.mrf.mxu0
        %4902 = vmatprep.mubr.bf16.mxu0 0
        %4903 = vmatmul.mubr.bf16.gmra.mxu0 %v4813
        %v4904 = vpop.f32.mrf.mxu0
        %v4905 = vadd.f32 %v4792, %v4904
        %v4906 = vpop.f32.mrf.mxu0
        %v4907 = vpop.f32.mrf.mxu0
        %v4908 = vadd.f32 %v4792, %v4907
        %v4909 = vpop.f32.mrf.mxu0
        %4910 = vmatprep.mubr.bf16.mxu0 0
        %4911 = vmatmul.mubr.bf16.gmra.mxu0 %v4816
        %v4912 = vpop.f32.mrf.mxu0
        %v4913 = vadd.f32 %v4792, %v4912
        %v4914 = vpop.f32.mrf.mxu0
        %v4915 = vpop.f32.mrf.mxu0
        %v4916 = vadd.f32 %v4792, %v4915
        %v4917 = vpop.f32.mrf.mxu0
        %4918 = vmatprep.mubr.bf16.mxu0 0
        %4919 = vmatmul.mubr.bf16.gmra.mxu0 %v4819
        %v4920 = vpop.f32.mrf.mxu0
        %v4921 = vadd.f32 %v4792, %v4920
        %v4922 = vpop.f32.mrf.mxu0
        %v4923 = vpop.f32.mrf.mxu0
        %v4924 = vadd.f32 %v4792, %v4923
        %v4925 = vpop.f32.mrf.mxu0
        %4926 = vmatprep.mubr.bf16.mxu0 0
        %4927 = vmatmul.mubr.bf16.gmra.mxu0 %v4822
        %v4928 = vpop.f32.mrf.mxu0
        %v4929 = vadd.f32 %v4792, %v4928
        %v4930 = vpop.f32.mrf.mxu0
        %v4931 = vpop.f32.mrf.mxu0
        %v4932 = vadd.f32 %v4792, %v4931
        %v4933 = vpop.f32.mrf.mxu0
        %4934 = vmatprep.mubr.bf16.mxu0 0
        %4935 = vmatmul.mubr.bf16.gmra.mxu0 %v4825
        %v4936 = vpop.f32.mrf.mxu0
        %v4937 = vadd.f32 %v4792, %v4936
        %v4938 = vpop.f32.mrf.mxu0
        %v4939 = vpop.f32.mrf.mxu0
        %v4940 = vadd.f32 %v4792, %v4939
        %v4941 = vpop.f32.mrf.mxu0
        %4942 = vmatprep.mubr.bf16.mxu0 0
        %4943 = vmatmul.mubr.bf16.gmra.mxu0 %v4828
        %v4944 = vpop.f32.mrf.mxu0
        %v4945 = vadd.f32 %v4792, %v4944
        %v4946 = vpop.f32.mrf.mxu0
        %v4947 = vpop.f32.mrf.mxu0
        %v4948 = vadd.f32 %v4792, %v4947
        %v4949 = vpop.f32.mrf.mxu0
        %4950 = vmatprep.mubr.bf16.mxu0 0
        %4951 = vmatmul.mubr.bf16.gmra.mxu0 %v4831
        %v4952 = vpop.f32.mrf.mxu0
        %v4953 = vadd.f32 %v4792, %v4952
        %v4954 = vpop.f32.mrf.mxu0
        %v4955 = vpop.f32.mrf.mxu0
        %v4956 = vadd.f32 %v4792, %v4955
        %v4957 = vpop.f32.mrf.mxu0
        %4958 = vmatprep.mubr.bf16.mxu0 0
        %4959 = vmatmul.mubr.bf16.gmra.mxu0 %v4834
        %v4960 = vpop.f32.mrf.mxu0
        %v4961 = vadd.f32 %v4792, %v4960
        %v4962 = vpop.f32.mrf.mxu0
        %v4963 = vpop.f32.mrf.mxu0
        %v4964 = vadd.f32 %v4792, %v4963
        %v4965 = vpop.f32.mrf.mxu0
        %4966 = vmatprep.mubr.bf16.mxu0 0
        %4967 = vmatmul.mubr.bf16.gmra.mxu0 %v4837
        %v4968 = vpop.f32.mrf.mxu0
        %v4969 = vadd.f32 %v4792, %v4968
        %v4970 = vpop.f32.mrf.mxu0
        %v4971 = vpop.f32.mrf.mxu0
        %v4972 = vadd.f32 %v4792, %v4971
        %v4973 = vpop.f32.mrf.mxu0
        %4974 = vmatprep.mubr.bf16.mxu0 0
        %4975 = vmatmul.mubr.bf16.gmra.mxu0 %v4840
        %v4976 = vpop.f32.mrf.mxu0
        %v4977 = vadd.f32 %v4792, %v4976
        %v4978 = vpop.f32.mrf.mxu0
        %v4979 = vpop.f32.mrf.mxu0
        %v4980 = vadd.f32 %v4792, %v4979
        %v4981 = vpop.f32.mrf.mxu0
        %4982 = vmatprep.mubr.bf16.mxu0 0
        %4983 = vmatmul.mubr.bf16.gmra.mxu0 %v4843
        %v4984 = vpop.f32.mrf.mxu0
        %v4985 = vadd.f32 %v4792, %v4984
        %v4986 = vpop.f32.mrf.mxu0
        %v4987 = vpop.f32.mrf.mxu0
        %v4988 = vadd.f32 %v4792, %v4987
        %v4989 = vpop.f32.mrf.mxu0
        %4990 = vmatprep.mubr.bf16.mxu0 0
        %4991 = vmatmul.mubr.bf16.gmra.mxu0 %v4846
        %v4992 = vpop.f32.mrf.mxu0
        %v4993 = vadd.f32 %v4792, %v4992
        %v4994 = vpop.f32.mrf.mxu0
        %v4995 = vpop.f32.mrf.mxu0
        %v4996 = vadd.f32 %v4792, %v4995
        %v4997 = vpop.f32.mrf.mxu0
        %4998 = vmatprep.mubr.bf16.mxu0 0
        %4999 = vmatmul.mubr.bf16.gmra.mxu0 %v4849
        %v5000 = vpop.f32.mrf.mxu0
        %v5001 = vadd.f32 %v4792, %v5000
        %v5002 = vpop.f32.mrf.mxu0
        %v5003 = vpop.f32.mrf.mxu0
        %v5004 = vadd.f32 %v4792, %v5003
        %v5005 = vpop.f32.mrf.mxu0
        %5006 = vmatprep.mubr.bf16.mxu0 0
        %5007 = vmatmul.mubr.bf16.gmra.mxu0 %v4852
        %v5008 = vpop.f32.mrf.mxu0
        %v5009 = vadd.f32 %v4792, %v5008
        %v5010 = vpop.f32.mrf.mxu0
        %v5011 = vpop.f32.mrf.mxu0
        %v5012 = vadd.f32 %v4792, %v5011
        %v5013 = vpop.f32.mrf.mxu0
        %5014 = vdwg.mxu0
        %5015 = vst [vmem:[%s652] sm:$0xff] %v4889
        %5016 = vst [vmem:[%s652 + $0x8] sm:$0xff] %v4892
        %5017 = vst [vmem:[%s652 + $0x10] sm:$0xff] %v4897
        %5018 = vst [vmem:[%s652 + $0x18] sm:$0xff] %v4900
        %5019 = vst [vmem:[%s652 + $0x20] sm:$0xff] %v4905
        %5020 = vst [vmem:[%s652 + $0x28] sm:$0xff] %v4908
        %5021 = vst [vmem:[%s652 + $0x30] sm:$0xff] %v4913
        %5022 = vst [vmem:[%s652 + $0x38] sm:$0xff] %v4916
        %5023 = vst [vmem:[%s652 + $0x40] sm:$0xff] %v4921
        %5024 = vst [vmem:[%s652 + $0x48] sm:$0xff] %v4924
        %5025 = vst [vmem:[%s652 + $0x50] sm:$0xff] %v4929
        %5026 = vst [vmem:[%s652 + $0x58] sm:$0xff] %v4932
        %5027 = vst [vmem:[%s652 + $0x60] sm:$0xff] %v4937
        %5028 = vst [vmem:[%s652 + $0x68] sm:$0xff] %v4940
        %5029 = vst [vmem:[%s652 + $0x70] sm:$0xff] %v4945
        %5030 = vst [vmem:[%s652 + $0x78] sm:$0xff] %v4948
        %5031 = vst [vmem:[%s652 + $0x80] sm:$0xff] %v4953
        %5032 = vst [vmem:[%s652 + $0x88] sm:$0xff] %v4956
        %5033 = vst [vmem:[%s652 + $0x90] sm:$0xff] %v4961
        %5034 = vst [vmem:[%s652 + $0x98] sm:$0xff] %v4964
        %5035 = vst [vmem:[%s652 + $0xa0] sm:$0xff] %v4969
        %5036 = vst [vmem:[%s652 + $0xa8] sm:$0xff] %v4972
        %5037 = vst [vmem:[%s652 + $0xb0] sm:$0xff] %v4977
        %5038 = vst [vmem:[%s652 + $0xb8] sm:$0xff] %v4980
        %5039 = vst [vmem:[%s652 + $0xc0] sm:$0xff] %v4985
        %5040 = vst [vmem:[%s652 + $0xc8] sm:$0xff] %v4988
        %5041 = vst [vmem:[%s652 + $0xd0] sm:$0xff] %v4993
        %5042 = vst [vmem:[%s652 + $0xd8] sm:$0xff] %v4996
        %5043 = vst [vmem:[%s652 + $0xe0] sm:$0xff] %v5001
        %5044 = vst [vmem:[%s652 + $0xe8] sm:$0xff] %v5004
        %5045 = vst [vmem:[%s652 + $0xf0] sm:$0xff] %v5009
        %5046 = vst [vmem:[%s652 + $0xf8] sm:$0xff] %v5012
        %s5047 = sand.u32 %s357, 1
        %s5048 = scalar_lea.sflag [#allocation4], %s5047
        %s5049 = sand.u32 %s357, 1
        %s5050 = smul.addr %s5049, 256
        %s5051 = scalar_lea.vmem [#allocation3], %s5050
        // Predicated region
        $region119: #{tpu_custom_call.1} parent=113 // pred_check
          %p5052 = pneg %p367
        $region120: #{tpu_custom_call.1} parent=113 // pred_check_branch
          %5054 = sbr.rel (%p5052) target = $region122
        $region121: #{tpu_custom_call.1} parent=113 // pred_region
          #allocation6 [shape = 'u32[6]{0}', space=smem, size = 0x18, scoped, tag = 'DMA stride descriptor']
          %s5055 = smul.u32 4, %s29
          %s5057 = ssub.s32 4096, 4096
          %5058 = vsyncadd %s5048, %s5057
          %s5059 = smul.addr %s5055, 128
          %s5060 = scalar_lea.hbm %s15, %s5059
          %s5062 = sshll.u32 1, 14
          %s5063 = sxor.u32 4294967295, %s5062
          %s5066 = sshll.u32 7, 18
          %s5067 = sxor.u32 4294967295, %s5066
          %s5068 = sand.u32 0, %s5067
          %s5070 = sor.u32 %s5068, 0
          %s5071 = sshll.u32 %s5051, 4
          %s5072 = int_to_ptr.vmem [resolvable:$true] %s5071
          %5078 = sst [smem:[#allocation6]] 512
          %s5079 = scalar_lea.smem [#allocation6], 1
          %5080 = sst [smem:[%s5079]] 1024
          %s5081 = scalar_lea.smem [#allocation6], 2
          %5082 = sst [smem:[%s5081]] 4
          %s5083 = scalar_lea.smem [#allocation6], 3
          %5084 = sst [smem:[%s5083]] 128
          %s5085 = scalar_lea.smem [#allocation6], 4
          %5086 = sst [smem:[%s5085]] 128
          %s5087 = scalar_lea.smem [#allocation6], 5
          %5088 = sst [smem:[%s5087]] 8
          %5090 = dma.general %s5072, 4096, %s5060, %s5048, 131072, [#allocation6], %s5070, 0
        $region122: #{tpu_custom_call.1} parent=113 // pred_fallthru
          _
      $region114: #{tpu_custom_call.1} parent=5 // pred_fallthru
        _
      %p5091 = scmp.le.s32.totalorder 2, %s24
      // Predicated region
      $region123: #{tpu_custom_call.1} parent=5 // pred_check
        %p5092 = pneg %p5091
      $region124: #{tpu_custom_call.1} parent=5 // pred_check_branch
        %5094 = sbr.rel (%p5092) target = $region126
      $region125: #{tpu_custom_call.1} parent=5 // pred_region
        %s5095 = ssub.s32 %s24, 2
        // Predicated region
        $region127: #{tpu_custom_call.1} parent=125 // pred_check
          %p5096 = pneg %p373
        $region128: #{tpu_custom_call.1} parent=125 // pred_check_branch
          %5098 = sbr.rel (%p5096) target = $region130
        $region129: #{tpu_custom_call.1} parent=125 // pred_region
          %s5099 = sand.u32 %s358, 1
          %s5100 = scalar_lea.sflag [#allocation4], %s5099
          %s5101 = sand.u32 %s358, 1
          %s5102 = smul.addr %s5101, 256
          %s5103 = scalar_lea.vmem [#allocation3], %s5102
          %5104 = dma.done %s5100, 4096
        $region130: #{tpu_custom_call.1} parent=125 // pred_fallthru
          _
      $region126: #{tpu_custom_call.1} parent=5 // pred_fallthru
        _
    $region6: #{tpu_custom_call.1} parent=1 // loop_footer
      %s28 = sadd.s32 1, %s24
    $region7: #{tpu_custom_call.1} parent=1 // loop_footer_branch
      %23 = sbr.rel target = $region3
    $region8: #{tpu_custom_call.1} parent=1 // loop_exit
      _
    %5105 = vsyncpa [#allocation4], 1
    %s5106 = scalar_lea.sflag [#allocation4], 1
    %5107 = vsyncpa %s5106, 1

</llo_original>
